<compile_context>
chip_gen: v6e
topology: v6e:2x2x1
jax: 0.10.0
libtpu: 0.0.40
codegen_flags: <defaults>
</compile_context>

<pallas_src>
import functools

import jax
import jax.numpy as jnp
from jax import lax
from jax.experimental import pallas as pl
from jax.experimental.pallas import tpu as pltpu

# ------------------------- model configuration -------------------------------
INNER_DIM = 32          # d_model
IMAGE_FEAT_DIM = 16     # cond_dim
MOD_EMBED_DIM = 8       # mod_dim (unused by forward, kept for parity)
NUM_LAYERS = 2
D_STATE = 16            # Mamba default
D_CONV = 4              # Mamba default
EXPAND = 2              # Mamba default
D_INNER = EXPAND * INNER_DIM
DT_RANK = max(1, -(-INNER_DIM // 16))   # ceil(d_model / 16)
EPS = 1e-5
NC = D_INNER * D_STATE  # 1024 = flattened (d_state-major) scan-state width


def _silu(x):
    return x * (1.0 / (1.0 + jnp.exp(-x)))


def _softplus(x):
    return jnp.maximum(x, 0.0) + jnp.log(1.0 + jnp.exp(-jnp.abs(x)))


# --------------------------- fused forward kernel -----------------------------
def _fused_kernel(cond_ref, emb_ref,
                  cw_ref, cb_ref, inw_ref, inb_ref,
                  convw_ref, convb_ref, xdtw_ref, dtb_ref,
                  dskip_ref, outw_ref, nfw_ref,
                  r_ref, rt_ref, rd_ref, ra_ref,
                  o_ref, *, L, T, eps):
    S = L + T
    cond_in = cond_ref[...]                     # (L, IMAGE_FEAT_DIM)
    emb = emb_ref[...]                          # (T, INNER_DIM)
    R = r_ref[...]                              # (D_STATE, NC)  broadcast B/C over d
    RT = rt_ref[...]                            # (NC, D_INNER)  reduce over n
    RD = rd_ref[...]                            # (D_INNER, NC)  broadcast d over n

    hidden = None
    residual = None
    for l in range(NUM_LAYERS):
        # ---- cond_affine + token re-prepend (token_pnum == 1) ----
        cond = (jnp.dot(cond_in, cw_ref[l], preferred_element_type=jnp.float32)
                + cb_ref[l])                                           # (L, Dm)
        # ---- Block: residual add (prenorm "Add") ----
        if l == 0:
            res = jnp.concatenate([cond, emb], axis=0)                 # (S, Dm)
        else:
            # zero residual on the re-prepended cond rows; add only on tokens
            res = jnp.concatenate([cond, hidden[L:] + residual[L:]], axis=0)

        # ---- LayerNorm (affine folded into in_proj at pack time) ----
        mu = jnp.mean(res, axis=-1, keepdims=True)
        var = jnp.mean(jnp.square(res - mu), axis=-1, keepdims=True)
        xhat = (res - mu) * lax.rsqrt(var + eps)

        # ---- Mamba mixer: in_proj (LN scale folded into weight, LN bias into bias) ----
        xz = (jnp.dot(xhat, inw_ref[l], preferred_element_type=jnp.float32)
              + inb_ref[l])                                            # (S, 2*D_INNER)
        x = xz[:, :D_INNER]
        z = xz[:, D_INNER:]

        # causal depthwise conv1d (left pad D_CONV-1) + bias + SiLU
        cw_l = convw_ref[l]                                            # (D_CONV, D_INNER)
        acc = x * cw_l[D_CONV - 1:D_CONV, :]
        for k in range(D_CONV - 1):
            shift = D_CONV - 1 - k
            xk = jnp.concatenate(
                [jnp.zeros((shift, D_INNER), jnp.float32), x[:S - shift]], axis=0)
            acc = acc + xk * cw_l[k:k + 1, :]
        xc = _silu(acc + convb_ref[l])                                 # (S, D_INNER)

        # fused x_proj + dt_proj matmul -> (dt_pre | B | C)
        proj = jnp.dot(xc, xdtw_ref[l],
                       preferred_element_type=jnp.float32)             # (S, D_INNER+2*D_STATE)
        dt = _softplus(proj[:, :D_INNER] + dtb_ref[l])                 # (S, D_INNER)
        B_ = proj[:, D_INNER:D_INNER + D_STATE]                        # (S, D_STATE)
        C_ = proj[:, D_INNER + D_STATE:]                               # (S, D_STATE)

        # Dense (S, NC) scan operands, column c = n * D_INNER + d.
        # Broadcasts over d_state are done on the MXU; A is folded into RA.
        dA = jnp.exp(jnp.dot(dt, ra_ref[l],
                             preferred_element_type=jnp.float32))      # (S, NC)
        dBu = (jnp.dot(dt * xc, RD, preferred_element_type=jnp.float32)
               * jnp.dot(B_, R, preferred_element_type=jnp.float32))   # (S, NC)

        # log-depth (Hillis-Steele) prefix scan of h_t = dA_t * h_{t-1} + dBu_t
        a = dA
        h = dBu
        shift = 1
        while shift < S:
            a_sh = jnp.concatenate(
                [jnp.ones((shift, NC), jnp.float32), a[:S - shift]], axis=0)
            h_sh = jnp.concatenate(
                [jnp.zeros((shift, NC), jnp.float32), h[:S - shift]], axis=0)
            h = h + a * h_sh
            if shift * 2 < S:          # last step does not need the 'a' update
                a = a * a_sh
            shift *= 2

        # y[s, d] = sum_n h[s, n*D_INNER+d] * C[s, n]  (one MXU contraction)
        yc = h * jnp.dot(C_, R, preferred_element_type=jnp.float32)
        y = jnp.dot(yc, RT, preferred_element_type=jnp.float32)        # (S, D_INNER)
        y = y + xc * dskip_ref[l]                                      # D skip
        y = y * _silu(z)                                               # gate

        # out_proj (no bias)
        hidden = jnp.dot(y, outw_ref[l], preferred_element_type=jnp.float32)
        residual = res

    # ---- final fused add + RMSNorm (prenorm=False, residual_in_fp32) ----
    xf = hidden + residual
    ms = jnp.mean(jnp.square(xf), axis=-1, keepdims=True)
    out = xf * lax.rsqrt(ms + eps) * nfw_ref[...]
    o_ref[...] = out[L + 1:, :].astype(o_ref.dtype)                    # (T-1, Dm)


# ------------------------------ wrapper ---------------------------------------
_WEIGHT_NAMES = ('cond_w', 'cond_b', 'in_w', 'in_b', 'conv_w', 'conv_b',
                 'xdt_w', 'dt_b', 'D', 'out_w', 'norm_f_w', 'R', 'RT', 'RD', 'RA')


def trigambaformer_forward(packed, img_cond, mod, embedding):
    del mod  # unused in the reference forward as well
    N, L, F = img_cond.shape
    T, Dm = embedding.shape

    kern = functools.partial(_fused_kernel, L=L, T=T, eps=EPS)
    weights = [packed[n] for n in _WEIGHT_NAMES]

    def full_spec(arr):
        nd = arr.ndim
        return pl.BlockSpec(arr.shape, lambda b, _n=nd: (0,) * _n)

    in_specs = ([pl.BlockSpec((None, L, F), lambda b: (b, 0, 0)),
                 pl.BlockSpec((T, Dm), lambda b: (0, 0))]
                + [full_spec(w) for w in weights])

    feats = pl.pallas_call(
        kern,
        grid=(N,),
        in_specs=in_specs,
        out_specs=pl.BlockSpec((None, T - 1, Dm), lambda b: (b, 0, 0)),
        out_shape=jax.ShapeDtypeStruct((N, T - 1, Dm), jnp.float32),
        compiler_params=pltpu.CompilerParams(
            dimension_semantics=("parallel",)),   # batch iterations independent
    )(img_cond, embedding, *weights)
    return {'tri_feats': feats}


# ------------------------ deterministic parameter init ------------------------
def init_params(key):
    keys = list(jax.random.split(key, 8 * NUM_LAYERS + 1))
    kit = iter(keys)

    def nrm(shape, scale=0.02):
        return (scale * jax.random.normal(next(kit), shape)).astype(jnp.float32)

    layers = []
    for _ in range(NUM_LAYERS):
        p = {
            'cond_w_t': nrm((IMAGE_FEAT_DIM, INNER_DIM)),
            'cond_b': jnp.zeros((1, INNER_DIM), jnp.float32),
            'ln_w': jnp.ones((1, INNER_DIM), jnp.float32),
            'ln_b': jnp.zeros((1, INNER_DIM), jnp.float32),
            'in_proj_wt': nrm((INNER_DIM, 2 * D_INNER), 0.05),
            'conv_w': nrm((D_CONV, D_INNER), 0.1),
            'conv_b': jnp.zeros((1, D_INNER), jnp.float32),
            'xproj_wt': nrm((D_INNER, DT_RANK + 2 * D_STATE), 0.05),
            'dtproj_wt': nrm((DT_RANK, D_INNER), 0.5),
            'dt_b': jnp.full((1, D_INNER), 0.1, jnp.float32),
            'A_log': jnp.log(jnp.broadcast_to(
                jnp.arange(1, D_STATE + 1, dtype=jnp.float32)[None, :],
                (D_INNER, D_STATE))),
            'D': jnp.ones((1, D_INNER), jnp.float32),
            'out_proj_wt': nrm((D_INNER, INNER_DIM), 0.05),
        }
        layers.append(p)
    return {'layers': layers, 'norm_f_w': jnp.ones((1, INNER_DIM), jnp.float32)}


def pack_params(params):
    """Stack per-layer weights and pre-fold (all exact, linear):
       * LayerNorm affine into in_proj (scale rows / bias vector),
       * dt_proj into x_proj,
       * A into the dt->scan-layout broadcast matrix (RA = RD * A_flat),
    plus the constant broadcast (R, RD) / reduce (RT) matrices for the
    flattened (d_state-major) scan layout."""
    layers = params['layers']

    def stack(name):
        return jnp.stack([p[name] for p in layers], axis=0)

    c = jnp.arange(NC)
    # R[n, c]  = 1 iff c // D_INNER == n   (broadcast B/C over d via MXU)
    R = (c[None, :] // D_INNER == jnp.arange(D_STATE)[:, None]).astype(jnp.float32)
    # RT[c, d] = 1 iff c %  D_INNER == d   (sum over n via MXU)
    RT = (c[:, None] % D_INNER == jnp.arange(D_INNER)[None, :]).astype(jnp.float32)
    RD = RT.T                                                  # (D_INNER, NC)

    in_w, in_b, xdt, ra = [], [], [], []
    for p in layers:
        # fold LayerNorm weight/bias into in_proj
        in_w.append(p['ln_w'].reshape(-1, 1) * p['in_proj_wt'])
        in_b.append(jnp.dot(p['ln_b'], p['in_proj_wt']))       # (1, 2*D_INNER)
        # fold dt_proj into x_proj
        xp = p['xproj_wt']                                     # (D_INNER, DT_RANK+2*D_STATE)
        dt_part = jnp.dot(xp[:, :DT_RANK], p['dtproj_wt'])
        xdt.append(jnp.concatenate([dt_part, xp[:, DT_RANK:]], axis=1))
        # fold A into the dt broadcast: RA[d, c] = 1{c%D_INNER==d} * A[d, c//D_INNER]
        A = -jnp.exp(p['A_log'])                               # (D_INNER, D_STATE), negative
        a_flat = A.T.reshape(1, NC)                            # d_state-major flat layout
        ra.append(RD * a_flat)

    return {
        'cond_w': stack('cond_w_t'), 'cond_b': stack('cond_b'),
        'in_w': jnp.stack(in_w, axis=0), 'in_b': jnp.stack(in_b, axis=0),
        'conv_w': stack('conv_w'), 'conv_b': stack('conv_b'),
        'xdt_w': jnp.stack(xdt, axis=0),                       # (NL, D_INNER, D_INNER+2*D_STATE)
        'dt_b': stack('dt_b'),
        'D': stack('D'),
        'out_w': stack('out_proj_wt'),
        'norm_f_w': params['norm_f_w'],
        'R': R, 'RT': RT, 'RD': RD,
        'RA': jnp.stack(ra, axis=0),                           # (NL, D_INNER, NC)
    }


# ------------------------------------ main -------------------------------------
if __name__ == "__main__":
    key = jax.random.PRNGKey(0)
    k1, k2, k3, k4 = jax.random.split(key, 4)

    N, L, T = 2, 8, 16   # batch, cond tokens, triplane tokens (embedding rows)
    img_cond = jax.random.normal(k1, (N, L, IMAGE_FEAT_DIM), dtype=jnp.float32)
    mod = jax.random.normal(k2, (N, MOD_EMBED_DIM), dtype=jnp.float32)
    embedding = jax.random.normal(k3, (T, INNER_DIM), dtype=jnp.float32)

    packed = pack_params(init_params(k4))

    out = trigambaformer_forward(packed, img_cond, mod, embedding)
    feats = jax.block_until_ready(out['tri_feats'])
    assert feats.shape == (N, T - 1, INNER_DIM), feats.shape
    assert bool(jnp.all(jnp.isfinite(feats)))
    print("KERNEL_OK")
</pallas_src>

<mosaic_0001>
module attributes {stable_mosaic.version = 11 : i64} {
  func.func @_fused_kernel(%arg0: i32, %arg1: memref<1x8x16xf32, #tpu.memory_space<vmem>>, %arg2: memref<16x32xf32, #tpu.memory_space<vmem>>, %arg3: memref<2x16x32xf32, #tpu.memory_space<vmem>>, %arg4: memref<2x1x32xf32, #tpu.memory_space<vmem>>, %arg5: memref<2x32x128xf32, #tpu.memory_space<vmem>>, %arg6: memref<2x1x128xf32, #tpu.memory_space<vmem>>, %arg7: memref<2x4x64xf32, #tpu.memory_space<vmem>>, %arg8: memref<2x1x64xf32, #tpu.memory_space<vmem>>, %arg9: memref<2x64x96xf32, #tpu.memory_space<vmem>>, %arg10: memref<2x1x64xf32, #tpu.memory_space<vmem>>, %arg11: memref<2x1x64xf32, #tpu.memory_space<vmem>>, %arg12: memref<2x64x32xf32, #tpu.memory_space<vmem>>, %arg13: memref<1x32xf32, #tpu.memory_space<vmem>>, %arg14: memref<16x1024xf32, #tpu.memory_space<vmem>>, %arg15: memref<1024x64xf32, #tpu.memory_space<vmem>>, %arg16: memref<64x1024xf32, #tpu.memory_space<vmem>>, %arg17: memref<2x64x1024xf32, #tpu.memory_space<vmem>>, %arg18: memref<1x15x32xf32, #tpu.memory_space<vmem>>) attributes {dimension_semantics = [#tpu.dimension_semantics<parallel>], iteration_bounds = array<i64: 2>, scalar_prefetch = 0 : i64, scratch_operands = 0 : i64, tpu.core_type = #tpu.core_type<tc>, window_params = [{transform_indices = @transform_0, window_bounds = array<i64: 1, 8, 16>}, {pipeline_mode = #tpu.pipeline_mode<synchronous>, transform_indices = @transform_1, window_bounds = array<i64: 16, 32>}, {pipeline_mode = #tpu.pipeline_mode<synchronous>, transform_indices = @transform_2, window_bounds = array<i64: 2, 16, 32>}, {pipeline_mode = #tpu.pipeline_mode<synchronous>, transform_indices = @transform_3, window_bounds = array<i64: 2, 1, 32>}, {pipeline_mode = #tpu.pipeline_mode<synchronous>, transform_indices = @transform_4, window_bounds = array<i64: 2, 32, 128>}, {pipeline_mode = #tpu.pipeline_mode<synchronous>, transform_indices = @transform_5, window_bounds = array<i64: 2, 1, 128>}, {pipeline_mode = #tpu.pipeline_mode<synchronous>, transform_indices = @transform_6, window_bounds = array<i64: 2, 4, 64>}, {pipeline_mode = #tpu.pipeline_mode<synchronous>, transform_indices = @transform_7, window_bounds = array<i64: 2, 1, 64>}, {pipeline_mode = #tpu.pipeline_mode<synchronous>, transform_indices = @transform_8, window_bounds = array<i64: 2, 64, 96>}, {pipeline_mode = #tpu.pipeline_mode<synchronous>, transform_indices = @transform_9, window_bounds = array<i64: 2, 1, 64>}, {pipeline_mode = #tpu.pipeline_mode<synchronous>, transform_indices = @transform_10, window_bounds = array<i64: 2, 1, 64>}, {pipeline_mode = #tpu.pipeline_mode<synchronous>, transform_indices = @transform_11, window_bounds = array<i64: 2, 64, 32>}, {pipeline_mode = #tpu.pipeline_mode<synchronous>, transform_indices = @transform_12, window_bounds = array<i64: 1, 32>}, {pipeline_mode = #tpu.pipeline_mode<synchronous>, transform_indices = @transform_13, window_bounds = array<i64: 16, 1024>}, {pipeline_mode = #tpu.pipeline_mode<synchronous>, transform_indices = @transform_14, window_bounds = array<i64: 1024, 64>}, {pipeline_mode = #tpu.pipeline_mode<synchronous>, transform_indices = @transform_15, window_bounds = array<i64: 64, 1024>}, {pipeline_mode = #tpu.pipeline_mode<synchronous>, transform_indices = @transform_16, window_bounds = array<i64: 2, 64, 1024>}, {transform_indices = @transform_17, window_bounds = array<i64: 1, 15, 32>}]} {
    %c0 = arith.constant 0 : index
    %c0_0 = arith.constant 0 : index
    %c0_1 = arith.constant 0 : index
    %0 = vector.load %arg1[%c0, %c0_0, %c0_1] : memref<1x8x16xf32, #tpu.memory_space<vmem>>, vector<1x8x16xf32>
    %1 = vector.shape_cast %0 : vector<1x8x16xf32> to vector<8x16xf32>
    %c0_2 = arith.constant 0 : index
    %c0_3 = arith.constant 0 : index
    %2 = vector.load %arg2[%c0_2, %c0_3] : memref<16x32xf32, #tpu.memory_space<vmem>>, vector<16x32xf32>
    %c0_4 = arith.constant 0 : index
    %c0_5 = arith.constant 0 : index
    %3 = vector.load %arg14[%c0_4, %c0_5] : memref<16x1024xf32, #tpu.memory_space<vmem>>, vector<16x1024xf32>
    %c0_6 = arith.constant 0 : index
    %c0_7 = arith.constant 0 : index
    %4 = vector.load %arg15[%c0_6, %c0_7] : memref<1024x64xf32, #tpu.memory_space<vmem>>, vector<1024x64xf32>
    %c0_8 = arith.constant 0 : index
    %c0_9 = arith.constant 0 : index
    %5 = vector.load %arg16[%c0_8, %c0_9] : memref<64x1024xf32, #tpu.memory_space<vmem>>, vector<64x1024xf32>
    %c0_10 = arith.constant 0 : index
    %c0_11 = arith.constant 0 : index
    %c0_12 = arith.constant 0 : index
    %6 = vector.load %arg3[%c0_10, %c0_11, %c0_12] : memref<2x16x32xf32, #tpu.memory_space<vmem>>, vector<1x16x32xf32>
    %7 = vector.shape_cast %6 : vector<1x16x32xf32> to vector<16x32xf32>
    %cst = arith.constant dense<0.000000e+00> : vector<8x32xf32>
    %8 = tpu.matmul %1, %7, %cst {dimension_numbers = #tpu.dot_dimension_numbers<[1], [0], [0], [1], [0, 0, 1, 1], [], []>} : vector<8x16xf32>, vector<16x32xf32>, vector<8x32xf32> -> vector<8x32xf32>
    %c0_13 = arith.constant 0 : index
    %c0_14 = arith.constant 0 : index
    %c0_15 = arith.constant 0 : index
    %9 = vector.load %arg4[%c0_13, %c0_14, %c0_15] : memref<2x1x32xf32, #tpu.memory_space<vmem>>, vector<1x1x32xf32>
    %10 = vector.shape_cast %9 : vector<1x1x32xf32> to vector<1x32xf32>
    %11 = vector.broadcast %10 : vector<1x32xf32> to vector<8x32xf32>
    %12 = arith.addf %8, %11 : vector<8x32xf32>
    %13 = tpu.concatenate %12, %2 in 0 : vector<8x32xf32>, vector<16x32xf32> -> vector<24x32xf32>
    %cst_16 = arith.constant dense<0.000000e+00> : vector<24xf32>
    %14 = vector.multi_reduction <add>, %13, %cst_16 [1] : vector<24x32xf32> to vector<24xf32>
    %15 = vector.shape_cast %14 : vector<24xf32> to vector<24x1xf32>
    %cst_17 = arith.constant 3.200000e+01 : f32
    %16 = vector.broadcast %cst_17 : f32 to vector<24x1xf32>
    %17 = arith.divf %15, %16 : vector<24x1xf32>
    %18 = vector.broadcast %17 : vector<24x1xf32> to vector<24x32xf32>
    %19 = arith.subf %13, %18 : vector<24x32xf32>
    %20 = arith.mulf %19, %19 : vector<24x32xf32>
    %cst_18 = arith.constant dense<0.000000e+00> : vector<24xf32>
    %21 = vector.multi_reduction <add>, %20, %cst_18 [1] : vector<24x32xf32> to vector<24xf32>
    %22 = vector.shape_cast %21 : vector<24xf32> to vector<24x1xf32>
    %cst_19 = arith.constant 3.200000e+01 : f32
    %23 = vector.broadcast %cst_19 : f32 to vector<24x1xf32>
    %24 = arith.divf %22, %23 : vector<24x1xf32>
    %25 = vector.broadcast %17 : vector<24x1xf32> to vector<24x32xf32>
    %26 = arith.subf %13, %25 : vector<24x32xf32>
    %cst_20 = arith.constant 9.99999974E-6 : f32
    %27 = vector.broadcast %cst_20 : f32 to vector<24x1xf32>
    %28 = arith.addf %24, %27 : vector<24x1xf32>
    %29 = math.rsqrt %28 : vector<24x1xf32>
    %30 = vector.broadcast %29 : vector<24x1xf32> to vector<24x32xf32>
    %31 = arith.mulf %26, %30 : vector<24x32xf32>
    %c0_21 = arith.constant 0 : index
    %c0_22 = arith.constant 0 : index
    %c0_23 = arith.constant 0 : index
    %32 = vector.load %arg5[%c0_21, %c0_22, %c0_23] : memref<2x32x128xf32, #tpu.memory_space<vmem>>, vector<1x32x128xf32>
    %33 = vector.shape_cast %32 : vector<1x32x128xf32> to vector<32x128xf32>
    %cst_24 = arith.constant dense<0.000000e+00> : vector<24x128xf32>
    %34 = tpu.matmul %31, %33, %cst_24 {dimension_numbers = #tpu.dot_dimension_numbers<[1], [0], [0], [1], [0, 0, 1, 1], [], []>} : vector<24x32xf32>, vector<32x128xf32>, vector<24x128xf32> -> vector<24x128xf32>
    %c0_25 = arith.constant 0 : index
    %c0_26 = arith.constant 0 : index
    %c0_27 = arith.constant 0 : index
    %35 = vector.load %arg6[%c0_25, %c0_26, %c0_27] : memref<2x1x128xf32, #tpu.memory_space<vmem>>, vector<1x1x128xf32>
    %36 = vector.shape_cast %35 : vector<1x1x128xf32> to vector<1x128xf32>
    %37 = vector.broadcast %36 : vector<1x128xf32> to vector<24x128xf32>
    %38 = arith.addf %34, %37 : vector<24x128xf32>
    %39 = vector.extract_strided_slice %38 {offsets = [0, 0], sizes = [24, 64], strides = [1, 1]} : vector<24x128xf32> to vector<24x64xf32>
    %40 = vector.extract_strided_slice %38 {offsets = [0, 64], sizes = [24, 64], strides = [1, 1]} : vector<24x128xf32> to vector<24x64xf32>
    %c0_28 = arith.constant 0 : index
    %c0_29 = arith.constant 0 : index
    %c0_30 = arith.constant 0 : index
    %41 = vector.load %arg7[%c0_28, %c0_29, %c0_30] : memref<2x4x64xf32, #tpu.memory_space<vmem>>, vector<1x4x64xf32>
    %42 = vector.shape_cast %41 : vector<1x4x64xf32> to vector<4x64xf32>
    %43 = vector.extract_strided_slice %42 {offsets = [3, 0], sizes = [1, 64], strides = [1, 1]} : vector<4x64xf32> to vector<1x64xf32>
    %44 = vector.broadcast %43 : vector<1x64xf32> to vector<24x64xf32>
    %45 = arith.mulf %39, %44 : vector<24x64xf32>
    %cst_31 = arith.constant 0.000000e+00 : f32
    %46 = vector.broadcast %cst_31 : f32 to vector<3x64xf32>
    %47 = vector.extract_strided_slice %39 {offsets = [0, 0], sizes = [21, 64], strides = [1, 1]} : vector<24x64xf32> to vector<21x64xf32>
    %48 = tpu.concatenate %46, %47 in 0 : vector<3x64xf32>, vector<21x64xf32> -> vector<24x64xf32>
    %49 = vector.extract_strided_slice %42 {offsets = [0, 0], sizes = [1, 64], strides = [1, 1]} : vector<4x64xf32> to vector<1x64xf32>
    %50 = vector.broadcast %49 : vector<1x64xf32> to vector<24x64xf32>
    %51 = arith.mulf %48, %50 : vector<24x64xf32>
    %52 = arith.addf %45, %51 : vector<24x64xf32>
    %cst_32 = arith.constant 0.000000e+00 : f32
    %53 = vector.broadcast %cst_32 : f32 to vector<2x64xf32>
    %54 = vector.extract_strided_slice %39 {offsets = [0, 0], sizes = [22, 64], strides = [1, 1]} : vector<24x64xf32> to vector<22x64xf32>
    %55 = tpu.concatenate %53, %54 in 0 : vector<2x64xf32>, vector<22x64xf32> -> vector<24x64xf32>
    %56 = vector.extract_strided_slice %42 {offsets = [1, 0], sizes = [1, 64], strides = [1, 1]} : vector<4x64xf32> to vector<1x64xf32>
    %57 = vector.broadcast %56 : vector<1x64xf32> to vector<24x64xf32>
    %58 = arith.mulf %55, %57 : vector<24x64xf32>
    %59 = arith.addf %52, %58 : vector<24x64xf32>
    %cst_33 = arith.constant 0.000000e+00 : f32
    %60 = vector.broadcast %cst_33 : f32 to vector<1x64xf32>
    %61 = vector.extract_strided_slice %39 {offsets = [0, 0], sizes = [23, 64], strides = [1, 1]} : vector<24x64xf32> to vector<23x64xf32>
    %62 = tpu.concatenate %60, %61 in 0 : vector<1x64xf32>, vector<23x64xf32> -> vector<24x64xf32>
    %63 = vector.extract_strided_slice %42 {offsets = [2, 0], sizes = [1, 64], strides = [1, 1]} : vector<4x64xf32> to vector<1x64xf32>
    %64 = vector.broadcast %63 : vector<1x64xf32> to vector<24x64xf32>
    %65 = arith.mulf %62, %64 : vector<24x64xf32>
    %66 = arith.addf %59, %65 : vector<24x64xf32>
    %c0_34 = arith.constant 0 : index
    %c0_35 = arith.constant 0 : index
    %c0_36 = arith.constant 0 : index
    %67 = vector.load %arg8[%c0_34, %c0_35, %c0_36] : memref<2x1x64xf32, #tpu.memory_space<vmem>>, vector<1x1x64xf32>
    %68 = vector.shape_cast %67 : vector<1x1x64xf32> to vector<1x64xf32>
    %69 = vector.broadcast %68 : vector<1x64xf32> to vector<24x64xf32>
    %70 = arith.addf %66, %69 : vector<24x64xf32>
    %cst_37 = arith.constant 0.000000e+00 : f32
    %71 = vector.broadcast %cst_37 : f32 to vector<24x64xf32>
    %72 = arith.subf %71, %70 : vector<24x64xf32>
    %73 = math.exp %72 : vector<24x64xf32>
    %cst_38 = arith.constant 1.000000e+00 : f32
    %74 = vector.broadcast %cst_38 : f32 to vector<24x64xf32>
    %75 = arith.addf %74, %73 : vector<24x64xf32>
    %cst_39 = arith.constant 1.000000e+00 : f32
    %76 = vector.broadcast %cst_39 : f32 to vector<24x64xf32>
    %77 = arith.divf %76, %75 : vector<24x64xf32>
    %78 = arith.mulf %70, %77 : vector<24x64xf32>
    %c0_40 = arith.constant 0 : index
    %c0_41 = arith.constant 0 : index
    %c0_42 = arith.constant 0 : index
    %79 = vector.load %arg9[%c0_40, %c0_41, %c0_42] : memref<2x64x96xf32, #tpu.memory_space<vmem>>, vector<1x64x96xf32>
    %80 = vector.shape_cast %79 : vector<1x64x96xf32> to vector<64x96xf32>
    %cst_43 = arith.constant dense<0.000000e+00> : vector<24x96xf32>
    %81 = tpu.matmul %78, %80, %cst_43 {dimension_numbers = #tpu.dot_dimension_numbers<[1], [0], [0], [1], [0, 0, 1, 1], [], []>} : vector<24x64xf32>, vector<64x96xf32>, vector<24x96xf32> -> vector<24x96xf32>
    %82 = vector.extract_strided_slice %81 {offsets = [0, 0], sizes = [24, 64], strides = [1, 1]} : vector<24x96xf32> to vector<24x64xf32>
    %c0_44 = arith.constant 0 : index
    %c0_45 = arith.constant 0 : index
    %c0_46 = arith.constant 0 : index
    %83 = vector.load %arg10[%c0_44, %c0_45, %c0_46] : memref<2x1x64xf32, #tpu.memory_space<vmem>>, vector<1x1x64xf32>
    %84 = vector.shape_cast %83 : vector<1x1x64xf32> to vector<1x64xf32>
    %85 = vector.broadcast %84 : vector<1x64xf32> to vector<24x64xf32>
    %86 = arith.addf %82, %85 : vector<24x64xf32>
    %cst_47 = arith.constant 0.000000e+00 : f32
    %87 = vector.broadcast %cst_47 : f32 to vector<24x64xf32>
    %88 = arith.maximumf %86, %87 : vector<24x64xf32>
    %89 = math.absf %86 : vector<24x64xf32>
    %cst_48 = arith.constant 0.000000e+00 : f32
    %90 = vector.broadcast %cst_48 : f32 to vector<24x64xf32>
    %91 = arith.subf %90, %89 : vector<24x64xf32>
    %92 = math.exp %91 : vector<24x64xf32>
    %cst_49 = arith.constant 1.000000e+00 : f32
    %93 = vector.broadcast %cst_49 : f32 to vector<24x64xf32>
    %94 = arith.addf %93, %92 : vector<24x64xf32>
    %95 = math.log %94 : vector<24x64xf32>
    %96 = arith.addf %88, %95 : vector<24x64xf32>
    %97 = vector.extract_strided_slice %81 {offsets = [0, 64], sizes = [24, 16], strides = [1, 1]} : vector<24x96xf32> to vector<24x16xf32>
    %98 = vector.extract_strided_slice %81 {offsets = [0, 80], sizes = [24, 16], strides = [1, 1]} : vector<24x96xf32> to vector<24x16xf32>
    %c0_50 = arith.constant 0 : index
    %c0_51 = arith.constant 0 : index
    %c0_52 = arith.constant 0 : index
    %99 = vector.load %arg17[%c0_50, %c0_51, %c0_52] : memref<2x64x1024xf32, #tpu.memory_space<vmem>>, vector<1x64x1024xf32>
    %100 = vector.shape_cast %99 : vector<1x64x1024xf32> to vector<64x1024xf32>
    %cst_53 = arith.constant dense<0.000000e+00> : vector<24x1024xf32>
    %101 = tpu.matmul %96, %100, %cst_53 {dimension_numbers = #tpu.dot_dimension_numbers<[1], [0], [0], [1], [0, 0, 1, 1], [], []>} : vector<24x64xf32>, vector<64x1024xf32>, vector<24x1024xf32> -> vector<24x1024xf32>
    %102 = math.exp %101 : vector<24x1024xf32>
    %103 = arith.mulf %96, %78 : vector<24x64xf32>
    %cst_54 = arith.constant dense<0.000000e+00> : vector<24x1024xf32>
    %104 = tpu.matmul %103, %5, %cst_54 {dimension_numbers = #tpu.dot_dimension_numbers<[1], [0], [0], [1], [0, 0, 1, 1], [], []>} : vector<24x64xf32>, vector<64x1024xf32>, vector<24x1024xf32> -> vector<24x1024xf32>
    %cst_55 = arith.constant dense<0.000000e+00> : vector<24x1024xf32>
    %105 = tpu.matmul %97, %3, %cst_55 {dimension_numbers = #tpu.dot_dimension_numbers<[1], [0], [0], [1], [0, 0, 1, 1], [], []>} : vector<24x16xf32>, vector<16x1024xf32>, vector<24x1024xf32> -> vector<24x1024xf32>
    %106 = arith.mulf %104, %105 : vector<24x1024xf32>
    %cst_56 = arith.constant 1.000000e+00 : f32
    %107 = vector.broadcast %cst_56 : f32 to vector<1x1024xf32>
    %108 = vector.extract_strided_slice %102 {offsets = [0, 0], sizes = [23, 1024], strides = [1, 1]} : vector<24x1024xf32> to vector<23x1024xf32>
    %109 = tpu.concatenate %107, %108 in 0 : vector<1x1024xf32>, vector<23x1024xf32> -> vector<24x1024xf32>
    %cst_57 = arith.constant 0.000000e+00 : f32
    %110 = vector.broadcast %cst_57 : f32 to vector<1x1024xf32>
    %111 = vector.extract_strided_slice %106 {offsets = [0, 0], sizes = [23, 1024], strides = [1, 1]} : vector<24x1024xf32> to vector<23x1024xf32>
    %112 = tpu.concatenate %110, %111 in 0 : vector<1x1024xf32>, vector<23x1024xf32> -> vector<24x1024xf32>
    %113 = arith.mulf %102, %112 : vector<24x1024xf32>
    %114 = arith.addf %106, %113 : vector<24x1024xf32>
    %115 = arith.mulf %102, %109 : vector<24x1024xf32>
    %cst_58 = arith.constant 1.000000e+00 : f32
    %116 = vector.broadcast %cst_58 : f32 to vector<2x1024xf32>
    %117 = vector.extract_strided_slice %115 {offsets = [0, 0], sizes = [22, 1024], strides = [1, 1]} : vector<24x1024xf32> to vector<22x1024xf32>
    %118 = tpu.concatenate %116, %117 in 0 : vector<2x1024xf32>, vector<22x1024xf32> -> vector<24x1024xf32>
    %cst_59 = arith.constant 0.000000e+00 : f32
    %119 = vector.broadcast %cst_59 : f32 to vector<2x1024xf32>
    %120 = vector.extract_strided_slice %114 {offsets = [0, 0], sizes = [22, 1024], strides = [1, 1]} : vector<24x1024xf32> to vector<22x1024xf32>
    %121 = tpu.concatenate %119, %120 in 0 : vector<2x1024xf32>, vector<22x1024xf32> -> vector<24x1024xf32>
    %122 = arith.mulf %115, %121 : vector<24x1024xf32>
    %123 = arith.addf %114, %122 : vector<24x1024xf32>
    %124 = arith.mulf %115, %118 : vector<24x1024xf32>
    %cst_60 = arith.constant 1.000000e+00 : f32
    %125 = vector.broadcast %cst_60 : f32 to vector<4x1024xf32>
    %126 = vector.extract_strided_slice %124 {offsets = [0, 0], sizes = [20, 1024], strides = [1, 1]} : vector<24x1024xf32> to vector<20x1024xf32>
    %127 = tpu.concatenate %125, %126 in 0 : vector<4x1024xf32>, vector<20x1024xf32> -> vector<24x1024xf32>
    %cst_61 = arith.constant 0.000000e+00 : f32
    %128 = vector.broadcast %cst_61 : f32 to vector<4x1024xf32>
    %129 = vector.extract_strided_slice %123 {offsets = [0, 0], sizes = [20, 1024], strides = [1, 1]} : vector<24x1024xf32> to vector<20x1024xf32>
    %130 = tpu.concatenate %128, %129 in 0 : vector<4x1024xf32>, vector<20x1024xf32> -> vector<24x1024xf32>
    %131 = arith.mulf %124, %130 : vector<24x1024xf32>
    %132 = arith.addf %123, %131 : vector<24x1024xf32>
    %133 = arith.mulf %124, %127 : vector<24x1024xf32>
    %cst_62 = arith.constant 1.000000e+00 : f32
    %134 = vector.broadcast %cst_62 : f32 to vector<8x1024xf32>
    %135 = vector.extract_strided_slice %133 {offsets = [0, 0], sizes = [16, 1024], strides = [1, 1]} : vector<24x1024xf32> to vector<16x1024xf32>
    %136 = tpu.concatenate %134, %135 in 0 : vector<8x1024xf32>, vector<16x1024xf32> -> vector<24x1024xf32>
    %cst_63 = arith.constant 0.000000e+00 : f32
    %137 = vector.broadcast %cst_63 : f32 to vector<8x1024xf32>
    %138 = vector.extract_strided_slice %132 {offsets = [0, 0], sizes = [16, 1024], strides = [1, 1]} : vector<24x1024xf32> to vector<16x1024xf32>
    %139 = tpu.concatenate %137, %138 in 0 : vector<8x1024xf32>, vector<16x1024xf32> -> vector<24x1024xf32>
    %140 = arith.mulf %133, %139 : vector<24x1024xf32>
    %141 = arith.addf %132, %140 : vector<24x1024xf32>
    %142 = arith.mulf %133, %136 : vector<24x1024xf32>
    %cst_64 = arith.constant 0.000000e+00 : f32
    %143 = vector.broadcast %cst_64 : f32 to vector<16x1024xf32>
    %144 = vector.extract_strided_slice %141 {offsets = [0, 0], sizes = [8, 1024], strides = [1, 1]} : vector<24x1024xf32> to vector<8x1024xf32>
    %145 = tpu.concatenate %143, %144 in 0 : vector<16x1024xf32>, vector<8x1024xf32> -> vector<24x1024xf32>
    %146 = arith.mulf %142, %145 : vector<24x1024xf32>
    %147 = arith.addf %141, %146 : vector<24x1024xf32>
    %cst_65 = arith.constant dense<0.000000e+00> : vector<24x1024xf32>
    %148 = tpu.matmul %98, %3, %cst_65 {dimension_numbers = #tpu.dot_dimension_numbers<[1], [0], [0], [1], [0, 0, 1, 1], [], []>} : vector<24x16xf32>, vector<16x1024xf32>, vector<24x1024xf32> -> vector<24x1024xf32>
    %149 = arith.mulf %147, %148 : vector<24x1024xf32>
    %cst_66 = arith.constant dense<0.000000e+00> : vector<24x64xf32>
    %150 = tpu.matmul %149, %4, %cst_66 {dimension_numbers = #tpu.dot_dimension_numbers<[1], [0], [0], [1], [0, 0, 1, 1], [], []>} : vector<24x1024xf32>, vector<1024x64xf32>, vector<24x64xf32> -> vector<24x64xf32>
    %c0_67 = arith.constant 0 : index
    %c0_68 = arith.constant 0 : index
    %c0_69 = arith.constant 0 : index
    %151 = vector.load %arg11[%c0_67, %c0_68, %c0_69] : memref<2x1x64xf32, #tpu.memory_space<vmem>>, vector<1x1x64xf32>
    %152 = vector.shape_cast %151 : vector<1x1x64xf32> to vector<1x64xf32>
    %153 = vector.broadcast %152 : vector<1x64xf32> to vector<24x64xf32>
    %154 = arith.mulf %78, %153 : vector<24x64xf32>
    %155 = arith.addf %150, %154 : vector<24x64xf32>
    %cst_70 = arith.constant 0.000000e+00 : f32
    %156 = vector.broadcast %cst_70 : f32 to vector<24x64xf32>
    %157 = arith.subf %156, %40 : vector<24x64xf32>
    %158 = math.exp %157 : vector<24x64xf32>
    %cst_71 = arith.constant 1.000000e+00 : f32
    %159 = vector.broadcast %cst_71 : f32 to vector<24x64xf32>
    %160 = arith.addf %159, %158 : vector<24x64xf32>
    %cst_72 = arith.constant 1.000000e+00 : f32
    %161 = vector.broadcast %cst_72 : f32 to vector<24x64xf32>
    %162 = arith.divf %161, %160 : vector<24x64xf32>
    %163 = arith.mulf %40, %162 : vector<24x64xf32>
    %164 = arith.mulf %155, %163 : vector<24x64xf32>
    %c0_73 = arith.constant 0 : index
    %c0_74 = arith.constant 0 : index
    %c0_75 = arith.constant 0 : index
    %165 = vector.load %arg12[%c0_73, %c0_74, %c0_75] : memref<2x64x32xf32, #tpu.memory_space<vmem>>, vector<1x64x32xf32>
    %166 = vector.shape_cast %165 : vector<1x64x32xf32> to vector<64x32xf32>
    %cst_76 = arith.constant dense<0.000000e+00> : vector<24x32xf32>
    %167 = tpu.matmul %164, %166, %cst_76 {dimension_numbers = #tpu.dot_dimension_numbers<[1], [0], [0], [1], [0, 0, 1, 1], [], []>} : vector<24x64xf32>, vector<64x32xf32>, vector<24x32xf32> -> vector<24x32xf32>
    %c1 = arith.constant 1 : index
    %c0_77 = arith.constant 0 : index
    %c0_78 = arith.constant 0 : index
    %168 = vector.load %arg3[%c1, %c0_77, %c0_78] : memref<2x16x32xf32, #tpu.memory_space<vmem>>, vector<1x16x32xf32>
    %169 = vector.shape_cast %168 : vector<1x16x32xf32> to vector<16x32xf32>
    %cst_79 = arith.constant dense<0.000000e+00> : vector<8x32xf32>
    %170 = tpu.matmul %1, %169, %cst_79 {dimension_numbers = #tpu.dot_dimension_numbers<[1], [0], [0], [1], [0, 0, 1, 1], [], []>} : vector<8x16xf32>, vector<16x32xf32>, vector<8x32xf32> -> vector<8x32xf32>
    %c1_80 = arith.constant 1 : index
    %c0_81 = arith.constant 0 : index
    %c0_82 = arith.constant 0 : index
    %171 = vector.load %arg4[%c1_80, %c0_81, %c0_82] : memref<2x1x32xf32, #tpu.memory_space<vmem>>, vector<1x1x32xf32>
    %172 = vector.shape_cast %171 : vector<1x1x32xf32> to vector<1x32xf32>
    %173 = vector.broadcast %172 : vector<1x32xf32> to vector<8x32xf32>
    %174 = arith.addf %170, %173 : vector<8x32xf32>
    %175 = vector.extract_strided_slice %167 {offsets = [8, 0], sizes = [16, 32], strides = [1, 1]} : vector<24x32xf32> to vector<16x32xf32>
    %176 = vector.extract_strided_slice %13 {offsets = [8, 0], sizes = [16, 32], strides = [1, 1]} : vector<24x32xf32> to vector<16x32xf32>
    %177 = arith.addf %175, %176 : vector<16x32xf32>
    %178 = tpu.concatenate %174, %177 in 0 : vector<8x32xf32>, vector<16x32xf32> -> vector<24x32xf32>
    %cst_83 = arith.constant dense<0.000000e+00> : vector<24xf32>
    %179 = vector.multi_reduction <add>, %178, %cst_83 [1] : vector<24x32xf32> to vector<24xf32>
    %180 = vector.shape_cast %179 : vector<24xf32> to vector<24x1xf32>
    %cst_84 = arith.constant 3.200000e+01 : f32
    %181 = vector.broadcast %cst_84 : f32 to vector<24x1xf32>
    %182 = arith.divf %180, %181 : vector<24x1xf32>
    %183 = vector.broadcast %182 : vector<24x1xf32> to vector<24x32xf32>
    %184 = arith.subf %178, %183 : vector<24x32xf32>
    %185 = arith.mulf %184, %184 : vector<24x32xf32>
    %cst_85 = arith.constant dense<0.000000e+00> : vector<24xf32>
    %186 = vector.multi_reduction <add>, %185, %cst_85 [1] : vector<24x32xf32> to vector<24xf32>
    %187 = vector.shape_cast %186 : vector<24xf32> to vector<24x1xf32>
    %cst_86 = arith.constant 3.200000e+01 : f32
    %188 = vector.broadcast %cst_86 : f32 to vector<24x1xf32>
    %189 = arith.divf %187, %188 : vector<24x1xf32>
    %190 = vector.broadcast %182 : vector<24x1xf32> to vector<24x32xf32>
    %191 = arith.subf %178, %190 : vector<24x32xf32>
    %cst_87 = arith.constant 9.99999974E-6 : f32
    %192 = vector.broadcast %cst_87 : f32 to vector<24x1xf32>
    %193 = arith.addf %189, %192 : vector<24x1xf32>
    %194 = math.rsqrt %193 : vector<24x1xf32>
    %195 = vector.broadcast %194 : vector<24x1xf32> to vector<24x32xf32>
    %196 = arith.mulf %191, %195 : vector<24x32xf32>
    %c1_88 = arith.constant 1 : index
    %c0_89 = arith.constant 0 : index
    %c0_90 = arith.constant 0 : index
    %197 = vector.load %arg5[%c1_88, %c0_89, %c0_90] : memref<2x32x128xf32, #tpu.memory_space<vmem>>, vector<1x32x128xf32>
    %198 = vector.shape_cast %197 : vector<1x32x128xf32> to vector<32x128xf32>
    %cst_91 = arith.constant dense<0.000000e+00> : vector<24x128xf32>
    %199 = tpu.matmul %196, %198, %cst_91 {dimension_numbers = #tpu.dot_dimension_numbers<[1], [0], [0], [1], [0, 0, 1, 1], [], []>} : vector<24x32xf32>, vector<32x128xf32>, vector<24x128xf32> -> vector<24x128xf32>
    %c1_92 = arith.constant 1 : index
    %c0_93 = arith.constant 0 : index
    %c0_94 = arith.constant 0 : index
    %200 = vector.load %arg6[%c1_92, %c0_93, %c0_94] : memref<2x1x128xf32, #tpu.memory_space<vmem>>, vector<1x1x128xf32>
    %201 = vector.shape_cast %200 : vector<1x1x128xf32> to vector<1x128xf32>
    %202 = vector.broadcast %201 : vector<1x128xf32> to vector<24x128xf32>
    %203 = arith.addf %199, %202 : vector<24x128xf32>
    %204 = vector.extract_strided_slice %203 {offsets = [0, 0], sizes = [24, 64], strides = [1, 1]} : vector<24x128xf32> to vector<24x64xf32>
    %205 = vector.extract_strided_slice %203 {offsets = [0, 64], sizes = [24, 64], strides = [1, 1]} : vector<24x128xf32> to vector<24x64xf32>
    %c1_95 = arith.constant 1 : index
    %c0_96 = arith.constant 0 : index
    %c0_97 = arith.constant 0 : index
    %206 = vector.load %arg7[%c1_95, %c0_96, %c0_97] : memref<2x4x64xf32, #tpu.memory_space<vmem>>, vector<1x4x64xf32>
    %207 = vector.shape_cast %206 : vector<1x4x64xf32> to vector<4x64xf32>
    %208 = vector.extract_strided_slice %207 {offsets = [3, 0], sizes = [1, 64], strides = [1, 1]} : vector<4x64xf32> to vector<1x64xf32>
    %209 = vector.broadcast %208 : vector<1x64xf32> to vector<24x64xf32>
    %210 = arith.mulf %204, %209 : vector<24x64xf32>
    %cst_98 = arith.constant 0.000000e+00 : f32
    %211 = vector.broadcast %cst_98 : f32 to vector<3x64xf32>
    %212 = vector.extract_strided_slice %204 {offsets = [0, 0], sizes = [21, 64], strides = [1, 1]} : vector<24x64xf32> to vector<21x64xf32>
    %213 = tpu.concatenate %211, %212 in 0 : vector<3x64xf32>, vector<21x64xf32> -> vector<24x64xf32>
    %214 = vector.extract_strided_slice %207 {offsets = [0, 0], sizes = [1, 64], strides = [1, 1]} : vector<4x64xf32> to vector<1x64xf32>
    %215 = vector.broadcast %214 : vector<1x64xf32> to vector<24x64xf32>
    %216 = arith.mulf %213, %215 : vector<24x64xf32>
    %217 = arith.addf %210, %216 : vector<24x64xf32>
    %cst_99 = arith.constant 0.000000e+00 : f32
    %218 = vector.broadcast %cst_99 : f32 to vector<2x64xf32>
    %219 = vector.extract_strided_slice %204 {offsets = [0, 0], sizes = [22, 64], strides = [1, 1]} : vector<24x64xf32> to vector<22x64xf32>
    %220 = tpu.concatenate %218, %219 in 0 : vector<2x64xf32>, vector<22x64xf32> -> vector<24x64xf32>
    %221 = vector.extract_strided_slice %207 {offsets = [1, 0], sizes = [1, 64], strides = [1, 1]} : vector<4x64xf32> to vector<1x64xf32>
    %222 = vector.broadcast %221 : vector<1x64xf32> to vector<24x64xf32>
    %223 = arith.mulf %220, %222 : vector<24x64xf32>
    %224 = arith.addf %217, %223 : vector<24x64xf32>
    %cst_100 = arith.constant 0.000000e+00 : f32
    %225 = vector.broadcast %cst_100 : f32 to vector<1x64xf32>
    %226 = vector.extract_strided_slice %204 {offsets = [0, 0], sizes = [23, 64], strides = [1, 1]} : vector<24x64xf32> to vector<23x64xf32>
    %227 = tpu.concatenate %225, %226 in 0 : vector<1x64xf32>, vector<23x64xf32> -> vector<24x64xf32>
    %228 = vector.extract_strided_slice %207 {offsets = [2, 0], sizes = [1, 64], strides = [1, 1]} : vector<4x64xf32> to vector<1x64xf32>
    %229 = vector.broadcast %228 : vector<1x64xf32> to vector<24x64xf32>
    %230 = arith.mulf %227, %229 : vector<24x64xf32>
    %231 = arith.addf %224, %230 : vector<24x64xf32>
    %c1_101 = arith.constant 1 : index
    %c0_102 = arith.constant 0 : index
    %c0_103 = arith.constant 0 : index
    %232 = vector.load %arg8[%c1_101, %c0_102, %c0_103] : memref<2x1x64xf32, #tpu.memory_space<vmem>>, vector<1x1x64xf32>
    %233 = vector.shape_cast %232 : vector<1x1x64xf32> to vector<1x64xf32>
    %234 = vector.broadcast %233 : vector<1x64xf32> to vector<24x64xf32>
    %235 = arith.addf %231, %234 : vector<24x64xf32>
    %cst_104 = arith.constant 0.000000e+00 : f32
    %236 = vector.broadcast %cst_104 : f32 to vector<24x64xf32>
    %237 = arith.subf %236, %235 : vector<24x64xf32>
    %238 = math.exp %237 : vector<24x64xf32>
    %cst_105 = arith.constant 1.000000e+00 : f32
    %239 = vector.broadcast %cst_105 : f32 to vector<24x64xf32>
    %240 = arith.addf %239, %238 : vector<24x64xf32>
    %cst_106 = arith.constant 1.000000e+00 : f32
    %241 = vector.broadcast %cst_106 : f32 to vector<24x64xf32>
    %242 = arith.divf %241, %240 : vector<24x64xf32>
    %243 = arith.mulf %235, %242 : vector<24x64xf32>
    %c1_107 = arith.constant 1 : index
    %c0_108 = arith.constant 0 : index
    %c0_109 = arith.constant 0 : index
    %244 = vector.load %arg9[%c1_107, %c0_108, %c0_109] : memref<2x64x96xf32, #tpu.memory_space<vmem>>, vector<1x64x96xf32>
    %245 = vector.shape_cast %244 : vector<1x64x96xf32> to vector<64x96xf32>
    %cst_110 = arith.constant dense<0.000000e+00> : vector<24x96xf32>
    %246 = tpu.matmul %243, %245, %cst_110 {dimension_numbers = #tpu.dot_dimension_numbers<[1], [0], [0], [1], [0, 0, 1, 1], [], []>} : vector<24x64xf32>, vector<64x96xf32>, vector<24x96xf32> -> vector<24x96xf32>
    %247 = vector.extract_strided_slice %246 {offsets = [0, 0], sizes = [24, 64], strides = [1, 1]} : vector<24x96xf32> to vector<24x64xf32>
    %c1_111 = arith.constant 1 : index
    %c0_112 = arith.constant 0 : index
    %c0_113 = arith.constant 0 : index
    %248 = vector.load %arg10[%c1_111, %c0_112, %c0_113] : memref<2x1x64xf32, #tpu.memory_space<vmem>>, vector<1x1x64xf32>
    %249 = vector.shape_cast %248 : vector<1x1x64xf32> to vector<1x64xf32>
    %250 = vector.broadcast %249 : vector<1x64xf32> to vector<24x64xf32>
    %251 = arith.addf %247, %250 : vector<24x64xf32>
    %cst_114 = arith.constant 0.000000e+00 : f32
    %252 = vector.broadcast %cst_114 : f32 to vector<24x64xf32>
    %253 = arith.maximumf %251, %252 : vector<24x64xf32>
    %254 = math.absf %251 : vector<24x64xf32>
    %cst_115 = arith.constant 0.000000e+00 : f32
    %255 = vector.broadcast %cst_115 : f32 to vector<24x64xf32>
    %256 = arith.subf %255, %254 : vector<24x64xf32>
    %257 = math.exp %256 : vector<24x64xf32>
    %cst_116 = arith.constant 1.000000e+00 : f32
    %258 = vector.broadcast %cst_116 : f32 to vector<24x64xf32>
    %259 = arith.addf %258, %257 : vector<24x64xf32>
    %260 = math.log %259 : vector<24x64xf32>
    %261 = arith.addf %253, %260 : vector<24x64xf32>
    %262 = vector.extract_strided_slice %246 {offsets = [0, 64], sizes = [24, 16], strides = [1, 1]} : vector<24x96xf32> to vector<24x16xf32>
    %263 = vector.extract_strided_slice %246 {offsets = [0, 80], sizes = [24, 16], strides = [1, 1]} : vector<24x96xf32> to vector<24x16xf32>
    %c1_117 = arith.constant 1 : index
    %c0_118 = arith.constant 0 : index
    %c0_119 = arith.constant 0 : index
    %264 = vector.load %arg17[%c1_117, %c0_118, %c0_119] : memref<2x64x1024xf32, #tpu.memory_space<vmem>>, vector<1x64x1024xf32>
    %265 = vector.shape_cast %264 : vector<1x64x1024xf32> to vector<64x1024xf32>
    %cst_120 = arith.constant dense<0.000000e+00> : vector<24x1024xf32>
    %266 = tpu.matmul %261, %265, %cst_120 {dimension_numbers = #tpu.dot_dimension_numbers<[1], [0], [0], [1], [0, 0, 1, 1], [], []>} : vector<24x64xf32>, vector<64x1024xf32>, vector<24x1024xf32> -> vector<24x1024xf32>
    %267 = math.exp %266 : vector<24x1024xf32>
    %268 = arith.mulf %261, %243 : vector<24x64xf32>
    %cst_121 = arith.constant dense<0.000000e+00> : vector<24x1024xf32>
    %269 = tpu.matmul %268, %5, %cst_121 {dimension_numbers = #tpu.dot_dimension_numbers<[1], [0], [0], [1], [0, 0, 1, 1], [], []>} : vector<24x64xf32>, vector<64x1024xf32>, vector<24x1024xf32> -> vector<24x1024xf32>
    %cst_122 = arith.constant dense<0.000000e+00> : vector<24x1024xf32>
    %270 = tpu.matmul %262, %3, %cst_122 {dimension_numbers = #tpu.dot_dimension_numbers<[1], [0], [0], [1], [0, 0, 1, 1], [], []>} : vector<24x16xf32>, vector<16x1024xf32>, vector<24x1024xf32> -> vector<24x1024xf32>
    %271 = arith.mulf %269, %270 : vector<24x1024xf32>
    %cst_123 = arith.constant 1.000000e+00 : f32
    %272 = vector.broadcast %cst_123 : f32 to vector<1x1024xf32>
    %273 = vector.extract_strided_slice %267 {offsets = [0, 0], sizes = [23, 1024], strides = [1, 1]} : vector<24x1024xf32> to vector<23x1024xf32>
    %274 = tpu.concatenate %272, %273 in 0 : vector<1x1024xf32>, vector<23x1024xf32> -> vector<24x1024xf32>
    %cst_124 = arith.constant 0.000000e+00 : f32
    %275 = vector.broadcast %cst_124 : f32 to vector<1x1024xf32>
    %276 = vector.extract_strided_slice %271 {offsets = [0, 0], sizes = [23, 1024], strides = [1, 1]} : vector<24x1024xf32> to vector<23x1024xf32>
    %277 = tpu.concatenate %275, %276 in 0 : vector<1x1024xf32>, vector<23x1024xf32> -> vector<24x1024xf32>
    %278 = arith.mulf %267, %277 : vector<24x1024xf32>
    %279 = arith.addf %271, %278 : vector<24x1024xf32>
    %280 = arith.mulf %267, %274 : vector<24x1024xf32>
    %cst_125 = arith.constant 1.000000e+00 : f32
    %281 = vector.broadcast %cst_125 : f32 to vector<2x1024xf32>
    %282 = vector.extract_strided_slice %280 {offsets = [0, 0], sizes = [22, 1024], strides = [1, 1]} : vector<24x1024xf32> to vector<22x1024xf32>
    %283 = tpu.concatenate %281, %282 in 0 : vector<2x1024xf32>, vector<22x1024xf32> -> vector<24x1024xf32>
    %cst_126 = arith.constant 0.000000e+00 : f32
    %284 = vector.broadcast %cst_126 : f32 to vector<2x1024xf32>
    %285 = vector.extract_strided_slice %279 {offsets = [0, 0], sizes = [22, 1024], strides = [1, 1]} : vector<24x1024xf32> to vector<22x1024xf32>
    %286 = tpu.concatenate %284, %285 in 0 : vector<2x1024xf32>, vector<22x1024xf32> -> vector<24x1024xf32>
    %287 = arith.mulf %280, %286 : vector<24x1024xf32>
    %288 = arith.addf %279, %287 : vector<24x1024xf32>
    %289 = arith.mulf %280, %283 : vector<24x1024xf32>
    %cst_127 = arith.constant 1.000000e+00 : f32
    %290 = vector.broadcast %cst_127 : f32 to vector<4x1024xf32>
    %291 = vector.extract_strided_slice %289 {offsets = [0, 0], sizes = [20, 1024], strides = [1, 1]} : vector<24x1024xf32> to vector<20x1024xf32>
    %292 = tpu.concatenate %290, %291 in 0 : vector<4x1024xf32>, vector<20x1024xf32> -> vector<24x1024xf32>
    %cst_128 = arith.constant 0.000000e+00 : f32
    %293 = vector.broadcast %cst_128 : f32 to vector<4x1024xf32>
    %294 = vector.extract_strided_slice %288 {offsets = [0, 0], sizes = [20, 1024], strides = [1, 1]} : vector<24x1024xf32> to vector<20x1024xf32>
    %295 = tpu.concatenate %293, %294 in 0 : vector<4x1024xf32>, vector<20x1024xf32> -> vector<24x1024xf32>
    %296 = arith.mulf %289, %295 : vector<24x1024xf32>
    %297 = arith.addf %288, %296 : vector<24x1024xf32>
    %298 = arith.mulf %289, %292 : vector<24x1024xf32>
    %cst_129 = arith.constant 1.000000e+00 : f32
    %299 = vector.broadcast %cst_129 : f32 to vector<8x1024xf32>
    %300 = vector.extract_strided_slice %298 {offsets = [0, 0], sizes = [16, 1024], strides = [1, 1]} : vector<24x1024xf32> to vector<16x1024xf32>
    %301 = tpu.concatenate %299, %300 in 0 : vector<8x1024xf32>, vector<16x1024xf32> -> vector<24x1024xf32>
    %cst_130 = arith.constant 0.000000e+00 : f32
    %302 = vector.broadcast %cst_130 : f32 to vector<8x1024xf32>
    %303 = vector.extract_strided_slice %297 {offsets = [0, 0], sizes = [16, 1024], strides = [1, 1]} : vector<24x1024xf32> to vector<16x1024xf32>
    %304 = tpu.concatenate %302, %303 in 0 : vector<8x1024xf32>, vector<16x1024xf32> -> vector<24x1024xf32>
    %305 = arith.mulf %298, %304 : vector<24x1024xf32>
    %306 = arith.addf %297, %305 : vector<24x1024xf32>
    %307 = arith.mulf %298, %301 : vector<24x1024xf32>
    %cst_131 = arith.constant 0.000000e+00 : f32
    %308 = vector.broadcast %cst_131 : f32 to vector<16x1024xf32>
    %309 = vector.extract_strided_slice %306 {offsets = [0, 0], sizes = [8, 1024], strides = [1, 1]} : vector<24x1024xf32> to vector<8x1024xf32>
    %310 = tpu.concatenate %308, %309 in 0 : vector<16x1024xf32>, vector<8x1024xf32> -> vector<24x1024xf32>
    %311 = arith.mulf %307, %310 : vector<24x1024xf32>
    %312 = arith.addf %306, %311 : vector<24x1024xf32>
    %cst_132 = arith.constant dense<0.000000e+00> : vector<24x1024xf32>
    %313 = tpu.matmul %263, %3, %cst_132 {dimension_numbers = #tpu.dot_dimension_numbers<[1], [0], [0], [1], [0, 0, 1, 1], [], []>} : vector<24x16xf32>, vector<16x1024xf32>, vector<24x1024xf32> -> vector<24x1024xf32>
    %314 = arith.mulf %312, %313 : vector<24x1024xf32>
    %cst_133 = arith.constant dense<0.000000e+00> : vector<24x64xf32>
    %315 = tpu.matmul %314, %4, %cst_133 {dimension_numbers = #tpu.dot_dimension_numbers<[1], [0], [0], [1], [0, 0, 1, 1], [], []>} : vector<24x1024xf32>, vector<1024x64xf32>, vector<24x64xf32> -> vector<24x64xf32>
    %c1_134 = arith.constant 1 : index
    %c0_135 = arith.constant 0 : index
    %c0_136 = arith.constant 0 : index
    %316 = vector.load %arg11[%c1_134, %c0_135, %c0_136] : memref<2x1x64xf32, #tpu.memory_space<vmem>>, vector<1x1x64xf32>
    %317 = vector.shape_cast %316 : vector<1x1x64xf32> to vector<1x64xf32>
    %318 = vector.broadcast %317 : vector<1x64xf32> to vector<24x64xf32>
    %319 = arith.mulf %243, %318 : vector<24x64xf32>
    %320 = arith.addf %315, %319 : vector<24x64xf32>
    %cst_137 = arith.constant 0.000000e+00 : f32
    %321 = vector.broadcast %cst_137 : f32 to vector<24x64xf32>
    %322 = arith.subf %321, %205 : vector<24x64xf32>
    %323 = math.exp %322 : vector<24x64xf32>
    %cst_138 = arith.constant 1.000000e+00 : f32
    %324 = vector.broadcast %cst_138 : f32 to vector<24x64xf32>
    %325 = arith.addf %324, %323 : vector<24x64xf32>
    %cst_139 = arith.constant 1.000000e+00 : f32
    %326 = vector.broadcast %cst_139 : f32 to vector<24x64xf32>
    %327 = arith.divf %326, %325 : vector<24x64xf32>
    %328 = arith.mulf %205, %327 : vector<24x64xf32>
    %329 = arith.mulf %320, %328 : vector<24x64xf32>
    %c1_140 = arith.constant 1 : index
    %c0_141 = arith.constant 0 : index
    %c0_142 = arith.constant 0 : index
    %330 = vector.load %arg12[%c1_140, %c0_141, %c0_142] : memref<2x64x32xf32, #tpu.memory_space<vmem>>, vector<1x64x32xf32>
    %331 = vector.shape_cast %330 : vector<1x64x32xf32> to vector<64x32xf32>
    %cst_143 = arith.constant dense<0.000000e+00> : vector<24x32xf32>
    %332 = tpu.matmul %329, %331, %cst_143 {dimension_numbers = #tpu.dot_dimension_numbers<[1], [0], [0], [1], [0, 0, 1, 1], [], []>} : vector<24x64xf32>, vector<64x32xf32>, vector<24x32xf32> -> vector<24x32xf32>
    %333 = arith.addf %332, %178 : vector<24x32xf32>
    %334 = arith.mulf %333, %333 : vector<24x32xf32>
    %cst_144 = arith.constant dense<0.000000e+00> : vector<24xf32>
    %335 = vector.multi_reduction <add>, %334, %cst_144 [1] : vector<24x32xf32> to vector<24xf32>
    %336 = vector.shape_cast %335 : vector<24xf32> to vector<24x1xf32>
    %cst_145 = arith.constant 3.200000e+01 : f32
    %337 = vector.broadcast %cst_145 : f32 to vector<24x1xf32>
    %338 = arith.divf %336, %337 : vector<24x1xf32>
    %cst_146 = arith.constant 9.99999974E-6 : f32
    %339 = vector.broadcast %cst_146 : f32 to vector<24x1xf32>
    %340 = arith.addf %338, %339 : vector<24x1xf32>
    %341 = math.rsqrt %340 : vector<24x1xf32>
    %342 = vector.broadcast %341 : vector<24x1xf32> to vector<24x32xf32>
    %343 = arith.mulf %333, %342 : vector<24x32xf32>
    %c0_147 = arith.constant 0 : index
    %c0_148 = arith.constant 0 : index
    %344 = vector.load %arg13[%c0_147, %c0_148] : memref<1x32xf32, #tpu.memory_space<vmem>>, vector<1x32xf32>
    %345 = vector.broadcast %344 : vector<1x32xf32> to vector<24x32xf32>
    %346 = arith.mulf %343, %345 : vector<24x32xf32>
    %347 = vector.extract_strided_slice %346 {offsets = [9, 0], sizes = [15, 32], strides = [1, 1]} : vector<24x32xf32> to vector<15x32xf32>
    %c0_149 = arith.constant 0 : index
    %c0_150 = arith.constant 0 : index
    %c0_151 = arith.constant 0 : index
    %348 = vector.load %arg18[%c0_149, %c0_150, %c0_151] : memref<1x15x32xf32, #tpu.memory_space<vmem>>, vector<1x15x32xf32>
    %349 = vector.shape_cast %348 : vector<1x15x32xf32> to vector<15x32xf32>
    %350 = vector.shape_cast %347 : vector<15x32xf32> to vector<1x15x32xf32>
    tpu.vector_store %arg18[%c0_149, %c0_150, %c0_151], %350 {strides = array<i32>} : memref<1x15x32xf32, #tpu.memory_space<vmem>>, vector<1x15x32xf32>,
    return
  }
  func.func @transform_0(%arg0: i32) -> (i32, i32, i32) {
    %c0_i32 = arith.constant 0 : i32
    %c0_i32_0 = arith.constant 0 : i32
    %c0_i32_1 = arith.constant 0 : i32
    return %arg0, %c0_i32, %c0_i32_0 : i32, i32, i32
  }
  func.func @transform_1(%arg0: i32) -> (i32, i32) {
    %c0_i32 = arith.constant 0 : i32
    %c0_i32_0 = arith.constant 0 : i32
    %c0_i32_1 = arith.constant 0 : i32
    return %c0_i32, %c0_i32_0 : i32, i32
  }
  func.func @transform_2(%arg0: i32) -> (i32, i32, i32) {
    %c0_i32 = arith.constant 0 : i32
    %c0_i32_0 = arith.constant 0 : i32
    %c0_i32_1 = arith.constant 0 : i32
    %c0_i32_2 = arith.constant 0 : i32
    return %c0_i32, %c0_i32_0, %c0_i32_1 : i32, i32, i32
  }
  func.func @transform_3(%arg0: i32) -> (i32, i32, i32) {
    %c0_i32 = arith.constant 0 : i32
    %c0_i32_0 = arith.constant 0 : i32
    %c0_i32_1 = arith.constant 0 : i32
    %c0_i32_2 = arith.constant 0 : i32
    return %c0_i32, %c0_i32_0, %c0_i32_1 : i32, i32, i32
  }
  func.func @transform_4(%arg0: i32) -> (i32, i32, i32) {
    %c0_i32 = arith.constant 0 : i32
    %c0_i32_0 = arith.constant 0 : i32
    %c0_i32_1 = arith.constant 0 : i32
    %c0_i32_2 = arith.constant 0 : i32
    return %c0_i32, %c0_i32_0, %c0_i32_1 : i32, i32, i32
  }
  func.func @transform_5(%arg0: i32) -> (i32, i32, i32) {
    %c0_i32 = arith.constant 0 : i32
    %c0_i32_0 = arith.constant 0 : i32
    %c0_i32_1 = arith.constant 0 : i32
    %c0_i32_2 = arith.constant 0 : i32
    return %c0_i32, %c0_i32_0, %c0_i32_1 : i32, i32, i32
  }
  func.func @transform_6(%arg0: i32) -> (i32, i32, i32) {
    %c0_i32 = arith.constant 0 : i32
    %c0_i32_0 = arith.constant 0 : i32
    %c0_i32_1 = arith.constant 0 : i32
    %c0_i32_2 = arith.constant 0 : i32
    return %c0_i32, %c0_i32_0, %c0_i32_1 : i32, i32, i32
  }
  func.func @transform_7(%arg0: i32) -> (i32, i32, i32) {
    %c0_i32 = arith.constant 0 : i32
    %c0_i32_0 = arith.constant 0 : i32
    %c0_i32_1 = arith.constant 0 : i32
    %c0_i32_2 = arith.constant 0 : i32
    return %c0_i32, %c0_i32_0, %c0_i32_1 : i32, i32, i32
  }
  func.func @transform_8(%arg0: i32) -> (i32, i32, i32) {
    %c0_i32 = arith.constant 0 : i32
    %c0_i32_0 = arith.constant 0 : i32
    %c0_i32_1 = arith.constant 0 : i32
    %c0_i32_2 = arith.constant 0 : i32
    return %c0_i32, %c0_i32_0, %c0_i32_1 : i32, i32, i32
  }
  func.func @transform_9(%arg0: i32) -> (i32, i32, i32) {
    %c0_i32 = arith.constant 0 : i32
    %c0_i32_0 = arith.constant 0 : i32
    %c0_i32_1 = arith.constant 0 : i32
    %c0_i32_2 = arith.constant 0 : i32
    return %c0_i32, %c0_i32_0, %c0_i32_1 : i32, i32, i32
  }
  func.func @transform_10(%arg0: i32) -> (i32, i32, i32) {
    %c0_i32 = arith.constant 0 : i32
    %c0_i32_0 = arith.constant 0 : i32
    %c0_i32_1 = arith.constant 0 : i32
    %c0_i32_2 = arith.constant 0 : i32
    return %c0_i32, %c0_i32_0, %c0_i32_1 : i32, i32, i32
  }
  func.func @transform_11(%arg0: i32) -> (i32, i32, i32) {
    %c0_i32 = arith.constant 0 : i32
    %c0_i32_0 = arith.constant 0 : i32
    %c0_i32_1 = arith.constant 0 : i32
    %c0_i32_2 = arith.constant 0 : i32
    return %c0_i32, %c0_i32_0, %c0_i32_1 : i32, i32, i32
  }
  func.func @transform_12(%arg0: i32) -> (i32, i32) {
    %c0_i32 = arith.constant 0 : i32
    %c0_i32_0 = arith.constant 0 : i32
    %c0_i32_1 = arith.constant 0 : i32
    return %c0_i32, %c0_i32_0 : i32, i32
  }
  func.func @transform_13(%arg0: i32) -> (i32, i32) {
    %c0_i32 = arith.constant 0 : i32
    %c0_i32_0 = arith.constant 0 : i32
    %c0_i32_1 = arith.constant 0 : i32
    return %c0_i32, %c0_i32_0 : i32, i32
  }
  func.func @transform_14(%arg0: i32) -> (i32, i32) {
    %c0_i32 = arith.constant 0 : i32
    %c0_i32_0 = arith.constant 0 : i32
    %c0_i32_1 = arith.constant 0 : i32
    return %c0_i32, %c0_i32_0 : i32, i32
  }
  func.func @transform_15(%arg0: i32) -> (i32, i32) {
    %c0_i32 = arith.constant 0 : i32
    %c0_i32_0 = arith.constant 0 : i32
    %c0_i32_1 = arith.constant 0 : i32
    return %c0_i32, %c0_i32_0 : i32, i32
  }
  func.func @transform_16(%arg0: i32) -> (i32, i32, i32) {
    %c0_i32 = arith.constant 0 : i32
    %c0_i32_0 = arith.constant 0 : i32
    %c0_i32_1 = arith.constant 0 : i32
    %c0_i32_2 = arith.constant 0 : i32
    return %c0_i32, %c0_i32_0, %c0_i32_1 : i32, i32, i32
  }
  func.func @transform_17(%arg0: i32) -> (i32, i32, i32) {
    %c0_i32 = arith.constant 0 : i32
    %c0_i32_0 = arith.constant 0 : i32
    %c0_i32_1 = arith.constant 0 : i32
    return %arg0, %c0_i32, %c0_i32_0 : i32, i32, i32
  }
}

</mosaic_0001>

<llo_original>
// kernel: tpu_custom_call.1
$region0: #{tpu_custom_call.1}
  #allocation0 [shape = 'u32[]', space=smem, size = 0x4, offset = 0x4, fixed_abs, tag = 'smem constant byte address 0x4 - core index']
  #allocation1 [shape = 'u32[144,128]{1,0:T(1,128)}', space=vmem, size = 0x12000, scoped, tag = 'internal scratch']
  %s0 = inlined_call_operand.vmem [shape: f32[2,8,16], index: 0, kind: input, shape index: {}]
  %s1 = inlined_call_operand.hbm [shape: f32[16,32], index: 1, kind: input, shape index: {}]
  %s2 = inlined_call_operand.hbm [shape: f32[2,16,32], index: 2, kind: input, shape index: {}]
  %s3 = inlined_call_operand.vmem [shape: f32[2,1,32], index: 3, kind: input, shape index: {}]
  %s4 = inlined_call_operand.vmem [shape: f32[2,32,128], index: 4, kind: input, shape index: {}]
  %s5 = inlined_call_operand.vmem [shape: f32[2,1,128], index: 5, kind: input, shape index: {}]
  %s6 = inlined_call_operand.vmem [shape: f32[2,4,64], index: 6, kind: input, shape index: {}]
  %s7 = inlined_call_operand.hbm [shape: f32[2,1,64], index: 7, kind: input, shape index: {}]
  %s8 = inlined_call_operand.vmem [shape: f32[2,64,96], index: 8, kind: input, shape index: {}]
  %s9 = inlined_call_operand.hbm [shape: f32[2,1,64], index: 9, kind: input, shape index: {}]
  %s10 = inlined_call_operand.hbm [shape: f32[2,1,64], index: 10, kind: input, shape index: {}]
  %s11 = inlined_call_operand.vmem [shape: f32[2,64,32], index: 11, kind: input, shape index: {}]
  %s12 = inlined_call_operand.vmem [shape: f32[1,32], index: 12, kind: input, shape index: {}]
  %s13 = inlined_call_operand.hbm [shape: f32[16,1024], index: 13, kind: input, shape index: {}]
  %s14 = inlined_call_operand.vmem [shape: f32[1024,64], index: 14, kind: input, shape index: {}]
  %s15 = inlined_call_operand.vmem [shape: f32[64,1024], index: 15, kind: input, shape index: {}]
  %s16 = inlined_call_operand.vmem [shape: f32[2,64,1024], index: 16, kind: input, shape index: {}]
  %s17 = inlined_call_operand.vmem [shape: f32[2,15,32], index: 17, kind: output, shape index: {}]
  %s18 = sld [smem:[#allocation0]]
  $region125: #{tpu_custom_call.1} parent=0
    _
  %s20 = ssub.s32 1, %s18
  %s21 = scalar_select 0, %s20, %s18
  $region1: #{tpu_custom_call.1} parent=0
    #allocation2 [shape = 'u8[8192]{0}', space=vmem, size = 0x2000, scoped, tag = 'input window, operand 1, single buffered']
    #allocation3 [shape = 's32[2]{0}', space=sflag, size = 0x8, scoped, tag = 'scoped memory for tpu_custom_call.1']
    #allocation4 [shape = 'u8[16384]{0}', space=vmem, size = 0x4000, scoped, tag = 'input window, operand 2, single buffered']
    #allocation5 [shape = 's32[1]{0}', space=sflag, size = 0x4, scoped, tag = 'scoped memory for tpu_custom_call.1']
    #allocation6 [shape = 'u8[1024]{0}', space=vmem, size = 0x400, scoped, tag = 'input window, operand 7, single buffered']
    #allocation7 [shape = 'u8[1024]{0}', space=vmem, size = 0x400, scoped, tag = 'input window, operand 9, single buffered']
    #allocation8 [shape = 's32[1]{0}', space=sflag, size = 0x4, scoped, tag = 'scoped memory for tpu_custom_call.1']
    #allocation9 [shape = 'u8[1024]{0}', space=vmem, size = 0x400, scoped, tag = 'input window, operand 10, single buffered']
    #allocation10 [shape = 'u8[65536]{0}', space=vmem, size = 0x10000, scoped, tag = 'input window, operand 13, single buffered']
    #allocation11 [shape = 's32[1]{0}', space=sflag, size = 0x4, scoped, tag = 'scoped memory for tpu_custom_call.1']
    %22 = vsyncpa [#allocation3], 0
    %23 = vsyncpa [#allocation5], 0
    %24 = vsyncpa [#allocation8], 0
    %25 = vsyncpa [#allocation11], 0
    loop: start=0, step=1, limit=4
    $region2: #{tpu_custom_call.1} parent=1 // loop_pre_header
      _
    $region3: #{tpu_custom_call.1} parent=1 // loop_header
      %s27 = sphi 0, %s31
      %p28 = scmp.ge.s32.totalorder %s27, 4
      %s37 = sphi 0, %s39
      %s40 = sphi 0, %s37
      %s41 = sphi 0, %s40
      %s57 = sphi 0, %s41
      %s61 = sphi 0, %s61
      %s63 = sphi 0, %s61
      %s64 = sphi 0, %s63
      %s78 = sphi 0, %s64
      %s82 = sphi 0, %s82
      %s84 = sphi 0, %s82
      %s85 = sphi 0, %s84
      %s99 = sphi 0, %s85
      %s103 = sphi 0, %s103
      %s105 = sphi 0, %s103
      %s106 = sphi 0, %s105
      %s120 = sphi 0, %s106
      %s124 = sphi 0, %s124
      %s126 = sphi 0, %s124
      %s127 = sphi 0, %s126
      %s141 = sphi 0, %s127
      %s145 = sphi 0, %s145
      %s147 = sphi 0, %s145
      %s148 = sphi 0, %s147
      %s162 = sphi 0, %s148
      %s166 = sphi 0, %s166
      %s168 = sphi 0, %s166
      %s169 = sphi 0, %s168
      %s183 = sphi 0, %s169
      %s187 = sphi 0, %s187
      %s189 = sphi 0, %s187
      %s190 = sphi 0, %s189
      %s204 = sphi 0, %s190
      %s208 = sphi 0, %s208
      %s210 = sphi 0, %s208
      %s211 = sphi 0, %s210
      %s225 = sphi 0, %s211
      %s229 = sphi 0, %s229
      %s231 = sphi 0, %s229
      %s232 = sphi 0, %s231
      %s246 = sphi 0, %s232
      %s250 = sphi 0, %s250
      %s252 = sphi 0, %s250
      %s253 = sphi 0, %s252
      %s267 = sphi 0, %s253
      %s271 = sphi 0, %s271
      %s273 = sphi 0, %s271
      %s274 = sphi 0, %s273
      %s288 = sphi 0, %s274
      %s292 = sphi 0, %s292
      %s294 = sphi 0, %s292
      %s295 = sphi 0, %s294
      %s309 = sphi 0, %s295
      %s313 = sphi 0, %s313
      %s315 = sphi 0, %s313
      %s316 = sphi 0, %s315
      %s330 = sphi 0, %s316
      %s334 = sphi 0, %s334
      %s336 = sphi 0, %s334
      %s337 = sphi 0, %s336
      %s351 = sphi 0, %s337
      %s355 = sphi 0, %s355
      %s357 = sphi 0, %s355
      %s358 = sphi 0, %s357
      %s372 = sphi 0, %s358
      %s376 = sphi 0, %s376
      %s378 = sphi 0, %s376
      %s379 = sphi 0, %s378
      %s393 = sphi 0, %s379
      %s399 = sphi 0, %s401
      %s402 = sphi 0, %s399
      %s403 = sphi 0, %s402
      %s419 = sphi 0, %s403
    $region4: #{tpu_custom_call.1} parent=1 // loop_header_branch
      %30 = sbr.rel (%p28) target = $region8
    $region5: #{tpu_custom_call.1} parent=1 // loop_body
      %s32 = ssub.s32 %s27, 1
      %s33 = ssub.s32 %s27, 2
      %s34 = sadd.s32 %s27, 1
      %s35 = ssub.s32 %s27, %s34
      %p36 = scmp.eq.s32.totalorder %s35, 0
      %s38 = sadd.s32 %s37, 1
      %s39 = scalar_select %p36, %s37, %s38
      %p42 = pneg %p36
      %p43 = scmp.eq.s32.totalorder %s27, 1
      %p44 = por %p42, %p43
      %p45 = scmp.ne.s32.totalorder %s37, %s40
      %p46 = scmp.eq.s32.totalorder %s27, 0
      %p47 = por %p45, %p46
      %p48 = scmp.ne.s32.totalorder %s37, %s40
      %p49 = scmp.eq.s32.totalorder %s32, 1
      %p50 = por %p48, %p49
      %p51 = scmp.ne.s32.totalorder %s40, %s41
      %p52 = scmp.eq.s32.totalorder %s32, 0
      %p53 = por %p51, %p52
      %p54 = scmp.ne.s32.totalorder %s40, %s41
      %p55 = scmp.eq.s32.totalorder %s33, 1
      %p56 = por %p54, %p55
      %p58 = scmp.ne.s32.totalorder %s41, %s57
      %p59 = scmp.eq.s32.totalorder %s33, 0
      %p60 = por %p58, %p59
      %s62 = sadd.s32 %s61, 1
      %p65 = scmp.eq.s32.totalorder %s27, 1
      %p66 = scmp.ne.s32.totalorder %s61, %s63
      %p67 = scmp.eq.s32.totalorder %s27, 0
      %p68 = por %p66, %p67
      %p69 = scmp.ne.s32.totalorder %s61, %s63
      %p70 = scmp.eq.s32.totalorder %s32, 1
      %p71 = por %p69, %p70
      %p72 = scmp.ne.s32.totalorder %s63, %s64
      %p73 = scmp.eq.s32.totalorder %s32, 0
      %p74 = por %p72, %p73
      %p75 = scmp.ne.s32.totalorder %s63, %s64
      %p76 = scmp.eq.s32.totalorder %s33, 1
      %p77 = por %p75, %p76
      %p79 = scmp.ne.s32.totalorder %s64, %s78
      %p80 = scmp.eq.s32.totalorder %s33, 0
      %p81 = por %p79, %p80
      %s83 = sadd.s32 %s82, 1
      %p86 = scmp.eq.s32.totalorder %s27, 1
      %p87 = scmp.ne.s32.totalorder %s82, %s84
      %p88 = scmp.eq.s32.totalorder %s27, 0
      %p89 = por %p87, %p88
      %p90 = scmp.ne.s32.totalorder %s82, %s84
      %p91 = scmp.eq.s32.totalorder %s32, 1
      %p92 = por %p90, %p91
      %p93 = scmp.ne.s32.totalorder %s84, %s85
      %p94 = scmp.eq.s32.totalorder %s32, 0
      %p95 = por %p93, %p94
      %p96 = scmp.ne.s32.totalorder %s84, %s85
      %p97 = scmp.eq.s32.totalorder %s33, 1
      %p98 = por %p96, %p97
      %p100 = scmp.ne.s32.totalorder %s85, %s99
      %p101 = scmp.eq.s32.totalorder %s33, 0
      %p102 = por %p100, %p101
      %s104 = sadd.s32 %s103, 1
      %p107 = scmp.eq.s32.totalorder %s27, 1
      %p108 = scmp.ne.s32.totalorder %s103, %s105
      %p109 = scmp.eq.s32.totalorder %s27, 0
      %p110 = por %p108, %p109
      %p111 = scmp.ne.s32.totalorder %s103, %s105
      %p112 = scmp.eq.s32.totalorder %s32, 1
      %p113 = por %p111, %p112
      %p114 = scmp.ne.s32.totalorder %s105, %s106
      %p115 = scmp.eq.s32.totalorder %s32, 0
      %p116 = por %p114, %p115
      %p117 = scmp.ne.s32.totalorder %s105, %s106
      %p118 = scmp.eq.s32.totalorder %s33, 1
      %p119 = por %p117, %p118
      %p121 = scmp.ne.s32.totalorder %s106, %s120
      %p122 = scmp.eq.s32.totalorder %s33, 0
      %p123 = por %p121, %p122
      %s125 = sadd.s32 %s124, 1
      %p128 = scmp.eq.s32.totalorder %s27, 1
      %p129 = scmp.ne.s32.totalorder %s124, %s126
      %p130 = scmp.eq.s32.totalorder %s27, 0
      %p131 = por %p129, %p130
      %p132 = scmp.ne.s32.totalorder %s124, %s126
      %p133 = scmp.eq.s32.totalorder %s32, 1
      %p134 = por %p132, %p133
      %p135 = scmp.ne.s32.totalorder %s126, %s127
      %p136 = scmp.eq.s32.totalorder %s32, 0
      %p137 = por %p135, %p136
      %p138 = scmp.ne.s32.totalorder %s126, %s127
      %p139 = scmp.eq.s32.totalorder %s33, 1
      %p140 = por %p138, %p139
      %p142 = scmp.ne.s32.totalorder %s127, %s141
      %p143 = scmp.eq.s32.totalorder %s33, 0
      %p144 = por %p142, %p143
      %s146 = sadd.s32 %s145, 1
      %p149 = scmp.eq.s32.totalorder %s27, 1
      %p150 = scmp.ne.s32.totalorder %s145, %s147
      %p151 = scmp.eq.s32.totalorder %s27, 0
      %p152 = por %p150, %p151
      %p153 = scmp.ne.s32.totalorder %s145, %s147
      %p154 = scmp.eq.s32.totalorder %s32, 1
      %p155 = por %p153, %p154
      %p156 = scmp.ne.s32.totalorder %s147, %s148
      %p157 = scmp.eq.s32.totalorder %s32, 0
      %p158 = por %p156, %p157
      %p159 = scmp.ne.s32.totalorder %s147, %s148
      %p160 = scmp.eq.s32.totalorder %s33, 1
      %p161 = por %p159, %p160
      %p163 = scmp.ne.s32.totalorder %s148, %s162
      %p164 = scmp.eq.s32.totalorder %s33, 0
      %p165 = por %p163, %p164
      %s167 = sadd.s32 %s166, 1
      %p170 = scmp.eq.s32.totalorder %s27, 1
      %p171 = scmp.ne.s32.totalorder %s166, %s168
      %p172 = scmp.eq.s32.totalorder %s27, 0
      %p173 = por %p171, %p172
      %p174 = scmp.ne.s32.totalorder %s166, %s168
      %p175 = scmp.eq.s32.totalorder %s32, 1
      %p176 = por %p174, %p175
      %p177 = scmp.ne.s32.totalorder %s168, %s169
      %p178 = scmp.eq.s32.totalorder %s32, 0
      %p179 = por %p177, %p178
      %p180 = scmp.ne.s32.totalorder %s168, %s169
      %p181 = scmp.eq.s32.totalorder %s33, 1
      %p182 = por %p180, %p181
      %p184 = scmp.ne.s32.totalorder %s169, %s183
      %p185 = scmp.eq.s32.totalorder %s33, 0
      %p186 = por %p184, %p185
      %s188 = sadd.s32 %s187, 1
      %p191 = scmp.eq.s32.totalorder %s27, 1
      %p192 = scmp.ne.s32.totalorder %s187, %s189
      %p193 = scmp.eq.s32.totalorder %s27, 0
      %p194 = por %p192, %p193
      %p195 = scmp.ne.s32.totalorder %s187, %s189
      %p196 = scmp.eq.s32.totalorder %s32, 1
      %p197 = por %p195, %p196
      %p198 = scmp.ne.s32.totalorder %s189, %s190
      %p199 = scmp.eq.s32.totalorder %s32, 0
      %p200 = por %p198, %p199
      %p201 = scmp.ne.s32.totalorder %s189, %s190
      %p202 = scmp.eq.s32.totalorder %s33, 1
      %p203 = por %p201, %p202
      %p205 = scmp.ne.s32.totalorder %s190, %s204
      %p206 = scmp.eq.s32.totalorder %s33, 0
      %p207 = por %p205, %p206
      %s209 = sadd.s32 %s208, 1
      %p212 = scmp.eq.s32.totalorder %s27, 1
      %p213 = scmp.ne.s32.totalorder %s208, %s210
      %p214 = scmp.eq.s32.totalorder %s27, 0
      %p215 = por %p213, %p214
      %p216 = scmp.ne.s32.totalorder %s208, %s210
      %p217 = scmp.eq.s32.totalorder %s32, 1
      %p218 = por %p216, %p217
      %p219 = scmp.ne.s32.totalorder %s210, %s211
      %p220 = scmp.eq.s32.totalorder %s32, 0
      %p221 = por %p219, %p220
      %p222 = scmp.ne.s32.totalorder %s210, %s211
      %p223 = scmp.eq.s32.totalorder %s33, 1
      %p224 = por %p222, %p223
      %p226 = scmp.ne.s32.totalorder %s211, %s225
      %p227 = scmp.eq.s32.totalorder %s33, 0
      %p228 = por %p226, %p227
      %s230 = sadd.s32 %s229, 1
      %p233 = scmp.eq.s32.totalorder %s27, 1
      %p234 = scmp.ne.s32.totalorder %s229, %s231
      %p235 = scmp.eq.s32.totalorder %s27, 0
      %p236 = por %p234, %p235
      %p237 = scmp.ne.s32.totalorder %s229, %s231
      %p238 = scmp.eq.s32.totalorder %s32, 1
      %p239 = por %p237, %p238
      %p240 = scmp.ne.s32.totalorder %s231, %s232
      %p241 = scmp.eq.s32.totalorder %s32, 0
      %p242 = por %p240, %p241
      %p243 = scmp.ne.s32.totalorder %s231, %s232
      %p244 = scmp.eq.s32.totalorder %s33, 1
      %p245 = por %p243, %p244
      %p247 = scmp.ne.s32.totalorder %s232, %s246
      %p248 = scmp.eq.s32.totalorder %s33, 0
      %p249 = por %p247, %p248
      %s251 = sadd.s32 %s250, 1
      %p254 = scmp.eq.s32.totalorder %s27, 1
      %p255 = scmp.ne.s32.totalorder %s250, %s252
      %p256 = scmp.eq.s32.totalorder %s27, 0
      %p257 = por %p255, %p256
      %p258 = scmp.ne.s32.totalorder %s250, %s252
      %p259 = scmp.eq.s32.totalorder %s32, 1
      %p260 = por %p258, %p259
      %p261 = scmp.ne.s32.totalorder %s252, %s253
      %p262 = scmp.eq.s32.totalorder %s32, 0
      %p263 = por %p261, %p262
      %p264 = scmp.ne.s32.totalorder %s252, %s253
      %p265 = scmp.eq.s32.totalorder %s33, 1
      %p266 = por %p264, %p265
      %p268 = scmp.ne.s32.totalorder %s253, %s267
      %p269 = scmp.eq.s32.totalorder %s33, 0
      %p270 = por %p268, %p269
      %s272 = sadd.s32 %s271, 1
      %p275 = scmp.eq.s32.totalorder %s27, 1
      %p276 = scmp.ne.s32.totalorder %s271, %s273
      %p277 = scmp.eq.s32.totalorder %s27, 0
      %p278 = por %p276, %p277
      %p279 = scmp.ne.s32.totalorder %s271, %s273
      %p280 = scmp.eq.s32.totalorder %s32, 1
      %p281 = por %p279, %p280
      %p282 = scmp.ne.s32.totalorder %s273, %s274
      %p283 = scmp.eq.s32.totalorder %s32, 0
      %p284 = por %p282, %p283
      %p285 = scmp.ne.s32.totalorder %s273, %s274
      %p286 = scmp.eq.s32.totalorder %s33, 1
      %p287 = por %p285, %p286
      %p289 = scmp.ne.s32.totalorder %s274, %s288
      %p290 = scmp.eq.s32.totalorder %s33, 0
      %p291 = por %p289, %p290
      %s293 = sadd.s32 %s292, 1
      %p296 = scmp.eq.s32.totalorder %s27, 1
      %p297 = scmp.ne.s32.totalorder %s292, %s294
      %p298 = scmp.eq.s32.totalorder %s27, 0
      %p299 = por %p297, %p298
      %p300 = scmp.ne.s32.totalorder %s292, %s294
      %p301 = scmp.eq.s32.totalorder %s32, 1
      %p302 = por %p300, %p301
      %p303 = scmp.ne.s32.totalorder %s294, %s295
      %p304 = scmp.eq.s32.totalorder %s32, 0
      %p305 = por %p303, %p304
      %p306 = scmp.ne.s32.totalorder %s294, %s295
      %p307 = scmp.eq.s32.totalorder %s33, 1
      %p308 = por %p306, %p307
      %p310 = scmp.ne.s32.totalorder %s295, %s309
      %p311 = scmp.eq.s32.totalorder %s33, 0
      %p312 = por %p310, %p311
      %s314 = sadd.s32 %s313, 1
      %p317 = scmp.eq.s32.totalorder %s27, 1
      %p318 = scmp.ne.s32.totalorder %s313, %s315
      %p319 = scmp.eq.s32.totalorder %s27, 0
      %p320 = por %p318, %p319
      %p321 = scmp.ne.s32.totalorder %s313, %s315
      %p322 = scmp.eq.s32.totalorder %s32, 1
      %p323 = por %p321, %p322
      %p324 = scmp.ne.s32.totalorder %s315, %s316
      %p325 = scmp.eq.s32.totalorder %s32, 0
      %p326 = por %p324, %p325
      %p327 = scmp.ne.s32.totalorder %s315, %s316
      %p328 = scmp.eq.s32.totalorder %s33, 1
      %p329 = por %p327, %p328
      %p331 = scmp.ne.s32.totalorder %s316, %s330
      %p332 = scmp.eq.s32.totalorder %s33, 0
      %p333 = por %p331, %p332
      %s335 = sadd.s32 %s334, 1
      %p338 = scmp.eq.s32.totalorder %s27, 1
      %p339 = scmp.ne.s32.totalorder %s334, %s336
      %p340 = scmp.eq.s32.totalorder %s27, 0
      %p341 = por %p339, %p340
      %p342 = scmp.ne.s32.totalorder %s334, %s336
      %p343 = scmp.eq.s32.totalorder %s32, 1
      %p344 = por %p342, %p343
      %p345 = scmp.ne.s32.totalorder %s336, %s337
      %p346 = scmp.eq.s32.totalorder %s32, 0
      %p347 = por %p345, %p346
      %p348 = scmp.ne.s32.totalorder %s336, %s337
      %p349 = scmp.eq.s32.totalorder %s33, 1
      %p350 = por %p348, %p349
      %p352 = scmp.ne.s32.totalorder %s337, %s351
      %p353 = scmp.eq.s32.totalorder %s33, 0
      %p354 = por %p352, %p353
      %s356 = sadd.s32 %s355, 1
      %p359 = scmp.eq.s32.totalorder %s27, 1
      %p360 = scmp.ne.s32.totalorder %s355, %s357
      %p361 = scmp.eq.s32.totalorder %s27, 0
      %p362 = por %p360, %p361
      %p363 = scmp.ne.s32.totalorder %s355, %s357
      %p364 = scmp.eq.s32.totalorder %s32, 1
      %p365 = por %p363, %p364
      %p366 = scmp.ne.s32.totalorder %s357, %s358
      %p367 = scmp.eq.s32.totalorder %s32, 0
      %p368 = por %p366, %p367
      %p369 = scmp.ne.s32.totalorder %s357, %s358
      %p370 = scmp.eq.s32.totalorder %s33, 1
      %p371 = por %p369, %p370
      %p373 = scmp.ne.s32.totalorder %s358, %s372
      %p374 = scmp.eq.s32.totalorder %s33, 0
      %p375 = por %p373, %p374
      %s377 = sadd.s32 %s376, 1
      %p380 = scmp.eq.s32.totalorder %s27, 1
      %p381 = scmp.ne.s32.totalorder %s376, %s378
      %p382 = scmp.eq.s32.totalorder %s27, 0
      %p383 = por %p381, %p382
      %p384 = scmp.ne.s32.totalorder %s376, %s378
      %p385 = scmp.eq.s32.totalorder %s32, 1
      %p386 = por %p384, %p385
      %p387 = scmp.ne.s32.totalorder %s378, %s379
      %p388 = scmp.eq.s32.totalorder %s32, 0
      %p389 = por %p387, %p388
      %p390 = scmp.ne.s32.totalorder %s378, %s379
      %p391 = scmp.eq.s32.totalorder %s33, 1
      %p392 = por %p390, %p391
      %p394 = scmp.ne.s32.totalorder %s379, %s393
      %p395 = scmp.eq.s32.totalorder %s33, 0
      %p396 = por %p394, %p395
      %s397 = ssub.s32 %s27, %s34
      %p398 = scmp.eq.s32.totalorder %s397, 0
      %s400 = sadd.s32 %s399, 1
      %s401 = scalar_select %p398, %s399, %s400
      %p404 = pneg %p398
      %p405 = scmp.eq.s32.totalorder %s27, 1
      %p406 = por %p404, %p405
      %p407 = scmp.ne.s32.totalorder %s399, %s402
      %p408 = scmp.eq.s32.totalorder %s27, 0
      %p409 = por %p407, %p408
      %p410 = scmp.ne.s32.totalorder %s399, %s402
      %p411 = scmp.eq.s32.totalorder %s32, 1
      %p412 = por %p410, %p411
      %p413 = scmp.ne.s32.totalorder %s402, %s403
      %p414 = scmp.eq.s32.totalorder %s32, 0
      %p415 = por %p413, %p414
      %p416 = scmp.ne.s32.totalorder %s402, %s403
      %p417 = scmp.eq.s32.totalorder %s33, 1
      %p418 = por %p416, %p417
      %p420 = scmp.ne.s32.totalorder %s403, %s419
      %p421 = scmp.eq.s32.totalorder %s33, 0
      %p422 = por %p420, %p421
      %p423 = scmp.le.s32.totalorder 1, %s27
      %p424 = scmp.lt.s32.totalorder %s27, 3
      %p425 = pnand %p423, %p424
      %p426 = pneg %p425
      // Predicated region
      $region9: #{tpu_custom_call.1} parent=5 // pred_check
        _
      $region10: #{tpu_custom_call.1} parent=5 // pred_check_branch
        %428 = sbr.rel (%p425) target = $region12
      $region11: #{tpu_custom_call.1} parent=5 // pred_region
        %s429 = ssub.s32 %s27, 1
        // Predicated region
        $region13: #{tpu_custom_call.1} parent=11 // pred_check
          %p430 = pneg %p74
        $region14: #{tpu_custom_call.1} parent=11 // pred_check_branch
          %432 = sbr.rel (%p430) target = $region16
        $region15: #{tpu_custom_call.1} parent=11 // pred_region
          %s434 = ssub.s32 256, 256
          %435 = vsyncadd [#allocation3], %s434
          %s436 = sshll.u32 [#allocation2], 4
          %s437 = int_to_ptr.vmem [resolvable:$true] %s436
          %442 = dma.hbm_to_vmem [thread:$0]  %s1, 256, %s437, [#allocation3], 128, 128, 8
        $region16: #{tpu_custom_call.1} parent=11 // pred_fallthru
          _
        // Predicated region
        $region17: #{tpu_custom_call.1} parent=11 // pred_check
          %p443 = pneg %p95
        $region18: #{tpu_custom_call.1} parent=11 // pred_check_branch
          %445 = sbr.rel (%p443) target = $region20
        $region19: #{tpu_custom_call.1} parent=11 // pred_region
          %s447 = ssub.s32 512, 512
          %448 = vsyncadd [#allocation5], %s447
          %s449 = sshll.u32 [#allocation4], 4
          %s450 = int_to_ptr.vmem [resolvable:$true] %s449
          %455 = dma.hbm_to_vmem [thread:$0]  %s2, 512, %s450, [#allocation5], 128, 128, 8
        $region20: #{tpu_custom_call.1} parent=11 // pred_fallthru
          _
        // Predicated region
        $region21: #{tpu_custom_call.1} parent=11 // pred_check
          %p456 = pneg %p116
        $region22: #{tpu_custom_call.1} parent=11 // pred_check_branch
          %458 = sbr.rel (%p456) target = $region24
        $region23: #{tpu_custom_call.1} parent=11 // pred_region
          _
        $region24: #{tpu_custom_call.1} parent=11 // pred_fallthru
          _
        // Predicated region
        $region25: #{tpu_custom_call.1} parent=11 // pred_check
          %p459 = pneg %p137
        $region26: #{tpu_custom_call.1} parent=11 // pred_check_branch
          %461 = sbr.rel (%p459) target = $region28
        $region27: #{tpu_custom_call.1} parent=11 // pred_region
          _
        $region28: #{tpu_custom_call.1} parent=11 // pred_fallthru
          _
        // Predicated region
        $region29: #{tpu_custom_call.1} parent=11 // pred_check
          %p462 = pneg %p158
        $region30: #{tpu_custom_call.1} parent=11 // pred_check_branch
          %464 = sbr.rel (%p462) target = $region32
        $region31: #{tpu_custom_call.1} parent=11 // pred_region
          _
        $region32: #{tpu_custom_call.1} parent=11 // pred_fallthru
          _
        // Predicated region
        $region33: #{tpu_custom_call.1} parent=11 // pred_check
          %p465 = pneg %p179
        $region34: #{tpu_custom_call.1} parent=11 // pred_check_branch
          %467 = sbr.rel (%p465) target = $region36
        $region35: #{tpu_custom_call.1} parent=11 // pred_region
          _
        $region36: #{tpu_custom_call.1} parent=11 // pred_fallthru
          _
        // Predicated region
        $region37: #{tpu_custom_call.1} parent=11 // pred_check
          %p468 = pneg %p200
        $region38: #{tpu_custom_call.1} parent=11 // pred_check_branch
          %470 = sbr.rel (%p468) target = $region40
        $region39: #{tpu_custom_call.1} parent=11 // pred_region
          %s472 = ssub.s32 32, 32
          %473 = vsyncadd [#allocation5], %s472
          %s474 = sshll.u32 [#allocation6], 4
          %s475 = int_to_ptr.vmem [resolvable:$true] %s474
          %480 = dma.hbm_to_vmem [thread:$0]  %s7, 32, %s475, [#allocation5], 16, 16, 1
        $region40: #{tpu_custom_call.1} parent=11 // pred_fallthru
          _
        // Predicated region
        $region41: #{tpu_custom_call.1} parent=11 // pred_check
          %p481 = pneg %p221
        $region42: #{tpu_custom_call.1} parent=11 // pred_check_branch
          %483 = sbr.rel (%p481) target = $region44
        $region43: #{tpu_custom_call.1} parent=11 // pred_region
          _
        $region44: #{tpu_custom_call.1} parent=11 // pred_fallthru
          _
        // Predicated region
        $region45: #{tpu_custom_call.1} parent=11 // pred_check
          %p484 = pneg %p242
        $region46: #{tpu_custom_call.1} parent=11 // pred_check_branch
          %486 = sbr.rel (%p484) target = $region48
        $region47: #{tpu_custom_call.1} parent=11 // pred_region
          %s488 = ssub.s32 32, 32
          %489 = vsyncadd [#allocation8], %s488
          %s490 = sshll.u32 [#allocation7], 4
          %s491 = int_to_ptr.vmem [resolvable:$true] %s490
          %496 = dma.hbm_to_vmem [thread:$0]  %s9, 32, %s491, [#allocation8], 16, 16, 1
        $region48: #{tpu_custom_call.1} parent=11 // pred_fallthru
          _
        // Predicated region
        $region49: #{tpu_custom_call.1} parent=11 // pred_check
          %p497 = pneg %p263
        $region50: #{tpu_custom_call.1} parent=11 // pred_check_branch
          %499 = sbr.rel (%p497) target = $region52
        $region51: #{tpu_custom_call.1} parent=11 // pred_region
          %s501 = ssub.s32 32, 32
          %502 = vsyncadd [#allocation8], %s501
          %s503 = sshll.u32 [#allocation9], 4
          %s504 = int_to_ptr.vmem [resolvable:$true] %s503
          %509 = dma.hbm_to_vmem [thread:$0]  %s10, 32, %s504, [#allocation8], 16, 16, 1
        $region52: #{tpu_custom_call.1} parent=11 // pred_fallthru
          _
        // Predicated region
        $region53: #{tpu_custom_call.1} parent=11 // pred_check
          %p510 = pneg %p284
        $region54: #{tpu_custom_call.1} parent=11 // pred_check_branch
          %512 = sbr.rel (%p510) target = $region56
        $region55: #{tpu_custom_call.1} parent=11 // pred_region
          _
        $region56: #{tpu_custom_call.1} parent=11 // pred_fallthru
          _
        // Predicated region
        $region57: #{tpu_custom_call.1} parent=11 // pred_check
          %p513 = pneg %p305
        $region58: #{tpu_custom_call.1} parent=11 // pred_check_branch
          %515 = sbr.rel (%p513) target = $region60
        $region59: #{tpu_custom_call.1} parent=11 // pred_region
          _
        $region60: #{tpu_custom_call.1} parent=11 // pred_fallthru
          _
        // Predicated region
        $region61: #{tpu_custom_call.1} parent=11 // pred_check
          %p516 = pneg %p326
        $region62: #{tpu_custom_call.1} parent=11 // pred_check_branch
          %518 = sbr.rel (%p516) target = $region64
        $region63: #{tpu_custom_call.1} parent=11 // pred_region
          %s520 = ssub.s32 2048, 2048
          %521 = vsyncadd [#allocation11], %s520
          %s522 = sshll.u32 [#allocation10], 4
          %s523 = int_to_ptr.vmem [resolvable:$true] %s522
          %528 = dma.hbm_to_vmem [thread:$0]  %s13, 2048, %s523, [#allocation11], 1024, 1024, 64
        $region64: #{tpu_custom_call.1} parent=11 // pred_fallthru
          _
        // Predicated region
        $region65: #{tpu_custom_call.1} parent=11 // pred_check
          %p529 = pneg %p347
        $region66: #{tpu_custom_call.1} parent=11 // pred_check_branch
          %531 = sbr.rel (%p529) target = $region68
        $region67: #{tpu_custom_call.1} parent=11 // pred_region
          _
        $region68: #{tpu_custom_call.1} parent=11 // pred_fallthru
          _
        // Predicated region
        $region69: #{tpu_custom_call.1} parent=11 // pred_check
          %p532 = pneg %p368
        $region70: #{tpu_custom_call.1} parent=11 // pred_check_branch
          %534 = sbr.rel (%p532) target = $region72
        $region71: #{tpu_custom_call.1} parent=11 // pred_region
          _
        $region72: #{tpu_custom_call.1} parent=11 // pred_fallthru
          _
        // Predicated region
        $region73: #{tpu_custom_call.1} parent=11 // pred_check
          %p535 = pneg %p389
        $region74: #{tpu_custom_call.1} parent=11 // pred_check_branch
          %537 = sbr.rel (%p535) target = $region76
        $region75: #{tpu_custom_call.1} parent=11 // pred_region
          _
        $region76: #{tpu_custom_call.1} parent=11 // pred_fallthru
          _
      $region12: #{tpu_custom_call.1} parent=5 // pred_fallthru
        _
      %p538 = scmp.lt.s32.totalorder %s27, 2
      // Predicated region
      $region77: #{tpu_custom_call.1} parent=5 // pred_check
        %p539 = pneg %p538
      $region78: #{tpu_custom_call.1} parent=5 // pred_check_branch
        %541 = sbr.rel (%p539) target = $region80
      $region79: #{tpu_custom_call.1} parent=5 // pred_region
        // Predicated region
        $region81: #{tpu_custom_call.1} parent=79 // pred_check
          %p542 = pneg %p47
        $region82: #{tpu_custom_call.1} parent=79 // pred_check_branch
          %544 = sbr.rel (%p542) target = $region84
        $region83: #{tpu_custom_call.1} parent=79 // pred_region
          %p545 = scmp.lt.s32.totalorder %s27, 1
          %s546 = scalar_select %p545, %s27, 1
          %s547 = smul.addr %s546, 8
          %s548 = scalar_lea.vmem %s0, %s547
        $region84: #{tpu_custom_call.1} parent=79 // pred_fallthru
          _
      $region80: #{tpu_custom_call.1} parent=5 // pred_fallthru
        _
      %p549 = scmp.le.s32.totalorder 1, %s27
      %p550 = scmp.lt.s32.totalorder %s27, 3
      %p551 = pnand %p549, %p550
      %p552 = pneg %p551
      // Predicated region
      $region85: #{tpu_custom_call.1} parent=5 // pred_check
        _
      $region86: #{tpu_custom_call.1} parent=5 // pred_check_branch
        %554 = sbr.rel (%p551) target = $region88
      $region87: #{tpu_custom_call.1} parent=5 // pred_region
        %s555 = ssub.s32 %s27, 1
        // Predicated region
        $region89: #{tpu_custom_call.1} parent=87 // pred_check
          %p556 = pneg %p74
        $region90: #{tpu_custom_call.1} parent=87 // pred_check_branch
          %558 = sbr.rel (%p556) target = $region92
        $region91: #{tpu_custom_call.1} parent=87 // pred_region
          %559 = dma.done [#allocation3], 256
        $region92: #{tpu_custom_call.1} parent=87 // pred_fallthru
          _
        // Predicated region
        $region93: #{tpu_custom_call.1} parent=87 // pred_check
          %p560 = pneg %p95
        $region94: #{tpu_custom_call.1} parent=87 // pred_check_branch
          %562 = sbr.rel (%p560) target = $region96
        $region95: #{tpu_custom_call.1} parent=87 // pred_region
          %563 = dma.done [#allocation5], 512
        $region96: #{tpu_custom_call.1} parent=87 // pred_fallthru
          _
        // Predicated region
        $region97: #{tpu_custom_call.1} parent=87 // pred_check
          %p564 = pneg %p200
        $region98: #{tpu_custom_call.1} parent=87 // pred_check_branch
          %566 = sbr.rel (%p564) target = $region100
        $region99: #{tpu_custom_call.1} parent=87 // pred_region
          %567 = dma.done [#allocation5], 32
        $region100: #{tpu_custom_call.1} parent=87 // pred_fallthru
          _
        // Predicated region
        $region101: #{tpu_custom_call.1} parent=87 // pred_check
          %p568 = pneg %p242
        $region102: #{tpu_custom_call.1} parent=87 // pred_check_branch
          %570 = sbr.rel (%p568) target = $region104
        $region103: #{tpu_custom_call.1} parent=87 // pred_region
          %571 = dma.done [#allocation8], 32
        $region104: #{tpu_custom_call.1} parent=87 // pred_fallthru
          _
        // Predicated region
        $region105: #{tpu_custom_call.1} parent=87 // pred_check
          %p572 = pneg %p263
        $region106: #{tpu_custom_call.1} parent=87 // pred_check_branch
          %574 = sbr.rel (%p572) target = $region108
        $region107: #{tpu_custom_call.1} parent=87 // pred_region
          %575 = dma.done [#allocation8], 32
        $region108: #{tpu_custom_call.1} parent=87 // pred_fallthru
          _
        // Predicated region
        $region109: #{tpu_custom_call.1} parent=87 // pred_check
          %p576 = pneg %p326
        $region110: #{tpu_custom_call.1} parent=87 // pred_check_branch
          %578 = sbr.rel (%p576) target = $region112
        $region111: #{tpu_custom_call.1} parent=87 // pred_region
          %579 = dma.done [#allocation11], 2048
        $region112: #{tpu_custom_call.1} parent=87 // pred_fallthru
          _
        %p580 = scmp.lt.s32.totalorder %s32, 1
        %s581 = scalar_select %p580, %s32, 1
        %s582 = smul.addr %s581, 8
        %s583 = scalar_lea.vmem %s0, %s582
        %p584 = pneg %p53
        %p585 = pneg %p50
        %p586 = pneg %p74
        %p587 = pneg %p71
        %p588 = pneg %p95
        %p589 = pneg %p92
        %p590 = pneg %p116
        %p591 = pneg %p113
        %p592 = pneg %p137
        %p593 = pneg %p134
        %p594 = pneg %p158
        %p595 = pneg %p155
        %p596 = pneg %p179
        %p597 = pneg %p176
        %p598 = pneg %p200
        %p599 = pneg %p197
        %p600 = pneg %p221
        %p601 = pneg %p218
        %p602 = pneg %p242
        %p603 = pneg %p239
        %p604 = pneg %p263
        %p605 = pneg %p260
        %p606 = pneg %p284
        %p607 = pneg %p281
        %p608 = pneg %p305
        %p609 = pneg %p302
        %p610 = pneg %p326
        %p611 = pneg %p323
        %p612 = pneg %p347
        %p613 = pneg %p344
        %p614 = pneg %p368
        %p615 = pneg %p365
        %p616 = pneg %p389
        %p617 = pneg %p386
        %p618 = pneg %p415
        %p619 = pneg %p412
        %p620 = scmp.lt.s32.totalorder %s32, 1
        %s621 = scalar_select %p620, %s32, 1
        %s622 = smul.addr %s621, 2
        %s623 = smul.addr %s622, 8
        %s624 = scalar_lea.vmem %s17, %s623
        %p625 = scmp.lt.s32.totalorder %s32, 1
        %s626 = scalar_select %p625, %s32, 1
        %s627 = smul.addr %s626, 8
        %s628 = scalar_lea.vmem %s0, %s627
        %p629 = scmp.lt.s32.totalorder %s32, 1
        %s630 = scalar_select %p629, %s32, 1
        %s631 = smul.addr %s630, 2
        %s632 = smul.addr %s631, 8
        %s633 = scalar_lea.vmem %s17, %s632
        %v634 = vld [vmem:[%s628] sm:$0xff]
        %v635 = vld [vmem:[#allocation2] sm:$0xff]
        %v636 = vld [vmem:[#allocation2 + $0x8] sm:$0xff]
        %v637 = vld [vmem:[#allocation10] sm:$0xff]
        %v638 = vld [vmem:[#allocation10 + $0x8] sm:$0xff]
        %v639 = vld [vmem:[#allocation10 + $0x10] sm:$0xff]
        %v640 = vld [vmem:[#allocation10 + $0x18] sm:$0xff]
        %v641 = vld [vmem:[#allocation10 + $0x20] sm:$0xff]
        %v642 = vld [vmem:[#allocation10 + $0x28] sm:$0xff]
        %v643 = vld [vmem:[#allocation10 + $0x30] sm:$0xff]
        %v644 = vld [vmem:[#allocation10 + $0x38] sm:$0xff]
        %v645 = vld [vmem:[#allocation10 + $0x40] sm:$0xff]
        %v646 = vld [vmem:[#allocation10 + $0x48] sm:$0xff]
        %v647 = vld [vmem:[#allocation10 + $0x50] sm:$0xff]
        %v648 = vld [vmem:[#allocation10 + $0x58] sm:$0xff]
        %v649 = vld [vmem:[#allocation10 + $0x60] sm:$0xff]
        %v650 = vld [vmem:[#allocation10 + $0x68] sm:$0xff]
        %v651 = vld [vmem:[#allocation10 + $0x70] sm:$0xff]
        %v652 = vld [vmem:[#allocation10 + $0x78] sm:$0xff]
        %v653 = vld [vmem:[%s14] sm:$0xff]
        %v654 = vld [vmem:[%s14 + $0x8] sm:$0xff]
        %v655 = vld [vmem:[%s14 + $0x10] sm:$0xff]
        %v656 = vld [vmem:[%s14 + $0x18] sm:$0xff]
        %v657 = vld [vmem:[%s14 + $0x20] sm:$0xff]
        %v658 = vld [vmem:[%s14 + $0x28] sm:$0xff]
        %v659 = vld [vmem:[%s14 + $0x30] sm:$0xff]
        %v660 = vld [vmem:[%s14 + $0x38] sm:$0xff]
        %v661 = vld [vmem:[%s14 + $0x40] sm:$0xff]
        %v662 = vld [vmem:[%s14 + $0x48] sm:$0xff]
        %v663 = vld [vmem:[%s14 + $0x50] sm:$0xff]
        %v664 = vld [vmem:[%s14 + $0x58] sm:$0xff]
        %v665 = vld [vmem:[%s14 + $0x60] sm:$0xff]
        %v666 = vld [vmem:[%s14 + $0x68] sm:$0xff]
        %v667 = vld [vmem:[%s14 + $0x70] sm:$0xff]
        %v668 = vld [vmem:[%s14 + $0x78] sm:$0xff]
        %v669 = vld [vmem:[%s14 + $0x80] sm:$0xff]
        %v670 = vld [vmem:[%s14 + $0x88] sm:$0xff]
        %v671 = vld [vmem:[%s14 + $0x90] sm:$0xff]
        %v672 = vld [vmem:[%s14 + $0x98] sm:$0xff]
        %v673 = vld [vmem:[%s14 + $0xa0] sm:$0xff]
        %v674 = vld [vmem:[%s14 + $0xa8] sm:$0xff]
        %v675 = vld [vmem:[%s14 + $0xb0] sm:$0xff]
        %v676 = vld [vmem:[%s14 + $0xb8] sm:$0xff]
        %v677 = vld [vmem:[%s14 + $0xc0] sm:$0xff]
        %v678 = vld [vmem:[%s14 + $0xc8] sm:$0xff]
        %v679 = vld [vmem:[%s14 + $0xd0] sm:$0xff]
        %v680 = vld [vmem:[%s14 + $0xd8] sm:$0xff]
        %v681 = vld [vmem:[%s14 + $0xe0] sm:$0xff]
        %v682 = vld [vmem:[%s14 + $0xe8] sm:$0xff]
        %v683 = vld [vmem:[%s14 + $0xf0] sm:$0xff]
        %v684 = vld [vmem:[%s14 + $0xf8] sm:$0xff]
        %v685 = vld [vmem:[%s14 + $0x100] sm:$0xff]
        %v686 = vld [vmem:[%s14 + $0x108] sm:$0xff]
        %v687 = vld [vmem:[%s14 + $0x110] sm:$0xff]
        %v688 = vld [vmem:[%s14 + $0x118] sm:$0xff]
        %v689 = vld [vmem:[%s14 + $0x120] sm:$0xff]
        %v690 = vld [vmem:[%s14 + $0x128] sm:$0xff]
        %v691 = vld [vmem:[%s14 + $0x130] sm:$0xff]
        %v692 = vld [vmem:[%s14 + $0x138] sm:$0xff]
        %v693 = vld [vmem:[%s14 + $0x140] sm:$0xff]
        %v694 = vld [vmem:[%s14 + $0x148] sm:$0xff]
        %v695 = vld [vmem:[%s14 + $0x150] sm:$0xff]
        %v696 = vld [vmem:[%s14 + $0x158] sm:$0xff]
        %v697 = vld [vmem:[%s14 + $0x160] sm:$0xff]
        %v698 = vld [vmem:[%s14 + $0x168] sm:$0xff]
        %v699 = vld [vmem:[%s14 + $0x170] sm:$0xff]
        %v700 = vld [vmem:[%s14 + $0x178] sm:$0xff]
        %v701 = vld [vmem:[%s14 + $0x180] sm:$0xff]
        %v702 = vld [vmem:[%s14 + $0x188] sm:$0xff]
        %v703 = vld [vmem:[%s14 + $0x190] sm:$0xff]
        %v704 = vld [vmem:[%s14 + $0x198] sm:$0xff]
        %v705 = vld [vmem:[%s14 + $0x1a0] sm:$0xff]
        %v706 = vld [vmem:[%s14 + $0x1a8] sm:$0xff]
        %v707 = vld [vmem:[%s14 + $0x1b0] sm:$0xff]
        %v708 = vld [vmem:[%s14 + $0x1b8] sm:$0xff]
        %v709 = vld [vmem:[%s14 + $0x1c0] sm:$0xff]
        %v710 = vld [vmem:[%s14 + $0x1c8] sm:$0xff]
        %v711 = vld [vmem:[%s14 + $0x1d0] sm:$0xff]
        %v712 = vld [vmem:[%s14 + $0x1d8] sm:$0xff]
        %v713 = vld [vmem:[%s14 + $0x1e0] sm:$0xff]
        %v714 = vld [vmem:[%s14 + $0x1e8] sm:$0xff]
        %v715 = vld [vmem:[%s14 + $0x1f0] sm:$0xff]
        %v716 = vld [vmem:[%s14 + $0x1f8] sm:$0xff]
        %v717 = vld [vmem:[%s14 + $0x200] sm:$0xff]
        %v718 = vld [vmem:[%s14 + $0x208] sm:$0xff]
        %v719 = vld [vmem:[%s14 + $0x210] sm:$0xff]
        %v720 = vld [vmem:[%s14 + $0x218] sm:$0xff]
        %v721 = vld [vmem:[%s14 + $0x220] sm:$0xff]
        %v722 = vld [vmem:[%s14 + $0x228] sm:$0xff]
        %v723 = vld [vmem:[%s14 + $0x230] sm:$0xff]
        %v724 = vld [vmem:[%s14 + $0x238] sm:$0xff]
        %v725 = vld [vmem:[%s14 + $0x240] sm:$0xff]
        %v726 = vld [vmem:[%s14 + $0x248] sm:$0xff]
        %v727 = vld [vmem:[%s14 + $0x250] sm:$0xff]
        %v728 = vld [vmem:[%s14 + $0x258] sm:$0xff]
        %v729 = vld [vmem:[%s14 + $0x260] sm:$0xff]
        %v730 = vld [vmem:[%s14 + $0x268] sm:$0xff]
        %v731 = vld [vmem:[%s14 + $0x270] sm:$0xff]
        %v732 = vld [vmem:[%s14 + $0x278] sm:$0xff]
        %v733 = vld [vmem:[%s14 + $0x280] sm:$0xff]
        %v734 = vld [vmem:[%s14 + $0x288] sm:$0xff]
        %v735 = vld [vmem:[%s14 + $0x290] sm:$0xff]
        %v736 = vld [vmem:[%s14 + $0x298] sm:$0xff]
        %v737 = vld [vmem:[%s14 + $0x2a0] sm:$0xff]
        %v738 = vld [vmem:[%s14 + $0x2a8] sm:$0xff]
        %v739 = vld [vmem:[%s14 + $0x2b0] sm:$0xff]
        %v740 = vld [vmem:[%s14 + $0x2b8] sm:$0xff]
        %v741 = vld [vmem:[%s14 + $0x2c0] sm:$0xff]
        %v742 = vld [vmem:[%s14 + $0x2c8] sm:$0xff]
        %v743 = vld [vmem:[%s14 + $0x2d0] sm:$0xff]
        %v744 = vld [vmem:[%s14 + $0x2d8] sm:$0xff]
        %v745 = vld [vmem:[%s14 + $0x2e0] sm:$0xff]
        %v746 = vld [vmem:[%s14 + $0x2e8] sm:$0xff]
        %v747 = vld [vmem:[%s14 + $0x2f0] sm:$0xff]
        %v748 = vld [vmem:[%s14 + $0x2f8] sm:$0xff]
        %v749 = vld [vmem:[%s14 + $0x300] sm:$0xff]
        %v750 = vld [vmem:[%s14 + $0x308] sm:$0xff]
        %v751 = vld [vmem:[%s14 + $0x310] sm:$0xff]
        %v752 = vld [vmem:[%s14 + $0x318] sm:$0xff]
        %v753 = vld [vmem:[%s14 + $0x320] sm:$0xff]
        %v754 = vld [vmem:[%s14 + $0x328] sm:$0xff]
        %v755 = vld [vmem:[%s14 + $0x330] sm:$0xff]
        %v756 = vld [vmem:[%s14 + $0x338] sm:$0xff]
        %v757 = vld [vmem:[%s14 + $0x340] sm:$0xff]
        %v758 = vld [vmem:[%s14 + $0x348] sm:$0xff]
        %v759 = vld [vmem:[%s14 + $0x350] sm:$0xff]
        %v760 = vld [vmem:[%s14 + $0x358] sm:$0xff]
        %v761 = vld [vmem:[%s14 + $0x360] sm:$0xff]
        %v762 = vld [vmem:[%s14 + $0x368] sm:$0xff]
        %v763 = vld [vmem:[%s14 + $0x370] sm:$0xff]
        %v764 = vld [vmem:[%s14 + $0x378] sm:$0xff]
        %v765 = vld [vmem:[%s14 + $0x380] sm:$0xff]
        %v766 = vld [vmem:[%s14 + $0x388] sm:$0xff]
        %v767 = vld [vmem:[%s14 + $0x390] sm:$0xff]
        %v768 = vld [vmem:[%s14 + $0x398] sm:$0xff]
        %v769 = vld [vmem:[%s14 + $0x3a0] sm:$0xff]
        %v770 = vld [vmem:[%s14 + $0x3a8] sm:$0xff]
        %v771 = vld [vmem:[%s14 + $0x3b0] sm:$0xff]
        %v772 = vld [vmem:[%s14 + $0x3b8] sm:$0xff]
        %v773 = vld [vmem:[%s14 + $0x3c0] sm:$0xff]
        %v774 = vld [vmem:[%s14 + $0x3c8] sm:$0xff]
        %v775 = vld [vmem:[%s14 + $0x3d0] sm:$0xff]
        %v776 = vld [vmem:[%s14 + $0x3d8] sm:$0xff]
        %v777 = vld [vmem:[%s14 + $0x3e0] sm:$0xff]
        %v778 = vld [vmem:[%s14 + $0x3e8] sm:$0xff]
        %v779 = vld [vmem:[%s14 + $0x3f0] sm:$0xff]
        %v780 = vld [vmem:[%s14 + $0x3f8] sm:$0xff]
        %v781 = vld [vmem:[%s15] sm:$0xff]
        %v782 = vld [vmem:[%s15 + $0x8] sm:$0xff]
        %v783 = vld [vmem:[%s15 + $0x10] sm:$0xff]
        %v784 = vld [vmem:[%s15 + $0x18] sm:$0xff]
        %v785 = vld [vmem:[%s15 + $0x20] sm:$0xff]
        %v786 = vld [vmem:[%s15 + $0x28] sm:$0xff]
        %v787 = vld [vmem:[%s15 + $0x30] sm:$0xff]
        %v788 = vld [vmem:[%s15 + $0x38] sm:$0xff]
        %v789 = vld [vmem:[%s15 + $0x40] sm:$0xff]
        %v790 = vld [vmem:[%s15 + $0x48] sm:$0xff]
        %v791 = vld [vmem:[%s15 + $0x50] sm:$0xff]
        %v792 = vld [vmem:[%s15 + $0x58] sm:$0xff]
        %v793 = vld [vmem:[%s15 + $0x60] sm:$0xff]
        %v794 = vld [vmem:[%s15 + $0x68] sm:$0xff]
        %v795 = vld [vmem:[%s15 + $0x70] sm:$0xff]
        %v796 = vld [vmem:[%s15 + $0x78] sm:$0xff]
        %v797 = vld [vmem:[%s15 + $0x80] sm:$0xff]
        %v798 = vld [vmem:[%s15 + $0x88] sm:$0xff]
        %v799 = vld [vmem:[%s15 + $0x90] sm:$0xff]
        %v800 = vld [vmem:[%s15 + $0x98] sm:$0xff]
        %v801 = vld [vmem:[%s15 + $0xa0] sm:$0xff]
        %v802 = vld [vmem:[%s15 + $0xa8] sm:$0xff]
        %v803 = vld [vmem:[%s15 + $0xb0] sm:$0xff]
        %v804 = vld [vmem:[%s15 + $0xb8] sm:$0xff]
        %v805 = vld [vmem:[%s15 + $0xc0] sm:$0xff]
        %v806 = vld [vmem:[%s15 + $0xc8] sm:$0xff]
        %v807 = vld [vmem:[%s15 + $0xd0] sm:$0xff]
        %v808 = vld [vmem:[%s15 + $0xd8] sm:$0xff]
        %v809 = vld [vmem:[%s15 + $0xe0] sm:$0xff]
        %v810 = vld [vmem:[%s15 + $0xe8] sm:$0xff]
        %v811 = vld [vmem:[%s15 + $0xf0] sm:$0xff]
        %v812 = vld [vmem:[%s15 + $0xf8] sm:$0xff]
        %v813 = vld [vmem:[%s15 + $0x100] sm:$0xff]
        %v814 = vld [vmem:[%s15 + $0x108] sm:$0xff]
        %v815 = vld [vmem:[%s15 + $0x110] sm:$0xff]
        %v816 = vld [vmem:[%s15 + $0x118] sm:$0xff]
        %v817 = vld [vmem:[%s15 + $0x120] sm:$0xff]
        %v818 = vld [vmem:[%s15 + $0x128] sm:$0xff]
        %v819 = vld [vmem:[%s15 + $0x130] sm:$0xff]
        %v820 = vld [vmem:[%s15 + $0x138] sm:$0xff]
        %v821 = vld [vmem:[%s15 + $0x140] sm:$0xff]
        %v822 = vld [vmem:[%s15 + $0x148] sm:$0xff]
        %v823 = vld [vmem:[%s15 + $0x150] sm:$0xff]
        %v824 = vld [vmem:[%s15 + $0x158] sm:$0xff]
        %v825 = vld [vmem:[%s15 + $0x160] sm:$0xff]
        %v826 = vld [vmem:[%s15 + $0x168] sm:$0xff]
        %v827 = vld [vmem:[%s15 + $0x170] sm:$0xff]
        %v828 = vld [vmem:[%s15 + $0x178] sm:$0xff]
        %v829 = vld [vmem:[%s15 + $0x180] sm:$0xff]
        %v830 = vld [vmem:[%s15 + $0x188] sm:$0xff]
        %v831 = vld [vmem:[%s15 + $0x190] sm:$0xff]
        %v832 = vld [vmem:[%s15 + $0x198] sm:$0xff]
        %v833 = vld [vmem:[%s15 + $0x1a0] sm:$0xff]
        %v834 = vld [vmem:[%s15 + $0x1a8] sm:$0xff]
        %v835 = vld [vmem:[%s15 + $0x1b0] sm:$0xff]
        %v836 = vld [vmem:[%s15 + $0x1b8] sm:$0xff]
        %v837 = vld [vmem:[%s15 + $0x1c0] sm:$0xff]
        %v838 = vld [vmem:[%s15 + $0x1c8] sm:$0xff]
        %v839 = vld [vmem:[%s15 + $0x1d0] sm:$0xff]
        %v840 = vld [vmem:[%s15 + $0x1d8] sm:$0xff]
        %v841 = vld [vmem:[%s15 + $0x1e0] sm:$0xff]
        %v842 = vld [vmem:[%s15 + $0x1e8] sm:$0xff]
        %v843 = vld [vmem:[%s15 + $0x1f0] sm:$0xff]
        %v844 = vld [vmem:[%s15 + $0x1f8] sm:$0xff]
        %v845 = vld [vmem:[#allocation4] sm:$0xff]
        %v846 = vld [vmem:[#allocation4 + $0x8] sm:$0xff]
        %v847 = vld [vmem:[%s3] sm:$0x1]
        %v849 = vlaneseq
        %v850 = vshrl.u32 %v849, 7
        %v851 = vsub.s32 0, %v850
        %v852 = vrot.slane %v847, %v851
        %vm854 = vcmask 130048
        %v856 = vsel %vm854, %v634, 0
        %858 = vmatprep.subr.mxu0 0.0
        %859 = vmatpush1.msra.mxu0 0.0
        %860 = vmatprep.subr.mxu0 0.0
        %861 = vmatpush1.msra.mxu0 0.0
        %862 = vmatprep.subr.mxu0 0.0
        %863 = vmatpush1.msra.mxu0 0.0
        %864 = vmatprep.subr.mxu0 0.0
        %865 = vmatpush1.msra.mxu0 0.0
        %866 = vmatprep.subr.mxu0 0.0
        %867 = vmatpush1.msra.mxu0 0.0
        %868 = vmatprep.subr.mxu0 0.0
        %869 = vmatpush1.msra.mxu0 0.0
        %870 = vmatprep.subr.mxu0 0.0
        %871 = vmatpush1.msra.mxu0 0.0
        %872 = vmatprep.subr.mxu0 0.0
        %873 = vmatpush1.msra.mxu0 0.0
        %874 = vmatprep.subr.mxu0 0.0
        %875 = vmatpush1.msra.mxu0 0.0
        %876 = vmatprep.subr.mxu0 0.0
        %877 = vmatpush1.msra.mxu0 0.0
        %878 = vmatprep.subr.mxu0 0.0
        %879 = vmatpush1.msra.mxu0 0.0
        %880 = vmatprep.subr.mxu0 0.0
        %881 = vmatpush1.msra.mxu0 0.0
        %882 = vmatprep.subr.mxu0 0.0
        %883 = vmatpush1.msra.mxu0 0.0
        %884 = vmatprep.subr.mxu0 0.0
        %885 = vmatpush1.msra.mxu0 0.0
        %886 = vmatprep.subr.mxu0 0.0
        %887 = vmatpush1.msra.mxu0 %v846
        %888 = vmatprep.subr.mxu0 0.0
        %889 = vmatpush1.msra.mxu0 %v845
        %890 = vmatprep.subr.mxu0 0.0
        %891 = vmatpush2.msra.mxu0 0.0
        %892 = vmatprep.subr.mxu0 0.0
        %893 = vmatpush2.msra.mxu0 0.0
        %894 = vmatprep.subr.mxu0 0.0
        %895 = vmatpush2.msra.mxu0 0.0
        %896 = vmatprep.subr.mxu0 0.0
        %897 = vmatpush2.msra.mxu0 0.0
        %898 = vmatprep.subr.mxu0 0.0
        %899 = vmatpush2.msra.mxu0 0.0
        %900 = vmatprep.subr.mxu0 0.0
        %901 = vmatpush2.msra.mxu0 0.0
        %902 = vmatprep.subr.mxu0 0.0
        %903 = vmatpush2.msra.mxu0 0.0
        %904 = vmatprep.subr.mxu0 0.0
        %905 = vmatpush2.msra.mxu0 0.0
        %906 = vmatprep.subr.mxu0 0.0
        %907 = vmatpush2.msra.mxu0 0.0
        %908 = vmatprep.subr.mxu0 0.0
        %909 = vmatpush2.msra.mxu0 0.0
        %910 = vmatprep.subr.mxu0 0.0
        %911 = vmatpush2.msra.mxu0 0.0
        %912 = vmatprep.subr.mxu0 0.0
        %913 = vmatpush2.msra.mxu0 0.0
        %914 = vmatprep.subr.mxu0 0.0
        %915 = vmatpush2.msra.mxu0 0.0
        %916 = vmatprep.subr.mxu0 0.0
        %917 = vmatpush2.msra.mxu0 0.0
        %918 = vmatprep.subr.mxu0 0.0
        %919 = vmatpush2.msra.mxu0 0.0
        %920 = vmatprep.subr.mxu0 0.0
        %921 = vmatpush2.msra.mxu0 0.0
        %922 = vmatprep.mubr.f32.mxu0 0.0
        %923 = vmatmul.mubr.f32.gmra.mxu0 %v856
        %v924 = vpop.f32.mrf.mxu0
        %v925 = vadd.f32 %v852, %v924
        %v926 = vpop.f32.mrf.mxu0
        %927 = vdwg.mxu0
        %vm928 = vcmask 261120
        %v929 = vsel %vm928, %v925, 0.0
        %930 = vadd.xlane.f32.xlu0 %v929
        %v931 = vpop.xlane.xlu0 %930
        %v932 = vsel %vm928, %v635, 0.0
        %933 = vadd.xlane.f32.xlu0 %v932
        %v934 = vpop.xlane.xlu0 %933
        %v935 = vsel %vm928, %v636, 0.0
        %936 = vadd.xlane.f32.xlu0 %v935
        %v937 = vpop.xlane.xlu0 %936
        %v938 = vrcp.pop 32.0
        %v939 = vmul.f32 %v931, %v938
        %v940 = vmul.f32 %v934, %v938
        %v941 = vmul.f32 %v937, %v938
        %v942 = vsub.f32 %v925, %v939
        %v943 = vsub.f32 %v635, %v940
        %v944 = vsub.f32 %v636, %v941
        %v945 = vmul.f32 %v942, %v942
        %v946 = vmul.f32 %v943, %v943
        %v947 = vmul.f32 %v944, %v944
        %v948 = vsel %vm928, %v945, 0.0
        %949 = vadd.xlane.f32.xlu0 %v948
        %v950 = vpop.xlane.xlu0 %949
        %v951 = vsel %vm928, %v946, 0.0
        %952 = vadd.xlane.f32.xlu0 %v951
        %v953 = vpop.xlane.xlu0 %952
        %v954 = vsel %vm928, %v947, 0.0
        %955 = vadd.xlane.f32.xlu0 %v954
        %v956 = vpop.xlane.xlu0 %955
        %v957 = vmul.f32 %v950, %v938
        %v958 = vmul.f32 %v953, %v938
        %v959 = vmul.f32 %v956, %v938
        %v960 = vadd.f32 %v957, 1e-05
        %v961 = vadd.f32 %v958, 1e-05
        %v962 = vadd.f32 %v959, 1e-05
        %v963 = vrsqrt.pop %v960
        %v964 = vrsqrt.pop %v961
        %v965 = vrsqrt.pop %v962
        %v966 = vmul.f32 %v942, %v963
        %v967 = vmul.f32 %v943, %v964
        %v968 = vmul.f32 %v944, %v965
        %v969 = vld [vmem:[%s4] sm:$0xff]
        %v970 = vld [vmem:[%s4 + $0x8] sm:$0xff]
        %v971 = vld [vmem:[%s4 + $0x10] sm:$0xff]
        %v972 = vld [vmem:[%s4 + $0x18] sm:$0xff]
        %v973 = vld [vmem:[%s5] sm:$0x1]
        %v975 = vlaneseq
        %v976 = vshrl.u32 %v975, 7
        %v977 = vsub.s32 0, %v976
        %v978 = vrot.slane %v973, %v977
        %v981 = vsel %vm928, %v966, 0
        %v984 = vsel %vm928, %v967, 0
        %v987 = vsel %vm928, %v968, 0
        %989 = vmatprep.subr.mxu0 0.0
        %990 = vmatpush1.msra.mxu0 0.0
        %991 = vmatprep.subr.mxu0 0.0
        %992 = vmatpush1.msra.mxu0 0.0
        %993 = vmatprep.subr.mxu0 0.0
        %994 = vmatpush1.msra.mxu0 0.0
        %995 = vmatprep.subr.mxu0 0.0
        %996 = vmatpush1.msra.mxu0 0.0
        %997 = vmatprep.subr.mxu0 0.0
        %998 = vmatpush1.msra.mxu0 0.0
        %999 = vmatprep.subr.mxu0 0.0
        %1000 = vmatpush1.msra.mxu0 0.0
        %1001 = vmatprep.subr.mxu0 0.0
        %1002 = vmatpush1.msra.mxu0 0.0
        %1003 = vmatprep.subr.mxu0 0.0
        %1004 = vmatpush1.msra.mxu0 0.0
        %1005 = vmatprep.subr.mxu0 0.0
        %1006 = vmatpush1.msra.mxu0 0.0
        %1007 = vmatprep.subr.mxu0 0.0
        %1008 = vmatpush1.msra.mxu0 0.0
        %1009 = vmatprep.subr.mxu0 0.0
        %1010 = vmatpush1.msra.mxu0 0.0
        %1011 = vmatprep.subr.mxu0 0.0
        %1012 = vmatpush1.msra.mxu0 0.0
        %1013 = vmatprep.subr.mxu0 0.0
        %1014 = vmatpush1.msra.mxu0 %v972
        %1015 = vmatprep.subr.mxu0 0.0
        %1016 = vmatpush1.msra.mxu0 %v971
        %1017 = vmatprep.subr.mxu0 0.0
        %1018 = vmatpush1.msra.mxu0 %v970
        %1019 = vmatprep.subr.mxu0 0.0
        %1020 = vmatpush1.msra.mxu0 %v969
        %1021 = vmatprep.subr.mxu0 0.0
        %1022 = vmatpush2.msra.mxu0 0.0
        %1023 = vmatprep.subr.mxu0 0.0
        %1024 = vmatpush2.msra.mxu0 0.0
        %1025 = vmatprep.subr.mxu0 0.0
        %1026 = vmatpush2.msra.mxu0 0.0
        %1027 = vmatprep.subr.mxu0 0.0
        %1028 = vmatpush2.msra.mxu0 0.0
        %1029 = vmatprep.subr.mxu0 0.0
        %1030 = vmatpush2.msra.mxu0 0.0
        %1031 = vmatprep.subr.mxu0 0.0
        %1032 = vmatpush2.msra.mxu0 0.0
        %1033 = vmatprep.subr.mxu0 0.0
        %1034 = vmatpush2.msra.mxu0 0.0
        %1035 = vmatprep.subr.mxu0 0.0
        %1036 = vmatpush2.msra.mxu0 0.0
        %1037 = vmatprep.subr.mxu0 0.0
        %1038 = vmatpush2.msra.mxu0 0.0
        %1039 = vmatprep.subr.mxu0 0.0
        %1040 = vmatpush2.msra.mxu0 0.0
        %1041 = vmatprep.subr.mxu0 0.0
        %1042 = vmatpush2.msra.mxu0 0.0
        %1043 = vmatprep.subr.mxu0 0.0
        %1044 = vmatpush2.msra.mxu0 0.0
        %1045 = vmatprep.subr.mxu0 0.0
        %1046 = vmatpush2.msra.mxu0 0.0
        %1047 = vmatprep.subr.mxu0 0.0
        %1048 = vmatpush2.msra.mxu0 0.0
        %1049 = vmatprep.subr.mxu0 0.0
        %1050 = vmatpush2.msra.mxu0 0.0
        %1051 = vmatprep.subr.mxu0 0.0
        %1052 = vmatpush2.msra.mxu0 0.0
        %1053 = vmatprep.mubr.f32.mxu0 0.0
        %1054 = vmatmul.mubr.f32.gmra.mxu0 %v981
        %v1055 = vpop.f32.mrf.mxu0
        %v1056 = vadd.f32 %v978, %v1055
        %v1057 = vpop.f32.mrf.mxu0
        %1058 = vmatprep.mubr.f32.mxu0 0.0
        %1059 = vmatmul.mubr.f32.gmra.mxu0 %v984
        %v1060 = vpop.f32.mrf.mxu0
        %v1061 = vadd.f32 %v978, %v1060
        %v1062 = vpop.f32.mrf.mxu0
        %1063 = vmatprep.mubr.f32.mxu0 0.0
        %1064 = vmatmul.mubr.f32.gmra.mxu0 %v987
        %v1065 = vpop.f32.mrf.mxu0
        %v1066 = vadd.f32 %v978, %v1065
        %v1067 = vpop.f32.mrf.mxu0
        %1068 = vdwg.mxu0
        %v1069 = vld [vmem:[%s6] sm:$0xf]
        %v1070 = vlaneseq
        %v1071 = vshrl.u32 %v1070, 7
        %v1072 = vsub.s32 3, %v1071
        %v1073 = vrot.slane %v1069, %v1072
        %v1074 = vmul.f32 %v1056, %v1073
        %v1075 = vmul.f32 %v1061, %v1073
        %v1076 = vmul.f32 %v1066, %v1073
        %vm1080 = vcmask 1042432
        %v1081 = vrot.slane %v1056, 5
        %v1082 = vrot.slane %v1061, 5
        %v1083 = vsel %vm1080, %v1081, %v1082
        %v1084 = vrot.slane %v1066, 5
        %v1085 = vsel %vm1080, %v1082, %v1084
        %v1089 = vsel %vm1080, 0.0, %v1081
        %v1090 = vlaneseq
        %v1091 = vshrl.u32 %v1090, 7
        %v1092 = vsub.s32 0, %v1091
        %v1093 = vrot.slane %v1069, %v1092
        %v1094 = vmul.f32 %v1089, %v1093
        %v1095 = vmul.f32 %v1083, %v1093
        %v1096 = vmul.f32 %v1085, %v1093
        %v1097 = vadd.f32 %v1074, %v1094
        %v1098 = vadd.f32 %v1075, %v1095
        %v1099 = vadd.f32 %v1076, %v1096
        %vm1100 = vcmask 1041408
        %v1101 = vrot.slane %v1056, 6
        %v1102 = vrot.slane %v1061, 6
        %v1103 = vsel %vm1100, %v1101, %v1102
        %v1104 = vrot.slane %v1066, 6
        %v1105 = vsel %vm1100, %v1102, %v1104
        %v1109 = vsel %vm1100, 0.0, %v1101
        %v1110 = vlaneseq
        %v1111 = vshrl.u32 %v1110, 7
        %v1112 = vsub.s32 1, %v1111
        %v1113 = vrot.slane %v1069, %v1112
        %v1114 = vmul.f32 %v1109, %v1113
        %v1115 = vmul.f32 %v1103, %v1113
        %v1116 = vmul.f32 %v1105, %v1113
        %v1117 = vadd.f32 %v1097, %v1114
        %v1118 = vadd.f32 %v1098, %v1115
        %v1119 = vadd.f32 %v1099, %v1116
        %vm1120 = vcmask 1040384
        %v1121 = vrot.slane %v1056, 7
        %v1122 = vrot.slane %v1061, 7
        %v1123 = vsel %vm1120, %v1121, %v1122
        %v1124 = vrot.slane %v1066, 7
        %v1125 = vsel %vm1120, %v1122, %v1124
        %v1129 = vsel %vm1120, 0.0, %v1121
        %v1130 = vlaneseq
        %v1131 = vshrl.u32 %v1130, 7
        %v1132 = vsub.s32 2, %v1131
        %v1133 = vrot.slane %v1069, %v1132
        %v1134 = vmul.f32 %v1129, %v1133
        %v1135 = vmul.f32 %v1123, %v1133
        %v1136 = vmul.f32 %v1125, %v1133
        %v1137 = vadd.f32 %v1117, %v1134
        %v1138 = vadd.f32 %v1118, %v1135
        %v1139 = vadd.f32 %v1119, %v1136
        %v1140 = vld [vmem:[#allocation6] sm:$0x1]
        %v1142 = vlaneseq
        %v1143 = vshrl.u32 %v1142, 7
        %v1144 = vsub.s32 0, %v1143
        %v1145 = vrot.slane %v1140, %v1144
        %v1147 = vadd.f32 %v1137, %v1145
        %v1148 = vadd.f32 %v1138, %v1145
        %v1149 = vadd.f32 %v1139, %v1145
        %v1150 = vsub.f32 0.0, %v1147
        %v1151 = vsub.f32 0.0, %v1148
        %v1152 = vsub.f32 0.0, %v1149
        %v1153 = vmul.f32 %v1150, 1.442695
        %v1154 = vpow.pop %v1153
        %v1155 = vmul.f32 %v1151, 1.442695
        %v1156 = vpow.pop %v1155
        %v1157 = vmul.f32 %v1152, 1.442695
        %v1158 = vpow.pop %v1157
        %v1159 = vadd.f32 %v1154, 1.0
        %v1160 = vadd.f32 %v1156, 1.0
        %v1161 = vadd.f32 %v1158, 1.0
        %v1162 = vrcp.pop %v1159
        %v1163 = vmul.f32 1.0, %v1162
        %v1164 = vrcp.pop %v1160
        %v1165 = vmul.f32 1.0, %v1164
        %v1166 = vrcp.pop %v1161
        %v1167 = vmul.f32 1.0, %v1166
        %v1168 = vmul.f32 %v1147, %v1163
        %v1169 = vmul.f32 %v1148, %v1165
        %v1170 = vmul.f32 %v1149, %v1167
        %v1171 = vld [vmem:[%s8] sm:$0xff]
        %v1172 = vld [vmem:[%s8 + $0x8] sm:$0xff]
        %v1173 = vld [vmem:[%s8 + $0x10] sm:$0xff]
        %v1174 = vld [vmem:[%s8 + $0x18] sm:$0xff]
        %v1175 = vld [vmem:[%s8 + $0x20] sm:$0xff]
        %v1176 = vld [vmem:[%s8 + $0x28] sm:$0xff]
        %v1177 = vld [vmem:[%s8 + $0x30] sm:$0xff]
        %v1178 = vld [vmem:[%s8 + $0x38] sm:$0xff]
        %vm1179 = vcmask 523264
        %v1181 = vsel %vm1179, %v1168, 0
        %v1184 = vsel %vm1179, %v1169, 0
        %v1187 = vsel %vm1179, %v1170, 0
        %1189 = vmatprep.subr.mxu0 0.0
        %1190 = vmatpush1.msra.mxu0 0.0
        %1191 = vmatprep.subr.mxu0 0.0
        %1192 = vmatpush1.msra.mxu0 0.0
        %1193 = vmatprep.subr.mxu0 0.0
        %1194 = vmatpush1.msra.mxu0 0.0
        %1195 = vmatprep.subr.mxu0 0.0
        %1196 = vmatpush1.msra.mxu0 0.0
        %1197 = vmatprep.subr.mxu0 0.0
        %1198 = vmatpush1.msra.mxu0 0.0
        %1199 = vmatprep.subr.mxu0 0.0
        %1200 = vmatpush1.msra.mxu0 0.0
        %1201 = vmatprep.subr.mxu0 0.0
        %1202 = vmatpush1.msra.mxu0 0.0
        %1203 = vmatprep.subr.mxu0 0.0
        %1204 = vmatpush1.msra.mxu0 0.0
        %1205 = vmatprep.subr.mxu0 0.0
        %1206 = vmatpush1.msra.mxu0 %v1178
        %1207 = vmatprep.subr.mxu0 0.0
        %1208 = vmatpush1.msra.mxu0 %v1177
        %1209 = vmatprep.subr.mxu0 0.0
        %1210 = vmatpush1.msra.mxu0 %v1176
        %1211 = vmatprep.subr.mxu0 0.0
        %1212 = vmatpush1.msra.mxu0 %v1175
        %1213 = vmatprep.subr.mxu0 0.0
        %1214 = vmatpush1.msra.mxu0 %v1174
        %1215 = vmatprep.subr.mxu0 0.0
        %1216 = vmatpush1.msra.mxu0 %v1173
        %1217 = vmatprep.subr.mxu0 0.0
        %1218 = vmatpush1.msra.mxu0 %v1172
        %1219 = vmatprep.subr.mxu0 0.0
        %1220 = vmatpush1.msra.mxu0 %v1171
        %1221 = vmatprep.subr.mxu0 0.0
        %1222 = vmatpush2.msra.mxu0 0.0
        %1223 = vmatprep.subr.mxu0 0.0
        %1224 = vmatpush2.msra.mxu0 0.0
        %1225 = vmatprep.subr.mxu0 0.0
        %1226 = vmatpush2.msra.mxu0 0.0
        %1227 = vmatprep.subr.mxu0 0.0
        %1228 = vmatpush2.msra.mxu0 0.0
        %1229 = vmatprep.subr.mxu0 0.0
        %1230 = vmatpush2.msra.mxu0 0.0
        %1231 = vmatprep.subr.mxu0 0.0
        %1232 = vmatpush2.msra.mxu0 0.0
        %1233 = vmatprep.subr.mxu0 0.0
        %1234 = vmatpush2.msra.mxu0 0.0
        %1235 = vmatprep.subr.mxu0 0.0
        %1236 = vmatpush2.msra.mxu0 0.0
        %1237 = vmatprep.subr.mxu0 0.0
        %1238 = vmatpush2.msra.mxu0 0.0
        %1239 = vmatprep.subr.mxu0 0.0
        %1240 = vmatpush2.msra.mxu0 0.0
        %1241 = vmatprep.subr.mxu0 0.0
        %1242 = vmatpush2.msra.mxu0 0.0
        %1243 = vmatprep.subr.mxu0 0.0
        %1244 = vmatpush2.msra.mxu0 0.0
        %1245 = vmatprep.subr.mxu0 0.0
        %1246 = vmatpush2.msra.mxu0 0.0
        %1247 = vmatprep.subr.mxu0 0.0
        %1248 = vmatpush2.msra.mxu0 0.0
        %1249 = vmatprep.subr.mxu0 0.0
        %1250 = vmatpush2.msra.mxu0 0.0
        %1251 = vmatprep.subr.mxu0 0.0
        %1252 = vmatpush2.msra.mxu0 0.0
        %1253 = vmatprep.mubr.f32.mxu0 0.0
        %1254 = vmatmul.mubr.f32.gmra.mxu0 %v1181
        %v1255 = vpop.f32.mrf.mxu0
        %v1256 = vadd.f32 0.0, %v1255
        %v1257 = vpop.f32.mrf.mxu0
        %1258 = vmatprep.mubr.f32.mxu0 0.0
        %1259 = vmatmul.mubr.f32.gmra.mxu0 %v1184
        %v1260 = vpop.f32.mrf.mxu0
        %v1261 = vadd.f32 0.0, %v1260
        %v1262 = vpop.f32.mrf.mxu0
        %1263 = vmatprep.mubr.f32.mxu0 0.0
        %1264 = vmatmul.mubr.f32.gmra.mxu0 %v1187
        %v1265 = vpop.f32.mrf.mxu0
        %v1266 = vadd.f32 0.0, %v1265
        %v1267 = vpop.f32.mrf.mxu0
        %1268 = vdwg.mxu0
        %v1269 = vld [vmem:[#allocation7] sm:$0x1]
        %v1271 = vlaneseq
        %v1272 = vshrl.u32 %v1271, 7
        %v1273 = vsub.s32 0, %v1272
        %v1274 = vrot.slane %v1269, %v1273
        %v1276 = vadd.f32 %v1256, %v1274
        %v1277 = vadd.f32 %v1261, %v1274
        %v1278 = vadd.f32 %v1266, %v1274
        %v1279 = vmax.f32 %v1276, 0.0
        %v1280 = vmax.f32 %v1277, 0.0
        %v1281 = vmax.f32 %v1278, 0.0
        %v1282 = vand.u32 2147483647, %v1276
        %v1283 = vand.u32 2147483647, %v1277
        %v1284 = vand.u32 2147483647, %v1278
        %v1285 = vsub.f32 0.0, %v1282
        %v1286 = vsub.f32 0.0, %v1283
        %v1287 = vsub.f32 0.0, %v1284
        %v1288 = vmul.f32 %v1285, 1.442695
        %v1289 = vpow.pop %v1288
        %v1290 = vmul.f32 %v1286, 1.442695
        %v1291 = vpow.pop %v1290
        %v1292 = vmul.f32 %v1287, 1.442695
        %v1293 = vpow.pop %v1292
        %v1294 = vadd.f32 %v1289, 1.0
        %v1295 = vadd.f32 %v1291, 1.0
        %v1296 = vadd.f32 %v1293, 1.0
        %v1297 = vlog2.pop %v1294
        %v1298 = vmul.f32 %v1297, 0.6931472
        %v1299 = vlog2.pop %v1295
        %v1300 = vmul.f32 %v1299, 0.6931472
        %v1301 = vlog2.pop %v1296
        %v1302 = vmul.f32 %v1301, 0.6931472
        %v1303 = vadd.f32 %v1279, %v1298
        %v1304 = vadd.f32 %v1280, %v1300
        %v1305 = vadd.f32 %v1281, %v1302
        %v1306 = vld [vmem:[%s16] sm:$0xff]
        %v1307 = vld [vmem:[%s16 + $0x8] sm:$0xff]
        %v1308 = vld [vmem:[%s16 + $0x10] sm:$0xff]
        %v1309 = vld [vmem:[%s16 + $0x18] sm:$0xff]
        %v1310 = vld [vmem:[%s16 + $0x20] sm:$0xff]
        %v1311 = vld [vmem:[%s16 + $0x28] sm:$0xff]
        %v1312 = vld [vmem:[%s16 + $0x30] sm:$0xff]
        %v1313 = vld [vmem:[%s16 + $0x38] sm:$0xff]
        %v1314 = vld [vmem:[%s16 + $0x40] sm:$0xff]
        %v1315 = vld [vmem:[%s16 + $0x48] sm:$0xff]
        %v1316 = vld [vmem:[%s16 + $0x50] sm:$0xff]
        %v1317 = vld [vmem:[%s16 + $0x58] sm:$0xff]
        %v1318 = vld [vmem:[%s16 + $0x60] sm:$0xff]
        %v1319 = vld [vmem:[%s16 + $0x68] sm:$0xff]
        %v1320 = vld [vmem:[%s16 + $0x70] sm:$0xff]
        %v1321 = vld [vmem:[%s16 + $0x78] sm:$0xff]
        %v1322 = vld [vmem:[%s16 + $0x80] sm:$0xff]
        %v1323 = vld [vmem:[%s16 + $0x88] sm:$0xff]
        %v1324 = vld [vmem:[%s16 + $0x90] sm:$0xff]
        %v1325 = vld [vmem:[%s16 + $0x98] sm:$0xff]
        %v1326 = vld [vmem:[%s16 + $0xa0] sm:$0xff]
        %v1327 = vld [vmem:[%s16 + $0xa8] sm:$0xff]
        %v1328 = vld [vmem:[%s16 + $0xb0] sm:$0xff]
        %v1329 = vld [vmem:[%s16 + $0xb8] sm:$0xff]
        %v1330 = vld [vmem:[%s16 + $0xc0] sm:$0xff]
        %v1331 = vld [vmem:[%s16 + $0xc8] sm:$0xff]
        %v1332 = vld [vmem:[%s16 + $0xd0] sm:$0xff]
        %v1333 = vld [vmem:[%s16 + $0xd8] sm:$0xff]
        %v1334 = vld [vmem:[%s16 + $0xe0] sm:$0xff]
        %v1335 = vld [vmem:[%s16 + $0xe8] sm:$0xff]
        %v1336 = vld [vmem:[%s16 + $0xf0] sm:$0xff]
        %v1337 = vld [vmem:[%s16 + $0xf8] sm:$0xff]
        %v1338 = vld [vmem:[%s16 + $0x100] sm:$0xff]
        %v1339 = vld [vmem:[%s16 + $0x108] sm:$0xff]
        %v1340 = vld [vmem:[%s16 + $0x110] sm:$0xff]
        %v1341 = vld [vmem:[%s16 + $0x118] sm:$0xff]
        %v1342 = vld [vmem:[%s16 + $0x120] sm:$0xff]
        %v1343 = vld [vmem:[%s16 + $0x128] sm:$0xff]
        %v1344 = vld [vmem:[%s16 + $0x130] sm:$0xff]
        %v1345 = vld [vmem:[%s16 + $0x138] sm:$0xff]
        %v1346 = vld [vmem:[%s16 + $0x140] sm:$0xff]
        %v1347 = vld [vmem:[%s16 + $0x148] sm:$0xff]
        %v1348 = vld [vmem:[%s16 + $0x150] sm:$0xff]
        %v1349 = vld [vmem:[%s16 + $0x158] sm:$0xff]
        %v1350 = vld [vmem:[%s16 + $0x160] sm:$0xff]
        %v1351 = vld [vmem:[%s16 + $0x168] sm:$0xff]
        %v1352 = vld [vmem:[%s16 + $0x170] sm:$0xff]
        %v1353 = vld [vmem:[%s16 + $0x178] sm:$0xff]
        %v1354 = vld [vmem:[%s16 + $0x180] sm:$0xff]
        %v1355 = vld [vmem:[%s16 + $0x188] sm:$0xff]
        %v1356 = vld [vmem:[%s16 + $0x190] sm:$0xff]
        %v1357 = vld [vmem:[%s16 + $0x198] sm:$0xff]
        %v1358 = vld [vmem:[%s16 + $0x1a0] sm:$0xff]
        %v1359 = vld [vmem:[%s16 + $0x1a8] sm:$0xff]
        %v1360 = vld [vmem:[%s16 + $0x1b0] sm:$0xff]
        %v1361 = vld [vmem:[%s16 + $0x1b8] sm:$0xff]
        %v1362 = vld [vmem:[%s16 + $0x1c0] sm:$0xff]
        %v1363 = vld [vmem:[%s16 + $0x1c8] sm:$0xff]
        %v1364 = vld [vmem:[%s16 + $0x1d0] sm:$0xff]
        %v1365 = vld [vmem:[%s16 + $0x1d8] sm:$0xff]
        %v1366 = vld [vmem:[%s16 + $0x1e0] sm:$0xff]
        %v1367 = vld [vmem:[%s16 + $0x1e8] sm:$0xff]
        %v1368 = vld [vmem:[%s16 + $0x1f0] sm:$0xff]
        %v1369 = vld [vmem:[%s16 + $0x1f8] sm:$0xff]
        %v1371 = vsel %vm1179, %v1303, 0
        %v1374 = vsel %vm1179, %v1304, 0
        %v1377 = vsel %vm1179, %v1305, 0
        %1379 = vmatprep.subr.mxu0 0.0
        %1380 = vmatpush1.msra.mxu0 0.0
        %1381 = vmatprep.subr.mxu0 0.0
        %1382 = vmatpush1.msra.mxu0 0.0
        %1383 = vmatprep.subr.mxu0 0.0
        %1384 = vmatpush1.msra.mxu0 0.0
        %1385 = vmatprep.subr.mxu0 0.0
        %1386 = vmatpush1.msra.mxu0 0.0
        %1387 = vmatprep.subr.mxu0 0.0
        %1388 = vmatpush1.msra.mxu0 0.0
        %1389 = vmatprep.subr.mxu0 0.0
        %1390 = vmatpush1.msra.mxu0 0.0
        %1391 = vmatprep.subr.mxu0 0.0
        %1392 = vmatpush1.msra.mxu0 0.0
        %1393 = vmatprep.subr.mxu0 0.0
        %1394 = vmatpush1.msra.mxu0 0.0
        %1395 = vmatprep.subr.mxu0 %v1363
        %1396 = vmatpush1.msra.mxu0 %v1362
        %1397 = vmatprep.subr.mxu0 %v1355
        %1398 = vmatpush1.msra.mxu0 %v1354
        %1399 = vmatprep.subr.mxu0 %v1347
        %1400 = vmatpush1.msra.mxu0 %v1346
        %1401 = vmatprep.subr.mxu0 %v1339
        %1402 = vmatpush1.msra.mxu0 %v1338
        %1403 = vmatprep.subr.mxu0 %v1331
        %1404 = vmatpush1.msra.mxu0 %v1330
        %1405 = vmatprep.subr.mxu0 %v1323
        %1406 = vmatpush1.msra.mxu0 %v1322
        %1407 = vmatprep.subr.mxu0 %v1315
        %1408 = vmatpush1.msra.mxu0 %v1314
        %1409 = vmatprep.subr.mxu0 %v1307
        %1410 = vmatpush1.msra.mxu0 %v1306
        %1411 = vmatprep.subr.mxu0 0.0
        %1412 = vmatpush2.msra.mxu0 0.0
        %1413 = vmatprep.subr.mxu0 0.0
        %1414 = vmatpush2.msra.mxu0 0.0
        %1415 = vmatprep.subr.mxu0 0.0
        %1416 = vmatpush2.msra.mxu0 0.0
        %1417 = vmatprep.subr.mxu0 0.0
        %1418 = vmatpush2.msra.mxu0 0.0
        %1419 = vmatprep.subr.mxu0 0.0
        %1420 = vmatpush2.msra.mxu0 0.0
        %1421 = vmatprep.subr.mxu0 0.0
        %1422 = vmatpush2.msra.mxu0 0.0
        %1423 = vmatprep.subr.mxu0 0.0
        %1424 = vmatpush2.msra.mxu0 0.0
        %1425 = vmatprep.subr.mxu0 0.0
        %1426 = vmatpush2.msra.mxu0 0.0
        %1427 = vmatprep.subr.mxu0 0.0
        %1428 = vmatpush2.msra.mxu0 0.0
        %1429 = vmatprep.subr.mxu0 0.0
        %1430 = vmatpush2.msra.mxu0 0.0
        %1431 = vmatprep.subr.mxu0 0.0
        %1432 = vmatpush2.msra.mxu0 0.0
        %1433 = vmatprep.subr.mxu0 0.0
        %1434 = vmatpush2.msra.mxu0 0.0
        %1435 = vmatprep.subr.mxu0 0.0
        %1436 = vmatpush2.msra.mxu0 0.0
        %1437 = vmatprep.subr.mxu0 0.0
        %1438 = vmatpush2.msra.mxu0 0.0
        %1439 = vmatprep.subr.mxu0 0.0
        %1440 = vmatpush2.msra.mxu0 0.0
        %1441 = vmatprep.subr.mxu0 0.0
        %1442 = vmatpush2.msra.mxu0 0.0
        %1443 = vmatprep.mubr.f32.mxu0 0.0
        %1444 = vmatmul.mubr.f32.gmra.mxu0 %v1371
        %v1445 = vpop.f32.mrf.mxu0
        %v1446 = vadd.f32 0.0, %v1445
        %v1447 = vpop.f32.mrf.mxu0
        %v1448 = vadd.f32 0.0, %v1447
        %1449 = vmatprep.mubr.f32.mxu0 0.0
        %1450 = vmatmul.mubr.f32.gmra.mxu0 %v1374
        %v1451 = vpop.f32.mrf.mxu0
        %v1452 = vadd.f32 0.0, %v1451
        %v1453 = vpop.f32.mrf.mxu0
        %v1454 = vadd.f32 0.0, %v1453
        %1455 = vmatprep.mubr.f32.mxu0 0.0
        %1456 = vmatmul.mubr.f32.gmra.mxu0 %v1377
        %v1457 = vpop.f32.mrf.mxu0
        %v1458 = vadd.f32 0.0, %v1457
        %v1459 = vpop.f32.mrf.mxu0
        %v1460 = vadd.f32 0.0, %v1459
        %1461 = vdwg.mxu0
        %1462 = vmatprep.subr.mxu0 0.0
        %1463 = vmatpush1.msra.mxu0 0.0
        %1464 = vmatprep.subr.mxu0 0.0
        %1465 = vmatpush1.msra.mxu0 0.0
        %1466 = vmatprep.subr.mxu0 0.0
        %1467 = vmatpush1.msra.mxu0 0.0
        %1468 = vmatprep.subr.mxu0 0.0
        %1469 = vmatpush1.msra.mxu0 0.0
        %1470 = vmatprep.subr.mxu0 0.0
        %1471 = vmatpush1.msra.mxu0 0.0
        %1472 = vmatprep.subr.mxu0 0.0
        %1473 = vmatpush1.msra.mxu0 0.0
        %1474 = vmatprep.subr.mxu0 0.0
        %1475 = vmatpush1.msra.mxu0 0.0
        %1476 = vmatprep.subr.mxu0 0.0
        %1477 = vmatpush1.msra.mxu0 0.0
        %1478 = vmatprep.subr.mxu0 %v1365
        %1479 = vmatpush1.msra.mxu0 %v1364
        %1480 = vmatprep.subr.mxu0 %v1357
        %1481 = vmatpush1.msra.mxu0 %v1356
        %1482 = vmatprep.subr.mxu0 %v1349
        %1483 = vmatpush1.msra.mxu0 %v1348
        %1484 = vmatprep.subr.mxu0 %v1341
        %1485 = vmatpush1.msra.mxu0 %v1340
        %1486 = vmatprep.subr.mxu0 %v1333
        %1487 = vmatpush1.msra.mxu0 %v1332
        %1488 = vmatprep.subr.mxu0 %v1325
        %1489 = vmatpush1.msra.mxu0 %v1324
        %1490 = vmatprep.subr.mxu0 %v1317
        %1491 = vmatpush1.msra.mxu0 %v1316
        %1492 = vmatprep.subr.mxu0 %v1309
        %1493 = vmatpush1.msra.mxu0 %v1308
        %1494 = vmatprep.subr.mxu0 0.0
        %1495 = vmatpush2.msra.mxu0 0.0
        %1496 = vmatprep.subr.mxu0 0.0
        %1497 = vmatpush2.msra.mxu0 0.0
        %1498 = vmatprep.subr.mxu0 0.0
        %1499 = vmatpush2.msra.mxu0 0.0
        %1500 = vmatprep.subr.mxu0 0.0
        %1501 = vmatpush2.msra.mxu0 0.0
        %1502 = vmatprep.subr.mxu0 0.0
        %1503 = vmatpush2.msra.mxu0 0.0
        %1504 = vmatprep.subr.mxu0 0.0
        %1505 = vmatpush2.msra.mxu0 0.0
        %1506 = vmatprep.subr.mxu0 0.0
        %1507 = vmatpush2.msra.mxu0 0.0
        %1508 = vmatprep.subr.mxu0 0.0
        %1509 = vmatpush2.msra.mxu0 0.0
        %1510 = vmatprep.subr.mxu0 0.0
        %1511 = vmatpush2.msra.mxu0 0.0
        %1512 = vmatprep.subr.mxu0 0.0
        %1513 = vmatpush2.msra.mxu0 0.0
        %1514 = vmatprep.subr.mxu0 0.0
        %1515 = vmatpush2.msra.mxu0 0.0
        %1516 = vmatprep.subr.mxu0 0.0
        %1517 = vmatpush2.msra.mxu0 0.0
        %1518 = vmatprep.subr.mxu0 0.0
        %1519 = vmatpush2.msra.mxu0 0.0
        %1520 = vmatprep.subr.mxu0 0.0
        %1521 = vmatpush2.msra.mxu0 0.0
        %1522 = vmatprep.subr.mxu0 0.0
        %1523 = vmatpush2.msra.mxu0 0.0
        %1524 = vmatprep.subr.mxu0 0.0
        %1525 = vmatpush2.msra.mxu0 0.0
        %1526 = vmatprep.mubr.f32.mxu0 0.0
        %1527 = vmatmul.mubr.f32.gmra.mxu0 %v1371
        %v1528 = vpop.f32.mrf.mxu0
        %v1529 = vadd.f32 0.0, %v1528
        %v1530 = vpop.f32.mrf.mxu0
        %v1531 = vadd.f32 0.0, %v1530
        %1532 = vmatprep.mubr.f32.mxu0 0.0
        %1533 = vmatmul.mubr.f32.gmra.mxu0 %v1374
        %v1534 = vpop.f32.mrf.mxu0
        %v1535 = vadd.f32 0.0, %v1534
        %v1536 = vpop.f32.mrf.mxu0
        %v1537 = vadd.f32 0.0, %v1536
        %1538 = vmatprep.mubr.f32.mxu0 0.0
        %1539 = vmatmul.mubr.f32.gmra.mxu0 %v1377
        %v1540 = vpop.f32.mrf.mxu0
        %v1541 = vadd.f32 0.0, %v1540
        %v1542 = vpop.f32.mrf.mxu0
        %v1543 = vadd.f32 0.0, %v1542
        %1544 = vdwg.mxu0
        %1545 = vmatprep.subr.mxu0 0.0
        %1546 = vmatpush1.msra.mxu0 0.0
        %1547 = vmatprep.subr.mxu0 0.0
        %1548 = vmatpush1.msra.mxu0 0.0
        %1549 = vmatprep.subr.mxu0 0.0
        %1550 = vmatpush1.msra.mxu0 0.0
        %1551 = vmatprep.subr.mxu0 0.0
        %1552 = vmatpush1.msra.mxu0 0.0
        %1553 = vmatprep.subr.mxu0 0.0
        %1554 = vmatpush1.msra.mxu0 0.0
        %1555 = vmatprep.subr.mxu0 0.0
        %1556 = vmatpush1.msra.mxu0 0.0
        %1557 = vmatprep.subr.mxu0 0.0
        %1558 = vmatpush1.msra.mxu0 0.0
        %1559 = vmatprep.subr.mxu0 0.0
        %1560 = vmatpush1.msra.mxu0 0.0
        %1561 = vmatprep.subr.mxu0 %v1367
        %1562 = vmatpush1.msra.mxu0 %v1366
        %1563 = vmatprep.subr.mxu0 %v1359
        %1564 = vmatpush1.msra.mxu0 %v1358
        %1565 = vmatprep.subr.mxu0 %v1351
        %1566 = vmatpush1.msra.mxu0 %v1350
        %1567 = vmatprep.subr.mxu0 %v1343
        %1568 = vmatpush1.msra.mxu0 %v1342
        %1569 = vmatprep.subr.mxu0 %v1335
        %1570 = vmatpush1.msra.mxu0 %v1334
        %1571 = vmatprep.subr.mxu0 %v1327
        %1572 = vmatpush1.msra.mxu0 %v1326
        %1573 = vmatprep.subr.mxu0 %v1319
        %1574 = vmatpush1.msra.mxu0 %v1318
        %1575 = vmatprep.subr.mxu0 %v1311
        %1576 = vmatpush1.msra.mxu0 %v1310
        %1577 = vmatprep.subr.mxu0 0.0
        %1578 = vmatpush2.msra.mxu0 0.0
        %1579 = vmatprep.subr.mxu0 0.0
        %1580 = vmatpush2.msra.mxu0 0.0
        %1581 = vmatprep.subr.mxu0 0.0
        %1582 = vmatpush2.msra.mxu0 0.0
        %1583 = vmatprep.subr.mxu0 0.0
        %1584 = vmatpush2.msra.mxu0 0.0
        %1585 = vmatprep.subr.mxu0 0.0
        %1586 = vmatpush2.msra.mxu0 0.0
        %1587 = vmatprep.subr.mxu0 0.0
        %1588 = vmatpush2.msra.mxu0 0.0
        %1589 = vmatprep.subr.mxu0 0.0
        %1590 = vmatpush2.msra.mxu0 0.0
        %1591 = vmatprep.subr.mxu0 0.0
        %1592 = vmatpush2.msra.mxu0 0.0
        %1593 = vmatprep.subr.mxu0 0.0
        %1594 = vmatpush2.msra.mxu0 0.0
        %1595 = vmatprep.subr.mxu0 0.0
        %1596 = vmatpush2.msra.mxu0 0.0
        %1597 = vmatprep.subr.mxu0 0.0
        %1598 = vmatpush2.msra.mxu0 0.0
        %1599 = vmatprep.subr.mxu0 0.0
        %1600 = vmatpush2.msra.mxu0 0.0
        %1601 = vmatprep.subr.mxu0 0.0
        %1602 = vmatpush2.msra.mxu0 0.0
        %1603 = vmatprep.subr.mxu0 0.0
        %1604 = vmatpush2.msra.mxu0 0.0
        %1605 = vmatprep.subr.mxu0 0.0
        %1606 = vmatpush2.msra.mxu0 0.0
        %1607 = vmatprep.subr.mxu0 0.0
        %1608 = vmatpush2.msra.mxu0 0.0
        %1609 = vmatprep.mubr.f32.mxu0 0.0
        %1610 = vmatmul.mubr.f32.gmra.mxu0 %v1371
        %v1611 = vpop.f32.mrf.mxu0
        %v1612 = vadd.f32 0.0, %v1611
        %v1613 = vpop.f32.mrf.mxu0
        %v1614 = vadd.f32 0.0, %v1613
        %1615 = vmatprep.mubr.f32.mxu0 0.0
        %1616 = vmatmul.mubr.f32.gmra.mxu0 %v1374
        %v1617 = vpop.f32.mrf.mxu0
        %v1618 = vadd.f32 0.0, %v1617
        %v1619 = vpop.f32.mrf.mxu0
        %v1620 = vadd.f32 0.0, %v1619
        %1621 = vmatprep.mubr.f32.mxu0 0.0
        %1622 = vmatmul.mubr.f32.gmra.mxu0 %v1377
        %v1623 = vpop.f32.mrf.mxu0
        %v1624 = vadd.f32 0.0, %v1623
        %v1625 = vpop.f32.mrf.mxu0
        %v1626 = vadd.f32 0.0, %v1625
        %1627 = vdwg.mxu0
        %1628 = vmatprep.subr.mxu0 0.0
        %1629 = vmatpush1.msra.mxu0 0.0
        %1630 = vmatprep.subr.mxu0 0.0
        %1631 = vmatpush1.msra.mxu0 0.0
        %1632 = vmatprep.subr.mxu0 0.0
        %1633 = vmatpush1.msra.mxu0 0.0
        %1634 = vmatprep.subr.mxu0 0.0
        %1635 = vmatpush1.msra.mxu0 0.0
        %1636 = vmatprep.subr.mxu0 0.0
        %1637 = vmatpush1.msra.mxu0 0.0
        %1638 = vmatprep.subr.mxu0 0.0
        %1639 = vmatpush1.msra.mxu0 0.0
        %1640 = vmatprep.subr.mxu0 0.0
        %1641 = vmatpush1.msra.mxu0 0.0
        %1642 = vmatprep.subr.mxu0 0.0
        %1643 = vmatpush1.msra.mxu0 0.0
        %1644 = vmatprep.subr.mxu0 %v1369
        %1645 = vmatpush1.msra.mxu0 %v1368
        %1646 = vmatprep.subr.mxu0 %v1361
        %1647 = vmatpush1.msra.mxu0 %v1360
        %1648 = vmatprep.subr.mxu0 %v1353
        %1649 = vmatpush1.msra.mxu0 %v1352
        %1650 = vmatprep.subr.mxu0 %v1345
        %1651 = vmatpush1.msra.mxu0 %v1344
        %1652 = vmatprep.subr.mxu0 %v1337
        %1653 = vmatpush1.msra.mxu0 %v1336
        %1654 = vmatprep.subr.mxu0 %v1329
        %1655 = vmatpush1.msra.mxu0 %v1328
        %1656 = vmatprep.subr.mxu0 %v1321
        %1657 = vmatpush1.msra.mxu0 %v1320
        %1658 = vmatprep.subr.mxu0 %v1313
        %1659 = vmatpush1.msra.mxu0 %v1312
        %1660 = vmatprep.subr.mxu0 0.0
        %1661 = vmatpush2.msra.mxu0 0.0
        %1662 = vmatprep.subr.mxu0 0.0
        %1663 = vmatpush2.msra.mxu0 0.0
        %1664 = vmatprep.subr.mxu0 0.0
        %1665 = vmatpush2.msra.mxu0 0.0
        %1666 = vmatprep.subr.mxu0 0.0
        %1667 = vmatpush2.msra.mxu0 0.0
        %1668 = vmatprep.subr.mxu0 0.0
        %1669 = vmatpush2.msra.mxu0 0.0
        %1670 = vmatprep.subr.mxu0 0.0
        %1671 = vmatpush2.msra.mxu0 0.0
        %1672 = vmatprep.subr.mxu0 0.0
        %1673 = vmatpush2.msra.mxu0 0.0
        %1674 = vmatprep.subr.mxu0 0.0
        %1675 = vmatpush2.msra.mxu0 0.0
        %1676 = vmatprep.subr.mxu0 0.0
        %1677 = vmatpush2.msra.mxu0 0.0
        %1678 = vmatprep.subr.mxu0 0.0
        %1679 = vmatpush2.msra.mxu0 0.0
        %1680 = vmatprep.subr.mxu0 0.0
        %1681 = vmatpush2.msra.mxu0 0.0
        %1682 = vmatprep.subr.mxu0 0.0
        %1683 = vmatpush2.msra.mxu0 0.0
        %1684 = vmatprep.subr.mxu0 0.0
        %1685 = vmatpush2.msra.mxu0 0.0
        %1686 = vmatprep.subr.mxu0 0.0
        %1687 = vmatpush2.msra.mxu0 0.0
        %1688 = vmatprep.subr.mxu0 0.0
        %1689 = vmatpush2.msra.mxu0 0.0
        %1690 = vmatprep.subr.mxu0 0.0
        %1691 = vmatpush2.msra.mxu0 0.0
        %1692 = vmatprep.mubr.f32.mxu0 0.0
        %1693 = vmatmul.mubr.f32.gmra.mxu0 %v1371
        %v1694 = vpop.f32.mrf.mxu0
        %v1695 = vadd.f32 0.0, %v1694
        %v1696 = vpop.f32.mrf.mxu0
        %v1697 = vadd.f32 0.0, %v1696
        %1698 = vmatprep.mubr.f32.mxu0 0.0
        %1699 = vmatmul.mubr.f32.gmra.mxu0 %v1374
        %v1700 = vpop.f32.mrf.mxu0
        %v1701 = vadd.f32 0.0, %v1700
        %v1702 = vpop.f32.mrf.mxu0
        %v1703 = vadd.f32 0.0, %v1702
        %1704 = vmatprep.mubr.f32.mxu0 0.0
        %1705 = vmatmul.mubr.f32.gmra.mxu0 %v1377
        %v1706 = vpop.f32.mrf.mxu0
        %v1707 = vadd.f32 0.0, %v1706
        %v1708 = vpop.f32.mrf.mxu0
        %v1709 = vadd.f32 0.0, %v1708
        %1710 = vdwg.mxu0
        %v1711 = vmul.f32 %v1446, 1.442695
        %v1712 = vpow.pop %v1711
        %v1713 = vmul.f32 %v1448, 1.442695
        %v1714 = vpow.pop %v1713
        %v1715 = vmul.f32 %v1529, 1.442695
        %v1716 = vpow.pop %v1715
        %v1717 = vmul.f32 %v1531, 1.442695
        %v1718 = vpow.pop %v1717
        %v1719 = vmul.f32 %v1612, 1.442695
        %v1720 = vpow.pop %v1719
        %v1721 = vmul.f32 %v1614, 1.442695
        %v1722 = vpow.pop %v1721
        %v1723 = vmul.f32 %v1695, 1.442695
        %v1724 = vpow.pop %v1723
        %v1725 = vmul.f32 %v1697, 1.442695
        %v1726 = vpow.pop %v1725
        %v1727 = vmul.f32 %v1452, 1.442695
        %v1728 = vpow.pop %v1727
        %v1729 = vmul.f32 %v1454, 1.442695
        %v1730 = vpow.pop %v1729
        %v1731 = vmul.f32 %v1535, 1.442695
        %v1732 = vpow.pop %v1731
        %v1733 = vmul.f32 %v1537, 1.442695
        %v1734 = vpow.pop %v1733
        %v1735 = vmul.f32 %v1618, 1.442695
        %v1736 = vpow.pop %v1735
        %v1737 = vmul.f32 %v1620, 1.442695
        %v1738 = vpow.pop %v1737
        %v1739 = vmul.f32 %v1701, 1.442695
        %v1740 = vpow.pop %v1739
        %v1741 = vmul.f32 %v1703, 1.442695
        %v1742 = vpow.pop %v1741
        %v1743 = vmul.f32 %v1458, 1.442695
        %v1744 = vpow.pop %v1743
        %v1745 = vmul.f32 %v1460, 1.442695
        %v1746 = vpow.pop %v1745
        %v1747 = vmul.f32 %v1541, 1.442695
        %v1748 = vpow.pop %v1747
        %v1749 = vmul.f32 %v1543, 1.442695
        %v1750 = vpow.pop %v1749
        %v1751 = vmul.f32 %v1624, 1.442695
        %v1752 = vpow.pop %v1751
        %v1753 = vmul.f32 %v1626, 1.442695
        %v1754 = vpow.pop %v1753
        %v1755 = vmul.f32 %v1707, 1.442695
        %v1756 = vpow.pop %v1755
        %v1757 = vmul.f32 %v1709, 1.442695
        %v1758 = vpow.pop %v1757
        %v1759 = vmul.f32 %v1303, %v1168
        %v1760 = vmul.f32 %v1304, %v1169
        %v1761 = vmul.f32 %v1305, %v1170
        %v1763 = vsel %vm1179, %v1759, 0
        %v1766 = vsel %vm1179, %v1760, 0
        %v1769 = vsel %vm1179, %v1761, 0
        %1771 = vmatprep.subr.mxu0 0.0
        %1772 = vmatpush1.msra.mxu0 0.0
        %1773 = vmatprep.subr.mxu0 0.0
        %1774 = vmatpush1.msra.mxu0 0.0
        %1775 = vmatprep.subr.mxu0 0.0
        %1776 = vmatpush1.msra.mxu0 0.0
        %1777 = vmatprep.subr.mxu0 0.0
        %1778 = vmatpush1.msra.mxu0 0.0
        %1779 = vmatprep.subr.mxu0 0.0
        %1780 = vmatpush1.msra.mxu0 0.0
        %1781 = vmatprep.subr.mxu0 0.0
        %1782 = vmatpush1.msra.mxu0 0.0
        %1783 = vmatprep.subr.mxu0 0.0
        %1784 = vmatpush1.msra.mxu0 0.0
        %1785 = vmatprep.subr.mxu0 0.0
        %1786 = vmatpush1.msra.mxu0 0.0
        %1787 = vmatprep.subr.mxu0 %v838
        %1788 = vmatpush1.msra.mxu0 %v837
        %1789 = vmatprep.subr.mxu0 %v830
        %1790 = vmatpush1.msra.mxu0 %v829
        %1791 = vmatprep.subr.mxu0 %v822
        %1792 = vmatpush1.msra.mxu0 %v821
        %1793 = vmatprep.subr.mxu0 %v814
        %1794 = vmatpush1.msra.mxu0 %v813
        %1795 = vmatprep.subr.mxu0 %v806
        %1796 = vmatpush1.msra.mxu0 %v805
        %1797 = vmatprep.subr.mxu0 %v798
        %1798 = vmatpush1.msra.mxu0 %v797
        %1799 = vmatprep.subr.mxu0 %v790
        %1800 = vmatpush1.msra.mxu0 %v789
        %1801 = vmatprep.subr.mxu0 %v782
        %1802 = vmatpush1.msra.mxu0 %v781
        %1803 = vmatprep.subr.mxu0 0.0
        %1804 = vmatpush2.msra.mxu0 0.0
        %1805 = vmatprep.subr.mxu0 0.0
        %1806 = vmatpush2.msra.mxu0 0.0
        %1807 = vmatprep.subr.mxu0 0.0
        %1808 = vmatpush2.msra.mxu0 0.0
        %1809 = vmatprep.subr.mxu0 0.0
        %1810 = vmatpush2.msra.mxu0 0.0
        %1811 = vmatprep.subr.mxu0 0.0
        %1812 = vmatpush2.msra.mxu0 0.0
        %1813 = vmatprep.subr.mxu0 0.0
        %1814 = vmatpush2.msra.mxu0 0.0
        %1815 = vmatprep.subr.mxu0 0.0
        %1816 = vmatpush2.msra.mxu0 0.0
        %1817 = vmatprep.subr.mxu0 0.0
        %1818 = vmatpush2.msra.mxu0 0.0
        %1819 = vmatprep.subr.mxu0 0.0
        %1820 = vmatpush2.msra.mxu0 0.0
        %1821 = vmatprep.subr.mxu0 0.0
        %1822 = vmatpush2.msra.mxu0 0.0
        %1823 = vmatprep.subr.mxu0 0.0
        %1824 = vmatpush2.msra.mxu0 0.0
        %1825 = vmatprep.subr.mxu0 0.0
        %1826 = vmatpush2.msra.mxu0 0.0
        %1827 = vmatprep.subr.mxu0 0.0
        %1828 = vmatpush2.msra.mxu0 0.0
        %1829 = vmatprep.subr.mxu0 0.0
        %1830 = vmatpush2.msra.mxu0 0.0
        %1831 = vmatprep.subr.mxu0 0.0
        %1832 = vmatpush2.msra.mxu0 0.0
        %1833 = vmatprep.subr.mxu0 0.0
        %1834 = vmatpush2.msra.mxu0 0.0
        %1835 = vmatprep.mubr.f32.mxu0 0.0
        %1836 = vmatmul.mubr.f32.gmra.mxu0 %v1763
        %v1837 = vpop.f32.mrf.mxu0
        %v1838 = vadd.f32 0.0, %v1837
        %v1839 = vpop.f32.mrf.mxu0
        %v1840 = vadd.f32 0.0, %v1839
        %1841 = vmatprep.mubr.f32.mxu0 0.0
        %1842 = vmatmul.mubr.f32.gmra.mxu0 %v1766
        %v1843 = vpop.f32.mrf.mxu0
        %v1844 = vadd.f32 0.0, %v1843
        %v1845 = vpop.f32.mrf.mxu0
        %v1846 = vadd.f32 0.0, %v1845
        %1847 = vmatprep.mubr.f32.mxu0 0.0
        %1848 = vmatmul.mubr.f32.gmra.mxu0 %v1769
        %v1849 = vpop.f32.mrf.mxu0
        %v1850 = vadd.f32 0.0, %v1849
        %v1851 = vpop.f32.mrf.mxu0
        %v1852 = vadd.f32 0.0, %v1851
        %1853 = vdwg.mxu0
        %1854 = vmatprep.subr.mxu0 0.0
        %1855 = vmatpush1.msra.mxu0 0.0
        %1856 = vmatprep.subr.mxu0 0.0
        %1857 = vmatpush1.msra.mxu0 0.0
        %1858 = vmatprep.subr.mxu0 0.0
        %1859 = vmatpush1.msra.mxu0 0.0
        %1860 = vmatprep.subr.mxu0 0.0
        %1861 = vmatpush1.msra.mxu0 0.0
        %1862 = vmatprep.subr.mxu0 0.0
        %1863 = vmatpush1.msra.mxu0 0.0
        %1864 = vmatprep.subr.mxu0 0.0
        %1865 = vmatpush1.msra.mxu0 0.0
        %1866 = vmatprep.subr.mxu0 0.0
        %1867 = vmatpush1.msra.mxu0 0.0
        %1868 = vmatprep.subr.mxu0 0.0
        %1869 = vmatpush1.msra.mxu0 0.0
        %1870 = vmatprep.subr.mxu0 %v840
        %1871 = vmatpush1.msra.mxu0 %v839
        %1872 = vmatprep.subr.mxu0 %v832
        %1873 = vmatpush1.msra.mxu0 %v831
        %1874 = vmatprep.subr.mxu0 %v824
        %1875 = vmatpush1.msra.mxu0 %v823
        %1876 = vmatprep.subr.mxu0 %v816
        %1877 = vmatpush1.msra.mxu0 %v815
        %1878 = vmatprep.subr.mxu0 %v808
        %1879 = vmatpush1.msra.mxu0 %v807
        %1880 = vmatprep.subr.mxu0 %v800
        %1881 = vmatpush1.msra.mxu0 %v799
        %1882 = vmatprep.subr.mxu0 %v792
        %1883 = vmatpush1.msra.mxu0 %v791
        %1884 = vmatprep.subr.mxu0 %v784
        %1885 = vmatpush1.msra.mxu0 %v783
        %1886 = vmatprep.subr.mxu0 0.0
        %1887 = vmatpush2.msra.mxu0 0.0
        %1888 = vmatprep.subr.mxu0 0.0
        %1889 = vmatpush2.msra.mxu0 0.0
        %1890 = vmatprep.subr.mxu0 0.0
        %1891 = vmatpush2.msra.mxu0 0.0
        %1892 = vmatprep.subr.mxu0 0.0
        %1893 = vmatpush2.msra.mxu0 0.0
        %1894 = vmatprep.subr.mxu0 0.0
        %1895 = vmatpush2.msra.mxu0 0.0
        %1896 = vmatprep.subr.mxu0 0.0
        %1897 = vmatpush2.msra.mxu0 0.0
        %1898 = vmatprep.subr.mxu0 0.0
        %1899 = vmatpush2.msra.mxu0 0.0
        %1900 = vmatprep.subr.mxu0 0.0
        %1901 = vmatpush2.msra.mxu0 0.0
        %1902 = vmatprep.subr.mxu0 0.0
        %1903 = vmatpush2.msra.mxu0 0.0
        %1904 = vmatprep.subr.mxu0 0.0
        %1905 = vmatpush2.msra.mxu0 0.0
        %1906 = vmatprep.subr.mxu0 0.0
        %1907 = vmatpush2.msra.mxu0 0.0
        %1908 = vmatprep.subr.mxu0 0.0
        %1909 = vmatpush2.msra.mxu0 0.0
        %1910 = vmatprep.subr.mxu0 0.0
        %1911 = vmatpush2.msra.mxu0 0.0
        %1912 = vmatprep.subr.mxu0 0.0
        %1913 = vmatpush2.msra.mxu0 0.0
        %1914 = vmatprep.subr.mxu0 0.0
        %1915 = vmatpush2.msra.mxu0 0.0
        %1916 = vmatprep.subr.mxu0 0.0
        %1917 = vmatpush2.msra.mxu0 0.0
        %1918 = vmatprep.mubr.f32.mxu0 0.0
        %1919 = vmatmul.mubr.f32.gmra.mxu0 %v1763
        %v1920 = vpop.f32.mrf.mxu0
        %v1921 = vadd.f32 0.0, %v1920
        %v1922 = vpop.f32.mrf.mxu0
        %v1923 = vadd.f32 0.0, %v1922
        %1924 = vmatprep.mubr.f32.mxu0 0.0
        %1925 = vmatmul.mubr.f32.gmra.mxu0 %v1766
        %v1926 = vpop.f32.mrf.mxu0
        %v1927 = vadd.f32 0.0, %v1926
        %v1928 = vpop.f32.mrf.mxu0
        %v1929 = vadd.f32 0.0, %v1928
        %1930 = vmatprep.mubr.f32.mxu0 0.0
        %1931 = vmatmul.mubr.f32.gmra.mxu0 %v1769
        %v1932 = vpop.f32.mrf.mxu0
        %v1933 = vadd.f32 0.0, %v1932
        %v1934 = vpop.f32.mrf.mxu0
        %v1935 = vadd.f32 0.0, %v1934
        %1936 = vdwg.mxu0
        %1937 = vmatprep.subr.mxu0 0.0
        %1938 = vmatpush1.msra.mxu0 0.0
        %1939 = vmatprep.subr.mxu0 0.0
        %1940 = vmatpush1.msra.mxu0 0.0
        %1941 = vmatprep.subr.mxu0 0.0
        %1942 = vmatpush1.msra.mxu0 0.0
        %1943 = vmatprep.subr.mxu0 0.0
        %1944 = vmatpush1.msra.mxu0 0.0
        %1945 = vmatprep.subr.mxu0 0.0
        %1946 = vmatpush1.msra.mxu0 0.0
        %1947 = vmatprep.subr.mxu0 0.0
        %1948 = vmatpush1.msra.mxu0 0.0
        %1949 = vmatprep.subr.mxu0 0.0
        %1950 = vmatpush1.msra.mxu0 0.0
        %1951 = vmatprep.subr.mxu0 0.0
        %1952 = vmatpush1.msra.mxu0 0.0
        %1953 = vmatprep.subr.mxu0 %v842
        %1954 = vmatpush1.msra.mxu0 %v841
        %1955 = vmatprep.subr.mxu0 %v834
        %1956 = vmatpush1.msra.mxu0 %v833
        %1957 = vmatprep.subr.mxu0 %v826
        %1958 = vmatpush1.msra.mxu0 %v825
        %1959 = vmatprep.subr.mxu0 %v818
        %1960 = vmatpush1.msra.mxu0 %v817
        %1961 = vmatprep.subr.mxu0 %v810
        %1962 = vmatpush1.msra.mxu0 %v809
        %1963 = vmatprep.subr.mxu0 %v802
        %1964 = vmatpush1.msra.mxu0 %v801
        %1965 = vmatprep.subr.mxu0 %v794
        %1966 = vmatpush1.msra.mxu0 %v793
        %1967 = vmatprep.subr.mxu0 %v786
        %1968 = vmatpush1.msra.mxu0 %v785
        %1969 = vmatprep.subr.mxu0 0.0
        %1970 = vmatpush2.msra.mxu0 0.0
        %1971 = vmatprep.subr.mxu0 0.0
        %1972 = vmatpush2.msra.mxu0 0.0
        %1973 = vmatprep.subr.mxu0 0.0
        %1974 = vmatpush2.msra.mxu0 0.0
        %1975 = vmatprep.subr.mxu0 0.0
        %1976 = vmatpush2.msra.mxu0 0.0
        %1977 = vmatprep.subr.mxu0 0.0
        %1978 = vmatpush2.msra.mxu0 0.0
        %1979 = vmatprep.subr.mxu0 0.0
        %1980 = vmatpush2.msra.mxu0 0.0
        %1981 = vmatprep.subr.mxu0 0.0
        %1982 = vmatpush2.msra.mxu0 0.0
        %1983 = vmatprep.subr.mxu0 0.0
        %1984 = vmatpush2.msra.mxu0 0.0
        %1985 = vmatprep.subr.mxu0 0.0
        %1986 = vmatpush2.msra.mxu0 0.0
        %1987 = vmatprep.subr.mxu0 0.0
        %1988 = vmatpush2.msra.mxu0 0.0
        %1989 = vmatprep.subr.mxu0 0.0
        %1990 = vmatpush2.msra.mxu0 0.0
        %1991 = vmatprep.subr.mxu0 0.0
        %1992 = vmatpush2.msra.mxu0 0.0
        %1993 = vmatprep.subr.mxu0 0.0
        %1994 = vmatpush2.msra.mxu0 0.0
        %1995 = vmatprep.subr.mxu0 0.0
        %1996 = vmatpush2.msra.mxu0 0.0
        %1997 = vmatprep.subr.mxu0 0.0
        %1998 = vmatpush2.msra.mxu0 0.0
        %1999 = vmatprep.subr.mxu0 0.0
        %2000 = vmatpush2.msra.mxu0 0.0
        %2001 = vmatprep.mubr.f32.mxu0 0.0
        %2002 = vmatmul.mubr.f32.gmra.mxu0 %v1763
        %v2003 = vpop.f32.mrf.mxu0
        %v2004 = vadd.f32 0.0, %v2003
        %v2005 = vpop.f32.mrf.mxu0
        %v2006 = vadd.f32 0.0, %v2005
        %2007 = vmatprep.mubr.f32.mxu0 0.0
        %2008 = vmatmul.mubr.f32.gmra.mxu0 %v1766
        %v2009 = vpop.f32.mrf.mxu0
        %v2010 = vadd.f32 0.0, %v2009
        %v2011 = vpop.f32.mrf.mxu0
        %v2012 = vadd.f32 0.0, %v2011
        %2013 = vmatprep.mubr.f32.mxu0 0.0
        %2014 = vmatmul.mubr.f32.gmra.mxu0 %v1769
        %v2015 = vpop.f32.mrf.mxu0
        %v2016 = vadd.f32 0.0, %v2015
        %v2017 = vpop.f32.mrf.mxu0
        %v2018 = vadd.f32 0.0, %v2017
        %2019 = vdwg.mxu0
        %2020 = vmatprep.subr.mxu0 0.0
        %2021 = vmatpush1.msra.mxu0 0.0
        %2022 = vmatprep.subr.mxu0 0.0
        %2023 = vmatpush1.msra.mxu0 0.0
        %2024 = vmatprep.subr.mxu0 0.0
        %2025 = vmatpush1.msra.mxu0 0.0
        %2026 = vmatprep.subr.mxu0 0.0
        %2027 = vmatpush1.msra.mxu0 0.0
        %2028 = vmatprep.subr.mxu0 0.0
        %2029 = vmatpush1.msra.mxu0 0.0
        %2030 = vmatprep.subr.mxu0 0.0
        %2031 = vmatpush1.msra.mxu0 0.0
        %2032 = vmatprep.subr.mxu0 0.0
        %2033 = vmatpush1.msra.mxu0 0.0
        %2034 = vmatprep.subr.mxu0 0.0
        %2035 = vmatpush1.msra.mxu0 0.0
        %2036 = vmatprep.subr.mxu0 %v844
        %2037 = vmatpush1.msra.mxu0 %v843
        %2038 = vmatprep.subr.mxu0 %v836
        %2039 = vmatpush1.msra.mxu0 %v835
        %2040 = vmatprep.subr.mxu0 %v828
        %2041 = vmatpush1.msra.mxu0 %v827
        %2042 = vmatprep.subr.mxu0 %v820
        %2043 = vmatpush1.msra.mxu0 %v819
        %2044 = vmatprep.subr.mxu0 %v812
        %2045 = vmatpush1.msra.mxu0 %v811
        %2046 = vmatprep.subr.mxu0 %v804
        %2047 = vmatpush1.msra.mxu0 %v803
        %2048 = vmatprep.subr.mxu0 %v796
        %2049 = vmatpush1.msra.mxu0 %v795
        %2050 = vmatprep.subr.mxu0 %v788
        %2051 = vmatpush1.msra.mxu0 %v787
        %2052 = vmatprep.subr.mxu0 0.0
        %2053 = vmatpush2.msra.mxu0 0.0
        %2054 = vmatprep.subr.mxu0 0.0
        %2055 = vmatpush2.msra.mxu0 0.0
        %2056 = vmatprep.subr.mxu0 0.0
        %2057 = vmatpush2.msra.mxu0 0.0
        %2058 = vmatprep.subr.mxu0 0.0
        %2059 = vmatpush2.msra.mxu0 0.0
        %2060 = vmatprep.subr.mxu0 0.0
        %2061 = vmatpush2.msra.mxu0 0.0
        %2062 = vmatprep.subr.mxu0 0.0
        %2063 = vmatpush2.msra.mxu0 0.0
        %2064 = vmatprep.subr.mxu0 0.0
        %2065 = vmatpush2.msra.mxu0 0.0
        %2066 = vmatprep.subr.mxu0 0.0
        %2067 = vmatpush2.msra.mxu0 0.0
        %2068 = vmatprep.subr.mxu0 0.0
        %2069 = vmatpush2.msra.mxu0 0.0
        %2070 = vmatprep.subr.mxu0 0.0
        %2071 = vmatpush2.msra.mxu0 0.0
        %2072 = vmatprep.subr.mxu0 0.0
        %2073 = vmatpush2.msra.mxu0 0.0
        %2074 = vmatprep.subr.mxu0 0.0
        %2075 = vmatpush2.msra.mxu0 0.0
        %2076 = vmatprep.subr.mxu0 0.0
        %2077 = vmatpush2.msra.mxu0 0.0
        %2078 = vmatprep.subr.mxu0 0.0
        %2079 = vmatpush2.msra.mxu0 0.0
        %2080 = vmatprep.subr.mxu0 0.0
        %2081 = vmatpush2.msra.mxu0 0.0
        %2082 = vmatprep.subr.mxu0 0.0
        %2083 = vmatpush2.msra.mxu0 0.0
        %2084 = vmatprep.mubr.f32.mxu0 0.0
        %2085 = vmatmul.mubr.f32.gmra.mxu0 %v1763
        %v2086 = vpop.f32.mrf.mxu0
        %v2087 = vadd.f32 0.0, %v2086
        %v2088 = vpop.f32.mrf.mxu0
        %v2089 = vadd.f32 0.0, %v2088
        %2090 = vmatprep.mubr.f32.mxu0 0.0
        %2091 = vmatmul.mubr.f32.gmra.mxu0 %v1766
        %v2092 = vpop.f32.mrf.mxu0
        %v2093 = vadd.f32 0.0, %v2092
        %v2094 = vpop.f32.mrf.mxu0
        %v2095 = vadd.f32 0.0, %v2094
        %2096 = vmatprep.mubr.f32.mxu0 0.0
        %2097 = vmatmul.mubr.f32.gmra.mxu0 %v1769
        %v2098 = vpop.f32.mrf.mxu0
        %v2099 = vadd.f32 0.0, %v2098
        %v2100 = vpop.f32.mrf.mxu0
        %v2101 = vadd.f32 0.0, %v2100
        %2102 = vdwg.mxu0
        %2106 = vrot.lane.b32.xlu0 %v1256, 64
        %v2107 = vpop.permute.xlu0 %2106
        %2108 = vrot.lane.b32.xlu0 %v1261, 64
        %v2109 = vpop.permute.xlu0 %2108
        %2110 = vrot.lane.b32.xlu0 %v1266, 64
        %v2111 = vpop.permute.xlu0 %2110
        %v2112 = vsel %vm854, %v2107, 0
        %v2114 = vsel %vm854, %v2109, 0
        %v2116 = vsel %vm854, %v2111, 0
        %2118 = vmatprep.subr.mxu0 0.0
        %2119 = vmatpush1.msra.mxu0 0.0
        %2120 = vmatprep.subr.mxu0 0.0
        %2121 = vmatpush1.msra.mxu0 0.0
        %2122 = vmatprep.subr.mxu0 0.0
        %2123 = vmatpush1.msra.mxu0 0.0
        %2124 = vmatprep.subr.mxu0 0.0
        %2125 = vmatpush1.msra.mxu0 0.0
        %2126 = vmatprep.subr.mxu0 0.0
        %2127 = vmatpush1.msra.mxu0 0.0
        %2128 = vmatprep.subr.mxu0 0.0
        %2129 = vmatpush1.msra.mxu0 0.0
        %2130 = vmatprep.subr.mxu0 0.0
        %2131 = vmatpush1.msra.mxu0 0.0
        %2132 = vmatprep.subr.mxu0 0.0
        %2133 = vmatpush1.msra.mxu0 0.0
        %2134 = vmatprep.subr.mxu0 0.0
        %2135 = vmatpush1.msra.mxu0 0.0
        %2136 = vmatprep.subr.mxu0 0.0
        %2137 = vmatpush1.msra.mxu0 0.0
        %2138 = vmatprep.subr.mxu0 0.0
        %2139 = vmatpush1.msra.mxu0 0.0
        %2140 = vmatprep.subr.mxu0 0.0
        %2141 = vmatpush1.msra.mxu0 0.0
        %2142 = vmatprep.subr.mxu0 0.0
        %2143 = vmatpush1.msra.mxu0 0.0
        %2144 = vmatprep.subr.mxu0 0.0
        %2145 = vmatpush1.msra.mxu0 0.0
        %2146 = vmatprep.subr.mxu0 %v646
        %2147 = vmatpush1.msra.mxu0 %v645
        %2148 = vmatprep.subr.mxu0 %v638
        %2149 = vmatpush1.msra.mxu0 %v637
        %2150 = vmatprep.subr.mxu0 0.0
        %2151 = vmatpush2.msra.mxu0 0.0
        %2152 = vmatprep.subr.mxu0 0.0
        %2153 = vmatpush2.msra.mxu0 0.0
        %2154 = vmatprep.subr.mxu0 0.0
        %2155 = vmatpush2.msra.mxu0 0.0
        %2156 = vmatprep.subr.mxu0 0.0
        %2157 = vmatpush2.msra.mxu0 0.0
        %2158 = vmatprep.subr.mxu0 0.0
        %2159 = vmatpush2.msra.mxu0 0.0
        %2160 = vmatprep.subr.mxu0 0.0
        %2161 = vmatpush2.msra.mxu0 0.0
        %2162 = vmatprep.subr.mxu0 0.0
        %2163 = vmatpush2.msra.mxu0 0.0
        %2164 = vmatprep.subr.mxu0 0.0
        %2165 = vmatpush2.msra.mxu0 0.0
        %2166 = vmatprep.subr.mxu0 0.0
        %2167 = vmatpush2.msra.mxu0 0.0
        %2168 = vmatprep.subr.mxu0 0.0
        %2169 = vmatpush2.msra.mxu0 0.0
        %2170 = vmatprep.subr.mxu0 0.0
        %2171 = vmatpush2.msra.mxu0 0.0
        %2172 = vmatprep.subr.mxu0 0.0
        %2173 = vmatpush2.msra.mxu0 0.0
        %2174 = vmatprep.subr.mxu0 0.0
        %2175 = vmatpush2.msra.mxu0 0.0
        %2176 = vmatprep.subr.mxu0 0.0
        %2177 = vmatpush2.msra.mxu0 0.0
        %2178 = vmatprep.subr.mxu0 0.0
        %2179 = vmatpush2.msra.mxu0 0.0
        %2180 = vmatprep.subr.mxu0 0.0
        %2181 = vmatpush2.msra.mxu0 0.0
        %2182 = vmatprep.mubr.f32.mxu0 0.0
        %2183 = vmatmul.mubr.f32.gmra.mxu0 %v2112
        %v2184 = vpop.f32.mrf.mxu0
        %v2185 = vadd.f32 0.0, %v2184
        %v2186 = vpop.f32.mrf.mxu0
        %v2187 = vadd.f32 0.0, %v2186
        %2188 = vmatprep.mubr.f32.mxu0 0.0
        %2189 = vmatmul.mubr.f32.gmra.mxu0 %v2114
        %v2190 = vpop.f32.mrf.mxu0
        %v2191 = vadd.f32 0.0, %v2190
        %v2192 = vpop.f32.mrf.mxu0
        %v2193 = vadd.f32 0.0, %v2192
        %2194 = vmatprep.mubr.f32.mxu0 0.0
        %2195 = vmatmul.mubr.f32.gmra.mxu0 %v2116
        %v2196 = vpop.f32.mrf.mxu0
        %v2197 = vadd.f32 0.0, %v2196
        %v2198 = vpop.f32.mrf.mxu0
        %v2199 = vadd.f32 0.0, %v2198
        %2200 = vdwg.mxu0
        %2201 = vmatprep.subr.mxu0 0.0
        %2202 = vmatpush1.msra.mxu0 0.0
        %2203 = vmatprep.subr.mxu0 0.0
        %2204 = vmatpush1.msra.mxu0 0.0
        %2205 = vmatprep.subr.mxu0 0.0
        %2206 = vmatpush1.msra.mxu0 0.0
        %2207 = vmatprep.subr.mxu0 0.0
        %2208 = vmatpush1.msra.mxu0 0.0
        %2209 = vmatprep.subr.mxu0 0.0
        %2210 = vmatpush1.msra.mxu0 0.0
        %2211 = vmatprep.subr.mxu0 0.0
        %2212 = vmatpush1.msra.mxu0 0.0
        %2213 = vmatprep.subr.mxu0 0.0
        %2214 = vmatpush1.msra.mxu0 0.0
        %2215 = vmatprep.subr.mxu0 0.0
        %2216 = vmatpush1.msra.mxu0 0.0
        %2217 = vmatprep.subr.mxu0 0.0
        %2218 = vmatpush1.msra.mxu0 0.0
        %2219 = vmatprep.subr.mxu0 0.0
        %2220 = vmatpush1.msra.mxu0 0.0
        %2221 = vmatprep.subr.mxu0 0.0
        %2222 = vmatpush1.msra.mxu0 0.0
        %2223 = vmatprep.subr.mxu0 0.0
        %2224 = vmatpush1.msra.mxu0 0.0
        %2225 = vmatprep.subr.mxu0 0.0
        %2226 = vmatpush1.msra.mxu0 0.0
        %2227 = vmatprep.subr.mxu0 0.0
        %2228 = vmatpush1.msra.mxu0 0.0
        %2229 = vmatprep.subr.mxu0 %v648
        %2230 = vmatpush1.msra.mxu0 %v647
        %2231 = vmatprep.subr.mxu0 %v640
        %2232 = vmatpush1.msra.mxu0 %v639
        %2233 = vmatprep.subr.mxu0 0.0
        %2234 = vmatpush2.msra.mxu0 0.0
        %2235 = vmatprep.subr.mxu0 0.0
        %2236 = vmatpush2.msra.mxu0 0.0
        %2237 = vmatprep.subr.mxu0 0.0
        %2238 = vmatpush2.msra.mxu0 0.0
        %2239 = vmatprep.subr.mxu0 0.0
        %2240 = vmatpush2.msra.mxu0 0.0
        %2241 = vmatprep.subr.mxu0 0.0
        %2242 = vmatpush2.msra.mxu0 0.0
        %2243 = vmatprep.subr.mxu0 0.0
        %2244 = vmatpush2.msra.mxu0 0.0
        %2245 = vmatprep.subr.mxu0 0.0
        %2246 = vmatpush2.msra.mxu0 0.0
        %2247 = vmatprep.subr.mxu0 0.0
        %2248 = vmatpush2.msra.mxu0 0.0
        %2249 = vmatprep.subr.mxu0 0.0
        %2250 = vmatpush2.msra.mxu0 0.0
        %2251 = vmatprep.subr.mxu0 0.0
        %2252 = vmatpush2.msra.mxu0 0.0
        %2253 = vmatprep.subr.mxu0 0.0
        %2254 = vmatpush2.msra.mxu0 0.0
        %2255 = vmatprep.subr.mxu0 0.0
        %2256 = vmatpush2.msra.mxu0 0.0
        %2257 = vmatprep.subr.mxu0 0.0
        %2258 = vmatpush2.msra.mxu0 0.0
        %2259 = vmatprep.subr.mxu0 0.0
        %2260 = vmatpush2.msra.mxu0 0.0
        %2261 = vmatprep.subr.mxu0 0.0
        %2262 = vmatpush2.msra.mxu0 0.0
        %2263 = vmatprep.subr.mxu0 0.0
        %2264 = vmatpush2.msra.mxu0 0.0
        %2265 = vmatprep.mubr.f32.mxu0 0.0
        %2266 = vmatmul.mubr.f32.gmra.mxu0 %v2112
        %v2267 = vpop.f32.mrf.mxu0
        %v2268 = vadd.f32 0.0, %v2267
        %v2269 = vpop.f32.mrf.mxu0
        %v2270 = vadd.f32 0.0, %v2269
        %2271 = vmatprep.mubr.f32.mxu0 0.0
        %2272 = vmatmul.mubr.f32.gmra.mxu0 %v2114
        %v2273 = vpop.f32.mrf.mxu0
        %v2274 = vadd.f32 0.0, %v2273
        %v2275 = vpop.f32.mrf.mxu0
        %v2276 = vadd.f32 0.0, %v2275
        %2277 = vmatprep.mubr.f32.mxu0 0.0
        %2278 = vmatmul.mubr.f32.gmra.mxu0 %v2116
        %v2279 = vpop.f32.mrf.mxu0
        %v2280 = vadd.f32 0.0, %v2279
        %v2281 = vpop.f32.mrf.mxu0
        %v2282 = vadd.f32 0.0, %v2281
        %2283 = vdwg.mxu0
        %2284 = vmatprep.subr.mxu0 0.0
        %2285 = vmatpush1.msra.mxu0 0.0
        %2286 = vmatprep.subr.mxu0 0.0
        %2287 = vmatpush1.msra.mxu0 0.0
        %2288 = vmatprep.subr.mxu0 0.0
        %2289 = vmatpush1.msra.mxu0 0.0
        %2290 = vmatprep.subr.mxu0 0.0
        %2291 = vmatpush1.msra.mxu0 0.0
        %2292 = vmatprep.subr.mxu0 0.0
        %2293 = vmatpush1.msra.mxu0 0.0
        %2294 = vmatprep.subr.mxu0 0.0
        %2295 = vmatpush1.msra.mxu0 0.0
        %2296 = vmatprep.subr.mxu0 0.0
        %2297 = vmatpush1.msra.mxu0 0.0
        %2298 = vmatprep.subr.mxu0 0.0
        %2299 = vmatpush1.msra.mxu0 0.0
        %2300 = vmatprep.subr.mxu0 0.0
        %2301 = vmatpush1.msra.mxu0 0.0
        %2302 = vmatprep.subr.mxu0 0.0
        %2303 = vmatpush1.msra.mxu0 0.0
        %2304 = vmatprep.subr.mxu0 0.0
        %2305 = vmatpush1.msra.mxu0 0.0
        %2306 = vmatprep.subr.mxu0 0.0
        %2307 = vmatpush1.msra.mxu0 0.0
        %2308 = vmatprep.subr.mxu0 0.0
        %2309 = vmatpush1.msra.mxu0 0.0
        %2310 = vmatprep.subr.mxu0 0.0
        %2311 = vmatpush1.msra.mxu0 0.0
        %2312 = vmatprep.subr.mxu0 %v650
        %2313 = vmatpush1.msra.mxu0 %v649
        %2314 = vmatprep.subr.mxu0 %v642
        %2315 = vmatpush1.msra.mxu0 %v641
        %2316 = vmatprep.subr.mxu0 0.0
        %2317 = vmatpush2.msra.mxu0 0.0
        %2318 = vmatprep.subr.mxu0 0.0
        %2319 = vmatpush2.msra.mxu0 0.0
        %2320 = vmatprep.subr.mxu0 0.0
        %2321 = vmatpush2.msra.mxu0 0.0
        %2322 = vmatprep.subr.mxu0 0.0
        %2323 = vmatpush2.msra.mxu0 0.0
        %2324 = vmatprep.subr.mxu0 0.0
        %2325 = vmatpush2.msra.mxu0 0.0
        %2326 = vmatprep.subr.mxu0 0.0
        %2327 = vmatpush2.msra.mxu0 0.0
        %2328 = vmatprep.subr.mxu0 0.0
        %2329 = vmatpush2.msra.mxu0 0.0
        %2330 = vmatprep.subr.mxu0 0.0
        %2331 = vmatpush2.msra.mxu0 0.0
        %2332 = vmatprep.subr.mxu0 0.0
        %2333 = vmatpush2.msra.mxu0 0.0
        %2334 = vmatprep.subr.mxu0 0.0
        %2335 = vmatpush2.msra.mxu0 0.0
        %2336 = vmatprep.subr.mxu0 0.0
        %2337 = vmatpush2.msra.mxu0 0.0
        %2338 = vmatprep.subr.mxu0 0.0
        %2339 = vmatpush2.msra.mxu0 0.0
        %2340 = vmatprep.subr.mxu0 0.0
        %2341 = vmatpush2.msra.mxu0 0.0
        %2342 = vmatprep.subr.mxu0 0.0
        %2343 = vmatpush2.msra.mxu0 0.0
        %2344 = vmatprep.subr.mxu0 0.0
        %2345 = vmatpush2.msra.mxu0 0.0
        %2346 = vmatprep.subr.mxu0 0.0
        %2347 = vmatpush2.msra.mxu0 0.0
        %2348 = vmatprep.mubr.f32.mxu0 0.0
        %2349 = vmatmul.mubr.f32.gmra.mxu0 %v2112
        %v2350 = vpop.f32.mrf.mxu0
        %v2351 = vadd.f32 0.0, %v2350
        %v2352 = vpop.f32.mrf.mxu0
        %v2353 = vadd.f32 0.0, %v2352
        %2354 = vmatprep.mubr.f32.mxu0 0.0
        %2355 = vmatmul.mubr.f32.gmra.mxu0 %v2114
        %v2356 = vpop.f32.mrf.mxu0
        %v2357 = vadd.f32 0.0, %v2356
        %v2358 = vpop.f32.mrf.mxu0
        %v2359 = vadd.f32 0.0, %v2358
        %2360 = vmatprep.mubr.f32.mxu0 0.0
        %2361 = vmatmul.mubr.f32.gmra.mxu0 %v2116
        %v2362 = vpop.f32.mrf.mxu0
        %v2363 = vadd.f32 0.0, %v2362
        %v2364 = vpop.f32.mrf.mxu0
        %v2365 = vadd.f32 0.0, %v2364
        %2366 = vdwg.mxu0
        %2367 = vmatprep.subr.mxu0 0.0
        %2368 = vmatpush1.msra.mxu0 0.0
        %2369 = vmatprep.subr.mxu0 0.0
        %2370 = vmatpush1.msra.mxu0 0.0
        %2371 = vmatprep.subr.mxu0 0.0
        %2372 = vmatpush1.msra.mxu0 0.0
        %2373 = vmatprep.subr.mxu0 0.0
        %2374 = vmatpush1.msra.mxu0 0.0
        %2375 = vmatprep.subr.mxu0 0.0
        %2376 = vmatpush1.msra.mxu0 0.0
        %2377 = vmatprep.subr.mxu0 0.0
        %2378 = vmatpush1.msra.mxu0 0.0
        %2379 = vmatprep.subr.mxu0 0.0
        %2380 = vmatpush1.msra.mxu0 0.0
        %2381 = vmatprep.subr.mxu0 0.0
        %2382 = vmatpush1.msra.mxu0 0.0
        %2383 = vmatprep.subr.mxu0 0.0
        %2384 = vmatpush1.msra.mxu0 0.0
        %2385 = vmatprep.subr.mxu0 0.0
        %2386 = vmatpush1.msra.mxu0 0.0
        %2387 = vmatprep.subr.mxu0 0.0
        %2388 = vmatpush1.msra.mxu0 0.0
        %2389 = vmatprep.subr.mxu0 0.0
        %2390 = vmatpush1.msra.mxu0 0.0
        %2391 = vmatprep.subr.mxu0 0.0
        %2392 = vmatpush1.msra.mxu0 0.0
        %2393 = vmatprep.subr.mxu0 0.0
        %2394 = vmatpush1.msra.mxu0 0.0
        %2395 = vmatprep.subr.mxu0 %v652
        %2396 = vmatpush1.msra.mxu0 %v651
        %2397 = vmatprep.subr.mxu0 %v644
        %2398 = vmatpush1.msra.mxu0 %v643
        %2399 = vmatprep.subr.mxu0 0.0
        %2400 = vmatpush2.msra.mxu0 0.0
        %2401 = vmatprep.subr.mxu0 0.0
        %2402 = vmatpush2.msra.mxu0 0.0
        %2403 = vmatprep.subr.mxu0 0.0
        %2404 = vmatpush2.msra.mxu0 0.0
        %2405 = vmatprep.subr.mxu0 0.0
        %2406 = vmatpush2.msra.mxu0 0.0
        %2407 = vmatprep.subr.mxu0 0.0
        %2408 = vmatpush2.msra.mxu0 0.0
        %2409 = vmatprep.subr.mxu0 0.0
        %2410 = vmatpush2.msra.mxu0 0.0
        %2411 = vmatprep.subr.mxu0 0.0
        %2412 = vmatpush2.msra.mxu0 0.0
        %2413 = vmatprep.subr.mxu0 0.0
        %2414 = vmatpush2.msra.mxu0 0.0
        %2415 = vmatprep.subr.mxu0 0.0
        %2416 = vmatpush2.msra.mxu0 0.0
        %2417 = vmatprep.subr.mxu0 0.0
        %2418 = vmatpush2.msra.mxu0 0.0
        %2419 = vmatprep.subr.mxu0 0.0
        %2420 = vmatpush2.msra.mxu0 0.0
        %2421 = vmatprep.subr.mxu0 0.0
        %2422 = vmatpush2.msra.mxu0 0.0
        %2423 = vmatprep.subr.mxu0 0.0
        %2424 = vmatpush2.msra.mxu0 0.0
        %2425 = vmatprep.subr.mxu0 0.0
        %2426 = vmatpush2.msra.mxu0 0.0
        %2427 = vmatprep.subr.mxu0 0.0
        %2428 = vmatpush2.msra.mxu0 0.0
        %2429 = vmatprep.subr.mxu0 0.0
        %2430 = vmatpush2.msra.mxu0 0.0
        %2431 = vmatprep.mubr.f32.mxu0 0.0
        %2432 = vmatmul.mubr.f32.gmra.mxu0 %v2112
        %v2433 = vpop.f32.mrf.mxu0
        %v2434 = vadd.f32 0.0, %v2433
        %v2435 = vpop.f32.mrf.mxu0
        %v2436 = vadd.f32 0.0, %v2435
        %2437 = vmatprep.mubr.f32.mxu0 0.0
        %2438 = vmatmul.mubr.f32.gmra.mxu0 %v2114
        %v2439 = vpop.f32.mrf.mxu0
        %v2440 = vadd.f32 0.0, %v2439
        %v2441 = vpop.f32.mrf.mxu0
        %v2442 = vadd.f32 0.0, %v2441
        %2443 = vmatprep.mubr.f32.mxu0 0.0
        %2444 = vmatmul.mubr.f32.gmra.mxu0 %v2116
        %v2445 = vpop.f32.mrf.mxu0
        %v2446 = vadd.f32 0.0, %v2445
        %v2447 = vpop.f32.mrf.mxu0
        %v2448 = vadd.f32 0.0, %v2447
        %2449 = vdwg.mxu0
        %v2450 = vmul.f32 %v1838, %v2185
        %v2451 = vmul.f32 %v1840, %v2187
        %v2452 = vmul.f32 %v1921, %v2268
        %v2453 = vmul.f32 %v1923, %v2270
        %v2454 = vmul.f32 %v2004, %v2351
        %v2455 = vmul.f32 %v2006, %v2353
        %v2456 = vmul.f32 %v2087, %v2434
        %v2457 = vmul.f32 %v2089, %v2436
        %v2458 = vmul.f32 %v1844, %v2191
        %v2459 = vmul.f32 %v1846, %v2193
        %v2460 = vmul.f32 %v1927, %v2274
        %v2461 = vmul.f32 %v1929, %v2276
        %v2462 = vmul.f32 %v2010, %v2357
        %v2463 = vmul.f32 %v2012, %v2359
        %v2464 = vmul.f32 %v2093, %v2440
        %v2465 = vmul.f32 %v2095, %v2442
        %v2466 = vmul.f32 %v1850, %v2197
        %v2467 = vmul.f32 %v1852, %v2199
        %v2468 = vmul.f32 %v1933, %v2280
        %v2469 = vmul.f32 %v1935, %v2282
        %v2470 = vmul.f32 %v2016, %v2363
        %v2471 = vmul.f32 %v2018, %v2365
        %v2472 = vmul.f32 %v2099, %v2446
        %v2473 = vmul.f32 %v2101, %v2448
        %v2498 = vrot.slane %v1712, 7
        %v2499 = vrot.slane %v1714, 7
        %v2500 = vrot.slane %v1716, 7
        %v2501 = vrot.slane %v1718, 7
        %v2502 = vrot.slane %v1720, 7
        %v2503 = vrot.slane %v1722, 7
        %v2504 = vrot.slane %v1724, 7
        %v2505 = vrot.slane %v1726, 7
        %v2506 = vrot.slane %v1728, 7
        %v2507 = vsel %vm1120, %v2498, %v2506
        %v2508 = vrot.slane %v1730, 7
        %v2509 = vsel %vm1120, %v2499, %v2508
        %v2510 = vrot.slane %v1732, 7
        %v2511 = vsel %vm1120, %v2500, %v2510
        %v2512 = vrot.slane %v1734, 7
        %v2513 = vsel %vm1120, %v2501, %v2512
        %v2514 = vrot.slane %v1736, 7
        %v2515 = vsel %vm1120, %v2502, %v2514
        %v2516 = vrot.slane %v1738, 7
        %v2517 = vsel %vm1120, %v2503, %v2516
        %v2518 = vrot.slane %v1740, 7
        %v2519 = vsel %vm1120, %v2504, %v2518
        %v2520 = vrot.slane %v1742, 7
        %v2521 = vsel %vm1120, %v2505, %v2520
        %v2522 = vrot.slane %v1744, 7
        %v2523 = vsel %vm1120, %v2506, %v2522
        %v2524 = vrot.slane %v1746, 7
        %v2525 = vsel %vm1120, %v2508, %v2524
        %v2526 = vrot.slane %v1748, 7
        %v2527 = vsel %vm1120, %v2510, %v2526
        %v2528 = vrot.slane %v1750, 7
        %v2529 = vsel %vm1120, %v2512, %v2528
        %v2530 = vrot.slane %v1752, 7
        %v2531 = vsel %vm1120, %v2514, %v2530
        %v2532 = vrot.slane %v1754, 7
        %v2533 = vsel %vm1120, %v2516, %v2532
        %v2534 = vrot.slane %v1756, 7
        %v2535 = vsel %vm1120, %v2518, %v2534
        %v2536 = vrot.slane %v1758, 7
        %v2537 = vsel %vm1120, %v2520, %v2536
        %v2562 = vsel %vm1120, 1.0, %v2498
        %v2563 = vsel %vm1120, 1.0, %v2499
        %v2564 = vsel %vm1120, 1.0, %v2500
        %v2565 = vsel %vm1120, 1.0, %v2501
        %v2566 = vsel %vm1120, 1.0, %v2502
        %v2567 = vsel %vm1120, 1.0, %v2503
        %v2568 = vsel %vm1120, 1.0, %v2504
        %v2569 = vsel %vm1120, 1.0, %v2505
        %v2594 = vrot.slane %v2450, 7
        %v2595 = vrot.slane %v2451, 7
        %v2596 = vrot.slane %v2452, 7
        %v2597 = vrot.slane %v2453, 7
        %v2598 = vrot.slane %v2454, 7
        %v2599 = vrot.slane %v2455, 7
        %v2600 = vrot.slane %v2456, 7
        %v2601 = vrot.slane %v2457, 7
        %v2602 = vrot.slane %v2458, 7
        %v2603 = vsel %vm1120, %v2594, %v2602
        %v2604 = vrot.slane %v2459, 7
        %v2605 = vsel %vm1120, %v2595, %v2604
        %v2606 = vrot.slane %v2460, 7
        %v2607 = vsel %vm1120, %v2596, %v2606
        %v2608 = vrot.slane %v2461, 7
        %v2609 = vsel %vm1120, %v2597, %v2608
        %v2610 = vrot.slane %v2462, 7
        %v2611 = vsel %vm1120, %v2598, %v2610
        %v2612 = vrot.slane %v2463, 7
        %v2613 = vsel %vm1120, %v2599, %v2612
        %v2614 = vrot.slane %v2464, 7
        %v2615 = vsel %vm1120, %v2600, %v2614
        %v2616 = vrot.slane %v2465, 7
        %v2617 = vsel %vm1120, %v2601, %v2616
        %v2618 = vrot.slane %v2466, 7
        %v2619 = vsel %vm1120, %v2602, %v2618
        %v2620 = vrot.slane %v2467, 7
        %v2621 = vsel %vm1120, %v2604, %v2620
        %v2622 = vrot.slane %v2468, 7
        %v2623 = vsel %vm1120, %v2606, %v2622
        %v2624 = vrot.slane %v2469, 7
        %v2625 = vsel %vm1120, %v2608, %v2624
        %v2626 = vrot.slane %v2470, 7
        %v2627 = vsel %vm1120, %v2610, %v2626
        %v2628 = vrot.slane %v2471, 7
        %v2629 = vsel %vm1120, %v2612, %v2628
        %v2630 = vrot.slane %v2472, 7
        %v2631 = vsel %vm1120, %v2614, %v2630
        %v2632 = vrot.slane %v2473, 7
        %v2633 = vsel %vm1120, %v2616, %v2632
        %v2658 = vsel %vm1120, 0.0, %v2594
        %v2659 = vsel %vm1120, 0.0, %v2595
        %v2660 = vsel %vm1120, 0.0, %v2596
        %v2661 = vsel %vm1120, 0.0, %v2597
        %v2662 = vsel %vm1120, 0.0, %v2598
        %v2663 = vsel %vm1120, 0.0, %v2599
        %v2664 = vsel %vm1120, 0.0, %v2600
        %v2665 = vsel %vm1120, 0.0, %v2601
        %v2666 = vmul.f32 %v1712, %v2658
        %v2667 = vmul.f32 %v1714, %v2659
        %v2668 = vmul.f32 %v1716, %v2660
        %v2669 = vmul.f32 %v1718, %v2661
        %v2670 = vmul.f32 %v1720, %v2662
        %v2671 = vmul.f32 %v1722, %v2663
        %v2672 = vmul.f32 %v1724, %v2664
        %v2673 = vmul.f32 %v1726, %v2665
        %v2674 = vmul.f32 %v1728, %v2603
        %v2675 = vmul.f32 %v1730, %v2605
        %v2676 = vmul.f32 %v1732, %v2607
        %v2677 = vmul.f32 %v1734, %v2609
        %v2678 = vmul.f32 %v1736, %v2611
        %v2679 = vmul.f32 %v1738, %v2613
        %v2680 = vmul.f32 %v1740, %v2615
        %v2681 = vmul.f32 %v1742, %v2617
        %v2682 = vmul.f32 %v1744, %v2619
        %v2683 = vmul.f32 %v1746, %v2621
        %v2684 = vmul.f32 %v1748, %v2623
        %v2685 = vmul.f32 %v1750, %v2625
        %v2686 = vmul.f32 %v1752, %v2627
        %v2687 = vmul.f32 %v1754, %v2629
        %v2688 = vmul.f32 %v1756, %v2631
        %v2689 = vmul.f32 %v1758, %v2633
        %v2690 = vadd.f32 %v2450, %v2666
        %v2691 = vadd.f32 %v2451, %v2667
        %v2692 = vadd.f32 %v2452, %v2668
        %v2693 = vadd.f32 %v2453, %v2669
        %v2694 = vadd.f32 %v2454, %v2670
        %v2695 = vadd.f32 %v2455, %v2671
        %v2696 = vadd.f32 %v2456, %v2672
        %v2697 = vadd.f32 %v2457, %v2673
        %v2698 = vadd.f32 %v2458, %v2674
        %v2699 = vadd.f32 %v2459, %v2675
        %v2700 = vadd.f32 %v2460, %v2676
        %v2701 = vadd.f32 %v2461, %v2677
        %v2702 = vadd.f32 %v2462, %v2678
        %v2703 = vadd.f32 %v2463, %v2679
        %v2704 = vadd.f32 %v2464, %v2680
        %v2705 = vadd.f32 %v2465, %v2681
        %v2706 = vadd.f32 %v2466, %v2682
        %v2707 = vadd.f32 %v2467, %v2683
        %v2708 = vadd.f32 %v2468, %v2684
        %v2709 = vadd.f32 %v2469, %v2685
        %v2710 = vadd.f32 %v2470, %v2686
        %v2711 = vadd.f32 %v2471, %v2687
        %v2712 = vadd.f32 %v2472, %v2688
        %v2713 = vadd.f32 %v2473, %v2689
        %v2714 = vmul.f32 %v1712, %v2562
        %v2715 = vmul.f32 %v1714, %v2563
        %v2716 = vmul.f32 %v1716, %v2564
        %v2717 = vmul.f32 %v1718, %v2565
        %v2718 = vmul.f32 %v1720, %v2566
        %v2719 = vmul.f32 %v1722, %v2567
        %v2720 = vmul.f32 %v1724, %v2568
        %v2721 = vmul.f32 %v1726, %v2569
        %v2722 = vmul.f32 %v1728, %v2507
        %v2723 = vmul.f32 %v1730, %v2509
        %v2724 = vmul.f32 %v1732, %v2511
        %v2725 = vmul.f32 %v1734, %v2513
        %v2726 = vmul.f32 %v1736, %v2515
        %v2727 = vmul.f32 %v1738, %v2517
        %v2728 = vmul.f32 %v1740, %v2519
        %v2729 = vmul.f32 %v1742, %v2521
        %v2730 = vmul.f32 %v1744, %v2523
        %v2731 = vmul.f32 %v1746, %v2525
        %v2732 = vmul.f32 %v1748, %v2527
        %v2733 = vmul.f32 %v1750, %v2529
        %v2734 = vmul.f32 %v1752, %v2531
        %v2735 = vmul.f32 %v1754, %v2533
        %v2736 = vmul.f32 %v1756, %v2535
        %v2737 = vmul.f32 %v1758, %v2537
        %v2762 = vrot.slane %v2714, 6
        %v2763 = vrot.slane %v2715, 6
        %v2764 = vrot.slane %v2716, 6
        %v2765 = vrot.slane %v2717, 6
        %v2766 = vrot.slane %v2718, 6
        %v2767 = vrot.slane %v2719, 6
        %v2768 = vrot.slane %v2720, 6
        %v2769 = vrot.slane %v2721, 6
        %v2770 = vrot.slane %v2722, 6
        %v2771 = vsel %vm1100, %v2762, %v2770
        %v2772 = vrot.slane %v2723, 6
        %v2773 = vsel %vm1100, %v2763, %v2772
        %v2774 = vrot.slane %v2724, 6
        %v2775 = vsel %vm1100, %v2764, %v2774
        %v2776 = vrot.slane %v2725, 6
        %v2777 = vsel %vm1100, %v2765, %v2776
        %v2778 = vrot.slane %v2726, 6
        %v2779 = vsel %vm1100, %v2766, %v2778
        %v2780 = vrot.slane %v2727, 6
        %v2781 = vsel %vm1100, %v2767, %v2780
        %v2782 = vrot.slane %v2728, 6
        %v2783 = vsel %vm1100, %v2768, %v2782
        %v2784 = vrot.slane %v2729, 6
        %v2785 = vsel %vm1100, %v2769, %v2784
        %v2786 = vrot.slane %v2730, 6
        %v2787 = vsel %vm1100, %v2770, %v2786
        %v2788 = vrot.slane %v2731, 6
        %v2789 = vsel %vm1100, %v2772, %v2788
        %v2790 = vrot.slane %v2732, 6
        %v2791 = vsel %vm1100, %v2774, %v2790
        %v2792 = vrot.slane %v2733, 6
        %v2793 = vsel %vm1100, %v2776, %v2792
        %v2794 = vrot.slane %v2734, 6
        %v2795 = vsel %vm1100, %v2778, %v2794
        %v2796 = vrot.slane %v2735, 6
        %v2797 = vsel %vm1100, %v2780, %v2796
        %v2798 = vrot.slane %v2736, 6
        %v2799 = vsel %vm1100, %v2782, %v2798
        %v2800 = vrot.slane %v2737, 6
        %v2801 = vsel %vm1100, %v2784, %v2800
        %v2826 = vsel %vm1100, 1.0, %v2762
        %v2827 = vsel %vm1100, 1.0, %v2763
        %v2828 = vsel %vm1100, 1.0, %v2764
        %v2829 = vsel %vm1100, 1.0, %v2765
        %v2830 = vsel %vm1100, 1.0, %v2766
        %v2831 = vsel %vm1100, 1.0, %v2767
        %v2832 = vsel %vm1100, 1.0, %v2768
        %v2833 = vsel %vm1100, 1.0, %v2769
        %v2858 = vrot.slane %v2690, 6
        %v2859 = vrot.slane %v2691, 6
        %v2860 = vrot.slane %v2692, 6
        %v2861 = vrot.slane %v2693, 6
        %v2862 = vrot.slane %v2694, 6
        %v2863 = vrot.slane %v2695, 6
        %v2864 = vrot.slane %v2696, 6
        %v2865 = vrot.slane %v2697, 6
        %v2866 = vrot.slane %v2698, 6
        %v2867 = vsel %vm1100, %v2858, %v2866
        %v2868 = vrot.slane %v2699, 6
        %v2869 = vsel %vm1100, %v2859, %v2868
        %v2870 = vrot.slane %v2700, 6
        %v2871 = vsel %vm1100, %v2860, %v2870
        %v2872 = vrot.slane %v2701, 6
        %v2873 = vsel %vm1100, %v2861, %v2872
        %v2874 = vrot.slane %v2702, 6
        %v2875 = vsel %vm1100, %v2862, %v2874
        %v2876 = vrot.slane %v2703, 6
        %v2877 = vsel %vm1100, %v2863, %v2876
        %v2878 = vrot.slane %v2704, 6
        %v2879 = vsel %vm1100, %v2864, %v2878
        %v2880 = vrot.slane %v2705, 6
        %v2881 = vsel %vm1100, %v2865, %v2880
        %v2882 = vrot.slane %v2706, 6
        %v2883 = vsel %vm1100, %v2866, %v2882
        %v2884 = vrot.slane %v2707, 6
        %v2885 = vsel %vm1100, %v2868, %v2884
        %v2886 = vrot.slane %v2708, 6
        %v2887 = vsel %vm1100, %v2870, %v2886
        %v2888 = vrot.slane %v2709, 6
        %v2889 = vsel %vm1100, %v2872, %v2888
        %v2890 = vrot.slane %v2710, 6
        %v2891 = vsel %vm1100, %v2874, %v2890
        %v2892 = vrot.slane %v2711, 6
        %v2893 = vsel %vm1100, %v2876, %v2892
        %v2894 = vrot.slane %v2712, 6
        %v2895 = vsel %vm1100, %v2878, %v2894
        %v2896 = vrot.slane %v2713, 6
        %v2897 = vsel %vm1100, %v2880, %v2896
        %v2922 = vsel %vm1100, 0.0, %v2858
        %v2923 = vsel %vm1100, 0.0, %v2859
        %v2924 = vsel %vm1100, 0.0, %v2860
        %v2925 = vsel %vm1100, 0.0, %v2861
        %v2926 = vsel %vm1100, 0.0, %v2862
        %v2927 = vsel %vm1100, 0.0, %v2863
        %v2928 = vsel %vm1100, 0.0, %v2864
        %v2929 = vsel %vm1100, 0.0, %v2865
        %v2930 = vmul.f32 %v2714, %v2922
        %v2931 = vmul.f32 %v2715, %v2923
        %v2932 = vmul.f32 %v2716, %v2924
        %v2933 = vmul.f32 %v2717, %v2925
        %v2934 = vmul.f32 %v2718, %v2926
        %v2935 = vmul.f32 %v2719, %v2927
        %v2936 = vmul.f32 %v2720, %v2928
        %v2937 = vmul.f32 %v2721, %v2929
        %v2938 = vmul.f32 %v2722, %v2867
        %v2939 = vmul.f32 %v2723, %v2869
        %v2940 = vmul.f32 %v2724, %v2871
        %v2941 = vmul.f32 %v2725, %v2873
        %v2942 = vmul.f32 %v2726, %v2875
        %v2943 = vmul.f32 %v2727, %v2877
        %v2944 = vmul.f32 %v2728, %v2879
        %v2945 = vmul.f32 %v2729, %v2881
        %v2946 = vmul.f32 %v2730, %v2883
        %v2947 = vmul.f32 %v2731, %v2885
        %v2948 = vmul.f32 %v2732, %v2887
        %v2949 = vmul.f32 %v2733, %v2889
        %v2950 = vmul.f32 %v2734, %v2891
        %v2951 = vmul.f32 %v2735, %v2893
        %v2952 = vmul.f32 %v2736, %v2895
        %v2953 = vmul.f32 %v2737, %v2897
        %v2954 = vadd.f32 %v2690, %v2930
        %v2955 = vadd.f32 %v2691, %v2931
        %v2956 = vadd.f32 %v2692, %v2932
        %v2957 = vadd.f32 %v2693, %v2933
        %v2958 = vadd.f32 %v2694, %v2934
        %v2959 = vadd.f32 %v2695, %v2935
        %v2960 = vadd.f32 %v2696, %v2936
        %v2961 = vadd.f32 %v2697, %v2937
        %v2962 = vadd.f32 %v2698, %v2938
        %v2963 = vadd.f32 %v2699, %v2939
        %v2964 = vadd.f32 %v2700, %v2940
        %v2965 = vadd.f32 %v2701, %v2941
        %v2966 = vadd.f32 %v2702, %v2942
        %v2967 = vadd.f32 %v2703, %v2943
        %v2968 = vadd.f32 %v2704, %v2944
        %v2969 = vadd.f32 %v2705, %v2945
        %v2970 = vadd.f32 %v2706, %v2946
        %v2971 = vadd.f32 %v2707, %v2947
        %v2972 = vadd.f32 %v2708, %v2948
        %v2973 = vadd.f32 %v2709, %v2949
        %v2974 = vadd.f32 %v2710, %v2950
        %v2975 = vadd.f32 %v2711, %v2951
        %v2976 = vadd.f32 %v2712, %v2952
        %v2977 = vadd.f32 %v2713, %v2953
        %v2978 = vmul.f32 %v2714, %v2826
        %v2979 = vmul.f32 %v2715, %v2827
        %v2980 = vmul.f32 %v2716, %v2828
        %v2981 = vmul.f32 %v2717, %v2829
        %v2982 = vmul.f32 %v2718, %v2830
        %v2983 = vmul.f32 %v2719, %v2831
        %v2984 = vmul.f32 %v2720, %v2832
        %v2985 = vmul.f32 %v2721, %v2833
        %v2986 = vmul.f32 %v2722, %v2771
        %v2987 = vmul.f32 %v2723, %v2773
        %v2988 = vmul.f32 %v2724, %v2775
        %v2989 = vmul.f32 %v2725, %v2777
        %v2990 = vmul.f32 %v2726, %v2779
        %v2991 = vmul.f32 %v2727, %v2781
        %v2992 = vmul.f32 %v2728, %v2783
        %v2993 = vmul.f32 %v2729, %v2785
        %v2994 = vmul.f32 %v2730, %v2787
        %v2995 = vmul.f32 %v2731, %v2789
        %v2996 = vmul.f32 %v2732, %v2791
        %v2997 = vmul.f32 %v2733, %v2793
        %v2998 = vmul.f32 %v2734, %v2795
        %v2999 = vmul.f32 %v2735, %v2797
        %v3000 = vmul.f32 %v2736, %v2799
        %v3001 = vmul.f32 %v2737, %v2801
        %vm3026 = vcmask 1043456
        %v3027 = vrot.slane %v2978, 4
        %v3028 = vrot.slane %v2979, 4
        %v3029 = vrot.slane %v2980, 4
        %v3030 = vrot.slane %v2981, 4
        %v3031 = vrot.slane %v2982, 4
        %v3032 = vrot.slane %v2983, 4
        %v3033 = vrot.slane %v2984, 4
        %v3034 = vrot.slane %v2985, 4
        %v3035 = vrot.slane %v2986, 4
        %v3036 = vsel %vm3026, %v3027, %v3035
        %v3037 = vrot.slane %v2987, 4
        %v3038 = vsel %vm3026, %v3028, %v3037
        %v3039 = vrot.slane %v2988, 4
        %v3040 = vsel %vm3026, %v3029, %v3039
        %v3041 = vrot.slane %v2989, 4
        %v3042 = vsel %vm3026, %v3030, %v3041
        %v3043 = vrot.slane %v2990, 4
        %v3044 = vsel %vm3026, %v3031, %v3043
        %v3045 = vrot.slane %v2991, 4
        %v3046 = vsel %vm3026, %v3032, %v3045
        %v3047 = vrot.slane %v2992, 4
        %v3048 = vsel %vm3026, %v3033, %v3047
        %v3049 = vrot.slane %v2993, 4
        %v3050 = vsel %vm3026, %v3034, %v3049
        %v3051 = vrot.slane %v2994, 4
        %v3052 = vsel %vm3026, %v3035, %v3051
        %v3053 = vrot.slane %v2995, 4
        %v3054 = vsel %vm3026, %v3037, %v3053
        %v3055 = vrot.slane %v2996, 4
        %v3056 = vsel %vm3026, %v3039, %v3055
        %v3057 = vrot.slane %v2997, 4
        %v3058 = vsel %vm3026, %v3041, %v3057
        %v3059 = vrot.slane %v2998, 4
        %v3060 = vsel %vm3026, %v3043, %v3059
        %v3061 = vrot.slane %v2999, 4
        %v3062 = vsel %vm3026, %v3045, %v3061
        %v3063 = vrot.slane %v3000, 4
        %v3064 = vsel %vm3026, %v3047, %v3063
        %v3065 = vrot.slane %v3001, 4
        %v3066 = vsel %vm3026, %v3049, %v3065
        %v3091 = vsel %vm3026, 1.0, %v3027
        %v3092 = vsel %vm3026, 1.0, %v3028
        %v3093 = vsel %vm3026, 1.0, %v3029
        %v3094 = vsel %vm3026, 1.0, %v3030
        %v3095 = vsel %vm3026, 1.0, %v3031
        %v3096 = vsel %vm3026, 1.0, %v3032
        %v3097 = vsel %vm3026, 1.0, %v3033
        %v3098 = vsel %vm3026, 1.0, %v3034
        %v3123 = vrot.slane %v2954, 4
        %v3124 = vrot.slane %v2955, 4
        %v3125 = vrot.slane %v2956, 4
        %v3126 = vrot.slane %v2957, 4
        %v3127 = vrot.slane %v2958, 4
        %v3128 = vrot.slane %v2959, 4
        %v3129 = vrot.slane %v2960, 4
        %v3130 = vrot.slane %v2961, 4
        %v3131 = vrot.slane %v2962, 4
        %v3132 = vsel %vm3026, %v3123, %v3131
        %v3133 = vrot.slane %v2963, 4
        %v3134 = vsel %vm3026, %v3124, %v3133
        %v3135 = vrot.slane %v2964, 4
        %v3136 = vsel %vm3026, %v3125, %v3135
        %v3137 = vrot.slane %v2965, 4
        %v3138 = vsel %vm3026, %v3126, %v3137
        %v3139 = vrot.slane %v2966, 4
        %v3140 = vsel %vm3026, %v3127, %v3139
        %v3141 = vrot.slane %v2967, 4
        %v3142 = vsel %vm3026, %v3128, %v3141
        %v3143 = vrot.slane %v2968, 4
        %v3144 = vsel %vm3026, %v3129, %v3143
        %v3145 = vrot.slane %v2969, 4
        %v3146 = vsel %vm3026, %v3130, %v3145
        %v3147 = vrot.slane %v2970, 4
        %v3148 = vsel %vm3026, %v3131, %v3147
        %v3149 = vrot.slane %v2971, 4
        %v3150 = vsel %vm3026, %v3133, %v3149
        %v3151 = vrot.slane %v2972, 4
        %v3152 = vsel %vm3026, %v3135, %v3151
        %v3153 = vrot.slane %v2973, 4
        %v3154 = vsel %vm3026, %v3137, %v3153
        %v3155 = vrot.slane %v2974, 4
        %v3156 = vsel %vm3026, %v3139, %v3155
        %v3157 = vrot.slane %v2975, 4
        %v3158 = vsel %vm3026, %v3141, %v3157
        %v3159 = vrot.slane %v2976, 4
        %v3160 = vsel %vm3026, %v3143, %v3159
        %v3161 = vrot.slane %v2977, 4
        %v3162 = vsel %vm3026, %v3145, %v3161
        %v3187 = vsel %vm3026, 0.0, %v3123
        %v3188 = vsel %vm3026, 0.0, %v3124
        %v3189 = vsel %vm3026, 0.0, %v3125
        %v3190 = vsel %vm3026, 0.0, %v3126
        %v3191 = vsel %vm3026, 0.0, %v3127
        %v3192 = vsel %vm3026, 0.0, %v3128
        %v3193 = vsel %vm3026, 0.0, %v3129
        %v3194 = vsel %vm3026, 0.0, %v3130
        %v3195 = vmul.f32 %v2978, %v3187
        %v3196 = vmul.f32 %v2979, %v3188
        %v3197 = vmul.f32 %v2980, %v3189
        %v3198 = vmul.f32 %v2981, %v3190
        %v3199 = vmul.f32 %v2982, %v3191
        %v3200 = vmul.f32 %v2983, %v3192
        %v3201 = vmul.f32 %v2984, %v3193
        %v3202 = vmul.f32 %v2985, %v3194
        %v3203 = vmul.f32 %v2986, %v3132
        %v3204 = vmul.f32 %v2987, %v3134
        %v3205 = vmul.f32 %v2988, %v3136
        %v3206 = vmul.f32 %v2989, %v3138
        %v3207 = vmul.f32 %v2990, %v3140
        %v3208 = vmul.f32 %v2991, %v3142
        %v3209 = vmul.f32 %v2992, %v3144
        %v3210 = vmul.f32 %v2993, %v3146
        %v3211 = vmul.f32 %v2994, %v3148
        %v3212 = vmul.f32 %v2995, %v3150
        %v3213 = vmul.f32 %v2996, %v3152
        %v3214 = vmul.f32 %v2997, %v3154
        %v3215 = vmul.f32 %v2998, %v3156
        %v3216 = vmul.f32 %v2999, %v3158
        %v3217 = vmul.f32 %v3000, %v3160
        %v3218 = vmul.f32 %v3001, %v3162
        %v3219 = vadd.f32 %v2954, %v3195
        %v3220 = vadd.f32 %v2955, %v3196
        %v3221 = vadd.f32 %v2956, %v3197
        %v3222 = vadd.f32 %v2957, %v3198
        %v3223 = vadd.f32 %v2958, %v3199
        %v3224 = vadd.f32 %v2959, %v3200
        %v3225 = vadd.f32 %v2960, %v3201
        %v3226 = vadd.f32 %v2961, %v3202
        %v3227 = vadd.f32 %v2962, %v3203
        %v3228 = vadd.f32 %v2963, %v3204
        %v3229 = vadd.f32 %v2964, %v3205
        %v3230 = vadd.f32 %v2965, %v3206
        %v3231 = vadd.f32 %v2966, %v3207
        %v3232 = vadd.f32 %v2967, %v3208
        %v3233 = vadd.f32 %v2968, %v3209
        %v3234 = vadd.f32 %v2969, %v3210
        %v3235 = vadd.f32 %v2970, %v3211
        %v3236 = vadd.f32 %v2971, %v3212
        %v3237 = vadd.f32 %v2972, %v3213
        %v3238 = vadd.f32 %v2973, %v3214
        %v3239 = vadd.f32 %v2974, %v3215
        %v3240 = vadd.f32 %v2975, %v3216
        %v3241 = vadd.f32 %v2976, %v3217
        %v3242 = vadd.f32 %v2977, %v3218
        %v3243 = vmul.f32 %v2978, %v3091
        %v3244 = vmul.f32 %v2979, %v3092
        %v3245 = vmul.f32 %v2980, %v3093
        %v3246 = vmul.f32 %v2981, %v3094
        %v3247 = vmul.f32 %v2982, %v3095
        %v3248 = vmul.f32 %v2983, %v3096
        %v3249 = vmul.f32 %v2984, %v3097
        %v3250 = vmul.f32 %v2985, %v3098
        %v3251 = vmul.f32 %v2986, %v3036
        %v3252 = vmul.f32 %v2987, %v3038
        %v3253 = vmul.f32 %v2988, %v3040
        %v3254 = vmul.f32 %v2989, %v3042
        %v3255 = vmul.f32 %v2990, %v3044
        %v3256 = vmul.f32 %v2991, %v3046
        %v3257 = vmul.f32 %v2992, %v3048
        %v3258 = vmul.f32 %v2993, %v3050
        %v3259 = vmul.f32 %v2994, %v3052
        %v3260 = vmul.f32 %v2995, %v3054
        %v3261 = vmul.f32 %v2996, %v3056
        %v3262 = vmul.f32 %v2997, %v3058
        %v3263 = vmul.f32 %v2998, %v3060
        %v3264 = vmul.f32 %v2999, %v3062
        %v3265 = vmul.f32 %v3000, %v3064
        %v3266 = vmul.f32 %v3001, %v3066
        %v3267 = vmul.f32 %v3243, 0.0
        %v3268 = vmul.f32 %v3244, 0.0
        %v3269 = vmul.f32 %v3245, 0.0
        %v3270 = vmul.f32 %v3246, 0.0
        %v3271 = vmul.f32 %v3247, 0.0
        %v3272 = vmul.f32 %v3248, 0.0
        %v3273 = vmul.f32 %v3249, 0.0
        %v3274 = vmul.f32 %v3250, 0.0
        %v3275 = vmul.f32 %v3251, %v3219
        %v3276 = vmul.f32 %v3252, %v3220
        %v3277 = vmul.f32 %v3253, %v3221
        %v3278 = vmul.f32 %v3254, %v3222
        %v3279 = vmul.f32 %v3255, %v3223
        %v3280 = vmul.f32 %v3256, %v3224
        %v3281 = vmul.f32 %v3257, %v3225
        %v3282 = vmul.f32 %v3258, %v3226
        %v3283 = vmul.f32 %v3259, %v3227
        %v3284 = vmul.f32 %v3260, %v3228
        %v3285 = vmul.f32 %v3261, %v3229
        %v3286 = vmul.f32 %v3262, %v3230
        %v3287 = vmul.f32 %v3263, %v3231
        %v3288 = vmul.f32 %v3264, %v3232
        %v3289 = vmul.f32 %v3265, %v3233
        %v3290 = vmul.f32 %v3266, %v3234
        %v3291 = vadd.f32 %v3219, %v3267
        %v3292 = vadd.f32 %v3220, %v3268
        %v3293 = vadd.f32 %v3221, %v3269
        %v3294 = vadd.f32 %v3222, %v3270
        %v3295 = vadd.f32 %v3223, %v3271
        %v3296 = vadd.f32 %v3224, %v3272
        %v3297 = vadd.f32 %v3225, %v3273
        %v3298 = vadd.f32 %v3226, %v3274
        %v3299 = vadd.f32 %v3227, %v3275
        %v3300 = vadd.f32 %v3228, %v3276
        %v3301 = vadd.f32 %v3229, %v3277
        %v3302 = vadd.f32 %v3230, %v3278
        %v3303 = vadd.f32 %v3231, %v3279
        %v3304 = vadd.f32 %v3232, %v3280
        %v3305 = vadd.f32 %v3233, %v3281
        %v3306 = vadd.f32 %v3234, %v3282
        %v3307 = vadd.f32 %v3235, %v3283
        %v3308 = vadd.f32 %v3236, %v3284
        %v3309 = vadd.f32 %v3237, %v3285
        %v3310 = vadd.f32 %v3238, %v3286
        %v3311 = vadd.f32 %v3239, %v3287
        %v3312 = vadd.f32 %v3240, %v3288
        %v3313 = vadd.f32 %v3241, %v3289
        %v3314 = vadd.f32 %v3242, %v3290
        %v3315 = vmul.f32 %v3251, %v3243
        %v3316 = vmul.f32 %v3252, %v3244
        %v3317 = vmul.f32 %v3253, %v3245
        %v3318 = vmul.f32 %v3254, %v3246
        %v3319 = vmul.f32 %v3255, %v3247
        %v3320 = vmul.f32 %v3256, %v3248
        %v3321 = vmul.f32 %v3257, %v3249
        %v3322 = vmul.f32 %v3258, %v3250
        %v3323 = vmul.f32 %v3259, %v3251
        %v3324 = vmul.f32 %v3260, %v3252
        %v3325 = vmul.f32 %v3261, %v3253
        %v3326 = vmul.f32 %v3262, %v3254
        %v3327 = vmul.f32 %v3263, %v3255
        %v3328 = vmul.f32 %v3264, %v3256
        %v3329 = vmul.f32 %v3265, %v3257
        %v3330 = vmul.f32 %v3266, %v3258
        %v3331 = vmul.f32 %v3315, 0.0
        %v3332 = vmul.f32 %v3316, 0.0
        %v3333 = vmul.f32 %v3317, 0.0
        %v3334 = vmul.f32 %v3318, 0.0
        %v3335 = vmul.f32 %v3319, 0.0
        %v3336 = vmul.f32 %v3320, 0.0
        %v3337 = vmul.f32 %v3321, 0.0
        %v3338 = vmul.f32 %v3322, 0.0
        %v3339 = vmul.f32 %v3323, %v3291
        %v3340 = vmul.f32 %v3324, %v3292
        %v3341 = vmul.f32 %v3325, %v3293
        %v3342 = vmul.f32 %v3326, %v3294
        %v3343 = vmul.f32 %v3327, %v3295
        %v3344 = vmul.f32 %v3328, %v3296
        %v3345 = vmul.f32 %v3329, %v3297
        %v3346 = vmul.f32 %v3330, %v3298
        %v3347 = vadd.f32 %v3291, %v3267
        %v3348 = vadd.f32 %v3292, %v3268
        %v3349 = vadd.f32 %v3293, %v3269
        %v3350 = vadd.f32 %v3294, %v3270
        %v3351 = vadd.f32 %v3295, %v3271
        %v3352 = vadd.f32 %v3296, %v3272
        %v3353 = vadd.f32 %v3297, %v3273
        %v3354 = vadd.f32 %v3298, %v3274
        %v3355 = vadd.f32 %v3299, %v3331
        %v3356 = vadd.f32 %v3300, %v3332
        %v3357 = vadd.f32 %v3301, %v3333
        %v3358 = vadd.f32 %v3302, %v3334
        %v3359 = vadd.f32 %v3303, %v3335
        %v3360 = vadd.f32 %v3304, %v3336
        %v3361 = vadd.f32 %v3305, %v3337
        %v3362 = vadd.f32 %v3306, %v3338
        %v3363 = vadd.f32 %v3307, %v3339
        %v3364 = vadd.f32 %v3308, %v3340
        %v3365 = vadd.f32 %v3309, %v3341
        %v3366 = vadd.f32 %v3310, %v3342
        %v3367 = vadd.f32 %v3311, %v3343
        %v3368 = vadd.f32 %v3312, %v3344
        %v3369 = vadd.f32 %v3313, %v3345
        %v3370 = vadd.f32 %v3314, %v3346
        %3371 = vrot.lane.b32.xlu0 %v1256, 48
        %v3372 = vpop.permute.xlu0 %3371
        %3373 = vrot.lane.b32.xlu0 %v1261, 48
        %v3374 = vpop.permute.xlu0 %3373
        %3375 = vrot.lane.b32.xlu0 %v1266, 48
        %v3376 = vpop.permute.xlu0 %3375
        %v3377 = vsel %vm854, %v3372, 0
        %v3379 = vsel %vm854, %v3374, 0
        %v3381 = vsel %vm854, %v3376, 0
        %3383 = vmatprep.subr.mxu0 0.0
        %3384 = vmatpush1.msra.mxu0 0.0
        %3385 = vmatprep.subr.mxu0 0.0
        %3386 = vmatpush1.msra.mxu0 0.0
        %3387 = vmatprep.subr.mxu0 0.0
        %3388 = vmatpush1.msra.mxu0 0.0
        %3389 = vmatprep.subr.mxu0 0.0
        %3390 = vmatpush1.msra.mxu0 0.0
        %3391 = vmatprep.subr.mxu0 0.0
        %3392 = vmatpush1.msra.mxu0 0.0
        %3393 = vmatprep.subr.mxu0 0.0
        %3394 = vmatpush1.msra.mxu0 0.0
        %3395 = vmatprep.subr.mxu0 0.0
        %3396 = vmatpush1.msra.mxu0 0.0
        %3397 = vmatprep.subr.mxu0 0.0
        %3398 = vmatpush1.msra.mxu0 0.0
        %3399 = vmatprep.subr.mxu0 0.0
        %3400 = vmatpush1.msra.mxu0 0.0
        %3401 = vmatprep.subr.mxu0 0.0
        %3402 = vmatpush1.msra.mxu0 0.0
        %3403 = vmatprep.subr.mxu0 0.0
        %3404 = vmatpush1.msra.mxu0 0.0
        %3405 = vmatprep.subr.mxu0 0.0
        %3406 = vmatpush1.msra.mxu0 0.0
        %3407 = vmatprep.subr.mxu0 0.0
        %3408 = vmatpush1.msra.mxu0 0.0
        %3409 = vmatprep.subr.mxu0 0.0
        %3410 = vmatpush1.msra.mxu0 0.0
        %3411 = vmatprep.subr.mxu0 %v646
        %3412 = vmatpush1.msra.mxu0 %v645
        %3413 = vmatprep.subr.mxu0 %v638
        %3414 = vmatpush1.msra.mxu0 %v637
        %3415 = vmatprep.subr.mxu0 0.0
        %3416 = vmatpush2.msra.mxu0 0.0
        %3417 = vmatprep.subr.mxu0 0.0
        %3418 = vmatpush2.msra.mxu0 0.0
        %3419 = vmatprep.subr.mxu0 0.0
        %3420 = vmatpush2.msra.mxu0 0.0
        %3421 = vmatprep.subr.mxu0 0.0
        %3422 = vmatpush2.msra.mxu0 0.0
        %3423 = vmatprep.subr.mxu0 0.0
        %3424 = vmatpush2.msra.mxu0 0.0
        %3425 = vmatprep.subr.mxu0 0.0
        %3426 = vmatpush2.msra.mxu0 0.0
        %3427 = vmatprep.subr.mxu0 0.0
        %3428 = vmatpush2.msra.mxu0 0.0
        %3429 = vmatprep.subr.mxu0 0.0
        %3430 = vmatpush2.msra.mxu0 0.0
        %3431 = vmatprep.subr.mxu0 0.0
        %3432 = vmatpush2.msra.mxu0 0.0
        %3433 = vmatprep.subr.mxu0 0.0
        %3434 = vmatpush2.msra.mxu0 0.0
        %3435 = vmatprep.subr.mxu0 0.0
        %3436 = vmatpush2.msra.mxu0 0.0
        %3437 = vmatprep.subr.mxu0 0.0
        %3438 = vmatpush2.msra.mxu0 0.0
        %3439 = vmatprep.subr.mxu0 0.0
        %3440 = vmatpush2.msra.mxu0 0.0
        %3441 = vmatprep.subr.mxu0 0.0
        %3442 = vmatpush2.msra.mxu0 0.0
        %3443 = vmatprep.subr.mxu0 0.0
        %3444 = vmatpush2.msra.mxu0 0.0
        %3445 = vmatprep.subr.mxu0 0.0
        %3446 = vmatpush2.msra.mxu0 0.0
        %3447 = vmatprep.mubr.f32.mxu0 0.0
        %3448 = vmatmul.mubr.f32.gmra.mxu0 %v3377
        %v3449 = vpop.f32.mrf.mxu0
        %v3450 = vadd.f32 0.0, %v3449
        %v3451 = vpop.f32.mrf.mxu0
        %v3452 = vadd.f32 0.0, %v3451
        %3453 = vmatprep.mubr.f32.mxu0 0.0
        %3454 = vmatmul.mubr.f32.gmra.mxu0 %v3379
        %v3455 = vpop.f32.mrf.mxu0
        %v3456 = vadd.f32 0.0, %v3455
        %v3457 = vpop.f32.mrf.mxu0
        %v3458 = vadd.f32 0.0, %v3457
        %3459 = vmatprep.mubr.f32.mxu0 0.0
        %3460 = vmatmul.mubr.f32.gmra.mxu0 %v3381
        %v3461 = vpop.f32.mrf.mxu0
        %v3462 = vadd.f32 0.0, %v3461
        %v3463 = vpop.f32.mrf.mxu0
        %v3464 = vadd.f32 0.0, %v3463
        %3465 = vdwg.mxu0
        %3466 = vmatprep.subr.mxu0 0.0
        %3467 = vmatpush1.msra.mxu0 0.0
        %3468 = vmatprep.subr.mxu0 0.0
        %3469 = vmatpush1.msra.mxu0 0.0
        %3470 = vmatprep.subr.mxu0 0.0
        %3471 = vmatpush1.msra.mxu0 0.0
        %3472 = vmatprep.subr.mxu0 0.0
        %3473 = vmatpush1.msra.mxu0 0.0
        %3474 = vmatprep.subr.mxu0 0.0
        %3475 = vmatpush1.msra.mxu0 0.0
        %3476 = vmatprep.subr.mxu0 0.0
        %3477 = vmatpush1.msra.mxu0 0.0
        %3478 = vmatprep.subr.mxu0 0.0
        %3479 = vmatpush1.msra.mxu0 0.0
        %3480 = vmatprep.subr.mxu0 0.0
        %3481 = vmatpush1.msra.mxu0 0.0
        %3482 = vmatprep.subr.mxu0 0.0
        %3483 = vmatpush1.msra.mxu0 0.0
        %3484 = vmatprep.subr.mxu0 0.0
        %3485 = vmatpush1.msra.mxu0 0.0
        %3486 = vmatprep.subr.mxu0 0.0
        %3487 = vmatpush1.msra.mxu0 0.0
        %3488 = vmatprep.subr.mxu0 0.0
        %3489 = vmatpush1.msra.mxu0 0.0
        %3490 = vmatprep.subr.mxu0 0.0
        %3491 = vmatpush1.msra.mxu0 0.0
        %3492 = vmatprep.subr.mxu0 0.0
        %3493 = vmatpush1.msra.mxu0 0.0
        %3494 = vmatprep.subr.mxu0 %v648
        %3495 = vmatpush1.msra.mxu0 %v647
        %3496 = vmatprep.subr.mxu0 %v640
        %3497 = vmatpush1.msra.mxu0 %v639
        %3498 = vmatprep.subr.mxu0 0.0
        %3499 = vmatpush2.msra.mxu0 0.0
        %3500 = vmatprep.subr.mxu0 0.0
        %3501 = vmatpush2.msra.mxu0 0.0
        %3502 = vmatprep.subr.mxu0 0.0
        %3503 = vmatpush2.msra.mxu0 0.0
        %3504 = vmatprep.subr.mxu0 0.0
        %3505 = vmatpush2.msra.mxu0 0.0
        %3506 = vmatprep.subr.mxu0 0.0
        %3507 = vmatpush2.msra.mxu0 0.0
        %3508 = vmatprep.subr.mxu0 0.0
        %3509 = vmatpush2.msra.mxu0 0.0
        %3510 = vmatprep.subr.mxu0 0.0
        %3511 = vmatpush2.msra.mxu0 0.0
        %3512 = vmatprep.subr.mxu0 0.0
        %3513 = vmatpush2.msra.mxu0 0.0
        %3514 = vmatprep.subr.mxu0 0.0
        %3515 = vmatpush2.msra.mxu0 0.0
        %3516 = vmatprep.subr.mxu0 0.0
        %3517 = vmatpush2.msra.mxu0 0.0
        %3518 = vmatprep.subr.mxu0 0.0
        %3519 = vmatpush2.msra.mxu0 0.0
        %3520 = vmatprep.subr.mxu0 0.0
        %3521 = vmatpush2.msra.mxu0 0.0
        %3522 = vmatprep.subr.mxu0 0.0
        %3523 = vmatpush2.msra.mxu0 0.0
        %3524 = vmatprep.subr.mxu0 0.0
        %3525 = vmatpush2.msra.mxu0 0.0
        %3526 = vmatprep.subr.mxu0 0.0
        %3527 = vmatpush2.msra.mxu0 0.0
        %3528 = vmatprep.subr.mxu0 0.0
        %3529 = vmatpush2.msra.mxu0 0.0
        %3530 = vmatprep.mubr.f32.mxu0 0.0
        %3531 = vmatmul.mubr.f32.gmra.mxu0 %v3377
        %v3532 = vpop.f32.mrf.mxu0
        %v3533 = vadd.f32 0.0, %v3532
        %v3534 = vpop.f32.mrf.mxu0
        %v3535 = vadd.f32 0.0, %v3534
        %3536 = vmatprep.mubr.f32.mxu0 0.0
        %3537 = vmatmul.mubr.f32.gmra.mxu0 %v3379
        %v3538 = vpop.f32.mrf.mxu0
        %v3539 = vadd.f32 0.0, %v3538
        %v3540 = vpop.f32.mrf.mxu0
        %v3541 = vadd.f32 0.0, %v3540
        %3542 = vmatprep.mubr.f32.mxu0 0.0
        %3543 = vmatmul.mubr.f32.gmra.mxu0 %v3381
        %v3544 = vpop.f32.mrf.mxu0
        %v3545 = vadd.f32 0.0, %v3544
        %v3546 = vpop.f32.mrf.mxu0
        %v3547 = vadd.f32 0.0, %v3546
        %3548 = vdwg.mxu0
        %3549 = vmatprep.subr.mxu0 0.0
        %3550 = vmatpush1.msra.mxu0 0.0
        %3551 = vmatprep.subr.mxu0 0.0
        %3552 = vmatpush1.msra.mxu0 0.0
        %3553 = vmatprep.subr.mxu0 0.0
        %3554 = vmatpush1.msra.mxu0 0.0
        %3555 = vmatprep.subr.mxu0 0.0
        %3556 = vmatpush1.msra.mxu0 0.0
        %3557 = vmatprep.subr.mxu0 0.0
        %3558 = vmatpush1.msra.mxu0 0.0
        %3559 = vmatprep.subr.mxu0 0.0
        %3560 = vmatpush1.msra.mxu0 0.0
        %3561 = vmatprep.subr.mxu0 0.0
        %3562 = vmatpush1.msra.mxu0 0.0
        %3563 = vmatprep.subr.mxu0 0.0
        %3564 = vmatpush1.msra.mxu0 0.0
        %3565 = vmatprep.subr.mxu0 0.0
        %3566 = vmatpush1.msra.mxu0 0.0
        %3567 = vmatprep.subr.mxu0 0.0
        %3568 = vmatpush1.msra.mxu0 0.0
        %3569 = vmatprep.subr.mxu0 0.0
        %3570 = vmatpush1.msra.mxu0 0.0
        %3571 = vmatprep.subr.mxu0 0.0
        %3572 = vmatpush1.msra.mxu0 0.0
        %3573 = vmatprep.subr.mxu0 0.0
        %3574 = vmatpush1.msra.mxu0 0.0
        %3575 = vmatprep.subr.mxu0 0.0
        %3576 = vmatpush1.msra.mxu0 0.0
        %3577 = vmatprep.subr.mxu0 %v650
        %3578 = vmatpush1.msra.mxu0 %v649
        %3579 = vmatprep.subr.mxu0 %v642
        %3580 = vmatpush1.msra.mxu0 %v641
        %3581 = vmatprep.subr.mxu0 0.0
        %3582 = vmatpush2.msra.mxu0 0.0
        %3583 = vmatprep.subr.mxu0 0.0
        %3584 = vmatpush2.msra.mxu0 0.0
        %3585 = vmatprep.subr.mxu0 0.0
        %3586 = vmatpush2.msra.mxu0 0.0
        %3587 = vmatprep.subr.mxu0 0.0
        %3588 = vmatpush2.msra.mxu0 0.0
        %3589 = vmatprep.subr.mxu0 0.0
        %3590 = vmatpush2.msra.mxu0 0.0
        %3591 = vmatprep.subr.mxu0 0.0
        %3592 = vmatpush2.msra.mxu0 0.0
        %3593 = vmatprep.subr.mxu0 0.0
        %3594 = vmatpush2.msra.mxu0 0.0
        %3595 = vmatprep.subr.mxu0 0.0
        %3596 = vmatpush2.msra.mxu0 0.0
        %3597 = vmatprep.subr.mxu0 0.0
        %3598 = vmatpush2.msra.mxu0 0.0
        %3599 = vmatprep.subr.mxu0 0.0
        %3600 = vmatpush2.msra.mxu0 0.0
        %3601 = vmatprep.subr.mxu0 0.0
        %3602 = vmatpush2.msra.mxu0 0.0
        %3603 = vmatprep.subr.mxu0 0.0
        %3604 = vmatpush2.msra.mxu0 0.0
        %3605 = vmatprep.subr.mxu0 0.0
        %3606 = vmatpush2.msra.mxu0 0.0
        %3607 = vmatprep.subr.mxu0 0.0
        %3608 = vmatpush2.msra.mxu0 0.0
        %3609 = vmatprep.subr.mxu0 0.0
        %3610 = vmatpush2.msra.mxu0 0.0
        %3611 = vmatprep.subr.mxu0 0.0
        %3612 = vmatpush2.msra.mxu0 0.0
        %3613 = vmatprep.mubr.f32.mxu0 0.0
        %3614 = vmatmul.mubr.f32.gmra.mxu0 %v3377
        %v3615 = vpop.f32.mrf.mxu0
        %v3616 = vadd.f32 0.0, %v3615
        %v3617 = vpop.f32.mrf.mxu0
        %v3618 = vadd.f32 0.0, %v3617
        %3619 = vmatprep.mubr.f32.mxu0 0.0
        %3620 = vmatmul.mubr.f32.gmra.mxu0 %v3379
        %v3621 = vpop.f32.mrf.mxu0
        %v3622 = vadd.f32 0.0, %v3621
        %v3623 = vpop.f32.mrf.mxu0
        %v3624 = vadd.f32 0.0, %v3623
        %3625 = vmatprep.mubr.f32.mxu0 0.0
        %3626 = vmatmul.mubr.f32.gmra.mxu0 %v3381
        %v3627 = vpop.f32.mrf.mxu0
        %v3628 = vadd.f32 0.0, %v3627
        %v3629 = vpop.f32.mrf.mxu0
        %v3630 = vadd.f32 0.0, %v3629
        %3631 = vdwg.mxu0
        %3632 = vmatprep.subr.mxu0 0.0
        %3633 = vmatpush1.msra.mxu0 0.0
        %3634 = vmatprep.subr.mxu0 0.0
        %3635 = vmatpush1.msra.mxu0 0.0
        %3636 = vmatprep.subr.mxu0 0.0
        %3637 = vmatpush1.msra.mxu0 0.0
        %3638 = vmatprep.subr.mxu0 0.0
        %3639 = vmatpush1.msra.mxu0 0.0
        %3640 = vmatprep.subr.mxu0 0.0
        %3641 = vmatpush1.msra.mxu0 0.0
        %3642 = vmatprep.subr.mxu0 0.0
        %3643 = vmatpush1.msra.mxu0 0.0
        %3644 = vmatprep.subr.mxu0 0.0
        %3645 = vmatpush1.msra.mxu0 0.0
        %3646 = vmatprep.subr.mxu0 0.0
        %3647 = vmatpush1.msra.mxu0 0.0
        %3648 = vmatprep.subr.mxu0 0.0
        %3649 = vmatpush1.msra.mxu0 0.0
        %3650 = vmatprep.subr.mxu0 0.0
        %3651 = vmatpush1.msra.mxu0 0.0
        %3652 = vmatprep.subr.mxu0 0.0
        %3653 = vmatpush1.msra.mxu0 0.0
        %3654 = vmatprep.subr.mxu0 0.0
        %3655 = vmatpush1.msra.mxu0 0.0
        %3656 = vmatprep.subr.mxu0 0.0
        %3657 = vmatpush1.msra.mxu0 0.0
        %3658 = vmatprep.subr.mxu0 0.0
        %3659 = vmatpush1.msra.mxu0 0.0
        %3660 = vmatprep.subr.mxu0 %v652
        %3661 = vmatpush1.msra.mxu0 %v651
        %3662 = vmatprep.subr.mxu0 %v644
        %3663 = vmatpush1.msra.mxu0 %v643
        %3664 = vmatprep.subr.mxu0 0.0
        %3665 = vmatpush2.msra.mxu0 0.0
        %3666 = vmatprep.subr.mxu0 0.0
        %3667 = vmatpush2.msra.mxu0 0.0
        %3668 = vmatprep.subr.mxu0 0.0
        %3669 = vmatpush2.msra.mxu0 0.0
        %3670 = vmatprep.subr.mxu0 0.0
        %3671 = vmatpush2.msra.mxu0 0.0
        %3672 = vmatprep.subr.mxu0 0.0
        %3673 = vmatpush2.msra.mxu0 0.0
        %3674 = vmatprep.subr.mxu0 0.0
        %3675 = vmatpush2.msra.mxu0 0.0
        %3676 = vmatprep.subr.mxu0 0.0
        %3677 = vmatpush2.msra.mxu0 0.0
        %3678 = vmatprep.subr.mxu0 0.0
        %3679 = vmatpush2.msra.mxu0 0.0
        %3680 = vmatprep.subr.mxu0 0.0
        %3681 = vmatpush2.msra.mxu0 0.0
        %3682 = vmatprep.subr.mxu0 0.0
        %3683 = vmatpush2.msra.mxu0 0.0
        %3684 = vmatprep.subr.mxu0 0.0
        %3685 = vmatpush2.msra.mxu0 0.0
        %3686 = vmatprep.subr.mxu0 0.0
        %3687 = vmatpush2.msra.mxu0 0.0
        %3688 = vmatprep.subr.mxu0 0.0
        %3689 = vmatpush2.msra.mxu0 0.0
        %3690 = vmatprep.subr.mxu0 0.0
        %3691 = vmatpush2.msra.mxu0 0.0
        %3692 = vmatprep.subr.mxu0 0.0
        %3693 = vmatpush2.msra.mxu0 0.0
        %3694 = vmatprep.subr.mxu0 0.0
        %3695 = vmatpush2.msra.mxu0 0.0
        %3696 = vmatprep.mubr.f32.mxu0 0.0
        %3697 = vmatmul.mubr.f32.gmra.mxu0 %v3377
        %v3698 = vpop.f32.mrf.mxu0
        %v3699 = vadd.f32 0.0, %v3698
        %v3700 = vpop.f32.mrf.mxu0
        %v3701 = vadd.f32 0.0, %v3700
        %3702 = vmatprep.mubr.f32.mxu0 0.0
        %3703 = vmatmul.mubr.f32.gmra.mxu0 %v3379
        %v3704 = vpop.f32.mrf.mxu0
        %v3705 = vadd.f32 0.0, %v3704
        %v3706 = vpop.f32.mrf.mxu0
        %v3707 = vadd.f32 0.0, %v3706
        %3708 = vmatprep.mubr.f32.mxu0 0.0
        %3709 = vmatmul.mubr.f32.gmra.mxu0 %v3381
        %v3710 = vpop.f32.mrf.mxu0
        %v3711 = vadd.f32 0.0, %v3710
        %v3712 = vpop.f32.mrf.mxu0
        %v3713 = vadd.f32 0.0, %v3712
        %3714 = vdwg.mxu0
        %v3715 = vmul.f32 %v3347, %v3450
        %v3716 = vmul.f32 %v3348, %v3452
        %v3717 = vmul.f32 %v3349, %v3533
        %v3718 = vmul.f32 %v3350, %v3535
        %v3719 = vmul.f32 %v3351, %v3616
        %v3720 = vmul.f32 %v3352, %v3618
        %v3721 = vmul.f32 %v3353, %v3699
        %v3722 = vmul.f32 %v3354, %v3701
        %v3723 = vmul.f32 %v3355, %v3456
        %v3724 = vmul.f32 %v3356, %v3458
        %v3725 = vmul.f32 %v3357, %v3539
        %v3726 = vmul.f32 %v3358, %v3541
        %v3727 = vmul.f32 %v3359, %v3622
        %v3728 = vmul.f32 %v3360, %v3624
        %v3729 = vmul.f32 %v3361, %v3705
        %v3730 = vmul.f32 %v3362, %v3707
        %v3731 = vmul.f32 %v3363, %v3462
        %v3732 = vmul.f32 %v3364, %v3464
        %v3733 = vmul.f32 %v3365, %v3545
        %v3734 = vmul.f32 %v3366, %v3547
        %v3735 = vmul.f32 %v3367, %v3628
        %v3736 = vmul.f32 %v3368, %v3630
        %v3737 = vmul.f32 %v3369, %v3711
        %v3738 = vmul.f32 %v3370, %v3713
        %v3739 = vld [vmem:[#allocation9] sm:$0x1]
        %v3741 = vlaneseq
        %v3742 = vshrl.u32 %v3741, 7
        %v3743 = vsub.s32 0, %v3742
        %v3744 = vrot.slane %v3739, %v3743
        %v3746 = vmul.f32 %v1168, %v3744
        %v3747 = vmul.f32 %v1169, %v3744
        %v3748 = vmul.f32 %v1170, %v3744
        %3749 = vmatprep.subr.mxu0 0.0
        %3750 = vmatpush1.msra.mxu0 %v668
        %3751 = vmatprep.subr.mxu0 0.0
        %3752 = vmatpush1.msra.mxu0 %v667
        %3753 = vmatprep.subr.mxu0 0.0
        %3754 = vmatpush1.msra.mxu0 %v666
        %3755 = vmatprep.subr.mxu0 0.0
        %3756 = vmatpush1.msra.mxu0 %v665
        %3757 = vmatprep.subr.mxu0 0.0
        %3758 = vmatpush1.msra.mxu0 %v664
        %3759 = vmatprep.subr.mxu0 0.0
        %3760 = vmatpush1.msra.mxu0 %v663
        %3761 = vmatprep.subr.mxu0 0.0
        %3762 = vmatpush1.msra.mxu0 %v662
        %3763 = vmatprep.subr.mxu0 0.0
        %3764 = vmatpush1.msra.mxu0 %v661
        %3765 = vmatprep.subr.mxu0 0.0
        %3766 = vmatpush1.msra.mxu0 %v660
        %3767 = vmatprep.subr.mxu0 0.0
        %3768 = vmatpush1.msra.mxu0 %v659
        %3769 = vmatprep.subr.mxu0 0.0
        %3770 = vmatpush1.msra.mxu0 %v658
        %3771 = vmatprep.subr.mxu0 0.0
        %3772 = vmatpush1.msra.mxu0 %v657
        %3773 = vmatprep.subr.mxu0 0.0
        %3774 = vmatpush1.msra.mxu0 %v656
        %3775 = vmatprep.subr.mxu0 0.0
        %3776 = vmatpush1.msra.mxu0 %v655
        %3777 = vmatprep.subr.mxu0 0.0
        %3778 = vmatpush1.msra.mxu0 %v654
        %3779 = vmatprep.subr.mxu0 0.0
        %3780 = vmatpush1.msra.mxu0 %v653
        %3781 = vmatprep.subr.mxu0 0.0
        %3782 = vmatpush2.msra.mxu0 %v684
        %3783 = vmatprep.subr.mxu0 0.0
        %3784 = vmatpush2.msra.mxu0 %v683
        %3785 = vmatprep.subr.mxu0 0.0
        %3786 = vmatpush2.msra.mxu0 %v682
        %3787 = vmatprep.subr.mxu0 0.0
        %3788 = vmatpush2.msra.mxu0 %v681
        %3789 = vmatprep.subr.mxu0 0.0
        %3790 = vmatpush2.msra.mxu0 %v680
        %3791 = vmatprep.subr.mxu0 0.0
        %3792 = vmatpush2.msra.mxu0 %v679
        %3793 = vmatprep.subr.mxu0 0.0
        %3794 = vmatpush2.msra.mxu0 %v678
        %3795 = vmatprep.subr.mxu0 0.0
        %3796 = vmatpush2.msra.mxu0 %v677
        %3797 = vmatprep.subr.mxu0 0.0
        %3798 = vmatpush2.msra.mxu0 %v676
        %3799 = vmatprep.subr.mxu0 0.0
        %3800 = vmatpush2.msra.mxu0 %v675
        %3801 = vmatprep.subr.mxu0 0.0
        %3802 = vmatpush2.msra.mxu0 %v674
        %3803 = vmatprep.subr.mxu0 0.0
        %3804 = vmatpush2.msra.mxu0 %v673
        %3805 = vmatprep.subr.mxu0 0.0
        %3806 = vmatpush2.msra.mxu0 %v672
        %3807 = vmatprep.subr.mxu0 0.0
        %3808 = vmatpush2.msra.mxu0 %v671
        %3809 = vmatprep.subr.mxu0 0.0
        %3810 = vmatpush2.msra.mxu0 %v670
        %3811 = vmatprep.subr.mxu0 0.0
        %3812 = vmatpush2.msra.mxu0 %v669
        %3813 = vmatprep.mubr.f32.mxu0 %v3716
        %3814 = vmatmul.mubr.f32.gmra.mxu0 %v3715
        %v3815 = vpop.f32.mrf.mxu0
        %v3816 = vadd.f32 %v3746, %v3815
        %v3817 = vpop.f32.mrf.mxu0
        %3818 = vmatprep.mubr.f32.mxu0 %v3724
        %3819 = vmatmul.mubr.f32.gmra.mxu0 %v3723
        %v3820 = vpop.f32.mrf.mxu0
        %v3821 = vadd.f32 %v3747, %v3820
        %v3822 = vpop.f32.mrf.mxu0
        %3823 = vmatprep.mubr.f32.mxu0 %v3732
        %3824 = vmatmul.mubr.f32.gmra.mxu0 %v3731
        %v3825 = vpop.f32.mrf.mxu0
        %v3826 = vadd.f32 %v3748, %v3825
        %v3827 = vpop.f32.mrf.mxu0
        %3828 = vdwg.mxu0
        %3829 = vmatprep.subr.mxu0 0.0
        %3830 = vmatpush1.msra.mxu0 %v700
        %3831 = vmatprep.subr.mxu0 0.0
        %3832 = vmatpush1.msra.mxu0 %v699
        %3833 = vmatprep.subr.mxu0 0.0
        %3834 = vmatpush1.msra.mxu0 %v698
        %3835 = vmatprep.subr.mxu0 0.0
        %3836 = vmatpush1.msra.mxu0 %v697
        %3837 = vmatprep.subr.mxu0 0.0
        %3838 = vmatpush1.msra.mxu0 %v696
        %3839 = vmatprep.subr.mxu0 0.0
        %3840 = vmatpush1.msra.mxu0 %v695
        %3841 = vmatprep.subr.mxu0 0.0
        %3842 = vmatpush1.msra.mxu0 %v694
        %3843 = vmatprep.subr.mxu0 0.0
        %3844 = vmatpush1.msra.mxu0 %v693
        %3845 = vmatprep.subr.mxu0 0.0
        %3846 = vmatpush1.msra.mxu0 %v692
        %3847 = vmatprep.subr.mxu0 0.0
        %3848 = vmatpush1.msra.mxu0 %v691
        %3849 = vmatprep.subr.mxu0 0.0
        %3850 = vmatpush1.msra.mxu0 %v690
        %3851 = vmatprep.subr.mxu0 0.0
        %3852 = vmatpush1.msra.mxu0 %v689
        %3853 = vmatprep.subr.mxu0 0.0
        %3854 = vmatpush1.msra.mxu0 %v688
        %3855 = vmatprep.subr.mxu0 0.0
        %3856 = vmatpush1.msra.mxu0 %v687
        %3857 = vmatprep.subr.mxu0 0.0
        %3858 = vmatpush1.msra.mxu0 %v686
        %3859 = vmatprep.subr.mxu0 0.0
        %3860 = vmatpush1.msra.mxu0 %v685
        %3861 = vmatprep.subr.mxu0 0.0
        %3862 = vmatpush2.msra.mxu0 %v716
        %3863 = vmatprep.subr.mxu0 0.0
        %3864 = vmatpush2.msra.mxu0 %v715
        %3865 = vmatprep.subr.mxu0 0.0
        %3866 = vmatpush2.msra.mxu0 %v714
        %3867 = vmatprep.subr.mxu0 0.0
        %3868 = vmatpush2.msra.mxu0 %v713
        %3869 = vmatprep.subr.mxu0 0.0
        %3870 = vmatpush2.msra.mxu0 %v712
        %3871 = vmatprep.subr.mxu0 0.0
        %3872 = vmatpush2.msra.mxu0 %v711
        %3873 = vmatprep.subr.mxu0 0.0
        %3874 = vmatpush2.msra.mxu0 %v710
        %3875 = vmatprep.subr.mxu0 0.0
        %3876 = vmatpush2.msra.mxu0 %v709
        %3877 = vmatprep.subr.mxu0 0.0
        %3878 = vmatpush2.msra.mxu0 %v708
        %3879 = vmatprep.subr.mxu0 0.0
        %3880 = vmatpush2.msra.mxu0 %v707
        %3881 = vmatprep.subr.mxu0 0.0
        %3882 = vmatpush2.msra.mxu0 %v706
        %3883 = vmatprep.subr.mxu0 0.0
        %3884 = vmatpush2.msra.mxu0 %v705
        %3885 = vmatprep.subr.mxu0 0.0
        %3886 = vmatpush2.msra.mxu0 %v704
        %3887 = vmatprep.subr.mxu0 0.0
        %3888 = vmatpush2.msra.mxu0 %v703
        %3889 = vmatprep.subr.mxu0 0.0
        %3890 = vmatpush2.msra.mxu0 %v702
        %3891 = vmatprep.subr.mxu0 0.0
        %3892 = vmatpush2.msra.mxu0 %v701
        %3893 = vmatprep.mubr.f32.mxu0 %v3718
        %3894 = vmatmul.mubr.f32.gmra.mxu0 %v3717
        %v3895 = vpop.f32.mrf.mxu0
        %v3896 = vadd.f32 %v3816, %v3895
        %v3897 = vpop.f32.mrf.mxu0
        %3898 = vmatprep.mubr.f32.mxu0 %v3726
        %3899 = vmatmul.mubr.f32.gmra.mxu0 %v3725
        %v3900 = vpop.f32.mrf.mxu0
        %v3901 = vadd.f32 %v3821, %v3900
        %v3902 = vpop.f32.mrf.mxu0
        %3903 = vmatprep.mubr.f32.mxu0 %v3734
        %3904 = vmatmul.mubr.f32.gmra.mxu0 %v3733
        %v3905 = vpop.f32.mrf.mxu0
        %v3906 = vadd.f32 %v3826, %v3905
        %v3907 = vpop.f32.mrf.mxu0
        %3908 = vdwg.mxu0
        %3909 = vmatprep.subr.mxu0 0.0
        %3910 = vmatpush1.msra.mxu0 %v732
        %3911 = vmatprep.subr.mxu0 0.0
        %3912 = vmatpush1.msra.mxu0 %v731
        %3913 = vmatprep.subr.mxu0 0.0
        %3914 = vmatpush1.msra.mxu0 %v730
        %3915 = vmatprep.subr.mxu0 0.0
        %3916 = vmatpush1.msra.mxu0 %v729
        %3917 = vmatprep.subr.mxu0 0.0
        %3918 = vmatpush1.msra.mxu0 %v728
        %3919 = vmatprep.subr.mxu0 0.0
        %3920 = vmatpush1.msra.mxu0 %v727
        %3921 = vmatprep.subr.mxu0 0.0
        %3922 = vmatpush1.msra.mxu0 %v726
        %3923 = vmatprep.subr.mxu0 0.0
        %3924 = vmatpush1.msra.mxu0 %v725
        %3925 = vmatprep.subr.mxu0 0.0
        %3926 = vmatpush1.msra.mxu0 %v724
        %3927 = vmatprep.subr.mxu0 0.0
        %3928 = vmatpush1.msra.mxu0 %v723
        %3929 = vmatprep.subr.mxu0 0.0
        %3930 = vmatpush1.msra.mxu0 %v722
        %3931 = vmatprep.subr.mxu0 0.0
        %3932 = vmatpush1.msra.mxu0 %v721
        %3933 = vmatprep.subr.mxu0 0.0
        %3934 = vmatpush1.msra.mxu0 %v720
        %3935 = vmatprep.subr.mxu0 0.0
        %3936 = vmatpush1.msra.mxu0 %v719
        %3937 = vmatprep.subr.mxu0 0.0
        %3938 = vmatpush1.msra.mxu0 %v718
        %3939 = vmatprep.subr.mxu0 0.0
        %3940 = vmatpush1.msra.mxu0 %v717
        %3941 = vmatprep.subr.mxu0 0.0
        %3942 = vmatpush2.msra.mxu0 %v748
        %3943 = vmatprep.subr.mxu0 0.0
        %3944 = vmatpush2.msra.mxu0 %v747
        %3945 = vmatprep.subr.mxu0 0.0
        %3946 = vmatpush2.msra.mxu0 %v746
        %3947 = vmatprep.subr.mxu0 0.0
        %3948 = vmatpush2.msra.mxu0 %v745
        %3949 = vmatprep.subr.mxu0 0.0
        %3950 = vmatpush2.msra.mxu0 %v744
        %3951 = vmatprep.subr.mxu0 0.0
        %3952 = vmatpush2.msra.mxu0 %v743
        %3953 = vmatprep.subr.mxu0 0.0
        %3954 = vmatpush2.msra.mxu0 %v742
        %3955 = vmatprep.subr.mxu0 0.0
        %3956 = vmatpush2.msra.mxu0 %v741
        %3957 = vmatprep.subr.mxu0 0.0
        %3958 = vmatpush2.msra.mxu0 %v740
        %3959 = vmatprep.subr.mxu0 0.0
        %3960 = vmatpush2.msra.mxu0 %v739
        %3961 = vmatprep.subr.mxu0 0.0
        %3962 = vmatpush2.msra.mxu0 %v738
        %3963 = vmatprep.subr.mxu0 0.0
        %3964 = vmatpush2.msra.mxu0 %v737
        %3965 = vmatprep.subr.mxu0 0.0
        %3966 = vmatpush2.msra.mxu0 %v736
        %3967 = vmatprep.subr.mxu0 0.0
        %3968 = vmatpush2.msra.mxu0 %v735
        %3969 = vmatprep.subr.mxu0 0.0
        %3970 = vmatpush2.msra.mxu0 %v734
        %3971 = vmatprep.subr.mxu0 0.0
        %3972 = vmatpush2.msra.mxu0 %v733
        %3973 = vmatprep.mubr.f32.mxu0 %v3720
        %3974 = vmatmul.mubr.f32.gmra.mxu0 %v3719
        %v3975 = vpop.f32.mrf.mxu0
        %v3976 = vadd.f32 %v3896, %v3975
        %v3977 = vpop.f32.mrf.mxu0
        %3978 = vmatprep.mubr.f32.mxu0 %v3728
        %3979 = vmatmul.mubr.f32.gmra.mxu0 %v3727
        %v3980 = vpop.f32.mrf.mxu0
        %v3981 = vadd.f32 %v3901, %v3980
        %v3982 = vpop.f32.mrf.mxu0
        %3983 = vmatprep.mubr.f32.mxu0 %v3736
        %3984 = vmatmul.mubr.f32.gmra.mxu0 %v3735
        %v3985 = vpop.f32.mrf.mxu0
        %v3986 = vadd.f32 %v3906, %v3985
        %v3987 = vpop.f32.mrf.mxu0
        %3988 = vdwg.mxu0
        %3989 = vmatprep.subr.mxu0 0.0
        %3990 = vmatpush1.msra.mxu0 %v764
        %3991 = vmatprep.subr.mxu0 0.0
        %3992 = vmatpush1.msra.mxu0 %v763
        %3993 = vmatprep.subr.mxu0 0.0
        %3994 = vmatpush1.msra.mxu0 %v762
        %3995 = vmatprep.subr.mxu0 0.0
        %3996 = vmatpush1.msra.mxu0 %v761
        %3997 = vmatprep.subr.mxu0 0.0
        %3998 = vmatpush1.msra.mxu0 %v760
        %3999 = vmatprep.subr.mxu0 0.0
        %4000 = vmatpush1.msra.mxu0 %v759
        %4001 = vmatprep.subr.mxu0 0.0
        %4002 = vmatpush1.msra.mxu0 %v758
        %4003 = vmatprep.subr.mxu0 0.0
        %4004 = vmatpush1.msra.mxu0 %v757
        %4005 = vmatprep.subr.mxu0 0.0
        %4006 = vmatpush1.msra.mxu0 %v756
        %4007 = vmatprep.subr.mxu0 0.0
        %4008 = vmatpush1.msra.mxu0 %v755
        %4009 = vmatprep.subr.mxu0 0.0
        %4010 = vmatpush1.msra.mxu0 %v754
        %4011 = vmatprep.subr.mxu0 0.0
        %4012 = vmatpush1.msra.mxu0 %v753
        %4013 = vmatprep.subr.mxu0 0.0
        %4014 = vmatpush1.msra.mxu0 %v752
        %4015 = vmatprep.subr.mxu0 0.0
        %4016 = vmatpush1.msra.mxu0 %v751
        %4017 = vmatprep.subr.mxu0 0.0
        %4018 = vmatpush1.msra.mxu0 %v750
        %4019 = vmatprep.subr.mxu0 0.0
        %4020 = vmatpush1.msra.mxu0 %v749
        %4021 = vmatprep.subr.mxu0 0.0
        %4022 = vmatpush2.msra.mxu0 %v780
        %4023 = vmatprep.subr.mxu0 0.0
        %4024 = vmatpush2.msra.mxu0 %v779
        %4025 = vmatprep.subr.mxu0 0.0
        %4026 = vmatpush2.msra.mxu0 %v778
        %4027 = vmatprep.subr.mxu0 0.0
        %4028 = vmatpush2.msra.mxu0 %v777
        %4029 = vmatprep.subr.mxu0 0.0
        %4030 = vmatpush2.msra.mxu0 %v776
        %4031 = vmatprep.subr.mxu0 0.0
        %4032 = vmatpush2.msra.mxu0 %v775
        %4033 = vmatprep.subr.mxu0 0.0
        %4034 = vmatpush2.msra.mxu0 %v774
        %4035 = vmatprep.subr.mxu0 0.0
        %4036 = vmatpush2.msra.mxu0 %v773
        %4037 = vmatprep.subr.mxu0 0.0
        %4038 = vmatpush2.msra.mxu0 %v772
        %4039 = vmatprep.subr.mxu0 0.0
        %4040 = vmatpush2.msra.mxu0 %v771
        %4041 = vmatprep.subr.mxu0 0.0
        %4042 = vmatpush2.msra.mxu0 %v770
        %4043 = vmatprep.subr.mxu0 0.0
        %4044 = vmatpush2.msra.mxu0 %v769
        %4045 = vmatprep.subr.mxu0 0.0
        %4046 = vmatpush2.msra.mxu0 %v768
        %4047 = vmatprep.subr.mxu0 0.0
        %4048 = vmatpush2.msra.mxu0 %v767
        %4049 = vmatprep.subr.mxu0 0.0
        %4050 = vmatpush2.msra.mxu0 %v766
        %4051 = vmatprep.subr.mxu0 0.0
        %4052 = vmatpush2.msra.mxu0 %v765
        %4053 = vmatprep.mubr.f32.mxu0 %v3722
        %4054 = vmatmul.mubr.f32.gmra.mxu0 %v3721
        %v4055 = vpop.f32.mrf.mxu0
        %v4056 = vadd.f32 %v3976, %v4055
        %v4057 = vpop.f32.mrf.mxu0
        %4058 = vmatprep.mubr.f32.mxu0 %v3730
        %4059 = vmatmul.mubr.f32.gmra.mxu0 %v3729
        %v4060 = vpop.f32.mrf.mxu0
        %v4061 = vadd.f32 %v3981, %v4060
        %v4062 = vpop.f32.mrf.mxu0
        %4063 = vmatprep.mubr.f32.mxu0 %v3738
        %4064 = vmatmul.mubr.f32.gmra.mxu0 %v3737
        %v4065 = vpop.f32.mrf.mxu0
        %v4066 = vadd.f32 %v3986, %v4065
        %v4067 = vpop.f32.mrf.mxu0
        %4068 = vdwg.mxu0
        %v4069 = vsub.f32 0.0, %v1056
        %v4070 = vsub.f32 0.0, %v1061
        %v4071 = vsub.f32 0.0, %v1066
        %v4072 = vmul.f32 %v4069, 1.442695
        %v4073 = vpow.pop %v4072
        %v4074 = vmul.f32 %v4070, 1.442695
        %v4075 = vpow.pop %v4074
        %v4076 = vmul.f32 %v4071, 1.442695
        %v4077 = vpow.pop %v4076
        %v4078 = vadd.f32 %v4073, 1.0
        %v4079 = vadd.f32 %v4075, 1.0
        %v4080 = vadd.f32 %v4077, 1.0
        %v4081 = vrcp.pop %v4078
        %v4082 = vmul.f32 1.0, %v4081
        %v4083 = vrcp.pop %v4079
        %v4084 = vmul.f32 1.0, %v4083
        %v4085 = vrcp.pop %v4080
        %v4086 = vmul.f32 1.0, %v4085
        %v4087 = vmul.f32 %v1056, %v4082
        %v4088 = vmul.f32 %v1061, %v4084
        %v4089 = vmul.f32 %v1066, %v4086
        %4093 = vrot.lane.b32.xlu0 %v4087, 64
        %v4094 = vpop.permute.xlu0 %4093
        %4095 = vrot.lane.b32.xlu0 %v4088, 64
        %v4096 = vpop.permute.xlu0 %4095
        %4097 = vrot.lane.b32.xlu0 %v4089, 64
        %v4098 = vpop.permute.xlu0 %4097
        %v4102 = vmul.f32 %v4056, %v4094
        %v4103 = vmul.f32 %v4061, %v4096
        %v4104 = vmul.f32 %v4066, %v4098
        %v4105 = vld [vmem:[%s11] sm:$0xff]
        %v4106 = vld [vmem:[%s11 + $0x8] sm:$0xff]
        %v4107 = vld [vmem:[%s11 + $0x10] sm:$0xff]
        %v4108 = vld [vmem:[%s11 + $0x18] sm:$0xff]
        %v4109 = vld [vmem:[%s11 + $0x20] sm:$0xff]
        %v4110 = vld [vmem:[%s11 + $0x28] sm:$0xff]
        %v4111 = vld [vmem:[%s11 + $0x30] sm:$0xff]
        %v4112 = vld [vmem:[%s11 + $0x38] sm:$0xff]
        %v4114 = vsel %vm1179, %v4102, 0
        %v4117 = vsel %vm1179, %v4103, 0
        %v4120 = vsel %vm1179, %v4104, 0
        %4122 = vmatprep.subr.mxu0 0.0
        %4123 = vmatpush1.msra.mxu0 0.0
        %4124 = vmatprep.subr.mxu0 0.0
        %4125 = vmatpush1.msra.mxu0 0.0
        %4126 = vmatprep.subr.mxu0 0.0
        %4127 = vmatpush1.msra.mxu0 0.0
        %4128 = vmatprep.subr.mxu0 0.0
        %4129 = vmatpush1.msra.mxu0 0.0
        %4130 = vmatprep.subr.mxu0 0.0
        %4131 = vmatpush1.msra.mxu0 0.0
        %4132 = vmatprep.subr.mxu0 0.0
        %4133 = vmatpush1.msra.mxu0 0.0
        %4134 = vmatprep.subr.mxu0 0.0
        %4135 = vmatpush1.msra.mxu0 0.0
        %4136 = vmatprep.subr.mxu0 0.0
        %4137 = vmatpush1.msra.mxu0 0.0
        %4138 = vmatprep.subr.mxu0 0.0
        %4139 = vmatpush1.msra.mxu0 %v4112
        %4140 = vmatprep.subr.mxu0 0.0
        %4141 = vmatpush1.msra.mxu0 %v4111
        %4142 = vmatprep.subr.mxu0 0.0
        %4143 = vmatpush1.msra.mxu0 %v4110
        %4144 = vmatprep.subr.mxu0 0.0
        %4145 = vmatpush1.msra.mxu0 %v4109
        %4146 = vmatprep.subr.mxu0 0.0
        %4147 = vmatpush1.msra.mxu0 %v4108
        %4148 = vmatprep.subr.mxu0 0.0
        %4149 = vmatpush1.msra.mxu0 %v4107
        %4150 = vmatprep.subr.mxu0 0.0
        %4151 = vmatpush1.msra.mxu0 %v4106
        %4152 = vmatprep.subr.mxu0 0.0
        %4153 = vmatpush1.msra.mxu0 %v4105
        %4154 = vmatprep.subr.mxu0 0.0
        %4155 = vmatpush2.msra.mxu0 0.0
        %4156 = vmatprep.subr.mxu0 0.0
        %4157 = vmatpush2.msra.mxu0 0.0
        %4158 = vmatprep.subr.mxu0 0.0
        %4159 = vmatpush2.msra.mxu0 0.0
        %4160 = vmatprep.subr.mxu0 0.0
        %4161 = vmatpush2.msra.mxu0 0.0
        %4162 = vmatprep.subr.mxu0 0.0
        %4163 = vmatpush2.msra.mxu0 0.0
        %4164 = vmatprep.subr.mxu0 0.0
        %4165 = vmatpush2.msra.mxu0 0.0
        %4166 = vmatprep.subr.mxu0 0.0
        %4167 = vmatpush2.msra.mxu0 0.0
        %4168 = vmatprep.subr.mxu0 0.0
        %4169 = vmatpush2.msra.mxu0 0.0
        %4170 = vmatprep.subr.mxu0 0.0
        %4171 = vmatpush2.msra.mxu0 0.0
        %4172 = vmatprep.subr.mxu0 0.0
        %4173 = vmatpush2.msra.mxu0 0.0
        %4174 = vmatprep.subr.mxu0 0.0
        %4175 = vmatpush2.msra.mxu0 0.0
        %4176 = vmatprep.subr.mxu0 0.0
        %4177 = vmatpush2.msra.mxu0 0.0
        %4178 = vmatprep.subr.mxu0 0.0
        %4179 = vmatpush2.msra.mxu0 0.0
        %4180 = vmatprep.subr.mxu0 0.0
        %4181 = vmatpush2.msra.mxu0 0.0
        %4182 = vmatprep.subr.mxu0 0.0
        %4183 = vmatpush2.msra.mxu0 0.0
        %4184 = vmatprep.subr.mxu0 0.0
        %4185 = vmatpush2.msra.mxu0 0.0
        %4186 = vmatprep.mubr.f32.mxu0 0.0
        %4187 = vmatmul.mubr.f32.gmra.mxu0 %v4114
        %v4188 = vpop.f32.mrf.mxu0
        %v4189 = vpop.f32.mrf.mxu0
        %4190 = vmatprep.mubr.f32.mxu0 0.0
        %4191 = vmatmul.mubr.f32.gmra.mxu0 %v4117
        %v4192 = vpop.f32.mrf.mxu0
        %v4193 = vadd.f32 0.0, %v4192
        %v4194 = vpop.f32.mrf.mxu0
        %4195 = vmatprep.mubr.f32.mxu0 0.0
        %4196 = vmatmul.mubr.f32.gmra.mxu0 %v4120
        %v4197 = vpop.f32.mrf.mxu0
        %v4198 = vadd.f32 0.0, %v4197
        %v4199 = vpop.f32.mrf.mxu0
        %4200 = vdwg.mxu0
        %s4201 = scalar_lea.vmem [#allocation4], 16
        %v4202 = vld [vmem:[%s4201] sm:$0xff]
        %v4203 = vld [vmem:[%s4201 + $0x8] sm:$0xff]
        %s4204 = scalar_lea.vmem %s3, 1
        %v4205 = vld [vmem:[%s4204] sm:$0x1]
        %v4207 = vlaneseq
        %v4208 = vshrl.u32 %v4207, 7
        %v4209 = vsub.s32 0, %v4208
        %v4210 = vrot.slane %v4205, %v4209
        %4212 = vmatprep.subr.mxu0 0.0
        %4213 = vmatpush1.msra.mxu0 0.0
        %4214 = vmatprep.subr.mxu0 0.0
        %4215 = vmatpush1.msra.mxu0 0.0
        %4216 = vmatprep.subr.mxu0 0.0
        %4217 = vmatpush1.msra.mxu0 0.0
        %4218 = vmatprep.subr.mxu0 0.0
        %4219 = vmatpush1.msra.mxu0 0.0
        %4220 = vmatprep.subr.mxu0 0.0
        %4221 = vmatpush1.msra.mxu0 0.0
        %4222 = vmatprep.subr.mxu0 0.0
        %4223 = vmatpush1.msra.mxu0 0.0
        %4224 = vmatprep.subr.mxu0 0.0
        %4225 = vmatpush1.msra.mxu0 0.0
        %4226 = vmatprep.subr.mxu0 0.0
        %4227 = vmatpush1.msra.mxu0 0.0
        %4228 = vmatprep.subr.mxu0 0.0
        %4229 = vmatpush1.msra.mxu0 0.0
        %4230 = vmatprep.subr.mxu0 0.0
        %4231 = vmatpush1.msra.mxu0 0.0
        %4232 = vmatprep.subr.mxu0 0.0
        %4233 = vmatpush1.msra.mxu0 0.0
        %4234 = vmatprep.subr.mxu0 0.0
        %4235 = vmatpush1.msra.mxu0 0.0
        %4236 = vmatprep.subr.mxu0 0.0
        %4237 = vmatpush1.msra.mxu0 0.0
        %4238 = vmatprep.subr.mxu0 0.0
        %4239 = vmatpush1.msra.mxu0 0.0
        %4240 = vmatprep.subr.mxu0 0.0
        %4241 = vmatpush1.msra.mxu0 %v4203
        %4242 = vmatprep.subr.mxu0 0.0
        %4243 = vmatpush1.msra.mxu0 %v4202
        %4244 = vmatprep.subr.mxu0 0.0
        %4245 = vmatpush2.msra.mxu0 0.0
        %4246 = vmatprep.subr.mxu0 0.0
        %4247 = vmatpush2.msra.mxu0 0.0
        %4248 = vmatprep.subr.mxu0 0.0
        %4249 = vmatpush2.msra.mxu0 0.0
        %4250 = vmatprep.subr.mxu0 0.0
        %4251 = vmatpush2.msra.mxu0 0.0
        %4252 = vmatprep.subr.mxu0 0.0
        %4253 = vmatpush2.msra.mxu0 0.0
        %4254 = vmatprep.subr.mxu0 0.0
        %4255 = vmatpush2.msra.mxu0 0.0
        %4256 = vmatprep.subr.mxu0 0.0
        %4257 = vmatpush2.msra.mxu0 0.0
        %4258 = vmatprep.subr.mxu0 0.0
        %4259 = vmatpush2.msra.mxu0 0.0
        %4260 = vmatprep.subr.mxu0 0.0
        %4261 = vmatpush2.msra.mxu0 0.0
        %4262 = vmatprep.subr.mxu0 0.0
        %4263 = vmatpush2.msra.mxu0 0.0
        %4264 = vmatprep.subr.mxu0 0.0
        %4265 = vmatpush2.msra.mxu0 0.0
        %4266 = vmatprep.subr.mxu0 0.0
        %4267 = vmatpush2.msra.mxu0 0.0
        %4268 = vmatprep.subr.mxu0 0.0
        %4269 = vmatpush2.msra.mxu0 0.0
        %4270 = vmatprep.subr.mxu0 0.0
        %4271 = vmatpush2.msra.mxu0 0.0
        %4272 = vmatprep.subr.mxu0 0.0
        %4273 = vmatpush2.msra.mxu0 0.0
        %4274 = vmatprep.subr.mxu0 0.0
        %4275 = vmatpush2.msra.mxu0 0.0
        %4276 = vmatprep.mubr.f32.mxu0 0.0
        %4277 = vmatmul.mubr.f32.gmra.mxu0 %v856
        %v4278 = vpop.f32.mrf.mxu0
        %v4279 = vadd.f32 %v4210, %v4278
        %v4280 = vpop.f32.mrf.mxu0
        %4281 = vdwg.mxu0
        %v4282 = vadd.f32 %v4193, %v635
        %v4283 = vadd.f32 %v4198, %v636
        %v4284 = vsel %vm928, %v4279, 0.0
        %4285 = vadd.xlane.f32.xlu0 %v4284
        %v4286 = vpop.xlane.xlu0 %4285
        %v4287 = vsel %vm928, %v4282, 0.0
        %4288 = vadd.xlane.f32.xlu0 %v4287
        %v4289 = vpop.xlane.xlu0 %4288
        %v4290 = vsel %vm928, %v4283, 0.0
        %4291 = vadd.xlane.f32.xlu0 %v4290
        %v4292 = vpop.xlane.xlu0 %4291
        %v4293 = vmul.f32 %v4286, %v938
        %v4294 = vmul.f32 %v4289, %v938
        %v4295 = vmul.f32 %v4292, %v938
        %v4296 = vsub.f32 %v4279, %v4293
        %v4297 = vsub.f32 %v4282, %v4294
        %v4298 = vsub.f32 %v4283, %v4295
        %v4299 = vmul.f32 %v4296, %v4296
        %v4300 = vmul.f32 %v4297, %v4297
        %v4301 = vmul.f32 %v4298, %v4298
        %v4302 = vsel %vm928, %v4299, 0.0
        %4303 = vadd.xlane.f32.xlu0 %v4302
        %v4304 = vpop.xlane.xlu0 %4303
        %v4305 = vsel %vm928, %v4300, 0.0
        %4306 = vadd.xlane.f32.xlu0 %v4305
        %v4307 = vpop.xlane.xlu0 %4306
        %v4308 = vsel %vm928, %v4301, 0.0
        %4309 = vadd.xlane.f32.xlu0 %v4308
        %v4310 = vpop.xlane.xlu0 %4309
        %v4311 = vmul.f32 %v4304, %v938
        %v4312 = vmul.f32 %v4307, %v938
        %v4313 = vmul.f32 %v4310, %v938
        %v4314 = vadd.f32 %v4311, 1e-05
        %v4315 = vadd.f32 %v4312, 1e-05
        %v4316 = vadd.f32 %v4313, 1e-05
        %v4317 = vrsqrt.pop %v4314
        %v4318 = vrsqrt.pop %v4315
        %v4319 = vrsqrt.pop %v4316
        %v4320 = vmul.f32 %v4296, %v4317
        %v4321 = vmul.f32 %v4297, %v4318
        %v4322 = vmul.f32 %v4298, %v4319
        %s4323 = scalar_lea.vmem %s4, 32
        %v4324 = vld [vmem:[%s4323] sm:$0xff]
        %v4325 = vld [vmem:[%s4323 + $0x8] sm:$0xff]
        %v4326 = vld [vmem:[%s4323 + $0x10] sm:$0xff]
        %v4327 = vld [vmem:[%s4323 + $0x18] sm:$0xff]
        %s4328 = scalar_lea.vmem %s5, 1
        %v4329 = vld [vmem:[%s4328] sm:$0x1]
        %v4331 = vlaneseq
        %v4332 = vshrl.u32 %v4331, 7
        %v4333 = vsub.s32 0, %v4332
        %v4334 = vrot.slane %v4329, %v4333
        %v4337 = vsel %vm928, %v4320, 0
        %v4340 = vsel %vm928, %v4321, 0
        %v4343 = vsel %vm928, %v4322, 0
        %4345 = vmatprep.subr.mxu0 0.0
        %4346 = vmatpush1.msra.mxu0 0.0
        %4347 = vmatprep.subr.mxu0 0.0
        %4348 = vmatpush1.msra.mxu0 0.0
        %4349 = vmatprep.subr.mxu0 0.0
        %4350 = vmatpush1.msra.mxu0 0.0
        %4351 = vmatprep.subr.mxu0 0.0
        %4352 = vmatpush1.msra.mxu0 0.0
        %4353 = vmatprep.subr.mxu0 0.0
        %4354 = vmatpush1.msra.mxu0 0.0
        %4355 = vmatprep.subr.mxu0 0.0
        %4356 = vmatpush1.msra.mxu0 0.0
        %4357 = vmatprep.subr.mxu0 0.0
        %4358 = vmatpush1.msra.mxu0 0.0
        %4359 = vmatprep.subr.mxu0 0.0
        %4360 = vmatpush1.msra.mxu0 0.0
        %4361 = vmatprep.subr.mxu0 0.0
        %4362 = vmatpush1.msra.mxu0 0.0
        %4363 = vmatprep.subr.mxu0 0.0
        %4364 = vmatpush1.msra.mxu0 0.0
        %4365 = vmatprep.subr.mxu0 0.0
        %4366 = vmatpush1.msra.mxu0 0.0
        %4367 = vmatprep.subr.mxu0 0.0
        %4368 = vmatpush1.msra.mxu0 0.0
        %4369 = vmatprep.subr.mxu0 0.0
        %4370 = vmatpush1.msra.mxu0 %v4327
        %4371 = vmatprep.subr.mxu0 0.0
        %4372 = vmatpush1.msra.mxu0 %v4326
        %4373 = vmatprep.subr.mxu0 0.0
        %4374 = vmatpush1.msra.mxu0 %v4325
        %4375 = vmatprep.subr.mxu0 0.0
        %4376 = vmatpush1.msra.mxu0 %v4324
        %4377 = vmatprep.subr.mxu0 0.0
        %4378 = vmatpush2.msra.mxu0 0.0
        %4379 = vmatprep.subr.mxu0 0.0
        %4380 = vmatpush2.msra.mxu0 0.0
        %4381 = vmatprep.subr.mxu0 0.0
        %4382 = vmatpush2.msra.mxu0 0.0
        %4383 = vmatprep.subr.mxu0 0.0
        %4384 = vmatpush2.msra.mxu0 0.0
        %4385 = vmatprep.subr.mxu0 0.0
        %4386 = vmatpush2.msra.mxu0 0.0
        %4387 = vmatprep.subr.mxu0 0.0
        %4388 = vmatpush2.msra.mxu0 0.0
        %4389 = vmatprep.subr.mxu0 0.0
        %4390 = vmatpush2.msra.mxu0 0.0
        %4391 = vmatprep.subr.mxu0 0.0
        %4392 = vmatpush2.msra.mxu0 0.0
        %4393 = vmatprep.subr.mxu0 0.0
        %4394 = vmatpush2.msra.mxu0 0.0
        %4395 = vmatprep.subr.mxu0 0.0
        %4396 = vmatpush2.msra.mxu0 0.0
        %4397 = vmatprep.subr.mxu0 0.0
        %4398 = vmatpush2.msra.mxu0 0.0
        %4399 = vmatprep.subr.mxu0 0.0
        %4400 = vmatpush2.msra.mxu0 0.0
        %4401 = vmatprep.subr.mxu0 0.0
        %4402 = vmatpush2.msra.mxu0 0.0
        %4403 = vmatprep.subr.mxu0 0.0
        %4404 = vmatpush2.msra.mxu0 0.0
        %4405 = vmatprep.subr.mxu0 0.0
        %4406 = vmatpush2.msra.mxu0 0.0
        %4407 = vmatprep.subr.mxu0 0.0
        %4408 = vmatpush2.msra.mxu0 0.0
        %4409 = vmatprep.mubr.f32.mxu0 0.0
        %4410 = vmatmul.mubr.f32.gmra.mxu0 %v4337
        %v4411 = vpop.f32.mrf.mxu0
        %v4412 = vadd.f32 %v4334, %v4411
        %v4413 = vpop.f32.mrf.mxu0
        %4414 = vmatprep.mubr.f32.mxu0 0.0
        %4415 = vmatmul.mubr.f32.gmra.mxu0 %v4340
        %v4416 = vpop.f32.mrf.mxu0
        %v4417 = vadd.f32 %v4334, %v4416
        %v4418 = vpop.f32.mrf.mxu0
        %4419 = vmatprep.mubr.f32.mxu0 0.0
        %4420 = vmatmul.mubr.f32.gmra.mxu0 %v4343
        %v4421 = vpop.f32.mrf.mxu0
        %v4422 = vadd.f32 %v4334, %v4421
        %v4423 = vpop.f32.mrf.mxu0
        %4424 = vdwg.mxu0
        %s4425 = scalar_lea.vmem %s6, 4
        %v4426 = vld [vmem:[%s4425] sm:$0xf]
        %v4427 = vlaneseq
        %v4428 = vshrl.u32 %v4427, 7
        %v4429 = vsub.s32 3, %v4428
        %v4430 = vrot.slane %v4426, %v4429
        %v4431 = vmul.f32 %v4412, %v4430
        %v4432 = vmul.f32 %v4417, %v4430
        %v4433 = vmul.f32 %v4422, %v4430
        %v4437 = vrot.slane %v4412, 5
        %v4438 = vrot.slane %v4417, 5
        %v4439 = vsel %vm1080, %v4437, %v4438
        %v4440 = vrot.slane %v4422, 5
        %v4441 = vsel %vm1080, %v4438, %v4440
        %v4445 = vsel %vm1080, 0.0, %v4437
        %v4446 = vlaneseq
        %v4447 = vshrl.u32 %v4446, 7
        %v4448 = vsub.s32 0, %v4447
        %v4449 = vrot.slane %v4426, %v4448
        %v4450 = vmul.f32 %v4445, %v4449
        %v4451 = vmul.f32 %v4439, %v4449
        %v4452 = vmul.f32 %v4441, %v4449
        %v4453 = vadd.f32 %v4431, %v4450
        %v4454 = vadd.f32 %v4432, %v4451
        %v4455 = vadd.f32 %v4433, %v4452
        %v4456 = vrot.slane %v4412, 6
        %v4457 = vrot.slane %v4417, 6
        %v4458 = vsel %vm1100, %v4456, %v4457
        %v4459 = vrot.slane %v4422, 6
        %v4460 = vsel %vm1100, %v4457, %v4459
        %v4464 = vsel %vm1100, 0.0, %v4456
        %v4465 = vlaneseq
        %v4466 = vshrl.u32 %v4465, 7
        %v4467 = vsub.s32 1, %v4466
        %v4468 = vrot.slane %v4426, %v4467
        %v4469 = vmul.f32 %v4464, %v4468
        %v4470 = vmul.f32 %v4458, %v4468
        %v4471 = vmul.f32 %v4460, %v4468
        %v4472 = vadd.f32 %v4453, %v4469
        %v4473 = vadd.f32 %v4454, %v4470
        %v4474 = vadd.f32 %v4455, %v4471
        %v4475 = vrot.slane %v4412, 7
        %v4476 = vrot.slane %v4417, 7
        %v4477 = vsel %vm1120, %v4475, %v4476
        %v4478 = vrot.slane %v4422, 7
        %v4479 = vsel %vm1120, %v4476, %v4478
        %v4483 = vsel %vm1120, 0.0, %v4475
        %v4484 = vlaneseq
        %v4485 = vshrl.u32 %v4484, 7
        %v4486 = vsub.s32 2, %v4485
        %v4487 = vrot.slane %v4426, %v4486
        %v4488 = vmul.f32 %v4483, %v4487
        %v4489 = vmul.f32 %v4477, %v4487
        %v4490 = vmul.f32 %v4479, %v4487
        %v4491 = vadd.f32 %v4472, %v4488
        %v4492 = vadd.f32 %v4473, %v4489
        %v4493 = vadd.f32 %v4474, %v4490
        %s4494 = scalar_lea.vmem [#allocation6], 1
        %v4495 = vld [vmem:[%s4494] sm:$0x1]
        %v4497 = vlaneseq
        %v4498 = vshrl.u32 %v4497, 7
        %v4499 = vsub.s32 0, %v4498
        %v4500 = vrot.slane %v4495, %v4499
        %v4502 = vadd.f32 %v4491, %v4500
        %v4503 = vadd.f32 %v4492, %v4500
        %v4504 = vadd.f32 %v4493, %v4500
        %v4505 = vsub.f32 0.0, %v4502
        %v4506 = vsub.f32 0.0, %v4503
        %v4507 = vsub.f32 0.0, %v4504
        %v4508 = vmul.f32 %v4505, 1.442695
        %v4509 = vpow.pop %v4508
        %v4510 = vmul.f32 %v4506, 1.442695
        %v4511 = vpow.pop %v4510
        %v4512 = vmul.f32 %v4507, 1.442695
        %v4513 = vpow.pop %v4512
        %v4514 = vadd.f32 %v4509, 1.0
        %v4515 = vadd.f32 %v4511, 1.0
        %v4516 = vadd.f32 %v4513, 1.0
        %v4517 = vrcp.pop %v4514
        %v4518 = vmul.f32 1.0, %v4517
        %v4519 = vrcp.pop %v4515
        %v4520 = vmul.f32 1.0, %v4519
        %v4521 = vrcp.pop %v4516
        %v4522 = vmul.f32 1.0, %v4521
        %v4523 = vmul.f32 %v4502, %v4518
        %v4524 = vmul.f32 %v4503, %v4520
        %v4525 = vmul.f32 %v4504, %v4522
        %s4526 = scalar_lea.vmem %s8, 64
        %v4527 = vld [vmem:[%s4526] sm:$0xff]
        %v4528 = vld [vmem:[%s4526 + $0x8] sm:$0xff]
        %v4529 = vld [vmem:[%s4526 + $0x10] sm:$0xff]
        %v4530 = vld [vmem:[%s4526 + $0x18] sm:$0xff]
        %v4531 = vld [vmem:[%s4526 + $0x20] sm:$0xff]
        %v4532 = vld [vmem:[%s4526 + $0x28] sm:$0xff]
        %v4533 = vld [vmem:[%s4526 + $0x30] sm:$0xff]
        %v4534 = vld [vmem:[%s4526 + $0x38] sm:$0xff]
        %v4536 = vsel %vm1179, %v4523, 0
        %v4539 = vsel %vm1179, %v4524, 0
        %v4542 = vsel %vm1179, %v4525, 0
        %4544 = vmatprep.subr.mxu0 0.0
        %4545 = vmatpush1.msra.mxu0 0.0
        %4546 = vmatprep.subr.mxu0 0.0
        %4547 = vmatpush1.msra.mxu0 0.0
        %4548 = vmatprep.subr.mxu0 0.0
        %4549 = vmatpush1.msra.mxu0 0.0
        %4550 = vmatprep.subr.mxu0 0.0
        %4551 = vmatpush1.msra.mxu0 0.0
        %4552 = vmatprep.subr.mxu0 0.0
        %4553 = vmatpush1.msra.mxu0 0.0
        %4554 = vmatprep.subr.mxu0 0.0
        %4555 = vmatpush1.msra.mxu0 0.0
        %4556 = vmatprep.subr.mxu0 0.0
        %4557 = vmatpush1.msra.mxu0 0.0
        %4558 = vmatprep.subr.mxu0 0.0
        %4559 = vmatpush1.msra.mxu0 0.0
        %4560 = vmatprep.subr.mxu0 0.0
        %4561 = vmatpush1.msra.mxu0 %v4534
        %4562 = vmatprep.subr.mxu0 0.0
        %4563 = vmatpush1.msra.mxu0 %v4533
        %4564 = vmatprep.subr.mxu0 0.0
        %4565 = vmatpush1.msra.mxu0 %v4532
        %4566 = vmatprep.subr.mxu0 0.0
        %4567 = vmatpush1.msra.mxu0 %v4531
        %4568 = vmatprep.subr.mxu0 0.0
        %4569 = vmatpush1.msra.mxu0 %v4530
        %4570 = vmatprep.subr.mxu0 0.0
        %4571 = vmatpush1.msra.mxu0 %v4529
        %4572 = vmatprep.subr.mxu0 0.0
        %4573 = vmatpush1.msra.mxu0 %v4528
        %4574 = vmatprep.subr.mxu0 0.0
        %4575 = vmatpush1.msra.mxu0 %v4527
        %4576 = vmatprep.subr.mxu0 0.0
        %4577 = vmatpush2.msra.mxu0 0.0
        %4578 = vmatprep.subr.mxu0 0.0
        %4579 = vmatpush2.msra.mxu0 0.0
        %4580 = vmatprep.subr.mxu0 0.0
        %4581 = vmatpush2.msra.mxu0 0.0
        %4582 = vmatprep.subr.mxu0 0.0
        %4583 = vmatpush2.msra.mxu0 0.0
        %4584 = vmatprep.subr.mxu0 0.0
        %4585 = vmatpush2.msra.mxu0 0.0
        %4586 = vmatprep.subr.mxu0 0.0
        %4587 = vmatpush2.msra.mxu0 0.0
        %4588 = vmatprep.subr.mxu0 0.0
        %4589 = vmatpush2.msra.mxu0 0.0
        %4590 = vmatprep.subr.mxu0 0.0
        %4591 = vmatpush2.msra.mxu0 0.0
        %4592 = vmatprep.subr.mxu0 0.0
        %4593 = vmatpush2.msra.mxu0 0.0
        %4594 = vmatprep.subr.mxu0 0.0
        %4595 = vmatpush2.msra.mxu0 0.0
        %4596 = vmatprep.subr.mxu0 0.0
        %4597 = vmatpush2.msra.mxu0 0.0
        %4598 = vmatprep.subr.mxu0 0.0
        %4599 = vmatpush2.msra.mxu0 0.0
        %4600 = vmatprep.subr.mxu0 0.0
        %4601 = vmatpush2.msra.mxu0 0.0
        %4602 = vmatprep.subr.mxu0 0.0
        %4603 = vmatpush2.msra.mxu0 0.0
        %4604 = vmatprep.subr.mxu0 0.0
        %4605 = vmatpush2.msra.mxu0 0.0
        %4606 = vmatprep.subr.mxu0 0.0
        %4607 = vmatpush2.msra.mxu0 0.0
        %4608 = vmatprep.mubr.f32.mxu0 0.0
        %4609 = vmatmul.mubr.f32.gmra.mxu0 %v4536
        %v4610 = vpop.f32.mrf.mxu0
        %v4611 = vadd.f32 0.0, %v4610
        %v4612 = vpop.f32.mrf.mxu0
        %4613 = vmatprep.mubr.f32.mxu0 0.0
        %4614 = vmatmul.mubr.f32.gmra.mxu0 %v4539
        %v4615 = vpop.f32.mrf.mxu0
        %v4616 = vadd.f32 0.0, %v4615
        %v4617 = vpop.f32.mrf.mxu0
        %4618 = vmatprep.mubr.f32.mxu0 0.0
        %4619 = vmatmul.mubr.f32.gmra.mxu0 %v4542
        %v4620 = vpop.f32.mrf.mxu0
        %v4621 = vadd.f32 0.0, %v4620
        %v4622 = vpop.f32.mrf.mxu0
        %4623 = vdwg.mxu0
        %s4624 = scalar_lea.vmem [#allocation7], 1
        %v4625 = vld [vmem:[%s4624] sm:$0x1]
        %v4627 = vlaneseq
        %v4628 = vshrl.u32 %v4627, 7
        %v4629 = vsub.s32 0, %v4628
        %v4630 = vrot.slane %v4625, %v4629
        %v4632 = vadd.f32 %v4611, %v4630
        %v4633 = vadd.f32 %v4616, %v4630
        %v4634 = vadd.f32 %v4621, %v4630
        %v4635 = vmax.f32 %v4632, 0.0
        %v4636 = vmax.f32 %v4633, 0.0
        %v4637 = vmax.f32 %v4634, 0.0
        %v4638 = vand.u32 2147483647, %v4632
        %v4639 = vand.u32 2147483647, %v4633
        %v4640 = vand.u32 2147483647, %v4634
        %v4641 = vsub.f32 0.0, %v4638
        %v4642 = vsub.f32 0.0, %v4639
        %v4643 = vsub.f32 0.0, %v4640
        %v4644 = vmul.f32 %v4641, 1.442695
        %v4645 = vpow.pop %v4644
        %v4646 = vmul.f32 %v4642, 1.442695
        %v4647 = vpow.pop %v4646
        %v4648 = vmul.f32 %v4643, 1.442695
        %v4649 = vpow.pop %v4648
        %v4650 = vadd.f32 %v4645, 1.0
        %v4651 = vadd.f32 %v4647, 1.0
        %v4652 = vadd.f32 %v4649, 1.0
        %v4653 = vlog2.pop %v4650
        %v4654 = vmul.f32 %v4653, 0.6931472
        %v4655 = vlog2.pop %v4651
        %v4656 = vmul.f32 %v4655, 0.6931472
        %v4657 = vlog2.pop %v4652
        %v4658 = vmul.f32 %v4657, 0.6931472
        %v4659 = vadd.f32 %v4635, %v4654
        %v4660 = vadd.f32 %v4636, %v4656
        %v4661 = vadd.f32 %v4637, %v4658
        %s4662 = scalar_lea.vmem %s16, 512
        %v4663 = vld [vmem:[%s4662] sm:$0xff]
        %v4664 = vld [vmem:[%s4662 + $0x8] sm:$0xff]
        %v4665 = vld [vmem:[%s4662 + $0x10] sm:$0xff]
        %v4666 = vld [vmem:[%s4662 + $0x18] sm:$0xff]
        %v4667 = vld [vmem:[%s4662 + $0x20] sm:$0xff]
        %v4668 = vld [vmem:[%s4662 + $0x28] sm:$0xff]
        %v4669 = vld [vmem:[%s4662 + $0x30] sm:$0xff]
        %v4670 = vld [vmem:[%s4662 + $0x38] sm:$0xff]
        %v4671 = vld [vmem:[%s4662 + $0x40] sm:$0xff]
        %v4672 = vld [vmem:[%s4662 + $0x48] sm:$0xff]
        %v4673 = vld [vmem:[%s4662 + $0x50] sm:$0xff]
        %v4674 = vld [vmem:[%s4662 + $0x58] sm:$0xff]
        %v4675 = vld [vmem:[%s4662 + $0x60] sm:$0xff]
        %v4676 = vld [vmem:[%s4662 + $0x68] sm:$0xff]
        %v4677 = vld [vmem:[%s4662 + $0x70] sm:$0xff]
        %v4678 = vld [vmem:[%s4662 + $0x78] sm:$0xff]
        %v4679 = vld [vmem:[%s4662 + $0x80] sm:$0xff]
        %v4680 = vld [vmem:[%s4662 + $0x88] sm:$0xff]
        %v4681 = vld [vmem:[%s4662 + $0x90] sm:$0xff]
        %v4682 = vld [vmem:[%s4662 + $0x98] sm:$0xff]
        %v4683 = vld [vmem:[%s4662 + $0xa0] sm:$0xff]
        %v4684 = vld [vmem:[%s4662 + $0xa8] sm:$0xff]
        %v4685 = vld [vmem:[%s4662 + $0xb0] sm:$0xff]
        %v4686 = vld [vmem:[%s4662 + $0xb8] sm:$0xff]
        %v4687 = vld [vmem:[%s4662 + $0xc0] sm:$0xff]
        %v4688 = vld [vmem:[%s4662 + $0xc8] sm:$0xff]
        %v4689 = vld [vmem:[%s4662 + $0xd0] sm:$0xff]
        %v4690 = vld [vmem:[%s4662 + $0xd8] sm:$0xff]
        %v4691 = vld [vmem:[%s4662 + $0xe0] sm:$0xff]
        %v4692 = vld [vmem:[%s4662 + $0xe8] sm:$0xff]
        %v4693 = vld [vmem:[%s4662 + $0xf0] sm:$0xff]
        %v4694 = vld [vmem:[%s4662 + $0xf8] sm:$0xff]
        %v4695 = vld [vmem:[%s4662 + $0x100] sm:$0xff]
        %v4696 = vld [vmem:[%s4662 + $0x108] sm:$0xff]
        %v4697 = vld [vmem:[%s4662 + $0x110] sm:$0xff]
        %v4698 = vld [vmem:[%s4662 + $0x118] sm:$0xff]
        %v4699 = vld [vmem:[%s4662 + $0x120] sm:$0xff]
        %v4700 = vld [vmem:[%s4662 + $0x128] sm:$0xff]
        %v4701 = vld [vmem:[%s4662 + $0x130] sm:$0xff]
        %v4702 = vld [vmem:[%s4662 + $0x138] sm:$0xff]
        %v4703 = vld [vmem:[%s4662 + $0x140] sm:$0xff]
        %v4704 = vld [vmem:[%s4662 + $0x148] sm:$0xff]
        %v4705 = vld [vmem:[%s4662 + $0x150] sm:$0xff]
        %v4706 = vld [vmem:[%s4662 + $0x158] sm:$0xff]
        %v4707 = vld [vmem:[%s4662 + $0x160] sm:$0xff]
        %v4708 = vld [vmem:[%s4662 + $0x168] sm:$0xff]
        %v4709 = vld [vmem:[%s4662 + $0x170] sm:$0xff]
        %v4710 = vld [vmem:[%s4662 + $0x178] sm:$0xff]
        %v4711 = vld [vmem:[%s4662 + $0x180] sm:$0xff]
        %v4712 = vld [vmem:[%s4662 + $0x188] sm:$0xff]
        %v4713 = vld [vmem:[%s4662 + $0x190] sm:$0xff]
        %v4714 = vld [vmem:[%s4662 + $0x198] sm:$0xff]
        %v4715 = vld [vmem:[%s4662 + $0x1a0] sm:$0xff]
        %v4716 = vld [vmem:[%s4662 + $0x1a8] sm:$0xff]
        %v4717 = vld [vmem:[%s4662 + $0x1b0] sm:$0xff]
        %v4718 = vld [vmem:[%s4662 + $0x1b8] sm:$0xff]
        %v4719 = vld [vmem:[%s4662 + $0x1c0] sm:$0xff]
        %v4720 = vld [vmem:[%s4662 + $0x1c8] sm:$0xff]
        %v4721 = vld [vmem:[%s4662 + $0x1d0] sm:$0xff]
        %v4722 = vld [vmem:[%s4662 + $0x1d8] sm:$0xff]
        %v4723 = vld [vmem:[%s4662 + $0x1e0] sm:$0xff]
        %v4724 = vld [vmem:[%s4662 + $0x1e8] sm:$0xff]
        %v4725 = vld [vmem:[%s4662 + $0x1f0] sm:$0xff]
        %v4726 = vld [vmem:[%s4662 + $0x1f8] sm:$0xff]
        %v4728 = vsel %vm1179, %v4659, 0
        %v4731 = vsel %vm1179, %v4660, 0
        %v4734 = vsel %vm1179, %v4661, 0
        %4736 = vmatprep.subr.mxu0 0.0
        %4737 = vmatpush1.msra.mxu0 0.0
        %4738 = vmatprep.subr.mxu0 0.0
        %4739 = vmatpush1.msra.mxu0 0.0
        %4740 = vmatprep.subr.mxu0 0.0
        %4741 = vmatpush1.msra.mxu0 0.0
        %4742 = vmatprep.subr.mxu0 0.0
        %4743 = vmatpush1.msra.mxu0 0.0
        %4744 = vmatprep.subr.mxu0 0.0
        %4745 = vmatpush1.msra.mxu0 0.0
        %4746 = vmatprep.subr.mxu0 0.0
        %4747 = vmatpush1.msra.mxu0 0.0
        %4748 = vmatprep.subr.mxu0 0.0
        %4749 = vmatpush1.msra.mxu0 0.0
        %4750 = vmatprep.subr.mxu0 0.0
        %4751 = vmatpush1.msra.mxu0 0.0
        %4752 = vmatprep.subr.mxu0 %v4720
        %4753 = vmatpush1.msra.mxu0 %v4719
        %4754 = vmatprep.subr.mxu0 %v4712
        %4755 = vmatpush1.msra.mxu0 %v4711
        %4756 = vmatprep.subr.mxu0 %v4704
        %4757 = vmatpush1.msra.mxu0 %v4703
        %4758 = vmatprep.subr.mxu0 %v4696
        %4759 = vmatpush1.msra.mxu0 %v4695
        %4760 = vmatprep.subr.mxu0 %v4688
        %4761 = vmatpush1.msra.mxu0 %v4687
        %4762 = vmatprep.subr.mxu0 %v4680
        %4763 = vmatpush1.msra.mxu0 %v4679
        %4764 = vmatprep.subr.mxu0 %v4672
        %4765 = vmatpush1.msra.mxu0 %v4671
        %4766 = vmatprep.subr.mxu0 %v4664
        %4767 = vmatpush1.msra.mxu0 %v4663
        %4768 = vmatprep.subr.mxu0 0.0
        %4769 = vmatpush2.msra.mxu0 0.0
        %4770 = vmatprep.subr.mxu0 0.0
        %4771 = vmatpush2.msra.mxu0 0.0
        %4772 = vmatprep.subr.mxu0 0.0
        %4773 = vmatpush2.msra.mxu0 0.0
        %4774 = vmatprep.subr.mxu0 0.0
        %4775 = vmatpush2.msra.mxu0 0.0
        %4776 = vmatprep.subr.mxu0 0.0
        %4777 = vmatpush2.msra.mxu0 0.0
        %4778 = vmatprep.subr.mxu0 0.0
        %4779 = vmatpush2.msra.mxu0 0.0
        %4780 = vmatprep.subr.mxu0 0.0
        %4781 = vmatpush2.msra.mxu0 0.0
        %4782 = vmatprep.subr.mxu0 0.0
        %4783 = vmatpush2.msra.mxu0 0.0
        %4784 = vmatprep.subr.mxu0 0.0
        %4785 = vmatpush2.msra.mxu0 0.0
        %4786 = vmatprep.subr.mxu0 0.0
        %4787 = vmatpush2.msra.mxu0 0.0
        %4788 = vmatprep.subr.mxu0 0.0
        %4789 = vmatpush2.msra.mxu0 0.0
        %4790 = vmatprep.subr.mxu0 0.0
        %4791 = vmatpush2.msra.mxu0 0.0
        %4792 = vmatprep.subr.mxu0 0.0
        %4793 = vmatpush2.msra.mxu0 0.0
        %4794 = vmatprep.subr.mxu0 0.0
        %4795 = vmatpush2.msra.mxu0 0.0
        %4796 = vmatprep.subr.mxu0 0.0
        %4797 = vmatpush2.msra.mxu0 0.0
        %4798 = vmatprep.subr.mxu0 0.0
        %4799 = vmatpush2.msra.mxu0 0.0
        %4800 = vmatprep.mubr.f32.mxu0 0.0
        %4801 = vmatmul.mubr.f32.gmra.mxu0 %v4728
        %v4802 = vpop.f32.mrf.mxu0
        %v4803 = vadd.f32 0.0, %v4802
        %v4804 = vpop.f32.mrf.mxu0
        %v4805 = vadd.f32 0.0, %v4804
        %4806 = vmatprep.mubr.f32.mxu0 0.0
        %4807 = vmatmul.mubr.f32.gmra.mxu0 %v4731
        %v4808 = vpop.f32.mrf.mxu0
        %v4809 = vadd.f32 0.0, %v4808
        %v4810 = vpop.f32.mrf.mxu0
        %v4811 = vadd.f32 0.0, %v4810
        %4812 = vmatprep.mubr.f32.mxu0 0.0
        %4813 = vmatmul.mubr.f32.gmra.mxu0 %v4734
        %v4814 = vpop.f32.mrf.mxu0
        %v4815 = vadd.f32 0.0, %v4814
        %v4816 = vpop.f32.mrf.mxu0
        %v4817 = vadd.f32 0.0, %v4816
        %4818 = vdwg.mxu0
        %4819 = vmatprep.subr.mxu0 0.0
        %4820 = vmatpush1.msra.mxu0 0.0
        %4821 = vmatprep.subr.mxu0 0.0
        %4822 = vmatpush1.msra.mxu0 0.0
        %4823 = vmatprep.subr.mxu0 0.0
        %4824 = vmatpush1.msra.mxu0 0.0
        %4825 = vmatprep.subr.mxu0 0.0
        %4826 = vmatpush1.msra.mxu0 0.0
        %4827 = vmatprep.subr.mxu0 0.0
        %4828 = vmatpush1.msra.mxu0 0.0
        %4829 = vmatprep.subr.mxu0 0.0
        %4830 = vmatpush1.msra.mxu0 0.0
        %4831 = vmatprep.subr.mxu0 0.0
        %4832 = vmatpush1.msra.mxu0 0.0
        %4833 = vmatprep.subr.mxu0 0.0
        %4834 = vmatpush1.msra.mxu0 0.0
        %4835 = vmatprep.subr.mxu0 %v4722
        %4836 = vmatpush1.msra.mxu0 %v4721
        %4837 = vmatprep.subr.mxu0 %v4714
        %4838 = vmatpush1.msra.mxu0 %v4713
        %4839 = vmatprep.subr.mxu0 %v4706
        %4840 = vmatpush1.msra.mxu0 %v4705
        %4841 = vmatprep.subr.mxu0 %v4698
        %4842 = vmatpush1.msra.mxu0 %v4697
        %4843 = vmatprep.subr.mxu0 %v4690
        %4844 = vmatpush1.msra.mxu0 %v4689
        %4845 = vmatprep.subr.mxu0 %v4682
        %4846 = vmatpush1.msra.mxu0 %v4681
        %4847 = vmatprep.subr.mxu0 %v4674
        %4848 = vmatpush1.msra.mxu0 %v4673
        %4849 = vmatprep.subr.mxu0 %v4666
        %4850 = vmatpush1.msra.mxu0 %v4665
        %4851 = vmatprep.subr.mxu0 0.0
        %4852 = vmatpush2.msra.mxu0 0.0
        %4853 = vmatprep.subr.mxu0 0.0
        %4854 = vmatpush2.msra.mxu0 0.0
        %4855 = vmatprep.subr.mxu0 0.0
        %4856 = vmatpush2.msra.mxu0 0.0
        %4857 = vmatprep.subr.mxu0 0.0
        %4858 = vmatpush2.msra.mxu0 0.0
        %4859 = vmatprep.subr.mxu0 0.0
        %4860 = vmatpush2.msra.mxu0 0.0
        %4861 = vmatprep.subr.mxu0 0.0
        %4862 = vmatpush2.msra.mxu0 0.0
        %4863 = vmatprep.subr.mxu0 0.0
        %4864 = vmatpush2.msra.mxu0 0.0
        %4865 = vmatprep.subr.mxu0 0.0
        %4866 = vmatpush2.msra.mxu0 0.0
        %4867 = vmatprep.subr.mxu0 0.0
        %4868 = vmatpush2.msra.mxu0 0.0
        %4869 = vmatprep.subr.mxu0 0.0
        %4870 = vmatpush2.msra.mxu0 0.0
        %4871 = vmatprep.subr.mxu0 0.0
        %4872 = vmatpush2.msra.mxu0 0.0
        %4873 = vmatprep.subr.mxu0 0.0
        %4874 = vmatpush2.msra.mxu0 0.0
        %4875 = vmatprep.subr.mxu0 0.0
        %4876 = vmatpush2.msra.mxu0 0.0
        %4877 = vmatprep.subr.mxu0 0.0
        %4878 = vmatpush2.msra.mxu0 0.0
        %4879 = vmatprep.subr.mxu0 0.0
        %4880 = vmatpush2.msra.mxu0 0.0
        %4881 = vmatprep.subr.mxu0 0.0
        %4882 = vmatpush2.msra.mxu0 0.0
        %4883 = vmatprep.mubr.f32.mxu0 0.0
        %4884 = vmatmul.mubr.f32.gmra.mxu0 %v4728
        %v4885 = vpop.f32.mrf.mxu0
        %v4886 = vadd.f32 0.0, %v4885
        %v4887 = vpop.f32.mrf.mxu0
        %v4888 = vadd.f32 0.0, %v4887
        %4889 = vmatprep.mubr.f32.mxu0 0.0
        %4890 = vmatmul.mubr.f32.gmra.mxu0 %v4731
        %v4891 = vpop.f32.mrf.mxu0
        %v4892 = vadd.f32 0.0, %v4891
        %v4893 = vpop.f32.mrf.mxu0
        %v4894 = vadd.f32 0.0, %v4893
        %4895 = vmatprep.mubr.f32.mxu0 0.0
        %4896 = vmatmul.mubr.f32.gmra.mxu0 %v4734
        %v4897 = vpop.f32.mrf.mxu0
        %v4898 = vadd.f32 0.0, %v4897
        %v4899 = vpop.f32.mrf.mxu0
        %v4900 = vadd.f32 0.0, %v4899
        %4901 = vdwg.mxu0
        %4902 = vmatprep.subr.mxu0 0.0
        %4903 = vmatpush1.msra.mxu0 0.0
        %4904 = vmatprep.subr.mxu0 0.0
        %4905 = vmatpush1.msra.mxu0 0.0
        %4906 = vmatprep.subr.mxu0 0.0
        %4907 = vmatpush1.msra.mxu0 0.0
        %4908 = vmatprep.subr.mxu0 0.0
        %4909 = vmatpush1.msra.mxu0 0.0
        %4910 = vmatprep.subr.mxu0 0.0
        %4911 = vmatpush1.msra.mxu0 0.0
        %4912 = vmatprep.subr.mxu0 0.0
        %4913 = vmatpush1.msra.mxu0 0.0
        %4914 = vmatprep.subr.mxu0 0.0
        %4915 = vmatpush1.msra.mxu0 0.0
        %4916 = vmatprep.subr.mxu0 0.0
        %4917 = vmatpush1.msra.mxu0 0.0
        %4918 = vmatprep.subr.mxu0 %v4724
        %4919 = vmatpush1.msra.mxu0 %v4723
        %4920 = vmatprep.subr.mxu0 %v4716
        %4921 = vmatpush1.msra.mxu0 %v4715
        %4922 = vmatprep.subr.mxu0 %v4708
        %4923 = vmatpush1.msra.mxu0 %v4707
        %4924 = vmatprep.subr.mxu0 %v4700
        %4925 = vmatpush1.msra.mxu0 %v4699
        %4926 = vmatprep.subr.mxu0 %v4692
        %4927 = vmatpush1.msra.mxu0 %v4691
        %4928 = vmatprep.subr.mxu0 %v4684
        %4929 = vmatpush1.msra.mxu0 %v4683
        %4930 = vmatprep.subr.mxu0 %v4676
        %4931 = vmatpush1.msra.mxu0 %v4675
        %4932 = vmatprep.subr.mxu0 %v4668
        %4933 = vmatpush1.msra.mxu0 %v4667
        %4934 = vmatprep.subr.mxu0 0.0
        %4935 = vmatpush2.msra.mxu0 0.0
        %4936 = vmatprep.subr.mxu0 0.0
        %4937 = vmatpush2.msra.mxu0 0.0
        %4938 = vmatprep.subr.mxu0 0.0
        %4939 = vmatpush2.msra.mxu0 0.0
        %4940 = vmatprep.subr.mxu0 0.0
        %4941 = vmatpush2.msra.mxu0 0.0
        %4942 = vmatprep.subr.mxu0 0.0
        %4943 = vmatpush2.msra.mxu0 0.0
        %4944 = vmatprep.subr.mxu0 0.0
        %4945 = vmatpush2.msra.mxu0 0.0
        %4946 = vmatprep.subr.mxu0 0.0
        %4947 = vmatpush2.msra.mxu0 0.0
        %4948 = vmatprep.subr.mxu0 0.0
        %4949 = vmatpush2.msra.mxu0 0.0
        %4950 = vmatprep.subr.mxu0 0.0
        %4951 = vmatpush2.msra.mxu0 0.0
        %4952 = vmatprep.subr.mxu0 0.0
        %4953 = vmatpush2.msra.mxu0 0.0
        %4954 = vmatprep.subr.mxu0 0.0
        %4955 = vmatpush2.msra.mxu0 0.0
        %4956 = vmatprep.subr.mxu0 0.0
        %4957 = vmatpush2.msra.mxu0 0.0
        %4958 = vmatprep.subr.mxu0 0.0
        %4959 = vmatpush2.msra.mxu0 0.0
        %4960 = vmatprep.subr.mxu0 0.0
        %4961 = vmatpush2.msra.mxu0 0.0
        %4962 = vmatprep.subr.mxu0 0.0
        %4963 = vmatpush2.msra.mxu0 0.0
        %4964 = vmatprep.subr.mxu0 0.0
        %4965 = vmatpush2.msra.mxu0 0.0
        %4966 = vmatprep.mubr.f32.mxu0 0.0
        %4967 = vmatmul.mubr.f32.gmra.mxu0 %v4728
        %v4968 = vpop.f32.mrf.mxu0
        %v4969 = vadd.f32 0.0, %v4968
        %v4970 = vpop.f32.mrf.mxu0
        %v4971 = vadd.f32 0.0, %v4970
        %4972 = vmatprep.mubr.f32.mxu0 0.0
        %4973 = vmatmul.mubr.f32.gmra.mxu0 %v4731
        %v4974 = vpop.f32.mrf.mxu0
        %v4975 = vadd.f32 0.0, %v4974
        %v4976 = vpop.f32.mrf.mxu0
        %v4977 = vadd.f32 0.0, %v4976
        %4978 = vmatprep.mubr.f32.mxu0 0.0
        %4979 = vmatmul.mubr.f32.gmra.mxu0 %v4734
        %v4980 = vpop.f32.mrf.mxu0
        %v4981 = vadd.f32 0.0, %v4980
        %v4982 = vpop.f32.mrf.mxu0
        %v4983 = vadd.f32 0.0, %v4982
        %4984 = vdwg.mxu0
        %4985 = vmatprep.subr.mxu0 0.0
        %4986 = vmatpush1.msra.mxu0 0.0
        %4987 = vmatprep.subr.mxu0 0.0
        %4988 = vmatpush1.msra.mxu0 0.0
        %4989 = vmatprep.subr.mxu0 0.0
        %4990 = vmatpush1.msra.mxu0 0.0
        %4991 = vmatprep.subr.mxu0 0.0
        %4992 = vmatpush1.msra.mxu0 0.0
        %4993 = vmatprep.subr.mxu0 0.0
        %4994 = vmatpush1.msra.mxu0 0.0
        %4995 = vmatprep.subr.mxu0 0.0
        %4996 = vmatpush1.msra.mxu0 0.0
        %4997 = vmatprep.subr.mxu0 0.0
        %4998 = vmatpush1.msra.mxu0 0.0
        %4999 = vmatprep.subr.mxu0 0.0
        %5000 = vmatpush1.msra.mxu0 0.0
        %5001 = vmatprep.subr.mxu0 %v4726
        %5002 = vmatpush1.msra.mxu0 %v4725
        %5003 = vmatprep.subr.mxu0 %v4718
        %5004 = vmatpush1.msra.mxu0 %v4717
        %5005 = vmatprep.subr.mxu0 %v4710
        %5006 = vmatpush1.msra.mxu0 %v4709
        %5007 = vmatprep.subr.mxu0 %v4702
        %5008 = vmatpush1.msra.mxu0 %v4701
        %5009 = vmatprep.subr.mxu0 %v4694
        %5010 = vmatpush1.msra.mxu0 %v4693
        %5011 = vmatprep.subr.mxu0 %v4686
        %5012 = vmatpush1.msra.mxu0 %v4685
        %5013 = vmatprep.subr.mxu0 %v4678
        %5014 = vmatpush1.msra.mxu0 %v4677
        %5015 = vmatprep.subr.mxu0 %v4670
        %5016 = vmatpush1.msra.mxu0 %v4669
        %5017 = vmatprep.subr.mxu0 0.0
        %5018 = vmatpush2.msra.mxu0 0.0
        %5019 = vmatprep.subr.mxu0 0.0
        %5020 = vmatpush2.msra.mxu0 0.0
        %5021 = vmatprep.subr.mxu0 0.0
        %5022 = vmatpush2.msra.mxu0 0.0
        %5023 = vmatprep.subr.mxu0 0.0
        %5024 = vmatpush2.msra.mxu0 0.0
        %5025 = vmatprep.subr.mxu0 0.0
        %5026 = vmatpush2.msra.mxu0 0.0
        %5027 = vmatprep.subr.mxu0 0.0
        %5028 = vmatpush2.msra.mxu0 0.0
        %5029 = vmatprep.subr.mxu0 0.0
        %5030 = vmatpush2.msra.mxu0 0.0
        %5031 = vmatprep.subr.mxu0 0.0
        %5032 = vmatpush2.msra.mxu0 0.0
        %5033 = vmatprep.subr.mxu0 0.0
        %5034 = vmatpush2.msra.mxu0 0.0
        %5035 = vmatprep.subr.mxu0 0.0
        %5036 = vmatpush2.msra.mxu0 0.0
        %5037 = vmatprep.subr.mxu0 0.0
        %5038 = vmatpush2.msra.mxu0 0.0
        %5039 = vmatprep.subr.mxu0 0.0
        %5040 = vmatpush2.msra.mxu0 0.0
        %5041 = vmatprep.subr.mxu0 0.0
        %5042 = vmatpush2.msra.mxu0 0.0
        %5043 = vmatprep.subr.mxu0 0.0
        %5044 = vmatpush2.msra.mxu0 0.0
        %5045 = vmatprep.subr.mxu0 0.0
        %5046 = vmatpush2.msra.mxu0 0.0
        %5047 = vmatprep.subr.mxu0 0.0
        %5048 = vmatpush2.msra.mxu0 0.0
        %5049 = vmatprep.mubr.f32.mxu0 0.0
        %5050 = vmatmul.mubr.f32.gmra.mxu0 %v4728
        %v5051 = vpop.f32.mrf.mxu0
        %v5052 = vadd.f32 0.0, %v5051
        %v5053 = vpop.f32.mrf.mxu0
        %v5054 = vadd.f32 0.0, %v5053
        %5055 = vmatprep.mubr.f32.mxu0 0.0
        %5056 = vmatmul.mubr.f32.gmra.mxu0 %v4731
        %v5057 = vpop.f32.mrf.mxu0
        %v5058 = vadd.f32 0.0, %v5057
        %v5059 = vpop.f32.mrf.mxu0
        %v5060 = vadd.f32 0.0, %v5059
        %5061 = vmatprep.mubr.f32.mxu0 0.0
        %5062 = vmatmul.mubr.f32.gmra.mxu0 %v4734
        %v5063 = vpop.f32.mrf.mxu0
        %v5064 = vadd.f32 0.0, %v5063
        %v5065 = vpop.f32.mrf.mxu0
        %v5066 = vadd.f32 0.0, %v5065
        %5067 = vdwg.mxu0
        %v5068 = vmul.f32 %v4803, 1.442695
        %v5069 = vpow.pop %v5068
        %v5070 = vmul.f32 %v4805, 1.442695
        %v5071 = vpow.pop %v5070
        %v5072 = vmul.f32 %v4886, 1.442695
        %v5073 = vpow.pop %v5072
        %v5074 = vmul.f32 %v4888, 1.442695
        %v5075 = vpow.pop %v5074
        %v5076 = vmul.f32 %v4969, 1.442695
        %v5077 = vpow.pop %v5076
        %v5078 = vmul.f32 %v4971, 1.442695
        %v5079 = vpow.pop %v5078
        %v5080 = vmul.f32 %v5052, 1.442695
        %v5081 = vpow.pop %v5080
        %v5082 = vmul.f32 %v5054, 1.442695
        %v5083 = vpow.pop %v5082
        %v5084 = vmul.f32 %v4809, 1.442695
        %v5085 = vpow.pop %v5084
        %v5086 = vmul.f32 %v4811, 1.442695
        %v5087 = vpow.pop %v5086
        %v5088 = vmul.f32 %v4892, 1.442695
        %v5089 = vpow.pop %v5088
        %v5090 = vmul.f32 %v4894, 1.442695
        %v5091 = vpow.pop %v5090
        %v5092 = vmul.f32 %v4975, 1.442695
        %v5093 = vpow.pop %v5092
        %v5094 = vmul.f32 %v4977, 1.442695
        %v5095 = vpow.pop %v5094
        %v5096 = vmul.f32 %v5058, 1.442695
        %v5097 = vpow.pop %v5096
        %v5098 = vmul.f32 %v5060, 1.442695
        %v5099 = vpow.pop %v5098
        %v5100 = vmul.f32 %v4815, 1.442695
        %v5101 = vpow.pop %v5100
        %v5102 = vmul.f32 %v4817, 1.442695
        %v5103 = vpow.pop %v5102
        %v5104 = vmul.f32 %v4898, 1.442695
        %v5105 = vpow.pop %v5104
        %v5106 = vmul.f32 %v4900, 1.442695
        %v5107 = vpow.pop %v5106
        %v5108 = vmul.f32 %v4981, 1.442695
        %v5109 = vpow.pop %v5108
        %v5110 = vmul.f32 %v4983, 1.442695
        %v5111 = vpow.pop %v5110
        %v5112 = vmul.f32 %v5064, 1.442695
        %v5113 = vpow.pop %v5112
        %v5114 = vmul.f32 %v5066, 1.442695
        %v5115 = vpow.pop %v5114
        %v5116 = vmul.f32 %v4659, %v4523
        %v5117 = vmul.f32 %v4660, %v4524
        %v5118 = vmul.f32 %v4661, %v4525
        %v5120 = vsel %vm1179, %v5116, 0
        %v5123 = vsel %vm1179, %v5117, 0
        %v5126 = vsel %vm1179, %v5118, 0
        %5128 = vmatprep.subr.mxu0 0.0
        %5129 = vmatpush1.msra.mxu0 0.0
        %5130 = vmatprep.subr.mxu0 0.0
        %5131 = vmatpush1.msra.mxu0 0.0
        %5132 = vmatprep.subr.mxu0 0.0
        %5133 = vmatpush1.msra.mxu0 0.0
        %5134 = vmatprep.subr.mxu0 0.0
        %5135 = vmatpush1.msra.mxu0 0.0
        %5136 = vmatprep.subr.mxu0 0.0
        %5137 = vmatpush1.msra.mxu0 0.0
        %5138 = vmatprep.subr.mxu0 0.0
        %5139 = vmatpush1.msra.mxu0 0.0
        %5140 = vmatprep.subr.mxu0 0.0
        %5141 = vmatpush1.msra.mxu0 0.0
        %5142 = vmatprep.subr.mxu0 0.0
        %5143 = vmatpush1.msra.mxu0 0.0
        %5144 = vmatprep.subr.mxu0 %v838
        %5145 = vmatpush1.msra.mxu0 %v837
        %5146 = vmatprep.subr.mxu0 %v830
        %5147 = vmatpush1.msra.mxu0 %v829
        %5148 = vmatprep.subr.mxu0 %v822
        %5149 = vmatpush1.msra.mxu0 %v821
        %5150 = vmatprep.subr.mxu0 %v814
        %5151 = vmatpush1.msra.mxu0 %v813
        %5152 = vmatprep.subr.mxu0 %v806
        %5153 = vmatpush1.msra.mxu0 %v805
        %5154 = vmatprep.subr.mxu0 %v798
        %5155 = vmatpush1.msra.mxu0 %v797
        %5156 = vmatprep.subr.mxu0 %v790
        %5157 = vmatpush1.msra.mxu0 %v789
        %5158 = vmatprep.subr.mxu0 %v782
        %5159 = vmatpush1.msra.mxu0 %v781
        %5160 = vmatprep.subr.mxu0 0.0
        %5161 = vmatpush2.msra.mxu0 0.0
        %5162 = vmatprep.subr.mxu0 0.0
        %5163 = vmatpush2.msra.mxu0 0.0
        %5164 = vmatprep.subr.mxu0 0.0
        %5165 = vmatpush2.msra.mxu0 0.0
        %5166 = vmatprep.subr.mxu0 0.0
        %5167 = vmatpush2.msra.mxu0 0.0
        %5168 = vmatprep.subr.mxu0 0.0
        %5169 = vmatpush2.msra.mxu0 0.0
        %5170 = vmatprep.subr.mxu0 0.0
        %5171 = vmatpush2.msra.mxu0 0.0
        %5172 = vmatprep.subr.mxu0 0.0
        %5173 = vmatpush2.msra.mxu0 0.0
        %5174 = vmatprep.subr.mxu0 0.0
        %5175 = vmatpush2.msra.mxu0 0.0
        %5176 = vmatprep.subr.mxu0 0.0
        %5177 = vmatpush2.msra.mxu0 0.0
        %5178 = vmatprep.subr.mxu0 0.0
        %5179 = vmatpush2.msra.mxu0 0.0
        %5180 = vmatprep.subr.mxu0 0.0
        %5181 = vmatpush2.msra.mxu0 0.0
        %5182 = vmatprep.subr.mxu0 0.0
        %5183 = vmatpush2.msra.mxu0 0.0
        %5184 = vmatprep.subr.mxu0 0.0
        %5185 = vmatpush2.msra.mxu0 0.0
        %5186 = vmatprep.subr.mxu0 0.0
        %5187 = vmatpush2.msra.mxu0 0.0
        %5188 = vmatprep.subr.mxu0 0.0
        %5189 = vmatpush2.msra.mxu0 0.0
        %5190 = vmatprep.subr.mxu0 0.0
        %5191 = vmatpush2.msra.mxu0 0.0
        %5192 = vmatprep.mubr.f32.mxu0 0.0
        %5193 = vmatmul.mubr.f32.gmra.mxu0 %v5120
        %v5194 = vpop.f32.mrf.mxu0
        %v5195 = vadd.f32 0.0, %v5194
        %v5196 = vpop.f32.mrf.mxu0
        %v5197 = vadd.f32 0.0, %v5196
        %5198 = vmatprep.mubr.f32.mxu0 0.0
        %5199 = vmatmul.mubr.f32.gmra.mxu0 %v5123
        %v5200 = vpop.f32.mrf.mxu0
        %v5201 = vadd.f32 0.0, %v5200
        %v5202 = vpop.f32.mrf.mxu0
        %v5203 = vadd.f32 0.0, %v5202
        %5204 = vmatprep.mubr.f32.mxu0 0.0
        %5205 = vmatmul.mubr.f32.gmra.mxu0 %v5126
        %v5206 = vpop.f32.mrf.mxu0
        %v5207 = vadd.f32 0.0, %v5206
        %v5208 = vpop.f32.mrf.mxu0
        %v5209 = vadd.f32 0.0, %v5208
        %5210 = vdwg.mxu0
        %5211 = vmatprep.subr.mxu0 0.0
        %5212 = vmatpush1.msra.mxu0 0.0
        %5213 = vmatprep.subr.mxu0 0.0
        %5214 = vmatpush1.msra.mxu0 0.0
        %5215 = vmatprep.subr.mxu0 0.0
        %5216 = vmatpush1.msra.mxu0 0.0
        %5217 = vmatprep.subr.mxu0 0.0
        %5218 = vmatpush1.msra.mxu0 0.0
        %5219 = vmatprep.subr.mxu0 0.0
        %5220 = vmatpush1.msra.mxu0 0.0
        %5221 = vmatprep.subr.mxu0 0.0
        %5222 = vmatpush1.msra.mxu0 0.0
        %5223 = vmatprep.subr.mxu0 0.0
        %5224 = vmatpush1.msra.mxu0 0.0
        %5225 = vmatprep.subr.mxu0 0.0
        %5226 = vmatpush1.msra.mxu0 0.0
        %5227 = vmatprep.subr.mxu0 %v840
        %5228 = vmatpush1.msra.mxu0 %v839
        %5229 = vmatprep.subr.mxu0 %v832
        %5230 = vmatpush1.msra.mxu0 %v831
        %5231 = vmatprep.subr.mxu0 %v824
        %5232 = vmatpush1.msra.mxu0 %v823
        %5233 = vmatprep.subr.mxu0 %v816
        %5234 = vmatpush1.msra.mxu0 %v815
        %5235 = vmatprep.subr.mxu0 %v808
        %5236 = vmatpush1.msra.mxu0 %v807
        %5237 = vmatprep.subr.mxu0 %v800
        %5238 = vmatpush1.msra.mxu0 %v799
        %5239 = vmatprep.subr.mxu0 %v792
        %5240 = vmatpush1.msra.mxu0 %v791
        %5241 = vmatprep.subr.mxu0 %v784
        %5242 = vmatpush1.msra.mxu0 %v783
        %5243 = vmatprep.subr.mxu0 0.0
        %5244 = vmatpush2.msra.mxu0 0.0
        %5245 = vmatprep.subr.mxu0 0.0
        %5246 = vmatpush2.msra.mxu0 0.0
        %5247 = vmatprep.subr.mxu0 0.0
        %5248 = vmatpush2.msra.mxu0 0.0
        %5249 = vmatprep.subr.mxu0 0.0
        %5250 = vmatpush2.msra.mxu0 0.0
        %5251 = vmatprep.subr.mxu0 0.0
        %5252 = vmatpush2.msra.mxu0 0.0
        %5253 = vmatprep.subr.mxu0 0.0
        %5254 = vmatpush2.msra.mxu0 0.0
        %5255 = vmatprep.subr.mxu0 0.0
        %5256 = vmatpush2.msra.mxu0 0.0
        %5257 = vmatprep.subr.mxu0 0.0
        %5258 = vmatpush2.msra.mxu0 0.0
        %5259 = vmatprep.subr.mxu0 0.0
        %5260 = vmatpush2.msra.mxu0 0.0
        %5261 = vmatprep.subr.mxu0 0.0
        %5262 = vmatpush2.msra.mxu0 0.0
        %5263 = vmatprep.subr.mxu0 0.0
        %5264 = vmatpush2.msra.mxu0 0.0
        %5265 = vmatprep.subr.mxu0 0.0
        %5266 = vmatpush2.msra.mxu0 0.0
        %5267 = vmatprep.subr.mxu0 0.0
        %5268 = vmatpush2.msra.mxu0 0.0
        %5269 = vmatprep.subr.mxu0 0.0
        %5270 = vmatpush2.msra.mxu0 0.0
        %5271 = vmatprep.subr.mxu0 0.0
        %5272 = vmatpush2.msra.mxu0 0.0
        %5273 = vmatprep.subr.mxu0 0.0
        %5274 = vmatpush2.msra.mxu0 0.0
        %5275 = vmatprep.mubr.f32.mxu0 0.0
        %5276 = vmatmul.mubr.f32.gmra.mxu0 %v5120
        %v5277 = vpop.f32.mrf.mxu0
        %v5278 = vadd.f32 0.0, %v5277
        %v5279 = vpop.f32.mrf.mxu0
        %v5280 = vadd.f32 0.0, %v5279
        %5281 = vmatprep.mubr.f32.mxu0 0.0
        %5282 = vmatmul.mubr.f32.gmra.mxu0 %v5123
        %v5283 = vpop.f32.mrf.mxu0
        %v5284 = vadd.f32 0.0, %v5283
        %v5285 = vpop.f32.mrf.mxu0
        %v5286 = vadd.f32 0.0, %v5285
        %5287 = vmatprep.mubr.f32.mxu0 0.0
        %5288 = vmatmul.mubr.f32.gmra.mxu0 %v5126
        %v5289 = vpop.f32.mrf.mxu0
        %v5290 = vadd.f32 0.0, %v5289
        %v5291 = vpop.f32.mrf.mxu0
        %v5292 = vadd.f32 0.0, %v5291
        %5293 = vdwg.mxu0
        %5294 = vmatprep.subr.mxu0 0.0
        %5295 = vmatpush1.msra.mxu0 0.0
        %5296 = vmatprep.subr.mxu0 0.0
        %5297 = vmatpush1.msra.mxu0 0.0
        %5298 = vmatprep.subr.mxu0 0.0
        %5299 = vmatpush1.msra.mxu0 0.0
        %5300 = vmatprep.subr.mxu0 0.0
        %5301 = vmatpush1.msra.mxu0 0.0
        %5302 = vmatprep.subr.mxu0 0.0
        %5303 = vmatpush1.msra.mxu0 0.0
        %5304 = vmatprep.subr.mxu0 0.0
        %5305 = vmatpush1.msra.mxu0 0.0
        %5306 = vmatprep.subr.mxu0 0.0
        %5307 = vmatpush1.msra.mxu0 0.0
        %5308 = vmatprep.subr.mxu0 0.0
        %5309 = vmatpush1.msra.mxu0 0.0
        %5310 = vmatprep.subr.mxu0 %v842
        %5311 = vmatpush1.msra.mxu0 %v841
        %5312 = vmatprep.subr.mxu0 %v834
        %5313 = vmatpush1.msra.mxu0 %v833
        %5314 = vmatprep.subr.mxu0 %v826
        %5315 = vmatpush1.msra.mxu0 %v825
        %5316 = vmatprep.subr.mxu0 %v818
        %5317 = vmatpush1.msra.mxu0 %v817
        %5318 = vmatprep.subr.mxu0 %v810
        %5319 = vmatpush1.msra.mxu0 %v809
        %5320 = vmatprep.subr.mxu0 %v802
        %5321 = vmatpush1.msra.mxu0 %v801
        %5322 = vmatprep.subr.mxu0 %v794
        %5323 = vmatpush1.msra.mxu0 %v793
        %5324 = vmatprep.subr.mxu0 %v786
        %5325 = vmatpush1.msra.mxu0 %v785
        %5326 = vmatprep.subr.mxu0 0.0
        %5327 = vmatpush2.msra.mxu0 0.0
        %5328 = vmatprep.subr.mxu0 0.0
        %5329 = vmatpush2.msra.mxu0 0.0
        %5330 = vmatprep.subr.mxu0 0.0
        %5331 = vmatpush2.msra.mxu0 0.0
        %5332 = vmatprep.subr.mxu0 0.0
        %5333 = vmatpush2.msra.mxu0 0.0
        %5334 = vmatprep.subr.mxu0 0.0
        %5335 = vmatpush2.msra.mxu0 0.0
        %5336 = vmatprep.subr.mxu0 0.0
        %5337 = vmatpush2.msra.mxu0 0.0
        %5338 = vmatprep.subr.mxu0 0.0
        %5339 = vmatpush2.msra.mxu0 0.0
        %5340 = vmatprep.subr.mxu0 0.0
        %5341 = vmatpush2.msra.mxu0 0.0
        %5342 = vmatprep.subr.mxu0 0.0
        %5343 = vmatpush2.msra.mxu0 0.0
        %5344 = vmatprep.subr.mxu0 0.0
        %5345 = vmatpush2.msra.mxu0 0.0
        %5346 = vmatprep.subr.mxu0 0.0
        %5347 = vmatpush2.msra.mxu0 0.0
        %5348 = vmatprep.subr.mxu0 0.0
        %5349 = vmatpush2.msra.mxu0 0.0
        %5350 = vmatprep.subr.mxu0 0.0
        %5351 = vmatpush2.msra.mxu0 0.0
        %5352 = vmatprep.subr.mxu0 0.0
        %5353 = vmatpush2.msra.mxu0 0.0
        %5354 = vmatprep.subr.mxu0 0.0
        %5355 = vmatpush2.msra.mxu0 0.0
        %5356 = vmatprep.subr.mxu0 0.0
        %5357 = vmatpush2.msra.mxu0 0.0
        %5358 = vmatprep.mubr.f32.mxu0 0.0
        %5359 = vmatmul.mubr.f32.gmra.mxu0 %v5120
        %v5360 = vpop.f32.mrf.mxu0
        %v5361 = vadd.f32 0.0, %v5360
        %v5362 = vpop.f32.mrf.mxu0
        %v5363 = vadd.f32 0.0, %v5362
        %5364 = vmatprep.mubr.f32.mxu0 0.0
        %5365 = vmatmul.mubr.f32.gmra.mxu0 %v5123
        %v5366 = vpop.f32.mrf.mxu0
        %v5367 = vadd.f32 0.0, %v5366
        %v5368 = vpop.f32.mrf.mxu0
        %v5369 = vadd.f32 0.0, %v5368
        %5370 = vmatprep.mubr.f32.mxu0 0.0
        %5371 = vmatmul.mubr.f32.gmra.mxu0 %v5126
        %v5372 = vpop.f32.mrf.mxu0
        %v5373 = vadd.f32 0.0, %v5372
        %v5374 = vpop.f32.mrf.mxu0
        %v5375 = vadd.f32 0.0, %v5374
        %5376 = vdwg.mxu0
        %5377 = vmatprep.subr.mxu0 0.0
        %5378 = vmatpush1.msra.mxu0 0.0
        %5379 = vmatprep.subr.mxu0 0.0
        %5380 = vmatpush1.msra.mxu0 0.0
        %5381 = vmatprep.subr.mxu0 0.0
        %5382 = vmatpush1.msra.mxu0 0.0
        %5383 = vmatprep.subr.mxu0 0.0
        %5384 = vmatpush1.msra.mxu0 0.0
        %5385 = vmatprep.subr.mxu0 0.0
        %5386 = vmatpush1.msra.mxu0 0.0
        %5387 = vmatprep.subr.mxu0 0.0
        %5388 = vmatpush1.msra.mxu0 0.0
        %5389 = vmatprep.subr.mxu0 0.0
        %5390 = vmatpush1.msra.mxu0 0.0
        %5391 = vmatprep.subr.mxu0 0.0
        %5392 = vmatpush1.msra.mxu0 0.0
        %5393 = vmatprep.subr.mxu0 %v844
        %5394 = vmatpush1.msra.mxu0 %v843
        %5395 = vmatprep.subr.mxu0 %v836
        %5396 = vmatpush1.msra.mxu0 %v835
        %5397 = vmatprep.subr.mxu0 %v828
        %5398 = vmatpush1.msra.mxu0 %v827
        %5399 = vmatprep.subr.mxu0 %v820
        %5400 = vmatpush1.msra.mxu0 %v819
        %5401 = vmatprep.subr.mxu0 %v812
        %5402 = vmatpush1.msra.mxu0 %v811
        %5403 = vmatprep.subr.mxu0 %v804
        %5404 = vmatpush1.msra.mxu0 %v803
        %5405 = vmatprep.subr.mxu0 %v796
        %5406 = vmatpush1.msra.mxu0 %v795
        %5407 = vmatprep.subr.mxu0 %v788
        %5408 = vmatpush1.msra.mxu0 %v787
        %5409 = vmatprep.subr.mxu0 0.0
        %5410 = vmatpush2.msra.mxu0 0.0
        %5411 = vmatprep.subr.mxu0 0.0
        %5412 = vmatpush2.msra.mxu0 0.0
        %5413 = vmatprep.subr.mxu0 0.0
        %5414 = vmatpush2.msra.mxu0 0.0
        %5415 = vmatprep.subr.mxu0 0.0
        %5416 = vmatpush2.msra.mxu0 0.0
        %5417 = vmatprep.subr.mxu0 0.0
        %5418 = vmatpush2.msra.mxu0 0.0
        %5419 = vmatprep.subr.mxu0 0.0
        %5420 = vmatpush2.msra.mxu0 0.0
        %5421 = vmatprep.subr.mxu0 0.0
        %5422 = vmatpush2.msra.mxu0 0.0
        %5423 = vmatprep.subr.mxu0 0.0
        %5424 = vmatpush2.msra.mxu0 0.0
        %5425 = vmatprep.subr.mxu0 0.0
        %5426 = vmatpush2.msra.mxu0 0.0
        %5427 = vmatprep.subr.mxu0 0.0
        %5428 = vmatpush2.msra.mxu0 0.0
        %5429 = vmatprep.subr.mxu0 0.0
        %5430 = vmatpush2.msra.mxu0 0.0
        %5431 = vmatprep.subr.mxu0 0.0
        %5432 = vmatpush2.msra.mxu0 0.0
        %5433 = vmatprep.subr.mxu0 0.0
        %5434 = vmatpush2.msra.mxu0 0.0
        %5435 = vmatprep.subr.mxu0 0.0
        %5436 = vmatpush2.msra.mxu0 0.0
        %5437 = vmatprep.subr.mxu0 0.0
        %5438 = vmatpush2.msra.mxu0 0.0
        %5439 = vmatprep.subr.mxu0 0.0
        %5440 = vmatpush2.msra.mxu0 0.0
        %5441 = vmatprep.mubr.f32.mxu0 0.0
        %5442 = vmatmul.mubr.f32.gmra.mxu0 %v5120
        %v5443 = vpop.f32.mrf.mxu0
        %v5444 = vadd.f32 0.0, %v5443
        %v5445 = vpop.f32.mrf.mxu0
        %v5446 = vadd.f32 0.0, %v5445
        %5447 = vmatprep.mubr.f32.mxu0 0.0
        %5448 = vmatmul.mubr.f32.gmra.mxu0 %v5123
        %v5449 = vpop.f32.mrf.mxu0
        %v5450 = vadd.f32 0.0, %v5449
        %v5451 = vpop.f32.mrf.mxu0
        %v5452 = vadd.f32 0.0, %v5451
        %5453 = vmatprep.mubr.f32.mxu0 0.0
        %5454 = vmatmul.mubr.f32.gmra.mxu0 %v5126
        %v5455 = vpop.f32.mrf.mxu0
        %v5456 = vadd.f32 0.0, %v5455
        %v5457 = vpop.f32.mrf.mxu0
        %v5458 = vadd.f32 0.0, %v5457
        %5459 = vdwg.mxu0
        %5463 = vrot.lane.b32.xlu0 %v4611, 64
        %v5464 = vpop.permute.xlu0 %5463
        %5465 = vrot.lane.b32.xlu0 %v4616, 64
        %v5466 = vpop.permute.xlu0 %5465
        %5467 = vrot.lane.b32.xlu0 %v4621, 64
        %v5468 = vpop.permute.xlu0 %5467
        %v5469 = vsel %vm854, %v5464, 0
        %v5471 = vsel %vm854, %v5466, 0
        %v5473 = vsel %vm854, %v5468, 0
        %5475 = vmatprep.subr.mxu0 0.0
        %5476 = vmatpush1.msra.mxu0 0.0
        %5477 = vmatprep.subr.mxu0 0.0
        %5478 = vmatpush1.msra.mxu0 0.0
        %5479 = vmatprep.subr.mxu0 0.0
        %5480 = vmatpush1.msra.mxu0 0.0
        %5481 = vmatprep.subr.mxu0 0.0
        %5482 = vmatpush1.msra.mxu0 0.0
        %5483 = vmatprep.subr.mxu0 0.0
        %5484 = vmatpush1.msra.mxu0 0.0
        %5485 = vmatprep.subr.mxu0 0.0
        %5486 = vmatpush1.msra.mxu0 0.0
        %5487 = vmatprep.subr.mxu0 0.0
        %5488 = vmatpush1.msra.mxu0 0.0
        %5489 = vmatprep.subr.mxu0 0.0
        %5490 = vmatpush1.msra.mxu0 0.0
        %5491 = vmatprep.subr.mxu0 0.0
        %5492 = vmatpush1.msra.mxu0 0.0
        %5493 = vmatprep.subr.mxu0 0.0
        %5494 = vmatpush1.msra.mxu0 0.0
        %5495 = vmatprep.subr.mxu0 0.0
        %5496 = vmatpush1.msra.mxu0 0.0
        %5497 = vmatprep.subr.mxu0 0.0
        %5498 = vmatpush1.msra.mxu0 0.0
        %5499 = vmatprep.subr.mxu0 0.0
        %5500 = vmatpush1.msra.mxu0 0.0
        %5501 = vmatprep.subr.mxu0 0.0
        %5502 = vmatpush1.msra.mxu0 0.0
        %5503 = vmatprep.subr.mxu0 %v646
        %5504 = vmatpush1.msra.mxu0 %v645
        %5505 = vmatprep.subr.mxu0 %v638
        %5506 = vmatpush1.msra.mxu0 %v637
        %5507 = vmatprep.subr.mxu0 0.0
        %5508 = vmatpush2.msra.mxu0 0.0
        %5509 = vmatprep.subr.mxu0 0.0
        %5510 = vmatpush2.msra.mxu0 0.0
        %5511 = vmatprep.subr.mxu0 0.0
        %5512 = vmatpush2.msra.mxu0 0.0
        %5513 = vmatprep.subr.mxu0 0.0
        %5514 = vmatpush2.msra.mxu0 0.0
        %5515 = vmatprep.subr.mxu0 0.0
        %5516 = vmatpush2.msra.mxu0 0.0
        %5517 = vmatprep.subr.mxu0 0.0
        %5518 = vmatpush2.msra.mxu0 0.0
        %5519 = vmatprep.subr.mxu0 0.0
        %5520 = vmatpush2.msra.mxu0 0.0
        %5521 = vmatprep.subr.mxu0 0.0
        %5522 = vmatpush2.msra.mxu0 0.0
        %5523 = vmatprep.subr.mxu0 0.0
        %5524 = vmatpush2.msra.mxu0 0.0
        %5525 = vmatprep.subr.mxu0 0.0
        %5526 = vmatpush2.msra.mxu0 0.0
        %5527 = vmatprep.subr.mxu0 0.0
        %5528 = vmatpush2.msra.mxu0 0.0
        %5529 = vmatprep.subr.mxu0 0.0
        %5530 = vmatpush2.msra.mxu0 0.0
        %5531 = vmatprep.subr.mxu0 0.0
        %5532 = vmatpush2.msra.mxu0 0.0
        %5533 = vmatprep.subr.mxu0 0.0
        %5534 = vmatpush2.msra.mxu0 0.0
        %5535 = vmatprep.subr.mxu0 0.0
        %5536 = vmatpush2.msra.mxu0 0.0
        %5537 = vmatprep.subr.mxu0 0.0
        %5538 = vmatpush2.msra.mxu0 0.0
        %5539 = vmatprep.mubr.f32.mxu0 0.0
        %5540 = vmatmul.mubr.f32.gmra.mxu0 %v5469
        %v5541 = vpop.f32.mrf.mxu0
        %v5542 = vadd.f32 0.0, %v5541
        %v5543 = vpop.f32.mrf.mxu0
        %v5544 = vadd.f32 0.0, %v5543
        %5545 = vmatprep.mubr.f32.mxu0 0.0
        %5546 = vmatmul.mubr.f32.gmra.mxu0 %v5471
        %v5547 = vpop.f32.mrf.mxu0
        %v5548 = vadd.f32 0.0, %v5547
        %v5549 = vpop.f32.mrf.mxu0
        %v5550 = vadd.f32 0.0, %v5549
        %5551 = vmatprep.mubr.f32.mxu0 0.0
        %5552 = vmatmul.mubr.f32.gmra.mxu0 %v5473
        %v5553 = vpop.f32.mrf.mxu0
        %v5554 = vadd.f32 0.0, %v5553
        %v5555 = vpop.f32.mrf.mxu0
        %v5556 = vadd.f32 0.0, %v5555
        %5557 = vdwg.mxu0
        %5558 = vmatprep.subr.mxu0 0.0
        %5559 = vmatpush1.msra.mxu0 0.0
        %5560 = vmatprep.subr.mxu0 0.0
        %5561 = vmatpush1.msra.mxu0 0.0
        %5562 = vmatprep.subr.mxu0 0.0
        %5563 = vmatpush1.msra.mxu0 0.0
        %5564 = vmatprep.subr.mxu0 0.0
        %5565 = vmatpush1.msra.mxu0 0.0
        %5566 = vmatprep.subr.mxu0 0.0
        %5567 = vmatpush1.msra.mxu0 0.0
        %5568 = vmatprep.subr.mxu0 0.0
        %5569 = vmatpush1.msra.mxu0 0.0
        %5570 = vmatprep.subr.mxu0 0.0
        %5571 = vmatpush1.msra.mxu0 0.0
        %5572 = vmatprep.subr.mxu0 0.0
        %5573 = vmatpush1.msra.mxu0 0.0
        %5574 = vmatprep.subr.mxu0 0.0
        %5575 = vmatpush1.msra.mxu0 0.0
        %5576 = vmatprep.subr.mxu0 0.0
        %5577 = vmatpush1.msra.mxu0 0.0
        %5578 = vmatprep.subr.mxu0 0.0
        %5579 = vmatpush1.msra.mxu0 0.0
        %5580 = vmatprep.subr.mxu0 0.0
        %5581 = vmatpush1.msra.mxu0 0.0
        %5582 = vmatprep.subr.mxu0 0.0
        %5583 = vmatpush1.msra.mxu0 0.0
        %5584 = vmatprep.subr.mxu0 0.0
        %5585 = vmatpush1.msra.mxu0 0.0
        %5586 = vmatprep.subr.mxu0 %v648
        %5587 = vmatpush1.msra.mxu0 %v647
        %5588 = vmatprep.subr.mxu0 %v640
        %5589 = vmatpush1.msra.mxu0 %v639
        %5590 = vmatprep.subr.mxu0 0.0
        %5591 = vmatpush2.msra.mxu0 0.0
        %5592 = vmatprep.subr.mxu0 0.0
        %5593 = vmatpush2.msra.mxu0 0.0
        %5594 = vmatprep.subr.mxu0 0.0
        %5595 = vmatpush2.msra.mxu0 0.0
        %5596 = vmatprep.subr.mxu0 0.0
        %5597 = vmatpush2.msra.mxu0 0.0
        %5598 = vmatprep.subr.mxu0 0.0
        %5599 = vmatpush2.msra.mxu0 0.0
        %5600 = vmatprep.subr.mxu0 0.0
        %5601 = vmatpush2.msra.mxu0 0.0
        %5602 = vmatprep.subr.mxu0 0.0
        %5603 = vmatpush2.msra.mxu0 0.0
        %5604 = vmatprep.subr.mxu0 0.0
        %5605 = vmatpush2.msra.mxu0 0.0
        %5606 = vmatprep.subr.mxu0 0.0
        %5607 = vmatpush2.msra.mxu0 0.0
        %5608 = vmatprep.subr.mxu0 0.0
        %5609 = vmatpush2.msra.mxu0 0.0
        %5610 = vmatprep.subr.mxu0 0.0
        %5611 = vmatpush2.msra.mxu0 0.0
        %5612 = vmatprep.subr.mxu0 0.0
        %5613 = vmatpush2.msra.mxu0 0.0
        %5614 = vmatprep.subr.mxu0 0.0
        %5615 = vmatpush2.msra.mxu0 0.0
        %5616 = vmatprep.subr.mxu0 0.0
        %5617 = vmatpush2.msra.mxu0 0.0
        %5618 = vmatprep.subr.mxu0 0.0
        %5619 = vmatpush2.msra.mxu0 0.0
        %5620 = vmatprep.subr.mxu0 0.0
        %5621 = vmatpush2.msra.mxu0 0.0
        %5622 = vmatprep.mubr.f32.mxu0 0.0
        %5623 = vmatmul.mubr.f32.gmra.mxu0 %v5469
        %v5624 = vpop.f32.mrf.mxu0
        %v5625 = vadd.f32 0.0, %v5624
        %v5626 = vpop.f32.mrf.mxu0
        %v5627 = vadd.f32 0.0, %v5626
        %5628 = vmatprep.mubr.f32.mxu0 0.0
        %5629 = vmatmul.mubr.f32.gmra.mxu0 %v5471
        %v5630 = vpop.f32.mrf.mxu0
        %v5631 = vadd.f32 0.0, %v5630
        %v5632 = vpop.f32.mrf.mxu0
        %v5633 = vadd.f32 0.0, %v5632
        %5634 = vmatprep.mubr.f32.mxu0 0.0
        %5635 = vmatmul.mubr.f32.gmra.mxu0 %v5473
        %v5636 = vpop.f32.mrf.mxu0
        %v5637 = vadd.f32 0.0, %v5636
        %v5638 = vpop.f32.mrf.mxu0
        %v5639 = vadd.f32 0.0, %v5638
        %5640 = vdwg.mxu0
        %5641 = vmatprep.subr.mxu0 0.0
        %5642 = vmatpush1.msra.mxu0 0.0
        %5643 = vmatprep.subr.mxu0 0.0
        %5644 = vmatpush1.msra.mxu0 0.0
        %5645 = vmatprep.subr.mxu0 0.0
        %5646 = vmatpush1.msra.mxu0 0.0
        %5647 = vmatprep.subr.mxu0 0.0
        %5648 = vmatpush1.msra.mxu0 0.0
        %5649 = vmatprep.subr.mxu0 0.0
        %5650 = vmatpush1.msra.mxu0 0.0
        %5651 = vmatprep.subr.mxu0 0.0
        %5652 = vmatpush1.msra.mxu0 0.0
        %5653 = vmatprep.subr.mxu0 0.0
        %5654 = vmatpush1.msra.mxu0 0.0
        %5655 = vmatprep.subr.mxu0 0.0
        %5656 = vmatpush1.msra.mxu0 0.0
        %5657 = vmatprep.subr.mxu0 0.0
        %5658 = vmatpush1.msra.mxu0 0.0
        %5659 = vmatprep.subr.mxu0 0.0
        %5660 = vmatpush1.msra.mxu0 0.0
        %5661 = vmatprep.subr.mxu0 0.0
        %5662 = vmatpush1.msra.mxu0 0.0
        %5663 = vmatprep.subr.mxu0 0.0
        %5664 = vmatpush1.msra.mxu0 0.0
        %5665 = vmatprep.subr.mxu0 0.0
        %5666 = vmatpush1.msra.mxu0 0.0
        %5667 = vmatprep.subr.mxu0 0.0
        %5668 = vmatpush1.msra.mxu0 0.0
        %5669 = vmatprep.subr.mxu0 %v650
        %5670 = vmatpush1.msra.mxu0 %v649
        %5671 = vmatprep.subr.mxu0 %v642
        %5672 = vmatpush1.msra.mxu0 %v641
        %5673 = vmatprep.subr.mxu0 0.0
        %5674 = vmatpush2.msra.mxu0 0.0
        %5675 = vmatprep.subr.mxu0 0.0
        %5676 = vmatpush2.msra.mxu0 0.0
        %5677 = vmatprep.subr.mxu0 0.0
        %5678 = vmatpush2.msra.mxu0 0.0
        %5679 = vmatprep.subr.mxu0 0.0
        %5680 = vmatpush2.msra.mxu0 0.0
        %5681 = vmatprep.subr.mxu0 0.0
        %5682 = vmatpush2.msra.mxu0 0.0
        %5683 = vmatprep.subr.mxu0 0.0
        %5684 = vmatpush2.msra.mxu0 0.0
        %5685 = vmatprep.subr.mxu0 0.0
        %5686 = vmatpush2.msra.mxu0 0.0
        %5687 = vmatprep.subr.mxu0 0.0
        %5688 = vmatpush2.msra.mxu0 0.0
        %5689 = vmatprep.subr.mxu0 0.0
        %5690 = vmatpush2.msra.mxu0 0.0
        %5691 = vmatprep.subr.mxu0 0.0
        %5692 = vmatpush2.msra.mxu0 0.0
        %5693 = vmatprep.subr.mxu0 0.0
        %5694 = vmatpush2.msra.mxu0 0.0
        %5695 = vmatprep.subr.mxu0 0.0
        %5696 = vmatpush2.msra.mxu0 0.0
        %5697 = vmatprep.subr.mxu0 0.0
        %5698 = vmatpush2.msra.mxu0 0.0
        %5699 = vmatprep.subr.mxu0 0.0
        %5700 = vmatpush2.msra.mxu0 0.0
        %5701 = vmatprep.subr.mxu0 0.0
        %5702 = vmatpush2.msra.mxu0 0.0
        %5703 = vmatprep.subr.mxu0 0.0
        %5704 = vmatpush2.msra.mxu0 0.0
        %5705 = vmatprep.mubr.f32.mxu0 0.0
        %5706 = vmatmul.mubr.f32.gmra.mxu0 %v5469
        %v5707 = vpop.f32.mrf.mxu0
        %v5708 = vadd.f32 0.0, %v5707
        %v5709 = vpop.f32.mrf.mxu0
        %v5710 = vadd.f32 0.0, %v5709
        %5711 = vmatprep.mubr.f32.mxu0 0.0
        %5712 = vmatmul.mubr.f32.gmra.mxu0 %v5471
        %v5713 = vpop.f32.mrf.mxu0
        %v5714 = vadd.f32 0.0, %v5713
        %v5715 = vpop.f32.mrf.mxu0
        %v5716 = vadd.f32 0.0, %v5715
        %5717 = vmatprep.mubr.f32.mxu0 0.0
        %5718 = vmatmul.mubr.f32.gmra.mxu0 %v5473
        %v5719 = vpop.f32.mrf.mxu0
        %v5720 = vadd.f32 0.0, %v5719
        %v5721 = vpop.f32.mrf.mxu0
        %v5722 = vadd.f32 0.0, %v5721
        %5723 = vdwg.mxu0
        %5724 = vmatprep.subr.mxu0 0.0
        %5725 = vmatpush1.msra.mxu0 0.0
        %5726 = vmatprep.subr.mxu0 0.0
        %5727 = vmatpush1.msra.mxu0 0.0
        %5728 = vmatprep.subr.mxu0 0.0
        %5729 = vmatpush1.msra.mxu0 0.0
        %5730 = vmatprep.subr.mxu0 0.0
        %5731 = vmatpush1.msra.mxu0 0.0
        %5732 = vmatprep.subr.mxu0 0.0
        %5733 = vmatpush1.msra.mxu0 0.0
        %5734 = vmatprep.subr.mxu0 0.0
        %5735 = vmatpush1.msra.mxu0 0.0
        %5736 = vmatprep.subr.mxu0 0.0
        %5737 = vmatpush1.msra.mxu0 0.0
        %5738 = vmatprep.subr.mxu0 0.0
        %5739 = vmatpush1.msra.mxu0 0.0
        %5740 = vmatprep.subr.mxu0 0.0
        %5741 = vmatpush1.msra.mxu0 0.0
        %5742 = vmatprep.subr.mxu0 0.0
        %5743 = vmatpush1.msra.mxu0 0.0
        %5744 = vmatprep.subr.mxu0 0.0
        %5745 = vmatpush1.msra.mxu0 0.0
        %5746 = vmatprep.subr.mxu0 0.0
        %5747 = vmatpush1.msra.mxu0 0.0
        %5748 = vmatprep.subr.mxu0 0.0
        %5749 = vmatpush1.msra.mxu0 0.0
        %5750 = vmatprep.subr.mxu0 0.0
        %5751 = vmatpush1.msra.mxu0 0.0
        %5752 = vmatprep.subr.mxu0 %v652
        %5753 = vmatpush1.msra.mxu0 %v651
        %5754 = vmatprep.subr.mxu0 %v644
        %5755 = vmatpush1.msra.mxu0 %v643
        %5756 = vmatprep.subr.mxu0 0.0
        %5757 = vmatpush2.msra.mxu0 0.0
        %5758 = vmatprep.subr.mxu0 0.0
        %5759 = vmatpush2.msra.mxu0 0.0
        %5760 = vmatprep.subr.mxu0 0.0
        %5761 = vmatpush2.msra.mxu0 0.0
        %5762 = vmatprep.subr.mxu0 0.0
        %5763 = vmatpush2.msra.mxu0 0.0
        %5764 = vmatprep.subr.mxu0 0.0
        %5765 = vmatpush2.msra.mxu0 0.0
        %5766 = vmatprep.subr.mxu0 0.0
        %5767 = vmatpush2.msra.mxu0 0.0
        %5768 = vmatprep.subr.mxu0 0.0
        %5769 = vmatpush2.msra.mxu0 0.0
        %5770 = vmatprep.subr.mxu0 0.0
        %5771 = vmatpush2.msra.mxu0 0.0
        %5772 = vmatprep.subr.mxu0 0.0
        %5773 = vmatpush2.msra.mxu0 0.0
        %5774 = vmatprep.subr.mxu0 0.0
        %5775 = vmatpush2.msra.mxu0 0.0
        %5776 = vmatprep.subr.mxu0 0.0
        %5777 = vmatpush2.msra.mxu0 0.0
        %5778 = vmatprep.subr.mxu0 0.0
        %5779 = vmatpush2.msra.mxu0 0.0
        %5780 = vmatprep.subr.mxu0 0.0
        %5781 = vmatpush2.msra.mxu0 0.0
        %5782 = vmatprep.subr.mxu0 0.0
        %5783 = vmatpush2.msra.mxu0 0.0
        %5784 = vmatprep.subr.mxu0 0.0
        %5785 = vmatpush2.msra.mxu0 0.0
        %5786 = vmatprep.subr.mxu0 0.0
        %5787 = vmatpush2.msra.mxu0 0.0
        %5788 = vmatprep.mubr.f32.mxu0 0.0
        %5789 = vmatmul.mubr.f32.gmra.mxu0 %v5469
        %v5790 = vpop.f32.mrf.mxu0
        %v5791 = vadd.f32 0.0, %v5790
        %v5792 = vpop.f32.mrf.mxu0
        %v5793 = vadd.f32 0.0, %v5792
        %5794 = vmatprep.mubr.f32.mxu0 0.0
        %5795 = vmatmul.mubr.f32.gmra.mxu0 %v5471
        %v5796 = vpop.f32.mrf.mxu0
        %v5797 = vadd.f32 0.0, %v5796
        %v5798 = vpop.f32.mrf.mxu0
        %v5799 = vadd.f32 0.0, %v5798
        %5800 = vmatprep.mubr.f32.mxu0 0.0
        %5801 = vmatmul.mubr.f32.gmra.mxu0 %v5473
        %v5802 = vpop.f32.mrf.mxu0
        %v5803 = vadd.f32 0.0, %v5802
        %v5804 = vpop.f32.mrf.mxu0
        %v5805 = vadd.f32 0.0, %v5804
        %5806 = vdwg.mxu0
        %v5807 = vmul.f32 %v5195, %v5542
        %v5808 = vmul.f32 %v5197, %v5544
        %v5809 = vmul.f32 %v5278, %v5625
        %v5810 = vmul.f32 %v5280, %v5627
        %v5811 = vmul.f32 %v5361, %v5708
        %v5812 = vmul.f32 %v5363, %v5710
        %v5813 = vmul.f32 %v5444, %v5791
        %v5814 = vmul.f32 %v5446, %v5793
        %v5815 = vmul.f32 %v5201, %v5548
        %v5816 = vmul.f32 %v5203, %v5550
        %v5817 = vmul.f32 %v5284, %v5631
        %v5818 = vmul.f32 %v5286, %v5633
        %v5819 = vmul.f32 %v5367, %v5714
        %v5820 = vmul.f32 %v5369, %v5716
        %v5821 = vmul.f32 %v5450, %v5797
        %v5822 = vmul.f32 %v5452, %v5799
        %v5823 = vmul.f32 %v5207, %v5554
        %v5824 = vmul.f32 %v5209, %v5556
        %v5825 = vmul.f32 %v5290, %v5637
        %v5826 = vmul.f32 %v5292, %v5639
        %v5827 = vmul.f32 %v5373, %v5720
        %v5828 = vmul.f32 %v5375, %v5722
        %v5829 = vmul.f32 %v5456, %v5803
        %v5830 = vmul.f32 %v5458, %v5805
        %v5855 = vrot.slane %v5069, 7
        %v5856 = vrot.slane %v5071, 7
        %v5857 = vrot.slane %v5073, 7
        %v5858 = vrot.slane %v5075, 7
        %v5859 = vrot.slane %v5077, 7
        %v5860 = vrot.slane %v5079, 7
        %v5861 = vrot.slane %v5081, 7
        %v5862 = vrot.slane %v5083, 7
        %v5863 = vrot.slane %v5085, 7
        %v5864 = vsel %vm1120, %v5855, %v5863
        %v5865 = vrot.slane %v5087, 7
        %v5866 = vsel %vm1120, %v5856, %v5865
        %v5867 = vrot.slane %v5089, 7
        %v5868 = vsel %vm1120, %v5857, %v5867
        %v5869 = vrot.slane %v5091, 7
        %v5870 = vsel %vm1120, %v5858, %v5869
        %v5871 = vrot.slane %v5093, 7
        %v5872 = vsel %vm1120, %v5859, %v5871
        %v5873 = vrot.slane %v5095, 7
        %v5874 = vsel %vm1120, %v5860, %v5873
        %v5875 = vrot.slane %v5097, 7
        %v5876 = vsel %vm1120, %v5861, %v5875
        %v5877 = vrot.slane %v5099, 7
        %v5878 = vsel %vm1120, %v5862, %v5877
        %v5879 = vrot.slane %v5101, 7
        %v5880 = vsel %vm1120, %v5863, %v5879
        %v5881 = vrot.slane %v5103, 7
        %v5882 = vsel %vm1120, %v5865, %v5881
        %v5883 = vrot.slane %v5105, 7
        %v5884 = vsel %vm1120, %v5867, %v5883
        %v5885 = vrot.slane %v5107, 7
        %v5886 = vsel %vm1120, %v5869, %v5885
        %v5887 = vrot.slane %v5109, 7
        %v5888 = vsel %vm1120, %v5871, %v5887
        %v5889 = vrot.slane %v5111, 7
        %v5890 = vsel %vm1120, %v5873, %v5889
        %v5891 = vrot.slane %v5113, 7
        %v5892 = vsel %vm1120, %v5875, %v5891
        %v5893 = vrot.slane %v5115, 7
        %v5894 = vsel %vm1120, %v5877, %v5893
        %v5919 = vsel %vm1120, 1.0, %v5855
        %v5920 = vsel %vm1120, 1.0, %v5856
        %v5921 = vsel %vm1120, 1.0, %v5857
        %v5922 = vsel %vm1120, 1.0, %v5858
        %v5923 = vsel %vm1120, 1.0, %v5859
        %v5924 = vsel %vm1120, 1.0, %v5860
        %v5925 = vsel %vm1120, 1.0, %v5861
        %v5926 = vsel %vm1120, 1.0, %v5862
        %v5951 = vrot.slane %v5807, 7
        %v5952 = vrot.slane %v5808, 7
        %v5953 = vrot.slane %v5809, 7
        %v5954 = vrot.slane %v5810, 7
        %v5955 = vrot.slane %v5811, 7
        %v5956 = vrot.slane %v5812, 7
        %v5957 = vrot.slane %v5813, 7
        %v5958 = vrot.slane %v5814, 7
        %v5959 = vrot.slane %v5815, 7
        %v5960 = vsel %vm1120, %v5951, %v5959
        %v5961 = vrot.slane %v5816, 7
        %v5962 = vsel %vm1120, %v5952, %v5961
        %v5963 = vrot.slane %v5817, 7
        %v5964 = vsel %vm1120, %v5953, %v5963
        %v5965 = vrot.slane %v5818, 7
        %v5966 = vsel %vm1120, %v5954, %v5965
        %v5967 = vrot.slane %v5819, 7
        %v5968 = vsel %vm1120, %v5955, %v5967
        %v5969 = vrot.slane %v5820, 7
        %v5970 = vsel %vm1120, %v5956, %v5969
        %v5971 = vrot.slane %v5821, 7
        %v5972 = vsel %vm1120, %v5957, %v5971
        %v5973 = vrot.slane %v5822, 7
        %v5974 = vsel %vm1120, %v5958, %v5973
        %v5975 = vrot.slane %v5823, 7
        %v5976 = vsel %vm1120, %v5959, %v5975
        %v5977 = vrot.slane %v5824, 7
        %v5978 = vsel %vm1120, %v5961, %v5977
        %v5979 = vrot.slane %v5825, 7
        %v5980 = vsel %vm1120, %v5963, %v5979
        %v5981 = vrot.slane %v5826, 7
        %v5982 = vsel %vm1120, %v5965, %v5981
        %v5983 = vrot.slane %v5827, 7
        %v5984 = vsel %vm1120, %v5967, %v5983
        %v5985 = vrot.slane %v5828, 7
        %v5986 = vsel %vm1120, %v5969, %v5985
        %v5987 = vrot.slane %v5829, 7
        %v5988 = vsel %vm1120, %v5971, %v5987
        %v5989 = vrot.slane %v5830, 7
        %v5990 = vsel %vm1120, %v5973, %v5989
        %v6015 = vsel %vm1120, 0.0, %v5951
        %v6016 = vsel %vm1120, 0.0, %v5952
        %v6017 = vsel %vm1120, 0.0, %v5953
        %v6018 = vsel %vm1120, 0.0, %v5954
        %v6019 = vsel %vm1120, 0.0, %v5955
        %v6020 = vsel %vm1120, 0.0, %v5956
        %v6021 = vsel %vm1120, 0.0, %v5957
        %v6022 = vsel %vm1120, 0.0, %v5958
        %v6023 = vmul.f32 %v5069, %v6015
        %v6024 = vmul.f32 %v5071, %v6016
        %v6025 = vmul.f32 %v5073, %v6017
        %v6026 = vmul.f32 %v5075, %v6018
        %v6027 = vmul.f32 %v5077, %v6019
        %v6028 = vmul.f32 %v5079, %v6020
        %v6029 = vmul.f32 %v5081, %v6021
        %v6030 = vmul.f32 %v5083, %v6022
        %v6031 = vmul.f32 %v5085, %v5960
        %v6032 = vmul.f32 %v5087, %v5962
        %v6033 = vmul.f32 %v5089, %v5964
        %v6034 = vmul.f32 %v5091, %v5966
        %v6035 = vmul.f32 %v5093, %v5968
        %v6036 = vmul.f32 %v5095, %v5970
        %v6037 = vmul.f32 %v5097, %v5972
        %v6038 = vmul.f32 %v5099, %v5974
        %v6039 = vmul.f32 %v5101, %v5976
        %v6040 = vmul.f32 %v5103, %v5978
        %v6041 = vmul.f32 %v5105, %v5980
        %v6042 = vmul.f32 %v5107, %v5982
        %v6043 = vmul.f32 %v5109, %v5984
        %v6044 = vmul.f32 %v5111, %v5986
        %v6045 = vmul.f32 %v5113, %v5988
        %v6046 = vmul.f32 %v5115, %v5990
        %v6047 = vadd.f32 %v5807, %v6023
        %v6048 = vadd.f32 %v5808, %v6024
        %v6049 = vadd.f32 %v5809, %v6025
        %v6050 = vadd.f32 %v5810, %v6026
        %v6051 = vadd.f32 %v5811, %v6027
        %v6052 = vadd.f32 %v5812, %v6028
        %v6053 = vadd.f32 %v5813, %v6029
        %v6054 = vadd.f32 %v5814, %v6030
        %v6055 = vadd.f32 %v5815, %v6031
        %v6056 = vadd.f32 %v5816, %v6032
        %v6057 = vadd.f32 %v5817, %v6033
        %v6058 = vadd.f32 %v5818, %v6034
        %v6059 = vadd.f32 %v5819, %v6035
        %v6060 = vadd.f32 %v5820, %v6036
        %v6061 = vadd.f32 %v5821, %v6037
        %v6062 = vadd.f32 %v5822, %v6038
        %v6063 = vadd.f32 %v5823, %v6039
        %v6064 = vadd.f32 %v5824, %v6040
        %v6065 = vadd.f32 %v5825, %v6041
        %v6066 = vadd.f32 %v5826, %v6042
        %v6067 = vadd.f32 %v5827, %v6043
        %v6068 = vadd.f32 %v5828, %v6044
        %v6069 = vadd.f32 %v5829, %v6045
        %v6070 = vadd.f32 %v5830, %v6046
        %v6071 = vmul.f32 %v5069, %v5919
        %v6072 = vmul.f32 %v5071, %v5920
        %v6073 = vmul.f32 %v5073, %v5921
        %v6074 = vmul.f32 %v5075, %v5922
        %v6075 = vmul.f32 %v5077, %v5923
        %v6076 = vmul.f32 %v5079, %v5924
        %v6077 = vmul.f32 %v5081, %v5925
        %v6078 = vmul.f32 %v5083, %v5926
        %v6079 = vmul.f32 %v5085, %v5864
        %v6080 = vmul.f32 %v5087, %v5866
        %v6081 = vmul.f32 %v5089, %v5868
        %v6082 = vmul.f32 %v5091, %v5870
        %v6083 = vmul.f32 %v5093, %v5872
        %v6084 = vmul.f32 %v5095, %v5874
        %v6085 = vmul.f32 %v5097, %v5876
        %v6086 = vmul.f32 %v5099, %v5878
        %v6087 = vmul.f32 %v5101, %v5880
        %v6088 = vmul.f32 %v5103, %v5882
        %v6089 = vmul.f32 %v5105, %v5884
        %v6090 = vmul.f32 %v5107, %v5886
        %v6091 = vmul.f32 %v5109, %v5888
        %v6092 = vmul.f32 %v5111, %v5890
        %v6093 = vmul.f32 %v5113, %v5892
        %v6094 = vmul.f32 %v5115, %v5894
        %v6119 = vrot.slane %v6071, 6
        %v6120 = vrot.slane %v6072, 6
        %v6121 = vrot.slane %v6073, 6
        %v6122 = vrot.slane %v6074, 6
        %v6123 = vrot.slane %v6075, 6
        %v6124 = vrot.slane %v6076, 6
        %v6125 = vrot.slane %v6077, 6
        %v6126 = vrot.slane %v6078, 6
        %v6127 = vrot.slane %v6079, 6
        %v6128 = vsel %vm1100, %v6119, %v6127
        %v6129 = vrot.slane %v6080, 6
        %v6130 = vsel %vm1100, %v6120, %v6129
        %v6131 = vrot.slane %v6081, 6
        %v6132 = vsel %vm1100, %v6121, %v6131
        %v6133 = vrot.slane %v6082, 6
        %v6134 = vsel %vm1100, %v6122, %v6133
        %v6135 = vrot.slane %v6083, 6
        %v6136 = vsel %vm1100, %v6123, %v6135
        %v6137 = vrot.slane %v6084, 6
        %v6138 = vsel %vm1100, %v6124, %v6137
        %v6139 = vrot.slane %v6085, 6
        %v6140 = vsel %vm1100, %v6125, %v6139
        %v6141 = vrot.slane %v6086, 6
        %v6142 = vsel %vm1100, %v6126, %v6141
        %v6143 = vrot.slane %v6087, 6
        %v6144 = vsel %vm1100, %v6127, %v6143
        %v6145 = vrot.slane %v6088, 6
        %v6146 = vsel %vm1100, %v6129, %v6145
        %v6147 = vrot.slane %v6089, 6
        %v6148 = vsel %vm1100, %v6131, %v6147
        %v6149 = vrot.slane %v6090, 6
        %v6150 = vsel %vm1100, %v6133, %v6149
        %v6151 = vrot.slane %v6091, 6
        %v6152 = vsel %vm1100, %v6135, %v6151
        %v6153 = vrot.slane %v6092, 6
        %v6154 = vsel %vm1100, %v6137, %v6153
        %v6155 = vrot.slane %v6093, 6
        %v6156 = vsel %vm1100, %v6139, %v6155
        %v6157 = vrot.slane %v6094, 6
        %v6158 = vsel %vm1100, %v6141, %v6157
        %v6183 = vsel %vm1100, 1.0, %v6119
        %v6184 = vsel %vm1100, 1.0, %v6120
        %v6185 = vsel %vm1100, 1.0, %v6121
        %v6186 = vsel %vm1100, 1.0, %v6122
        %v6187 = vsel %vm1100, 1.0, %v6123
        %v6188 = vsel %vm1100, 1.0, %v6124
        %v6189 = vsel %vm1100, 1.0, %v6125
        %v6190 = vsel %vm1100, 1.0, %v6126
        %v6215 = vrot.slane %v6047, 6
        %v6216 = vrot.slane %v6048, 6
        %v6217 = vrot.slane %v6049, 6
        %v6218 = vrot.slane %v6050, 6
        %v6219 = vrot.slane %v6051, 6
        %v6220 = vrot.slane %v6052, 6
        %v6221 = vrot.slane %v6053, 6
        %v6222 = vrot.slane %v6054, 6
        %v6223 = vrot.slane %v6055, 6
        %v6224 = vsel %vm1100, %v6215, %v6223
        %v6225 = vrot.slane %v6056, 6
        %v6226 = vsel %vm1100, %v6216, %v6225
        %v6227 = vrot.slane %v6057, 6
        %v6228 = vsel %vm1100, %v6217, %v6227
        %v6229 = vrot.slane %v6058, 6
        %v6230 = vsel %vm1100, %v6218, %v6229
        %v6231 = vrot.slane %v6059, 6
        %v6232 = vsel %vm1100, %v6219, %v6231
        %v6233 = vrot.slane %v6060, 6
        %v6234 = vsel %vm1100, %v6220, %v6233
        %v6235 = vrot.slane %v6061, 6
        %v6236 = vsel %vm1100, %v6221, %v6235
        %v6237 = vrot.slane %v6062, 6
        %v6238 = vsel %vm1100, %v6222, %v6237
        %v6239 = vrot.slane %v6063, 6
        %v6240 = vsel %vm1100, %v6223, %v6239
        %v6241 = vrot.slane %v6064, 6
        %v6242 = vsel %vm1100, %v6225, %v6241
        %v6243 = vrot.slane %v6065, 6
        %v6244 = vsel %vm1100, %v6227, %v6243
        %v6245 = vrot.slane %v6066, 6
        %v6246 = vsel %vm1100, %v6229, %v6245
        %v6247 = vrot.slane %v6067, 6
        %v6248 = vsel %vm1100, %v6231, %v6247
        %v6249 = vrot.slane %v6068, 6
        %v6250 = vsel %vm1100, %v6233, %v6249
        %v6251 = vrot.slane %v6069, 6
        %v6252 = vsel %vm1100, %v6235, %v6251
        %v6253 = vrot.slane %v6070, 6
        %v6254 = vsel %vm1100, %v6237, %v6253
        %v6279 = vsel %vm1100, 0.0, %v6215
        %v6280 = vsel %vm1100, 0.0, %v6216
        %v6281 = vsel %vm1100, 0.0, %v6217
        %v6282 = vsel %vm1100, 0.0, %v6218
        %v6283 = vsel %vm1100, 0.0, %v6219
        %v6284 = vsel %vm1100, 0.0, %v6220
        %v6285 = vsel %vm1100, 0.0, %v6221
        %v6286 = vsel %vm1100, 0.0, %v6222
        %v6287 = vmul.f32 %v6071, %v6279
        %v6288 = vmul.f32 %v6072, %v6280
        %v6289 = vmul.f32 %v6073, %v6281
        %v6290 = vmul.f32 %v6074, %v6282
        %v6291 = vmul.f32 %v6075, %v6283
        %v6292 = vmul.f32 %v6076, %v6284
        %v6293 = vmul.f32 %v6077, %v6285
        %v6294 = vmul.f32 %v6078, %v6286
        %v6295 = vmul.f32 %v6079, %v6224
        %v6296 = vmul.f32 %v6080, %v6226
        %v6297 = vmul.f32 %v6081, %v6228
        %v6298 = vmul.f32 %v6082, %v6230
        %v6299 = vmul.f32 %v6083, %v6232
        %v6300 = vmul.f32 %v6084, %v6234
        %v6301 = vmul.f32 %v6085, %v6236
        %v6302 = vmul.f32 %v6086, %v6238
        %v6303 = vmul.f32 %v6087, %v6240
        %v6304 = vmul.f32 %v6088, %v6242
        %v6305 = vmul.f32 %v6089, %v6244
        %v6306 = vmul.f32 %v6090, %v6246
        %v6307 = vmul.f32 %v6091, %v6248
        %v6308 = vmul.f32 %v6092, %v6250
        %v6309 = vmul.f32 %v6093, %v6252
        %v6310 = vmul.f32 %v6094, %v6254
        %v6311 = vadd.f32 %v6047, %v6287
        %v6312 = vadd.f32 %v6048, %v6288
        %v6313 = vadd.f32 %v6049, %v6289
        %v6314 = vadd.f32 %v6050, %v6290
        %v6315 = vadd.f32 %v6051, %v6291
        %v6316 = vadd.f32 %v6052, %v6292
        %v6317 = vadd.f32 %v6053, %v6293
        %v6318 = vadd.f32 %v6054, %v6294
        %v6319 = vadd.f32 %v6055, %v6295
        %v6320 = vadd.f32 %v6056, %v6296
        %v6321 = vadd.f32 %v6057, %v6297
        %v6322 = vadd.f32 %v6058, %v6298
        %v6323 = vadd.f32 %v6059, %v6299
        %v6324 = vadd.f32 %v6060, %v6300
        %v6325 = vadd.f32 %v6061, %v6301
        %v6326 = vadd.f32 %v6062, %v6302
        %v6327 = vadd.f32 %v6063, %v6303
        %v6328 = vadd.f32 %v6064, %v6304
        %v6329 = vadd.f32 %v6065, %v6305
        %v6330 = vadd.f32 %v6066, %v6306
        %v6331 = vadd.f32 %v6067, %v6307
        %v6332 = vadd.f32 %v6068, %v6308
        %v6333 = vadd.f32 %v6069, %v6309
        %v6334 = vadd.f32 %v6070, %v6310
        %v6335 = vmul.f32 %v6071, %v6183
        %v6336 = vmul.f32 %v6072, %v6184
        %v6337 = vmul.f32 %v6073, %v6185
        %v6338 = vmul.f32 %v6074, %v6186
        %v6339 = vmul.f32 %v6075, %v6187
        %v6340 = vmul.f32 %v6076, %v6188
        %v6341 = vmul.f32 %v6077, %v6189
        %v6342 = vmul.f32 %v6078, %v6190
        %v6343 = vmul.f32 %v6079, %v6128
        %v6344 = vmul.f32 %v6080, %v6130
        %v6345 = vmul.f32 %v6081, %v6132
        %v6346 = vmul.f32 %v6082, %v6134
        %v6347 = vmul.f32 %v6083, %v6136
        %v6348 = vmul.f32 %v6084, %v6138
        %v6349 = vmul.f32 %v6085, %v6140
        %v6350 = vmul.f32 %v6086, %v6142
        %v6351 = vmul.f32 %v6087, %v6144
        %v6352 = vmul.f32 %v6088, %v6146
        %v6353 = vmul.f32 %v6089, %v6148
        %v6354 = vmul.f32 %v6090, %v6150
        %v6355 = vmul.f32 %v6091, %v6152
        %v6356 = vmul.f32 %v6092, %v6154
        %v6357 = vmul.f32 %v6093, %v6156
        %v6358 = vmul.f32 %v6094, %v6158
        %v6383 = vrot.slane %v6335, 4
        %v6384 = vrot.slane %v6336, 4
        %v6385 = vrot.slane %v6337, 4
        %v6386 = vrot.slane %v6338, 4
        %v6387 = vrot.slane %v6339, 4
        %v6388 = vrot.slane %v6340, 4
        %v6389 = vrot.slane %v6341, 4
        %v6390 = vrot.slane %v6342, 4
        %v6391 = vrot.slane %v6343, 4
        %v6392 = vsel %vm3026, %v6383, %v6391
        %v6393 = vrot.slane %v6344, 4
        %v6394 = vsel %vm3026, %v6384, %v6393
        %v6395 = vrot.slane %v6345, 4
        %v6396 = vsel %vm3026, %v6385, %v6395
        %v6397 = vrot.slane %v6346, 4
        %v6398 = vsel %vm3026, %v6386, %v6397
        %v6399 = vrot.slane %v6347, 4
        %v6400 = vsel %vm3026, %v6387, %v6399
        %v6401 = vrot.slane %v6348, 4
        %v6402 = vsel %vm3026, %v6388, %v6401
        %v6403 = vrot.slane %v6349, 4
        %v6404 = vsel %vm3026, %v6389, %v6403
        %v6405 = vrot.slane %v6350, 4
        %v6406 = vsel %vm3026, %v6390, %v6405
        %v6407 = vrot.slane %v6351, 4
        %v6408 = vsel %vm3026, %v6391, %v6407
        %v6409 = vrot.slane %v6352, 4
        %v6410 = vsel %vm3026, %v6393, %v6409
        %v6411 = vrot.slane %v6353, 4
        %v6412 = vsel %vm3026, %v6395, %v6411
        %v6413 = vrot.slane %v6354, 4
        %v6414 = vsel %vm3026, %v6397, %v6413
        %v6415 = vrot.slane %v6355, 4
        %v6416 = vsel %vm3026, %v6399, %v6415
        %v6417 = vrot.slane %v6356, 4
        %v6418 = vsel %vm3026, %v6401, %v6417
        %v6419 = vrot.slane %v6357, 4
        %v6420 = vsel %vm3026, %v6403, %v6419
        %v6421 = vrot.slane %v6358, 4
        %v6422 = vsel %vm3026, %v6405, %v6421
        %v6447 = vsel %vm3026, 1.0, %v6383
        %v6448 = vsel %vm3026, 1.0, %v6384
        %v6449 = vsel %vm3026, 1.0, %v6385
        %v6450 = vsel %vm3026, 1.0, %v6386
        %v6451 = vsel %vm3026, 1.0, %v6387
        %v6452 = vsel %vm3026, 1.0, %v6388
        %v6453 = vsel %vm3026, 1.0, %v6389
        %v6454 = vsel %vm3026, 1.0, %v6390
        %v6479 = vrot.slane %v6311, 4
        %v6480 = vrot.slane %v6312, 4
        %v6481 = vrot.slane %v6313, 4
        %v6482 = vrot.slane %v6314, 4
        %v6483 = vrot.slane %v6315, 4
        %v6484 = vrot.slane %v6316, 4
        %v6485 = vrot.slane %v6317, 4
        %v6486 = vrot.slane %v6318, 4
        %v6487 = vrot.slane %v6319, 4
        %v6488 = vsel %vm3026, %v6479, %v6487
        %v6489 = vrot.slane %v6320, 4
        %v6490 = vsel %vm3026, %v6480, %v6489
        %v6491 = vrot.slane %v6321, 4
        %v6492 = vsel %vm3026, %v6481, %v6491
        %v6493 = vrot.slane %v6322, 4
        %v6494 = vsel %vm3026, %v6482, %v6493
        %v6495 = vrot.slane %v6323, 4
        %v6496 = vsel %vm3026, %v6483, %v6495
        %v6497 = vrot.slane %v6324, 4
        %v6498 = vsel %vm3026, %v6484, %v6497
        %v6499 = vrot.slane %v6325, 4
        %v6500 = vsel %vm3026, %v6485, %v6499
        %v6501 = vrot.slane %v6326, 4
        %v6502 = vsel %vm3026, %v6486, %v6501
        %v6503 = vrot.slane %v6327, 4
        %v6504 = vsel %vm3026, %v6487, %v6503
        %v6505 = vrot.slane %v6328, 4
        %v6506 = vsel %vm3026, %v6489, %v6505
        %v6507 = vrot.slane %v6329, 4
        %v6508 = vsel %vm3026, %v6491, %v6507
        %v6509 = vrot.slane %v6330, 4
        %v6510 = vsel %vm3026, %v6493, %v6509
        %v6511 = vrot.slane %v6331, 4
        %v6512 = vsel %vm3026, %v6495, %v6511
        %v6513 = vrot.slane %v6332, 4
        %v6514 = vsel %vm3026, %v6497, %v6513
        %v6515 = vrot.slane %v6333, 4
        %v6516 = vsel %vm3026, %v6499, %v6515
        %v6517 = vrot.slane %v6334, 4
        %v6518 = vsel %vm3026, %v6501, %v6517
        %v6543 = vsel %vm3026, 0.0, %v6479
        %v6544 = vsel %vm3026, 0.0, %v6480
        %v6545 = vsel %vm3026, 0.0, %v6481
        %v6546 = vsel %vm3026, 0.0, %v6482
        %v6547 = vsel %vm3026, 0.0, %v6483
        %v6548 = vsel %vm3026, 0.0, %v6484
        %v6549 = vsel %vm3026, 0.0, %v6485
        %v6550 = vsel %vm3026, 0.0, %v6486
        %v6551 = vmul.f32 %v6335, %v6543
        %v6552 = vmul.f32 %v6336, %v6544
        %v6553 = vmul.f32 %v6337, %v6545
        %v6554 = vmul.f32 %v6338, %v6546
        %v6555 = vmul.f32 %v6339, %v6547
        %v6556 = vmul.f32 %v6340, %v6548
        %v6557 = vmul.f32 %v6341, %v6549
        %v6558 = vmul.f32 %v6342, %v6550
        %v6559 = vmul.f32 %v6343, %v6488
        %v6560 = vmul.f32 %v6344, %v6490
        %v6561 = vmul.f32 %v6345, %v6492
        %v6562 = vmul.f32 %v6346, %v6494
        %v6563 = vmul.f32 %v6347, %v6496
        %v6564 = vmul.f32 %v6348, %v6498
        %v6565 = vmul.f32 %v6349, %v6500
        %v6566 = vmul.f32 %v6350, %v6502
        %v6567 = vmul.f32 %v6351, %v6504
        %v6568 = vmul.f32 %v6352, %v6506
        %v6569 = vmul.f32 %v6353, %v6508
        %v6570 = vmul.f32 %v6354, %v6510
        %v6571 = vmul.f32 %v6355, %v6512
        %v6572 = vmul.f32 %v6356, %v6514
        %v6573 = vmul.f32 %v6357, %v6516
        %v6574 = vmul.f32 %v6358, %v6518
        %v6575 = vadd.f32 %v6311, %v6551
        %v6576 = vadd.f32 %v6312, %v6552
        %v6577 = vadd.f32 %v6313, %v6553
        %v6578 = vadd.f32 %v6314, %v6554
        %v6579 = vadd.f32 %v6315, %v6555
        %v6580 = vadd.f32 %v6316, %v6556
        %v6581 = vadd.f32 %v6317, %v6557
        %v6582 = vadd.f32 %v6318, %v6558
        %v6583 = vadd.f32 %v6319, %v6559
        %v6584 = vadd.f32 %v6320, %v6560
        %v6585 = vadd.f32 %v6321, %v6561
        %v6586 = vadd.f32 %v6322, %v6562
        %v6587 = vadd.f32 %v6323, %v6563
        %v6588 = vadd.f32 %v6324, %v6564
        %v6589 = vadd.f32 %v6325, %v6565
        %v6590 = vadd.f32 %v6326, %v6566
        %v6591 = vadd.f32 %v6327, %v6567
        %v6592 = vadd.f32 %v6328, %v6568
        %v6593 = vadd.f32 %v6329, %v6569
        %v6594 = vadd.f32 %v6330, %v6570
        %v6595 = vadd.f32 %v6331, %v6571
        %v6596 = vadd.f32 %v6332, %v6572
        %v6597 = vadd.f32 %v6333, %v6573
        %v6598 = vadd.f32 %v6334, %v6574
        %v6599 = vmul.f32 %v6335, %v6447
        %v6600 = vmul.f32 %v6336, %v6448
        %v6601 = vmul.f32 %v6337, %v6449
        %v6602 = vmul.f32 %v6338, %v6450
        %v6603 = vmul.f32 %v6339, %v6451
        %v6604 = vmul.f32 %v6340, %v6452
        %v6605 = vmul.f32 %v6341, %v6453
        %v6606 = vmul.f32 %v6342, %v6454
        %v6607 = vmul.f32 %v6343, %v6392
        %v6608 = vmul.f32 %v6344, %v6394
        %v6609 = vmul.f32 %v6345, %v6396
        %v6610 = vmul.f32 %v6346, %v6398
        %v6611 = vmul.f32 %v6347, %v6400
        %v6612 = vmul.f32 %v6348, %v6402
        %v6613 = vmul.f32 %v6349, %v6404
        %v6614 = vmul.f32 %v6350, %v6406
        %v6615 = vmul.f32 %v6351, %v6408
        %v6616 = vmul.f32 %v6352, %v6410
        %v6617 = vmul.f32 %v6353, %v6412
        %v6618 = vmul.f32 %v6354, %v6414
        %v6619 = vmul.f32 %v6355, %v6416
        %v6620 = vmul.f32 %v6356, %v6418
        %v6621 = vmul.f32 %v6357, %v6420
        %v6622 = vmul.f32 %v6358, %v6422
        %v6623 = vmul.f32 %v6599, 0.0
        %v6624 = vmul.f32 %v6600, 0.0
        %v6625 = vmul.f32 %v6601, 0.0
        %v6626 = vmul.f32 %v6602, 0.0
        %v6627 = vmul.f32 %v6603, 0.0
        %v6628 = vmul.f32 %v6604, 0.0
        %v6629 = vmul.f32 %v6605, 0.0
        %v6630 = vmul.f32 %v6606, 0.0
        %v6631 = vmul.f32 %v6607, %v6575
        %v6632 = vmul.f32 %v6608, %v6576
        %v6633 = vmul.f32 %v6609, %v6577
        %v6634 = vmul.f32 %v6610, %v6578
        %v6635 = vmul.f32 %v6611, %v6579
        %v6636 = vmul.f32 %v6612, %v6580
        %v6637 = vmul.f32 %v6613, %v6581
        %v6638 = vmul.f32 %v6614, %v6582
        %v6639 = vmul.f32 %v6615, %v6583
        %v6640 = vmul.f32 %v6616, %v6584
        %v6641 = vmul.f32 %v6617, %v6585
        %v6642 = vmul.f32 %v6618, %v6586
        %v6643 = vmul.f32 %v6619, %v6587
        %v6644 = vmul.f32 %v6620, %v6588
        %v6645 = vmul.f32 %v6621, %v6589
        %v6646 = vmul.f32 %v6622, %v6590
        %v6647 = vadd.f32 %v6575, %v6623
        %v6648 = vadd.f32 %v6576, %v6624
        %v6649 = vadd.f32 %v6577, %v6625
        %v6650 = vadd.f32 %v6578, %v6626
        %v6651 = vadd.f32 %v6579, %v6627
        %v6652 = vadd.f32 %v6580, %v6628
        %v6653 = vadd.f32 %v6581, %v6629
        %v6654 = vadd.f32 %v6582, %v6630
        %v6655 = vadd.f32 %v6583, %v6631
        %v6656 = vadd.f32 %v6584, %v6632
        %v6657 = vadd.f32 %v6585, %v6633
        %v6658 = vadd.f32 %v6586, %v6634
        %v6659 = vadd.f32 %v6587, %v6635
        %v6660 = vadd.f32 %v6588, %v6636
        %v6661 = vadd.f32 %v6589, %v6637
        %v6662 = vadd.f32 %v6590, %v6638
        %v6663 = vadd.f32 %v6591, %v6639
        %v6664 = vadd.f32 %v6592, %v6640
        %v6665 = vadd.f32 %v6593, %v6641
        %v6666 = vadd.f32 %v6594, %v6642
        %v6667 = vadd.f32 %v6595, %v6643
        %v6668 = vadd.f32 %v6596, %v6644
        %v6669 = vadd.f32 %v6597, %v6645
        %v6670 = vadd.f32 %v6598, %v6646
        %v6671 = vmul.f32 %v6607, %v6599
        %v6672 = vmul.f32 %v6608, %v6600
        %v6673 = vmul.f32 %v6609, %v6601
        %v6674 = vmul.f32 %v6610, %v6602
        %v6675 = vmul.f32 %v6611, %v6603
        %v6676 = vmul.f32 %v6612, %v6604
        %v6677 = vmul.f32 %v6613, %v6605
        %v6678 = vmul.f32 %v6614, %v6606
        %v6679 = vmul.f32 %v6615, %v6607
        %v6680 = vmul.f32 %v6616, %v6608
        %v6681 = vmul.f32 %v6617, %v6609
        %v6682 = vmul.f32 %v6618, %v6610
        %v6683 = vmul.f32 %v6619, %v6611
        %v6684 = vmul.f32 %v6620, %v6612
        %v6685 = vmul.f32 %v6621, %v6613
        %v6686 = vmul.f32 %v6622, %v6614
        %v6687 = vmul.f32 %v6671, 0.0
        %v6688 = vmul.f32 %v6672, 0.0
        %v6689 = vmul.f32 %v6673, 0.0
        %v6690 = vmul.f32 %v6674, 0.0
        %v6691 = vmul.f32 %v6675, 0.0
        %v6692 = vmul.f32 %v6676, 0.0
        %v6693 = vmul.f32 %v6677, 0.0
        %v6694 = vmul.f32 %v6678, 0.0
        %v6695 = vmul.f32 %v6679, %v6647
        %v6696 = vmul.f32 %v6680, %v6648
        %v6697 = vmul.f32 %v6681, %v6649
        %v6698 = vmul.f32 %v6682, %v6650
        %v6699 = vmul.f32 %v6683, %v6651
        %v6700 = vmul.f32 %v6684, %v6652
        %v6701 = vmul.f32 %v6685, %v6653
        %v6702 = vmul.f32 %v6686, %v6654
        %v6703 = vadd.f32 %v6647, %v6623
        %v6704 = vadd.f32 %v6648, %v6624
        %v6705 = vadd.f32 %v6649, %v6625
        %v6706 = vadd.f32 %v6650, %v6626
        %v6707 = vadd.f32 %v6651, %v6627
        %v6708 = vadd.f32 %v6652, %v6628
        %v6709 = vadd.f32 %v6653, %v6629
        %v6710 = vadd.f32 %v6654, %v6630
        %v6711 = vadd.f32 %v6655, %v6687
        %v6712 = vadd.f32 %v6656, %v6688
        %v6713 = vadd.f32 %v6657, %v6689
        %v6714 = vadd.f32 %v6658, %v6690
        %v6715 = vadd.f32 %v6659, %v6691
        %v6716 = vadd.f32 %v6660, %v6692
        %v6717 = vadd.f32 %v6661, %v6693
        %v6718 = vadd.f32 %v6662, %v6694
        %v6719 = vadd.f32 %v6663, %v6695
        %v6720 = vadd.f32 %v6664, %v6696
        %v6721 = vadd.f32 %v6665, %v6697
        %v6722 = vadd.f32 %v6666, %v6698
        %v6723 = vadd.f32 %v6667, %v6699
        %v6724 = vadd.f32 %v6668, %v6700
        %v6725 = vadd.f32 %v6669, %v6701
        %v6726 = vadd.f32 %v6670, %v6702
        %6727 = vrot.lane.b32.xlu0 %v4611, 48
        %v6728 = vpop.permute.xlu0 %6727
        %6729 = vrot.lane.b32.xlu0 %v4616, 48
        %v6730 = vpop.permute.xlu0 %6729
        %6731 = vrot.lane.b32.xlu0 %v4621, 48
        %v6732 = vpop.permute.xlu0 %6731
        %v6733 = vsel %vm854, %v6728, 0
        %v6735 = vsel %vm854, %v6730, 0
        %v6737 = vsel %vm854, %v6732, 0
        %6739 = vmatprep.subr.mxu0 0.0
        %6740 = vmatpush1.msra.mxu0 0.0
        %6741 = vmatprep.subr.mxu0 0.0
        %6742 = vmatpush1.msra.mxu0 0.0
        %6743 = vmatprep.subr.mxu0 0.0
        %6744 = vmatpush1.msra.mxu0 0.0
        %6745 = vmatprep.subr.mxu0 0.0
        %6746 = vmatpush1.msra.mxu0 0.0
        %6747 = vmatprep.subr.mxu0 0.0
        %6748 = vmatpush1.msra.mxu0 0.0
        %6749 = vmatprep.subr.mxu0 0.0
        %6750 = vmatpush1.msra.mxu0 0.0
        %6751 = vmatprep.subr.mxu0 0.0
        %6752 = vmatpush1.msra.mxu0 0.0
        %6753 = vmatprep.subr.mxu0 0.0
        %6754 = vmatpush1.msra.mxu0 0.0
        %6755 = vmatprep.subr.mxu0 0.0
        %6756 = vmatpush1.msra.mxu0 0.0
        %6757 = vmatprep.subr.mxu0 0.0
        %6758 = vmatpush1.msra.mxu0 0.0
        %6759 = vmatprep.subr.mxu0 0.0
        %6760 = vmatpush1.msra.mxu0 0.0
        %6761 = vmatprep.subr.mxu0 0.0
        %6762 = vmatpush1.msra.mxu0 0.0
        %6763 = vmatprep.subr.mxu0 0.0
        %6764 = vmatpush1.msra.mxu0 0.0
        %6765 = vmatprep.subr.mxu0 0.0
        %6766 = vmatpush1.msra.mxu0 0.0
        %6767 = vmatprep.subr.mxu0 %v646
        %6768 = vmatpush1.msra.mxu0 %v645
        %6769 = vmatprep.subr.mxu0 %v638
        %6770 = vmatpush1.msra.mxu0 %v637
        %6771 = vmatprep.subr.mxu0 0.0
        %6772 = vmatpush2.msra.mxu0 0.0
        %6773 = vmatprep.subr.mxu0 0.0
        %6774 = vmatpush2.msra.mxu0 0.0
        %6775 = vmatprep.subr.mxu0 0.0
        %6776 = vmatpush2.msra.mxu0 0.0
        %6777 = vmatprep.subr.mxu0 0.0
        %6778 = vmatpush2.msra.mxu0 0.0
        %6779 = vmatprep.subr.mxu0 0.0
        %6780 = vmatpush2.msra.mxu0 0.0
        %6781 = vmatprep.subr.mxu0 0.0
        %6782 = vmatpush2.msra.mxu0 0.0
        %6783 = vmatprep.subr.mxu0 0.0
        %6784 = vmatpush2.msra.mxu0 0.0
        %6785 = vmatprep.subr.mxu0 0.0
        %6786 = vmatpush2.msra.mxu0 0.0
        %6787 = vmatprep.subr.mxu0 0.0
        %6788 = vmatpush2.msra.mxu0 0.0
        %6789 = vmatprep.subr.mxu0 0.0
        %6790 = vmatpush2.msra.mxu0 0.0
        %6791 = vmatprep.subr.mxu0 0.0
        %6792 = vmatpush2.msra.mxu0 0.0
        %6793 = vmatprep.subr.mxu0 0.0
        %6794 = vmatpush2.msra.mxu0 0.0
        %6795 = vmatprep.subr.mxu0 0.0
        %6796 = vmatpush2.msra.mxu0 0.0
        %6797 = vmatprep.subr.mxu0 0.0
        %6798 = vmatpush2.msra.mxu0 0.0
        %6799 = vmatprep.subr.mxu0 0.0
        %6800 = vmatpush2.msra.mxu0 0.0
        %6801 = vmatprep.subr.mxu0 0.0
        %6802 = vmatpush2.msra.mxu0 0.0
        %6803 = vmatprep.mubr.f32.mxu0 0.0
        %6804 = vmatmul.mubr.f32.gmra.mxu0 %v6733
        %v6805 = vpop.f32.mrf.mxu0
        %v6806 = vadd.f32 0.0, %v6805
        %v6807 = vpop.f32.mrf.mxu0
        %v6808 = vadd.f32 0.0, %v6807
        %6809 = vmatprep.mubr.f32.mxu0 0.0
        %6810 = vmatmul.mubr.f32.gmra.mxu0 %v6735
        %v6811 = vpop.f32.mrf.mxu0
        %v6812 = vadd.f32 0.0, %v6811
        %v6813 = vpop.f32.mrf.mxu0
        %v6814 = vadd.f32 0.0, %v6813
        %6815 = vmatprep.mubr.f32.mxu0 0.0
        %6816 = vmatmul.mubr.f32.gmra.mxu0 %v6737
        %v6817 = vpop.f32.mrf.mxu0
        %v6818 = vadd.f32 0.0, %v6817
        %v6819 = vpop.f32.mrf.mxu0
        %v6820 = vadd.f32 0.0, %v6819
        %6821 = vdwg.mxu0
        %6822 = vmatprep.subr.mxu0 0.0
        %6823 = vmatpush1.msra.mxu0 0.0
        %6824 = vmatprep.subr.mxu0 0.0
        %6825 = vmatpush1.msra.mxu0 0.0
        %6826 = vmatprep.subr.mxu0 0.0
        %6827 = vmatpush1.msra.mxu0 0.0
        %6828 = vmatprep.subr.mxu0 0.0
        %6829 = vmatpush1.msra.mxu0 0.0
        %6830 = vmatprep.subr.mxu0 0.0
        %6831 = vmatpush1.msra.mxu0 0.0
        %6832 = vmatprep.subr.mxu0 0.0
        %6833 = vmatpush1.msra.mxu0 0.0
        %6834 = vmatprep.subr.mxu0 0.0
        %6835 = vmatpush1.msra.mxu0 0.0
        %6836 = vmatprep.subr.mxu0 0.0
        %6837 = vmatpush1.msra.mxu0 0.0
        %6838 = vmatprep.subr.mxu0 0.0
        %6839 = vmatpush1.msra.mxu0 0.0
        %6840 = vmatprep.subr.mxu0 0.0
        %6841 = vmatpush1.msra.mxu0 0.0
        %6842 = vmatprep.subr.mxu0 0.0
        %6843 = vmatpush1.msra.mxu0 0.0
        %6844 = vmatprep.subr.mxu0 0.0
        %6845 = vmatpush1.msra.mxu0 0.0
        %6846 = vmatprep.subr.mxu0 0.0
        %6847 = vmatpush1.msra.mxu0 0.0
        %6848 = vmatprep.subr.mxu0 0.0
        %6849 = vmatpush1.msra.mxu0 0.0
        %6850 = vmatprep.subr.mxu0 %v648
        %6851 = vmatpush1.msra.mxu0 %v647
        %6852 = vmatprep.subr.mxu0 %v640
        %6853 = vmatpush1.msra.mxu0 %v639
        %6854 = vmatprep.subr.mxu0 0.0
        %6855 = vmatpush2.msra.mxu0 0.0
        %6856 = vmatprep.subr.mxu0 0.0
        %6857 = vmatpush2.msra.mxu0 0.0
        %6858 = vmatprep.subr.mxu0 0.0
        %6859 = vmatpush2.msra.mxu0 0.0
        %6860 = vmatprep.subr.mxu0 0.0
        %6861 = vmatpush2.msra.mxu0 0.0
        %6862 = vmatprep.subr.mxu0 0.0
        %6863 = vmatpush2.msra.mxu0 0.0
        %6864 = vmatprep.subr.mxu0 0.0
        %6865 = vmatpush2.msra.mxu0 0.0
        %6866 = vmatprep.subr.mxu0 0.0
        %6867 = vmatpush2.msra.mxu0 0.0
        %6868 = vmatprep.subr.mxu0 0.0
        %6869 = vmatpush2.msra.mxu0 0.0
        %6870 = vmatprep.subr.mxu0 0.0
        %6871 = vmatpush2.msra.mxu0 0.0
        %6872 = vmatprep.subr.mxu0 0.0
        %6873 = vmatpush2.msra.mxu0 0.0
        %6874 = vmatprep.subr.mxu0 0.0
        %6875 = vmatpush2.msra.mxu0 0.0
        %6876 = vmatprep.subr.mxu0 0.0
        %6877 = vmatpush2.msra.mxu0 0.0
        %6878 = vmatprep.subr.mxu0 0.0
        %6879 = vmatpush2.msra.mxu0 0.0
        %6880 = vmatprep.subr.mxu0 0.0
        %6881 = vmatpush2.msra.mxu0 0.0
        %6882 = vmatprep.subr.mxu0 0.0
        %6883 = vmatpush2.msra.mxu0 0.0
        %6884 = vmatprep.subr.mxu0 0.0
        %6885 = vmatpush2.msra.mxu0 0.0
        %6886 = vmatprep.mubr.f32.mxu0 0.0
        %6887 = vmatmul.mubr.f32.gmra.mxu0 %v6733
        %v6888 = vpop.f32.mrf.mxu0
        %v6889 = vadd.f32 0.0, %v6888
        %v6890 = vpop.f32.mrf.mxu0
        %v6891 = vadd.f32 0.0, %v6890
        %6892 = vmatprep.mubr.f32.mxu0 0.0
        %6893 = vmatmul.mubr.f32.gmra.mxu0 %v6735
        %v6894 = vpop.f32.mrf.mxu0
        %v6895 = vadd.f32 0.0, %v6894
        %v6896 = vpop.f32.mrf.mxu0
        %v6897 = vadd.f32 0.0, %v6896
        %6898 = vmatprep.mubr.f32.mxu0 0.0
        %6899 = vmatmul.mubr.f32.gmra.mxu0 %v6737
        %v6900 = vpop.f32.mrf.mxu0
        %v6901 = vadd.f32 0.0, %v6900
        %v6902 = vpop.f32.mrf.mxu0
        %v6903 = vadd.f32 0.0, %v6902
        %6904 = vdwg.mxu0
        %6905 = vmatprep.subr.mxu0 0.0
        %6906 = vmatpush1.msra.mxu0 0.0
        %6907 = vmatprep.subr.mxu0 0.0
        %6908 = vmatpush1.msra.mxu0 0.0
        %6909 = vmatprep.subr.mxu0 0.0
        %6910 = vmatpush1.msra.mxu0 0.0
        %6911 = vmatprep.subr.mxu0 0.0
        %6912 = vmatpush1.msra.mxu0 0.0
        %6913 = vmatprep.subr.mxu0 0.0
        %6914 = vmatpush1.msra.mxu0 0.0
        %6915 = vmatprep.subr.mxu0 0.0
        %6916 = vmatpush1.msra.mxu0 0.0
        %6917 = vmatprep.subr.mxu0 0.0
        %6918 = vmatpush1.msra.mxu0 0.0
        %6919 = vmatprep.subr.mxu0 0.0
        %6920 = vmatpush1.msra.mxu0 0.0
        %6921 = vmatprep.subr.mxu0 0.0
        %6922 = vmatpush1.msra.mxu0 0.0
        %6923 = vmatprep.subr.mxu0 0.0
        %6924 = vmatpush1.msra.mxu0 0.0
        %6925 = vmatprep.subr.mxu0 0.0
        %6926 = vmatpush1.msra.mxu0 0.0
        %6927 = vmatprep.subr.mxu0 0.0
        %6928 = vmatpush1.msra.mxu0 0.0
        %6929 = vmatprep.subr.mxu0 0.0
        %6930 = vmatpush1.msra.mxu0 0.0
        %6931 = vmatprep.subr.mxu0 0.0
        %6932 = vmatpush1.msra.mxu0 0.0
        %6933 = vmatprep.subr.mxu0 %v650
        %6934 = vmatpush1.msra.mxu0 %v649
        %6935 = vmatprep.subr.mxu0 %v642
        %6936 = vmatpush1.msra.mxu0 %v641
        %6937 = vmatprep.subr.mxu0 0.0
        %6938 = vmatpush2.msra.mxu0 0.0
        %6939 = vmatprep.subr.mxu0 0.0
        %6940 = vmatpush2.msra.mxu0 0.0
        %6941 = vmatprep.subr.mxu0 0.0
        %6942 = vmatpush2.msra.mxu0 0.0
        %6943 = vmatprep.subr.mxu0 0.0
        %6944 = vmatpush2.msra.mxu0 0.0
        %6945 = vmatprep.subr.mxu0 0.0
        %6946 = vmatpush2.msra.mxu0 0.0
        %6947 = vmatprep.subr.mxu0 0.0
        %6948 = vmatpush2.msra.mxu0 0.0
        %6949 = vmatprep.subr.mxu0 0.0
        %6950 = vmatpush2.msra.mxu0 0.0
        %6951 = vmatprep.subr.mxu0 0.0
        %6952 = vmatpush2.msra.mxu0 0.0
        %6953 = vmatprep.subr.mxu0 0.0
        %6954 = vmatpush2.msra.mxu0 0.0
        %6955 = vmatprep.subr.mxu0 0.0
        %6956 = vmatpush2.msra.mxu0 0.0
        %6957 = vmatprep.subr.mxu0 0.0
        %6958 = vmatpush2.msra.mxu0 0.0
        %6959 = vmatprep.subr.mxu0 0.0
        %6960 = vmatpush2.msra.mxu0 0.0
        %6961 = vmatprep.subr.mxu0 0.0
        %6962 = vmatpush2.msra.mxu0 0.0
        %6963 = vmatprep.subr.mxu0 0.0
        %6964 = vmatpush2.msra.mxu0 0.0
        %6965 = vmatprep.subr.mxu0 0.0
        %6966 = vmatpush2.msra.mxu0 0.0
        %6967 = vmatprep.subr.mxu0 0.0
        %6968 = vmatpush2.msra.mxu0 0.0
        %6969 = vmatprep.mubr.f32.mxu0 0.0
        %6970 = vmatmul.mubr.f32.gmra.mxu0 %v6733
        %v6971 = vpop.f32.mrf.mxu0
        %v6972 = vadd.f32 0.0, %v6971
        %v6973 = vpop.f32.mrf.mxu0
        %v6974 = vadd.f32 0.0, %v6973
        %6975 = vmatprep.mubr.f32.mxu0 0.0
        %6976 = vmatmul.mubr.f32.gmra.mxu0 %v6735
        %v6977 = vpop.f32.mrf.mxu0
        %v6978 = vadd.f32 0.0, %v6977
        %v6979 = vpop.f32.mrf.mxu0
        %v6980 = vadd.f32 0.0, %v6979
        %6981 = vmatprep.mubr.f32.mxu0 0.0
        %6982 = vmatmul.mubr.f32.gmra.mxu0 %v6737
        %v6983 = vpop.f32.mrf.mxu0
        %v6984 = vadd.f32 0.0, %v6983
        %v6985 = vpop.f32.mrf.mxu0
        %v6986 = vadd.f32 0.0, %v6985
        %6987 = vdwg.mxu0
        %6988 = vmatprep.subr.mxu0 0.0
        %6989 = vmatpush1.msra.mxu0 0.0
        %6990 = vmatprep.subr.mxu0 0.0
        %6991 = vmatpush1.msra.mxu0 0.0
        %6992 = vmatprep.subr.mxu0 0.0
        %6993 = vmatpush1.msra.mxu0 0.0
        %6994 = vmatprep.subr.mxu0 0.0
        %6995 = vmatpush1.msra.mxu0 0.0
        %6996 = vmatprep.subr.mxu0 0.0
        %6997 = vmatpush1.msra.mxu0 0.0
        %6998 = vmatprep.subr.mxu0 0.0
        %6999 = vmatpush1.msra.mxu0 0.0
        %7000 = vmatprep.subr.mxu0 0.0
        %7001 = vmatpush1.msra.mxu0 0.0
        %7002 = vmatprep.subr.mxu0 0.0
        %7003 = vmatpush1.msra.mxu0 0.0
        %7004 = vmatprep.subr.mxu0 0.0
        %7005 = vmatpush1.msra.mxu0 0.0
        %7006 = vmatprep.subr.mxu0 0.0
        %7007 = vmatpush1.msra.mxu0 0.0
        %7008 = vmatprep.subr.mxu0 0.0
        %7009 = vmatpush1.msra.mxu0 0.0
        %7010 = vmatprep.subr.mxu0 0.0
        %7011 = vmatpush1.msra.mxu0 0.0
        %7012 = vmatprep.subr.mxu0 0.0
        %7013 = vmatpush1.msra.mxu0 0.0
        %7014 = vmatprep.subr.mxu0 0.0
        %7015 = vmatpush1.msra.mxu0 0.0
        %7016 = vmatprep.subr.mxu0 %v652
        %7017 = vmatpush1.msra.mxu0 %v651
        %7018 = vmatprep.subr.mxu0 %v644
        %7019 = vmatpush1.msra.mxu0 %v643
        %7020 = vmatprep.subr.mxu0 0.0
        %7021 = vmatpush2.msra.mxu0 0.0
        %7022 = vmatprep.subr.mxu0 0.0
        %7023 = vmatpush2.msra.mxu0 0.0
        %7024 = vmatprep.subr.mxu0 0.0
        %7025 = vmatpush2.msra.mxu0 0.0
        %7026 = vmatprep.subr.mxu0 0.0
        %7027 = vmatpush2.msra.mxu0 0.0
        %7028 = vmatprep.subr.mxu0 0.0
        %7029 = vmatpush2.msra.mxu0 0.0
        %7030 = vmatprep.subr.mxu0 0.0
        %7031 = vmatpush2.msra.mxu0 0.0
        %7032 = vmatprep.subr.mxu0 0.0
        %7033 = vmatpush2.msra.mxu0 0.0
        %7034 = vmatprep.subr.mxu0 0.0
        %7035 = vmatpush2.msra.mxu0 0.0
        %7036 = vmatprep.subr.mxu0 0.0
        %7037 = vmatpush2.msra.mxu0 0.0
        %7038 = vmatprep.subr.mxu0 0.0
        %7039 = vmatpush2.msra.mxu0 0.0
        %7040 = vmatprep.subr.mxu0 0.0
        %7041 = vmatpush2.msra.mxu0 0.0
        %7042 = vmatprep.subr.mxu0 0.0
        %7043 = vmatpush2.msra.mxu0 0.0
        %7044 = vmatprep.subr.mxu0 0.0
        %7045 = vmatpush2.msra.mxu0 0.0
        %7046 = vmatprep.subr.mxu0 0.0
        %7047 = vmatpush2.msra.mxu0 0.0
        %7048 = vmatprep.subr.mxu0 0.0
        %7049 = vmatpush2.msra.mxu0 0.0
        %7050 = vmatprep.subr.mxu0 0.0
        %7051 = vmatpush2.msra.mxu0 0.0
        %7052 = vmatprep.mubr.f32.mxu0 0.0
        %7053 = vmatmul.mubr.f32.gmra.mxu0 %v6733
        %v7054 = vpop.f32.mrf.mxu0
        %v7055 = vadd.f32 0.0, %v7054
        %v7056 = vpop.f32.mrf.mxu0
        %v7057 = vadd.f32 0.0, %v7056
        %7058 = vmatprep.mubr.f32.mxu0 0.0
        %7059 = vmatmul.mubr.f32.gmra.mxu0 %v6735
        %v7060 = vpop.f32.mrf.mxu0
        %v7061 = vadd.f32 0.0, %v7060
        %v7062 = vpop.f32.mrf.mxu0
        %v7063 = vadd.f32 0.0, %v7062
        %7064 = vmatprep.mubr.f32.mxu0 0.0
        %7065 = vmatmul.mubr.f32.gmra.mxu0 %v6737
        %v7066 = vpop.f32.mrf.mxu0
        %v7067 = vadd.f32 0.0, %v7066
        %v7068 = vpop.f32.mrf.mxu0
        %v7069 = vadd.f32 0.0, %v7068
        %7070 = vdwg.mxu0
        %v7071 = vmul.f32 %v6703, %v6806
        %v7072 = vmul.f32 %v6704, %v6808
        %v7073 = vmul.f32 %v6705, %v6889
        %v7074 = vmul.f32 %v6706, %v6891
        %v7075 = vmul.f32 %v6707, %v6972
        %v7076 = vmul.f32 %v6708, %v6974
        %v7077 = vmul.f32 %v6709, %v7055
        %v7078 = vmul.f32 %v6710, %v7057
        %v7079 = vmul.f32 %v6711, %v6812
        %v7080 = vmul.f32 %v6712, %v6814
        %v7081 = vmul.f32 %v6713, %v6895
        %v7082 = vmul.f32 %v6714, %v6897
        %v7083 = vmul.f32 %v6715, %v6978
        %v7084 = vmul.f32 %v6716, %v6980
        %v7085 = vmul.f32 %v6717, %v7061
        %v7086 = vmul.f32 %v6718, %v7063
        %v7087 = vmul.f32 %v6719, %v6818
        %v7088 = vmul.f32 %v6720, %v6820
        %v7089 = vmul.f32 %v6721, %v6901
        %v7090 = vmul.f32 %v6722, %v6903
        %v7091 = vmul.f32 %v6723, %v6984
        %v7092 = vmul.f32 %v6724, %v6986
        %v7093 = vmul.f32 %v6725, %v7067
        %v7094 = vmul.f32 %v6726, %v7069
        %s7095 = scalar_lea.vmem [#allocation9], 1
        %v7096 = vld [vmem:[%s7095] sm:$0x1]
        %v7098 = vlaneseq
        %v7099 = vshrl.u32 %v7098, 7
        %v7100 = vsub.s32 0, %v7099
        %v7101 = vrot.slane %v7096, %v7100
        %v7103 = vmul.f32 %v4523, %v7101
        %v7104 = vmul.f32 %v4524, %v7101
        %v7105 = vmul.f32 %v4525, %v7101
        %7106 = vmatprep.subr.mxu0 0.0
        %7107 = vmatpush1.msra.mxu0 %v668
        %7108 = vmatprep.subr.mxu0 0.0
        %7109 = vmatpush1.msra.mxu0 %v667
        %7110 = vmatprep.subr.mxu0 0.0
        %7111 = vmatpush1.msra.mxu0 %v666
        %7112 = vmatprep.subr.mxu0 0.0
        %7113 = vmatpush1.msra.mxu0 %v665
        %7114 = vmatprep.subr.mxu0 0.0
        %7115 = vmatpush1.msra.mxu0 %v664
        %7116 = vmatprep.subr.mxu0 0.0
        %7117 = vmatpush1.msra.mxu0 %v663
        %7118 = vmatprep.subr.mxu0 0.0
        %7119 = vmatpush1.msra.mxu0 %v662
        %7120 = vmatprep.subr.mxu0 0.0
        %7121 = vmatpush1.msra.mxu0 %v661
        %7122 = vmatprep.subr.mxu0 0.0
        %7123 = vmatpush1.msra.mxu0 %v660
        %7124 = vmatprep.subr.mxu0 0.0
        %7125 = vmatpush1.msra.mxu0 %v659
        %7126 = vmatprep.subr.mxu0 0.0
        %7127 = vmatpush1.msra.mxu0 %v658
        %7128 = vmatprep.subr.mxu0 0.0
        %7129 = vmatpush1.msra.mxu0 %v657
        %7130 = vmatprep.subr.mxu0 0.0
        %7131 = vmatpush1.msra.mxu0 %v656
        %7132 = vmatprep.subr.mxu0 0.0
        %7133 = vmatpush1.msra.mxu0 %v655
        %7134 = vmatprep.subr.mxu0 0.0
        %7135 = vmatpush1.msra.mxu0 %v654
        %7136 = vmatprep.subr.mxu0 0.0
        %7137 = vmatpush1.msra.mxu0 %v653
        %7138 = vmatprep.subr.mxu0 0.0
        %7139 = vmatpush2.msra.mxu0 %v684
        %7140 = vmatprep.subr.mxu0 0.0
        %7141 = vmatpush2.msra.mxu0 %v683
        %7142 = vmatprep.subr.mxu0 0.0
        %7143 = vmatpush2.msra.mxu0 %v682
        %7144 = vmatprep.subr.mxu0 0.0
        %7145 = vmatpush2.msra.mxu0 %v681
        %7146 = vmatprep.subr.mxu0 0.0
        %7147 = vmatpush2.msra.mxu0 %v680
        %7148 = vmatprep.subr.mxu0 0.0
        %7149 = vmatpush2.msra.mxu0 %v679
        %7150 = vmatprep.subr.mxu0 0.0
        %7151 = vmatpush2.msra.mxu0 %v678
        %7152 = vmatprep.subr.mxu0 0.0
        %7153 = vmatpush2.msra.mxu0 %v677
        %7154 = vmatprep.subr.mxu0 0.0
        %7155 = vmatpush2.msra.mxu0 %v676
        %7156 = vmatprep.subr.mxu0 0.0
        %7157 = vmatpush2.msra.mxu0 %v675
        %7158 = vmatprep.subr.mxu0 0.0
        %7159 = vmatpush2.msra.mxu0 %v674
        %7160 = vmatprep.subr.mxu0 0.0
        %7161 = vmatpush2.msra.mxu0 %v673
        %7162 = vmatprep.subr.mxu0 0.0
        %7163 = vmatpush2.msra.mxu0 %v672
        %7164 = vmatprep.subr.mxu0 0.0
        %7165 = vmatpush2.msra.mxu0 %v671
        %7166 = vmatprep.subr.mxu0 0.0
        %7167 = vmatpush2.msra.mxu0 %v670
        %7168 = vmatprep.subr.mxu0 0.0
        %7169 = vmatpush2.msra.mxu0 %v669
        %7170 = vmatprep.mubr.f32.mxu0 %v7072
        %7171 = vmatmul.mubr.f32.gmra.mxu0 %v7071
        %v7172 = vpop.f32.mrf.mxu0
        %v7173 = vadd.f32 %v7103, %v7172
        %v7174 = vpop.f32.mrf.mxu0
        %7175 = vmatprep.mubr.f32.mxu0 %v7080
        %7176 = vmatmul.mubr.f32.gmra.mxu0 %v7079
        %v7177 = vpop.f32.mrf.mxu0
        %v7178 = vadd.f32 %v7104, %v7177
        %v7179 = vpop.f32.mrf.mxu0
        %7180 = vmatprep.mubr.f32.mxu0 %v7088
        %7181 = vmatmul.mubr.f32.gmra.mxu0 %v7087
        %v7182 = vpop.f32.mrf.mxu0
        %v7183 = vadd.f32 %v7105, %v7182
        %v7184 = vpop.f32.mrf.mxu0
        %7185 = vdwg.mxu0
        %7186 = vmatprep.subr.mxu0 0.0
        %7187 = vmatpush1.msra.mxu0 %v700
        %7188 = vmatprep.subr.mxu0 0.0
        %7189 = vmatpush1.msra.mxu0 %v699
        %7190 = vmatprep.subr.mxu0 0.0
        %7191 = vmatpush1.msra.mxu0 %v698
        %7192 = vmatprep.subr.mxu0 0.0
        %7193 = vmatpush1.msra.mxu0 %v697
        %7194 = vmatprep.subr.mxu0 0.0
        %7195 = vmatpush1.msra.mxu0 %v696
        %7196 = vmatprep.subr.mxu0 0.0
        %7197 = vmatpush1.msra.mxu0 %v695
        %7198 = vmatprep.subr.mxu0 0.0
        %7199 = vmatpush1.msra.mxu0 %v694
        %7200 = vmatprep.subr.mxu0 0.0
        %7201 = vmatpush1.msra.mxu0 %v693
        %7202 = vmatprep.subr.mxu0 0.0
        %7203 = vmatpush1.msra.mxu0 %v692
        %7204 = vmatprep.subr.mxu0 0.0
        %7205 = vmatpush1.msra.mxu0 %v691
        %7206 = vmatprep.subr.mxu0 0.0
        %7207 = vmatpush1.msra.mxu0 %v690
        %7208 = vmatprep.subr.mxu0 0.0
        %7209 = vmatpush1.msra.mxu0 %v689
        %7210 = vmatprep.subr.mxu0 0.0
        %7211 = vmatpush1.msra.mxu0 %v688
        %7212 = vmatprep.subr.mxu0 0.0
        %7213 = vmatpush1.msra.mxu0 %v687
        %7214 = vmatprep.subr.mxu0 0.0
        %7215 = vmatpush1.msra.mxu0 %v686
        %7216 = vmatprep.subr.mxu0 0.0
        %7217 = vmatpush1.msra.mxu0 %v685
        %7218 = vmatprep.subr.mxu0 0.0
        %7219 = vmatpush2.msra.mxu0 %v716
        %7220 = vmatprep.subr.mxu0 0.0
        %7221 = vmatpush2.msra.mxu0 %v715
        %7222 = vmatprep.subr.mxu0 0.0
        %7223 = vmatpush2.msra.mxu0 %v714
        %7224 = vmatprep.subr.mxu0 0.0
        %7225 = vmatpush2.msra.mxu0 %v713
        %7226 = vmatprep.subr.mxu0 0.0
        %7227 = vmatpush2.msra.mxu0 %v712
        %7228 = vmatprep.subr.mxu0 0.0
        %7229 = vmatpush2.msra.mxu0 %v711
        %7230 = vmatprep.subr.mxu0 0.0
        %7231 = vmatpush2.msra.mxu0 %v710
        %7232 = vmatprep.subr.mxu0 0.0
        %7233 = vmatpush2.msra.mxu0 %v709
        %7234 = vmatprep.subr.mxu0 0.0
        %7235 = vmatpush2.msra.mxu0 %v708
        %7236 = vmatprep.subr.mxu0 0.0
        %7237 = vmatpush2.msra.mxu0 %v707
        %7238 = vmatprep.subr.mxu0 0.0
        %7239 = vmatpush2.msra.mxu0 %v706
        %7240 = vmatprep.subr.mxu0 0.0
        %7241 = vmatpush2.msra.mxu0 %v705
        %7242 = vmatprep.subr.mxu0 0.0
        %7243 = vmatpush2.msra.mxu0 %v704
        %7244 = vmatprep.subr.mxu0 0.0
        %7245 = vmatpush2.msra.mxu0 %v703
        %7246 = vmatprep.subr.mxu0 0.0
        %7247 = vmatpush2.msra.mxu0 %v702
        %7248 = vmatprep.subr.mxu0 0.0
        %7249 = vmatpush2.msra.mxu0 %v701
        %7250 = vmatprep.mubr.f32.mxu0 %v7074
        %7251 = vmatmul.mubr.f32.gmra.mxu0 %v7073
        %v7252 = vpop.f32.mrf.mxu0
        %v7253 = vadd.f32 %v7173, %v7252
        %v7254 = vpop.f32.mrf.mxu0
        %7255 = vmatprep.mubr.f32.mxu0 %v7082
        %7256 = vmatmul.mubr.f32.gmra.mxu0 %v7081
        %v7257 = vpop.f32.mrf.mxu0
        %v7258 = vadd.f32 %v7178, %v7257
        %v7259 = vpop.f32.mrf.mxu0
        %7260 = vmatprep.mubr.f32.mxu0 %v7090
        %7261 = vmatmul.mubr.f32.gmra.mxu0 %v7089
        %v7262 = vpop.f32.mrf.mxu0
        %v7263 = vadd.f32 %v7183, %v7262
        %v7264 = vpop.f32.mrf.mxu0
        %7265 = vdwg.mxu0
        %7266 = vmatprep.subr.mxu0 0.0
        %7267 = vmatpush1.msra.mxu0 %v732
        %7268 = vmatprep.subr.mxu0 0.0
        %7269 = vmatpush1.msra.mxu0 %v731
        %7270 = vmatprep.subr.mxu0 0.0
        %7271 = vmatpush1.msra.mxu0 %v730
        %7272 = vmatprep.subr.mxu0 0.0
        %7273 = vmatpush1.msra.mxu0 %v729
        %7274 = vmatprep.subr.mxu0 0.0
        %7275 = vmatpush1.msra.mxu0 %v728
        %7276 = vmatprep.subr.mxu0 0.0
        %7277 = vmatpush1.msra.mxu0 %v727
        %7278 = vmatprep.subr.mxu0 0.0
        %7279 = vmatpush1.msra.mxu0 %v726
        %7280 = vmatprep.subr.mxu0 0.0
        %7281 = vmatpush1.msra.mxu0 %v725
        %7282 = vmatprep.subr.mxu0 0.0
        %7283 = vmatpush1.msra.mxu0 %v724
        %7284 = vmatprep.subr.mxu0 0.0
        %7285 = vmatpush1.msra.mxu0 %v723
        %7286 = vmatprep.subr.mxu0 0.0
        %7287 = vmatpush1.msra.mxu0 %v722
        %7288 = vmatprep.subr.mxu0 0.0
        %7289 = vmatpush1.msra.mxu0 %v721
        %7290 = vmatprep.subr.mxu0 0.0
        %7291 = vmatpush1.msra.mxu0 %v720
        %7292 = vmatprep.subr.mxu0 0.0
        %7293 = vmatpush1.msra.mxu0 %v719
        %7294 = vmatprep.subr.mxu0 0.0
        %7295 = vmatpush1.msra.mxu0 %v718
        %7296 = vmatprep.subr.mxu0 0.0
        %7297 = vmatpush1.msra.mxu0 %v717
        %7298 = vmatprep.subr.mxu0 0.0
        %7299 = vmatpush2.msra.mxu0 %v748
        %7300 = vmatprep.subr.mxu0 0.0
        %7301 = vmatpush2.msra.mxu0 %v747
        %7302 = vmatprep.subr.mxu0 0.0
        %7303 = vmatpush2.msra.mxu0 %v746
        %7304 = vmatprep.subr.mxu0 0.0
        %7305 = vmatpush2.msra.mxu0 %v745
        %7306 = vmatprep.subr.mxu0 0.0
        %7307 = vmatpush2.msra.mxu0 %v744
        %7308 = vmatprep.subr.mxu0 0.0
        %7309 = vmatpush2.msra.mxu0 %v743
        %7310 = vmatprep.subr.mxu0 0.0
        %7311 = vmatpush2.msra.mxu0 %v742
        %7312 = vmatprep.subr.mxu0 0.0
        %7313 = vmatpush2.msra.mxu0 %v741
        %7314 = vmatprep.subr.mxu0 0.0
        %7315 = vmatpush2.msra.mxu0 %v740
        %7316 = vmatprep.subr.mxu0 0.0
        %7317 = vmatpush2.msra.mxu0 %v739
        %7318 = vmatprep.subr.mxu0 0.0
        %7319 = vmatpush2.msra.mxu0 %v738
        %7320 = vmatprep.subr.mxu0 0.0
        %7321 = vmatpush2.msra.mxu0 %v737
        %7322 = vmatprep.subr.mxu0 0.0
        %7323 = vmatpush2.msra.mxu0 %v736
        %7324 = vmatprep.subr.mxu0 0.0
        %7325 = vmatpush2.msra.mxu0 %v735
        %7326 = vmatprep.subr.mxu0 0.0
        %7327 = vmatpush2.msra.mxu0 %v734
        %7328 = vmatprep.subr.mxu0 0.0
        %7329 = vmatpush2.msra.mxu0 %v733
        %7330 = vmatprep.mubr.f32.mxu0 %v7076
        %7331 = vmatmul.mubr.f32.gmra.mxu0 %v7075
        %v7332 = vpop.f32.mrf.mxu0
        %v7333 = vadd.f32 %v7253, %v7332
        %v7334 = vpop.f32.mrf.mxu0
        %7335 = vmatprep.mubr.f32.mxu0 %v7084
        %7336 = vmatmul.mubr.f32.gmra.mxu0 %v7083
        %v7337 = vpop.f32.mrf.mxu0
        %v7338 = vadd.f32 %v7258, %v7337
        %v7339 = vpop.f32.mrf.mxu0
        %7340 = vmatprep.mubr.f32.mxu0 %v7092
        %7341 = vmatmul.mubr.f32.gmra.mxu0 %v7091
        %v7342 = vpop.f32.mrf.mxu0
        %v7343 = vadd.f32 %v7263, %v7342
        %v7344 = vpop.f32.mrf.mxu0
        %7345 = vdwg.mxu0
        %7346 = vmatprep.subr.mxu0 0.0
        %7347 = vmatpush1.msra.mxu0 %v764
        %7348 = vmatprep.subr.mxu0 0.0
        %7349 = vmatpush1.msra.mxu0 %v763
        %7350 = vmatprep.subr.mxu0 0.0
        %7351 = vmatpush1.msra.mxu0 %v762
        %7352 = vmatprep.subr.mxu0 0.0
        %7353 = vmatpush1.msra.mxu0 %v761
        %7354 = vmatprep.subr.mxu0 0.0
        %7355 = vmatpush1.msra.mxu0 %v760
        %7356 = vmatprep.subr.mxu0 0.0
        %7357 = vmatpush1.msra.mxu0 %v759
        %7358 = vmatprep.subr.mxu0 0.0
        %7359 = vmatpush1.msra.mxu0 %v758
        %7360 = vmatprep.subr.mxu0 0.0
        %7361 = vmatpush1.msra.mxu0 %v757
        %7362 = vmatprep.subr.mxu0 0.0
        %7363 = vmatpush1.msra.mxu0 %v756
        %7364 = vmatprep.subr.mxu0 0.0
        %7365 = vmatpush1.msra.mxu0 %v755
        %7366 = vmatprep.subr.mxu0 0.0
        %7367 = vmatpush1.msra.mxu0 %v754
        %7368 = vmatprep.subr.mxu0 0.0
        %7369 = vmatpush1.msra.mxu0 %v753
        %7370 = vmatprep.subr.mxu0 0.0
        %7371 = vmatpush1.msra.mxu0 %v752
        %7372 = vmatprep.subr.mxu0 0.0
        %7373 = vmatpush1.msra.mxu0 %v751
        %7374 = vmatprep.subr.mxu0 0.0
        %7375 = vmatpush1.msra.mxu0 %v750
        %7376 = vmatprep.subr.mxu0 0.0
        %7377 = vmatpush1.msra.mxu0 %v749
        %7378 = vmatprep.subr.mxu0 0.0
        %7379 = vmatpush2.msra.mxu0 %v780
        %7380 = vmatprep.subr.mxu0 0.0
        %7381 = vmatpush2.msra.mxu0 %v779
        %7382 = vmatprep.subr.mxu0 0.0
        %7383 = vmatpush2.msra.mxu0 %v778
        %7384 = vmatprep.subr.mxu0 0.0
        %7385 = vmatpush2.msra.mxu0 %v777
        %7386 = vmatprep.subr.mxu0 0.0
        %7387 = vmatpush2.msra.mxu0 %v776
        %7388 = vmatprep.subr.mxu0 0.0
        %7389 = vmatpush2.msra.mxu0 %v775
        %7390 = vmatprep.subr.mxu0 0.0
        %7391 = vmatpush2.msra.mxu0 %v774
        %7392 = vmatprep.subr.mxu0 0.0
        %7393 = vmatpush2.msra.mxu0 %v773
        %7394 = vmatprep.subr.mxu0 0.0
        %7395 = vmatpush2.msra.mxu0 %v772
        %7396 = vmatprep.subr.mxu0 0.0
        %7397 = vmatpush2.msra.mxu0 %v771
        %7398 = vmatprep.subr.mxu0 0.0
        %7399 = vmatpush2.msra.mxu0 %v770
        %7400 = vmatprep.subr.mxu0 0.0
        %7401 = vmatpush2.msra.mxu0 %v769
        %7402 = vmatprep.subr.mxu0 0.0
        %7403 = vmatpush2.msra.mxu0 %v768
        %7404 = vmatprep.subr.mxu0 0.0
        %7405 = vmatpush2.msra.mxu0 %v767
        %7406 = vmatprep.subr.mxu0 0.0
        %7407 = vmatpush2.msra.mxu0 %v766
        %7408 = vmatprep.subr.mxu0 0.0
        %7409 = vmatpush2.msra.mxu0 %v765
        %7410 = vmatprep.mubr.f32.mxu0 %v7078
        %7411 = vmatmul.mubr.f32.gmra.mxu0 %v7077
        %v7412 = vpop.f32.mrf.mxu0
        %v7413 = vadd.f32 %v7333, %v7412
        %v7414 = vpop.f32.mrf.mxu0
        %7415 = vmatprep.mubr.f32.mxu0 %v7086
        %7416 = vmatmul.mubr.f32.gmra.mxu0 %v7085
        %v7417 = vpop.f32.mrf.mxu0
        %v7418 = vadd.f32 %v7338, %v7417
        %v7419 = vpop.f32.mrf.mxu0
        %7420 = vmatprep.mubr.f32.mxu0 %v7094
        %7421 = vmatmul.mubr.f32.gmra.mxu0 %v7093
        %v7422 = vpop.f32.mrf.mxu0
        %v7423 = vadd.f32 %v7343, %v7422
        %v7424 = vpop.f32.mrf.mxu0
        %7425 = vdwg.mxu0
        %v7426 = vsub.f32 0.0, %v4412
        %v7427 = vsub.f32 0.0, %v4417
        %v7428 = vsub.f32 0.0, %v4422
        %v7429 = vmul.f32 %v7426, 1.442695
        %v7430 = vpow.pop %v7429
        %v7431 = vmul.f32 %v7427, 1.442695
        %v7432 = vpow.pop %v7431
        %v7433 = vmul.f32 %v7428, 1.442695
        %v7434 = vpow.pop %v7433
        %v7435 = vadd.f32 %v7430, 1.0
        %v7436 = vadd.f32 %v7432, 1.0
        %v7437 = vadd.f32 %v7434, 1.0
        %v7438 = vrcp.pop %v7435
        %v7439 = vmul.f32 1.0, %v7438
        %v7440 = vrcp.pop %v7436
        %v7441 = vmul.f32 1.0, %v7440
        %v7442 = vrcp.pop %v7437
        %v7443 = vmul.f32 1.0, %v7442
        %v7444 = vmul.f32 %v4412, %v7439
        %v7445 = vmul.f32 %v4417, %v7441
        %v7446 = vmul.f32 %v4422, %v7443
        %7450 = vrot.lane.b32.xlu0 %v7444, 64
        %v7451 = vpop.permute.xlu0 %7450
        %7452 = vrot.lane.b32.xlu0 %v7445, 64
        %v7453 = vpop.permute.xlu0 %7452
        %7454 = vrot.lane.b32.xlu0 %v7446, 64
        %v7455 = vpop.permute.xlu0 %7454
        %v7459 = vmul.f32 %v7413, %v7451
        %v7460 = vmul.f32 %v7418, %v7453
        %v7461 = vmul.f32 %v7423, %v7455
        %s7462 = scalar_lea.vmem %s11, 64
        %v7463 = vld [vmem:[%s7462] sm:$0xff]
        %v7464 = vld [vmem:[%s7462 + $0x8] sm:$0xff]
        %v7465 = vld [vmem:[%s7462 + $0x10] sm:$0xff]
        %v7466 = vld [vmem:[%s7462 + $0x18] sm:$0xff]
        %v7467 = vld [vmem:[%s7462 + $0x20] sm:$0xff]
        %v7468 = vld [vmem:[%s7462 + $0x28] sm:$0xff]
        %v7469 = vld [vmem:[%s7462 + $0x30] sm:$0xff]
        %v7470 = vld [vmem:[%s7462 + $0x38] sm:$0xff]
        %v7472 = vsel %vm1179, %v7459, 0
        %v7475 = vsel %vm1179, %v7460, 0
        %v7478 = vsel %vm1179, %v7461, 0
        %7480 = vmatprep.subr.mxu0 0.0
        %7481 = vmatpush1.msra.mxu0 0.0
        %7482 = vmatprep.subr.mxu0 0.0
        %7483 = vmatpush1.msra.mxu0 0.0
        %7484 = vmatprep.subr.mxu0 0.0
        %7485 = vmatpush1.msra.mxu0 0.0
        %7486 = vmatprep.subr.mxu0 0.0
        %7487 = vmatpush1.msra.mxu0 0.0
        %7488 = vmatprep.subr.mxu0 0.0
        %7489 = vmatpush1.msra.mxu0 0.0
        %7490 = vmatprep.subr.mxu0 0.0
        %7491 = vmatpush1.msra.mxu0 0.0
        %7492 = vmatprep.subr.mxu0 0.0
        %7493 = vmatpush1.msra.mxu0 0.0
        %7494 = vmatprep.subr.mxu0 0.0
        %7495 = vmatpush1.msra.mxu0 0.0
        %7496 = vmatprep.subr.mxu0 0.0
        %7497 = vmatpush1.msra.mxu0 %v7470
        %7498 = vmatprep.subr.mxu0 0.0
        %7499 = vmatpush1.msra.mxu0 %v7469
        %7500 = vmatprep.subr.mxu0 0.0
        %7501 = vmatpush1.msra.mxu0 %v7468
        %7502 = vmatprep.subr.mxu0 0.0
        %7503 = vmatpush1.msra.mxu0 %v7467
        %7504 = vmatprep.subr.mxu0 0.0
        %7505 = vmatpush1.msra.mxu0 %v7466
        %7506 = vmatprep.subr.mxu0 0.0
        %7507 = vmatpush1.msra.mxu0 %v7465
        %7508 = vmatprep.subr.mxu0 0.0
        %7509 = vmatpush1.msra.mxu0 %v7464
        %7510 = vmatprep.subr.mxu0 0.0
        %7511 = vmatpush1.msra.mxu0 %v7463
        %7512 = vmatprep.subr.mxu0 0.0
        %7513 = vmatpush2.msra.mxu0 0.0
        %7514 = vmatprep.subr.mxu0 0.0
        %7515 = vmatpush2.msra.mxu0 0.0
        %7516 = vmatprep.subr.mxu0 0.0
        %7517 = vmatpush2.msra.mxu0 0.0
        %7518 = vmatprep.subr.mxu0 0.0
        %7519 = vmatpush2.msra.mxu0 0.0
        %7520 = vmatprep.subr.mxu0 0.0
        %7521 = vmatpush2.msra.mxu0 0.0
        %7522 = vmatprep.subr.mxu0 0.0
        %7523 = vmatpush2.msra.mxu0 0.0
        %7524 = vmatprep.subr.mxu0 0.0
        %7525 = vmatpush2.msra.mxu0 0.0
        %7526 = vmatprep.subr.mxu0 0.0
        %7527 = vmatpush2.msra.mxu0 0.0
        %7528 = vmatprep.subr.mxu0 0.0
        %7529 = vmatpush2.msra.mxu0 0.0
        %7530 = vmatprep.subr.mxu0 0.0
        %7531 = vmatpush2.msra.mxu0 0.0
        %7532 = vmatprep.subr.mxu0 0.0
        %7533 = vmatpush2.msra.mxu0 0.0
        %7534 = vmatprep.subr.mxu0 0.0
        %7535 = vmatpush2.msra.mxu0 0.0
        %7536 = vmatprep.subr.mxu0 0.0
        %7537 = vmatpush2.msra.mxu0 0.0
        %7538 = vmatprep.subr.mxu0 0.0
        %7539 = vmatpush2.msra.mxu0 0.0
        %7540 = vmatprep.subr.mxu0 0.0
        %7541 = vmatpush2.msra.mxu0 0.0
        %7542 = vmatprep.subr.mxu0 0.0
        %7543 = vmatpush2.msra.mxu0 0.0
        %7544 = vmatprep.mubr.f32.mxu0 0.0
        %7545 = vmatmul.mubr.f32.gmra.mxu0 %v7472
        %v7546 = vpop.f32.mrf.mxu0
        %v7547 = vpop.f32.mrf.mxu0
        %7548 = vmatprep.mubr.f32.mxu0 0.0
        %7549 = vmatmul.mubr.f32.gmra.mxu0 %v7475
        %v7550 = vpop.f32.mrf.mxu0
        %v7551 = vadd.f32 %v4282, %v7550
        %v7552 = vpop.f32.mrf.mxu0
        %7553 = vmatprep.mubr.f32.mxu0 0.0
        %7554 = vmatmul.mubr.f32.gmra.mxu0 %v7478
        %v7555 = vpop.f32.mrf.mxu0
        %v7556 = vadd.f32 %v4283, %v7555
        %v7557 = vpop.f32.mrf.mxu0
        %7558 = vdwg.mxu0
        %v7559 = vmul.f32 %v7551, %v7551
        %v7560 = vmul.f32 %v7556, %v7556
        %v7561 = vsel %vm928, %v7559, 0.0
        %7562 = vadd.xlane.f32.xlu0 %v7561
        %v7563 = vpop.xlane.xlu0 %7562
        %v7564 = vsel %vm928, %v7560, 0.0
        %7565 = vadd.xlane.f32.xlu0 %v7564
        %v7566 = vpop.xlane.xlu0 %7565
        %v7567 = vmul.f32 %v7563, %v938
        %v7568 = vmul.f32 %v7566, %v938
        %v7569 = vadd.f32 %v7567, 1e-05
        %v7570 = vadd.f32 %v7568, 1e-05
        %v7571 = vrsqrt.pop %v7569
        %v7572 = vrsqrt.pop %v7570
        %v7573 = vmul.f32 %v7551, %v7571
        %v7574 = vmul.f32 %v7556, %v7572
        %v7575 = vld [vmem:[%s12] sm:$0x1]
        %v7577 = vlaneseq
        %v7578 = vshrl.u32 %v7577, 7
        %v7579 = vsub.s32 0, %v7578
        %v7580 = vrot.slane %v7575, %v7579
        %v7582 = vmul.f32 %v7573, %v7580
        %v7583 = vmul.f32 %v7574, %v7580
        %vm7584 = vcmask 261121
        %7585 = vst.msk [vmem:[%s633 - $0x1] sm:$0xfe] %vm7584, %v7582
        %7586 = vst.msk [vmem:[%s633 + $0x7] sm:$0xff] %vm928, %v7583
        %p7587 = scmp.lt.s32.totalorder %s32, 1
        %s7588 = scalar_select %p7587, %s32, 1
        %s7589 = smul.addr %s7588, 2
        %s7590 = smul.addr %s7589, 8
        %s7591 = scalar_lea.vmem %s17, %s7590
        // Predicated region
        $region113: #{tpu_custom_call.1} parent=87 // pred_check
          %p7592 = pneg %p412
        $region114: #{tpu_custom_call.1} parent=87 // pred_check_branch
          %7594 = sbr.rel (%p7592) target = $region116
        $region115: #{tpu_custom_call.1} parent=87 // pred_region
          _
        $region116: #{tpu_custom_call.1} parent=87 // pred_fallthru
          _
      $region88: #{tpu_custom_call.1} parent=5 // pred_fallthru
        _
      %p7595 = scmp.le.s32.totalorder 2, %s27
      // Predicated region
      $region117: #{tpu_custom_call.1} parent=5 // pred_check
        %p7596 = pneg %p7595
      $region118: #{tpu_custom_call.1} parent=5 // pred_check_branch
        %7598 = sbr.rel (%p7596) target = $region120
      $region119: #{tpu_custom_call.1} parent=5 // pred_region
        %s7599 = ssub.s32 %s27, 2
        // Predicated region
        $region121: #{tpu_custom_call.1} parent=119 // pred_check
          %p7600 = pneg %p418
        $region122: #{tpu_custom_call.1} parent=119 // pred_check_branch
          %7602 = sbr.rel (%p7600) target = $region124
        $region123: #{tpu_custom_call.1} parent=119 // pred_region
          %p7603 = scmp.lt.s32.totalorder %s33, 1
          %s7604 = scalar_select %p7603, %s33, 1
          %s7605 = smul.addr %s7604, 2
          %s7606 = smul.addr %s7605, 8
          %s7607 = scalar_lea.vmem %s17, %s7606
        $region124: #{tpu_custom_call.1} parent=119 // pred_fallthru
          _
      $region120: #{tpu_custom_call.1} parent=5 // pred_fallthru
        _
    $region6: #{tpu_custom_call.1} parent=1 // loop_footer
      %s31 = sadd.s32 1, %s27
    $region7: #{tpu_custom_call.1} parent=1 // loop_footer_branch
      %26 = sbr.rel target = $region3
    $region8: #{tpu_custom_call.1} parent=1 // loop_exit
      _
    %7608 = vsyncpa [#allocation3], 1
    %s7609 = scalar_lea.sflag [#allocation3], 1
    %7610 = vsyncpa %s7609, 1
    %7611 = vsyncpa [#allocation5], 1
    %7612 = vsyncpa [#allocation8], 1
    %7613 = vsyncpa [#allocation11], 1

</llo_original>
